<compile_context>
chip_gen: v6e
topology: v6e:2x2x1
jax: 0.10.0
libtpu: 0.0.40
codegen_flags: <defaults>
</compile_context>

<pallas_src>
import jax
import jax.numpy as jnp
from jax import lax
from jax.experimental import pallas as pl
from jax.experimental.pallas import tpu as pltpu

n_wires = 3606          # from the PyTorch module
ENCODED_DIM = 16        # consistent with the module's constructor arg


def vae_kernel(x_ref, we_ref, wdt_ref, o_ref):
    """Fused forward on one (C, tl) slab.

    x_ref  : (C, tl)   VMEM   input, channels on sublanes, L on lanes
    we_ref : (E, C)    VMEM   encoder weight (resident across grid)
    wdt_ref: (E, C)    VMEM   decoder weight, pre-transposed / lane-dense
    o_ref  : (C, tl)   VMEM
    """
    # Encoder 1x1 conv == matmul over channels, then tanh (MXU + EUP).
    h = jnp.tanh(
        jnp.dot(we_ref[...], x_ref[...], preferred_element_type=jnp.float32)
    )
    # Decoder: out[c, l] = sum_e WdT[e, c] * h[e, l]  -> contract dim 0 of both.
    o_ref[...] = lax.dot_general(
        wdt_ref[...], h,
        dimension_numbers=(((0,), (0,)), ((), ())),
        preferred_element_type=jnp.float32,
    ).astype(o_ref.dtype)


def _auto_tile_and_vmem():
    """Pick (tile_l cap, vmem_limit_bytes) for the local TPU generation."""
    try:
        vmem_cap = pltpu.get_tpu_info().vmem_capacity_bytes
    except Exception:
        vmem_cap = 64 << 20                    # conservative fallback
    if vmem_cap >= (100 << 20):                # v5e / v6e: 128 MiB physical VMEM
        return 1024, 80 << 20
    return 512, 52 << 20                       # v7x: 64 MiB per TensorCore


def vae_forward(x, w_enc, w_dec, *, tile_l=None, vmem_limit_bytes=None):
    """x: (B, n_wires, L) float32
       w_enc: (encoded_dim, n_wires, 1)   (PyTorch Conv1d weight shape)
       w_dec: (n_wires, encoded_dim, 1)
       returns: (B, n_wires, L) float32
    """
    B, C, L = x.shape
    E = w_enc.shape[0]
    assert C == n_wires and w_enc.shape == (E, C, 1)
    assert w_dec.shape == (C, E, 1)

    we = w_enc[:, :, 0]                  # (E, C)  lane-dense
    wdt = jnp.transpose(w_dec[:, :, 0])  # (E, C)  lane-dense (pre-transposed)

    if tile_l is None or vmem_limit_bytes is None:
        auto_tl, auto_vmem = _auto_tile_and_vmem()
        if tile_l is None:
            tile_l = auto_tl
        if vmem_limit_bytes is None:
            vmem_limit_bytes = auto_vmem

    # Tile selection:
    #  * L <= cap  -> tl = L  (full-extent block: one contiguous slab DMA per
    #                          batch element, no raggedness).
    #  * L  > cap  -> tl = cap (multiple of 128 so stores are lane-dense); the
    #                 ragged final block is masked by Pallas — OOB input reads
    #                 are garbage but column-local, OOB output stores dropped.
    if L <= tile_l:
        tl = L
    else:
        assert tile_l % 128 == 0, "tile_l must be a multiple of 128"
        tl = tile_l
    grid = (B, pl.cdiv(L, tl))

    m_total = B * L
    cost = pl.CostEstimate(
        flops=4 * m_total * C * E,                      # two matmuls
        transcendentals=m_total * E,                    # tanh
        bytes_accessed=4 * (2 * B * C * L + 2 * C * E),
    )

    return pl.pallas_call(
        vae_kernel,
        out_shape=jax.ShapeDtypeStruct((B, C, L), jnp.float32),
        grid_spec=pltpu.PrefetchScalarGridSpec(
            num_scalar_prefetch=0,
            grid=grid,
            in_specs=[
                # x: one batch element, full channel extent, one L tile.
                pl.BlockSpec((None, C, tl), lambda b, l: (b, 0, l)),
                # weights: constant index_map -> fetched once, VMEM-resident
                # (~226 KiB each in the lane-dense (E, C) layout).
                pl.BlockSpec((E, C), lambda b, l: (0, 0)),
                pl.BlockSpec((E, C), lambda b, l: (0, 0)),
            ],
            out_specs=pl.BlockSpec((None, C, tl), lambda b, l: (b, 0, l)),
        ),
        compiler_params=pltpu.CompilerParams(
            dimension_semantics=("parallel", "parallel"),
            vmem_limit_bytes=vmem_limit_bytes,
        ),
        cost_estimate=cost,
    )(x, we, wdt)


def reference_forward(x, w_enc, w_dec):
    """Pure-JAX reference matching PyTorch semantics."""
    # Conv1d(k=1, no bias): y[b, o, l] = sum_c W[o, c, 0] * x[b, c, l]
    h = jnp.tanh(jnp.einsum("oc,bcl->bol", w_enc[:, :, 0], x))
    return jnp.einsum("oc,bcl->bol", w_dec[:, :, 0], h)


if __name__ == "__main__":
    key = jax.random.PRNGKey(0)
    k_x, k_we, k_wd, k_x2 = jax.random.split(key, 4)

    B, L, E = 2, 8, ENCODED_DIM

    # deterministic synthetic parameters (Conv1d weight shapes from __init__)
    w_enc = jax.random.normal(k_we, (E, n_wires, 1), dtype=jnp.float32) * 0.02
    w_dec = jax.random.normal(k_wd, (n_wires, E, 1), dtype=jnp.float32) * 0.02

    # --- small full-extent-tile path (tl = L, contiguous DMAs) ---
    x = jax.random.normal(k_x, (B, n_wires, L), dtype=jnp.float32)
    out = jax.block_until_ready(vae_forward(x, w_enc, w_dec))
    ref = jax.block_until_ready(reference_forward(x, w_enc, w_dec))
    assert out.shape == (B, n_wires, L), out.shape
    assert jnp.allclose(out, ref, atol=1e-4, rtol=1e-4), "mismatch vs reference"

    # --- ragged-L path (L not a multiple of the tile): exercises the
    #     no-pad / Pallas-masked final block introduced by the perf feedback ---
    L2 = 200
    x2 = jax.random.normal(k_x2, (B, n_wires, L2), dtype=jnp.float32)
    out2 = jax.block_until_ready(vae_forward(x2, w_enc, w_dec, tile_l=128))
    ref2 = jax.block_until_ready(reference_forward(x2, w_enc, w_dec))
    assert out2.shape == (B, n_wires, L2), out2.shape
    assert jnp.allclose(out2, ref2, atol=1e-4, rtol=1e-4), "ragged-L mismatch"

    print("KERNEL_OK")
</pallas_src>

<mosaic_0001>
module attributes {stable_mosaic.version = 11 : i64} {
  func.func @vae_kernel(%arg0: i32, %arg1: i32, %arg2: memref<1x3606x8xf32, #tpu.memory_space<vmem>>, %arg3: memref<16x3606xf32, #tpu.memory_space<vmem>>, %arg4: memref<16x3606xf32, #tpu.memory_space<vmem>>, %arg5: memref<1x3606x8xf32, #tpu.memory_space<vmem>>) attributes {dimension_semantics = [#tpu.dimension_semantics<parallel>, #tpu.dimension_semantics<parallel>], iteration_bounds = array<i64: 2, 1>, scalar_prefetch = 0 : i64, scratch_operands = 0 : i64, tpu.core_type = #tpu.core_type<tc>, window_params = [{transform_indices = @transform_0, window_bounds = array<i64: 1, 3606, 8>}, {pipeline_mode = #tpu.pipeline_mode<synchronous>, transform_indices = @transform_1, window_bounds = array<i64: 16, 3606>}, {pipeline_mode = #tpu.pipeline_mode<synchronous>, transform_indices = @transform_2, window_bounds = array<i64: 16, 3606>}, {transform_indices = @transform_3, window_bounds = array<i64: 1, 3606, 8>}]} {
    %c0 = arith.constant 0 : index
    %c0_0 = arith.constant 0 : index
    %0 = vector.load %arg3[%c0, %c0_0] : memref<16x3606xf32, #tpu.memory_space<vmem>>, vector<16x3606xf32>
    %c0_1 = arith.constant 0 : index
    %c0_2 = arith.constant 0 : index
    %c0_3 = arith.constant 0 : index
    %1 = vector.load %arg2[%c0_1, %c0_2, %c0_3] : memref<1x3606x8xf32, #tpu.memory_space<vmem>>, vector<1x3606x8xf32>
    %2 = vector.shape_cast %1 : vector<1x3606x8xf32> to vector<3606x8xf32>
    %cst = arith.constant dense<0.000000e+00> : vector<16x8xf32>
    %3 = tpu.matmul %0, %2, %cst {dimension_numbers = #tpu.dot_dimension_numbers<[1], [0], [0], [1], [0, 0, 1, 1], [], []>} : vector<16x3606xf32>, vector<3606x8xf32>, vector<16x8xf32> -> vector<16x8xf32>
    %4 = math.tanh %3 : vector<16x8xf32>
    %c0_4 = arith.constant 0 : index
    %c0_5 = arith.constant 0 : index
    %5 = vector.load %arg4[%c0_4, %c0_5] : memref<16x3606xf32, #tpu.memory_space<vmem>>, vector<16x3606xf32>
    %cst_6 = arith.constant dense<0.000000e+00> : vector<3606x8xf32>
    %6 = tpu.matmul %5, %4, %cst_6 {dimension_numbers = #tpu.dot_dimension_numbers<[0], [0], [1], [1], [0, 1, 1, 1], [], []>} : vector<16x3606xf32>, vector<16x8xf32>, vector<3606x8xf32> -> vector<3606x8xf32>
    %c0_7 = arith.constant 0 : index
    %c0_8 = arith.constant 0 : index
    %c0_9 = arith.constant 0 : index
    %7 = vector.load %arg5[%c0_7, %c0_8, %c0_9] : memref<1x3606x8xf32, #tpu.memory_space<vmem>>, vector<1x3606x8xf32>
    %8 = vector.shape_cast %7 : vector<1x3606x8xf32> to vector<3606x8xf32>
    %9 = vector.shape_cast %6 : vector<3606x8xf32> to vector<1x3606x8xf32>
    tpu.vector_store %arg5[%c0_7, %c0_8, %c0_9], %9 {strides = array<i32>} : memref<1x3606x8xf32, #tpu.memory_space<vmem>>, vector<1x3606x8xf32>,
    return
  }
  func.func @transform_0(%arg0: i32, %arg1: i32) -> (i32, i32, i32) {
    %c0_i32 = arith.constant 0 : i32
    %c0_i32_0 = arith.constant 0 : i32
    return %arg0, %c0_i32, %arg1 : i32, i32, i32
  }
  func.func @transform_1(%arg0: i32, %arg1: i32) -> (i32, i32) {
    %c0_i32 = arith.constant 0 : i32
    %c0_i32_0 = arith.constant 0 : i32
    %c0_i32_1 = arith.constant 0 : i32
    return %c0_i32, %c0_i32_0 : i32, i32
  }
  func.func @transform_2(%arg0: i32, %arg1: i32) -> (i32, i32) {
    %c0_i32 = arith.constant 0 : i32
    %c0_i32_0 = arith.constant 0 : i32
    %c0_i32_1 = arith.constant 0 : i32
    return %c0_i32, %c0_i32_0 : i32, i32
  }
  func.func @transform_3(%arg0: i32, %arg1: i32) -> (i32, i32, i32) {
    %c0_i32 = arith.constant 0 : i32
    %c0_i32_0 = arith.constant 0 : i32
    return %arg0, %c0_i32, %arg1 : i32, i32, i32
  }
}

</mosaic_0001>

<llo_original>
// kernel: tpu_custom_call.1
$region0: #{tpu_custom_call.1}
  #allocation0 [shape = 'u32[]', space=smem, size = 0x4, offset = 0x4, fixed_abs, tag = 'smem constant byte address 0x4 - core index']
  #allocation1 [shape = 'u32[144,128]{1,0:T(1,128)}', space=vmem, size = 0x12000, scoped, tag = 'internal scratch']
  %s0 = inlined_call_operand.vmem [shape: f32[2,3606,8], index: 0, kind: input, shape index: {}]
  %s1 = inlined_call_operand.vmem [shape: f32[16,3606], index: 1, kind: input, shape index: {}]
  %s2 = inlined_call_operand.vmem [shape: f32[16,3606], index: 2, kind: input, shape index: {}]
  %s3 = inlined_call_operand.vmem [shape: f32[2,3606,8], index: 3, kind: output, shape index: {}]
  %s4 = sld [smem:[#allocation0]]
  $region45: #{tpu_custom_call.1} parent=0
    _
  %s6 = ssub.s32 1, %s4
  %s7 = scalar_select 0, %s6, %s4
  loop: start=0, step=1, limit=4
  $region2: #{tpu_custom_call.1} parent=0 // loop_pre_header
    _
  $region3: #{tpu_custom_call.1} parent=0 // loop_header
    %s9 = sphi 0, %s13
    %p10 = scmp.ge.s32.totalorder %s9, 4
    %s16 = sphi 0, %s28
    %s17 = sphi 0, %s24
    %s18 = sphi 0, %s16
    %s19 = sphi 0, %s17
    %s20 = sphi 0, %s18
    %s21 = sphi 0, %s19
    %s33 = sphi 0, %s35
    %s36 = sphi 0, %s33
    %s37 = sphi 0, %s36
    %s53 = sphi 0, %s37
    %s57 = sphi 0, %s57
    %s59 = sphi 0, %s57
    %s60 = sphi 0, %s59
    %s74 = sphi 0, %s60
    %s78 = sphi 0, %s78
    %s80 = sphi 0, %s78
    %s81 = sphi 0, %s80
    %s95 = sphi 0, %s81
    %s103 = sphi 0, %s105
    %s106 = sphi 0, %s103
    %s107 = sphi 0, %s106
    %s123 = sphi 0, %s107
  $region4: #{tpu_custom_call.1} parent=0 // loop_header_branch
    %12 = sbr.rel (%p10) target = $region8
  $region5: #{tpu_custom_call.1} parent=0 // loop_body
    %s14 = ssub.s32 %s9, 1
    %s15 = ssub.s32 %s9, 2
    %s22 = sadd.s32 1, %s17
    %p23 = scmp.ge.s32.totalorder %s22, 1
    %s24 = scalar_select %p23, 0, %s22
    %s25 = sadd.s32 1, %s16
    %s26 = scalar_select %p23, %s25, %s16
    %p27 = scmp.ge.s32.totalorder %s26, 2
    %s28 = scalar_select %p27, 0, %s26
    %s29 = ssub.s32 %s16, %s28
    %s30 = ssub.s32 %s17, %s24
    %s31 = sor.u32 %s29, %s30
    %p32 = scmp.eq.s32.totalorder %s31, 0
    %s34 = sadd.s32 %s33, 1
    %s35 = scalar_select %p32, %s33, %s34
    %p38 = pneg %p32
    %p39 = scmp.eq.s32.totalorder %s9, 1
    %p40 = por %p38, %p39
    %p41 = scmp.ne.s32.totalorder %s33, %s36
    %p42 = scmp.eq.s32.totalorder %s9, 0
    %p43 = por %p41, %p42
    %p44 = scmp.ne.s32.totalorder %s33, %s36
    %p45 = scmp.eq.s32.totalorder %s14, 1
    %p46 = por %p44, %p45
    %p47 = scmp.ne.s32.totalorder %s36, %s37
    %p48 = scmp.eq.s32.totalorder %s14, 0
    %p49 = por %p47, %p48
    %p50 = scmp.ne.s32.totalorder %s36, %s37
    %p51 = scmp.eq.s32.totalorder %s15, 1
    %p52 = por %p50, %p51
    %p54 = scmp.ne.s32.totalorder %s37, %s53
    %p55 = scmp.eq.s32.totalorder %s15, 0
    %p56 = por %p54, %p55
    %s58 = sadd.s32 %s57, 1
    %p61 = scmp.eq.s32.totalorder %s9, 1
    %p62 = scmp.ne.s32.totalorder %s57, %s59
    %p63 = scmp.eq.s32.totalorder %s9, 0
    %p64 = por %p62, %p63
    %p65 = scmp.ne.s32.totalorder %s57, %s59
    %p66 = scmp.eq.s32.totalorder %s14, 1
    %p67 = por %p65, %p66
    %p68 = scmp.ne.s32.totalorder %s59, %s60
    %p69 = scmp.eq.s32.totalorder %s14, 0
    %p70 = por %p68, %p69
    %p71 = scmp.ne.s32.totalorder %s59, %s60
    %p72 = scmp.eq.s32.totalorder %s15, 1
    %p73 = por %p71, %p72
    %p75 = scmp.ne.s32.totalorder %s60, %s74
    %p76 = scmp.eq.s32.totalorder %s15, 0
    %p77 = por %p75, %p76
    %s79 = sadd.s32 %s78, 1
    %p82 = scmp.eq.s32.totalorder %s9, 1
    %p83 = scmp.ne.s32.totalorder %s78, %s80
    %p84 = scmp.eq.s32.totalorder %s9, 0
    %p85 = por %p83, %p84
    %p86 = scmp.ne.s32.totalorder %s78, %s80
    %p87 = scmp.eq.s32.totalorder %s14, 1
    %p88 = por %p86, %p87
    %p89 = scmp.ne.s32.totalorder %s80, %s81
    %p90 = scmp.eq.s32.totalorder %s14, 0
    %p91 = por %p89, %p90
    %p92 = scmp.ne.s32.totalorder %s80, %s81
    %p93 = scmp.eq.s32.totalorder %s15, 1
    %p94 = por %p92, %p93
    %p96 = scmp.ne.s32.totalorder %s81, %s95
    %p97 = scmp.eq.s32.totalorder %s15, 0
    %p98 = por %p96, %p97
    %s99 = ssub.s32 %s16, %s28
    %s100 = ssub.s32 %s17, %s24
    %s101 = sor.u32 %s99, %s100
    %p102 = scmp.eq.s32.totalorder %s101, 0
    %s104 = sadd.s32 %s103, 1
    %s105 = scalar_select %p102, %s103, %s104
    %p108 = pneg %p102
    %p109 = scmp.eq.s32.totalorder %s9, 1
    %p110 = por %p108, %p109
    %p111 = scmp.ne.s32.totalorder %s103, %s106
    %p112 = scmp.eq.s32.totalorder %s9, 0
    %p113 = por %p111, %p112
    %p114 = scmp.ne.s32.totalorder %s103, %s106
    %p115 = scmp.eq.s32.totalorder %s14, 1
    %p116 = por %p114, %p115
    %p117 = scmp.ne.s32.totalorder %s106, %s107
    %p118 = scmp.eq.s32.totalorder %s14, 0
    %p119 = por %p117, %p118
    %p120 = scmp.ne.s32.totalorder %s106, %s107
    %p121 = scmp.eq.s32.totalorder %s15, 1
    %p122 = por %p120, %p121
    %p124 = scmp.ne.s32.totalorder %s107, %s123
    %p125 = scmp.eq.s32.totalorder %s15, 0
    %p126 = por %p124, %p125
    %p127 = scmp.le.s32.totalorder 1, %s9
    %p128 = scmp.lt.s32.totalorder %s9, 3
    %p129 = pnand %p127, %p128
    %p130 = pneg %p129
    // Predicated region
    $region9: #{tpu_custom_call.1} parent=5 // pred_check
      _
    $region10: #{tpu_custom_call.1} parent=5 // pred_check_branch
      %132 = sbr.rel (%p129) target = $region12
    $region11: #{tpu_custom_call.1} parent=5 // pred_region
      %s133 = ssub.s32 %s9, 1
      // Predicated region
      $region13: #{tpu_custom_call.1} parent=11 // pred_check
        %p134 = pneg %p70
      $region14: #{tpu_custom_call.1} parent=11 // pred_check_branch
        %136 = sbr.rel (%p134) target = $region16
      $region15: #{tpu_custom_call.1} parent=11 // pred_region
        _
      $region16: #{tpu_custom_call.1} parent=11 // pred_fallthru
        _
      // Predicated region
      $region17: #{tpu_custom_call.1} parent=11 // pred_check
        %p137 = pneg %p91
      $region18: #{tpu_custom_call.1} parent=11 // pred_check_branch
        %139 = sbr.rel (%p137) target = $region20
      $region19: #{tpu_custom_call.1} parent=11 // pred_region
        _
      $region20: #{tpu_custom_call.1} parent=11 // pred_fallthru
        _
    $region12: #{tpu_custom_call.1} parent=5 // pred_fallthru
      _
    %p140 = scmp.lt.s32.totalorder %s9, 2
    // Predicated region
    $region21: #{tpu_custom_call.1} parent=5 // pred_check
      %p141 = pneg %p140
    $region22: #{tpu_custom_call.1} parent=5 // pred_check_branch
      %143 = sbr.rel (%p141) target = $region24
    $region23: #{tpu_custom_call.1} parent=5 // pred_region
      // Predicated region
      $region25: #{tpu_custom_call.1} parent=23 // pred_check
        %p144 = pneg %p43
      $region26: #{tpu_custom_call.1} parent=23 // pred_check_branch
        %146 = sbr.rel (%p144) target = $region28
      $region27: #{tpu_custom_call.1} parent=23 // pred_region
        %p147 = scmp.lt.s32.totalorder %s16, 1
        %s148 = scalar_select %p147, %s16, 1
        %p149 = scmp.lt.s32.totalorder %s17, 0
        %s150 = scalar_select %p149, %s17, 0
        %s151 = smul.addr %s148, 451
        %s152 = sadd.s32 %s150, %s151
        %s153 = smul.addr %s152, 8
        %s154 = scalar_lea.vmem %s0, %s153
      $region28: #{tpu_custom_call.1} parent=23 // pred_fallthru
        _
    $region24: #{tpu_custom_call.1} parent=5 // pred_fallthru
      _
    %p155 = scmp.le.s32.totalorder 1, %s9
    %p156 = scmp.lt.s32.totalorder %s9, 3
    %p157 = pnand %p155, %p156
    %p158 = pneg %p157
    // Predicated region
    $region29: #{tpu_custom_call.1} parent=5 // pred_check
      _
    $region30: #{tpu_custom_call.1} parent=5 // pred_check_branch
      %160 = sbr.rel (%p157) target = $region32
    $region31: #{tpu_custom_call.1} parent=5 // pred_region
      %s161 = ssub.s32 %s9, 1
      %p162 = scmp.lt.s32.totalorder %s18, 1
      %s163 = scalar_select %p162, %s18, 1
      %p164 = scmp.lt.s32.totalorder %s19, 0
      %s165 = scalar_select %p164, %s19, 0
      %s166 = smul.addr %s163, 451
      %s167 = sadd.s32 %s165, %s166
      %s168 = smul.addr %s167, 8
      %s169 = scalar_lea.vmem %s0, %s168
      %p170 = pneg %p49
      %p171 = pneg %p46
      %p172 = pneg %p70
      %p173 = pneg %p67
      %p174 = pneg %p91
      %p175 = pneg %p88
      %p176 = pneg %p119
      %p177 = pneg %p116
      %p178 = scmp.lt.s32.totalorder %s18, 1
      %s179 = scalar_select %p178, %s18, 1
      %p180 = scmp.lt.s32.totalorder %s19, 0
      %s181 = scalar_select %p180, %s19, 0
      %s182 = smul.addr %s179, 451
      %s183 = sadd.s32 %s181, %s182
      %s184 = smul.addr %s183, 8
      %s185 = scalar_lea.vmem %s3, %s184
      %p186 = scmp.lt.s32.totalorder %s18, 1
      %s187 = scalar_select %p186, %s18, 1
      %p188 = scmp.lt.s32.totalorder %s19, 0
      %s189 = scalar_select %p188, %s19, 0
      %s190 = smul.addr %s187, 451
      %s191 = sadd.s32 %s189, %s190
      %s192 = smul.addr %s191, 8
      %s193 = scalar_lea.vmem %s0, %s192
      %p194 = scmp.lt.s32.totalorder %s18, 1
      %s195 = scalar_select %p194, %s18, 1
      %p196 = scmp.lt.s32.totalorder %s19, 0
      %s197 = scalar_select %p196, %s19, 0
      %s198 = smul.addr %s195, 451
      %s199 = sadd.s32 %s197, %s198
      %s200 = smul.addr %s199, 8
      %s201 = scalar_lea.vmem %s3, %s200
      %v202 = vld [vmem:[%s1] sm:$0xff]
      %v203 = vld [vmem:[%s1 + $0x8] sm:$0xff]
      %v204 = vld [vmem:[%s1 + $0x10] sm:$0xff]
      %v205 = vld [vmem:[%s1 + $0x18] sm:$0xff]
      %v206 = vld [vmem:[%s1 + $0x20] sm:$0xff]
      %v207 = vld [vmem:[%s1 + $0x28] sm:$0xff]
      %v208 = vld [vmem:[%s1 + $0x30] sm:$0xff]
      %v209 = vld [vmem:[%s1 + $0x38] sm:$0xff]
      %v210 = vld [vmem:[%s1 + $0x40] sm:$0xff]
      %v211 = vld [vmem:[%s1 + $0x48] sm:$0xff]
      %v212 = vld [vmem:[%s1 + $0x50] sm:$0xff]
      %v213 = vld [vmem:[%s1 + $0x58] sm:$0xff]
      %v214 = vld [vmem:[%s1 + $0x60] sm:$0xff]
      %v215 = vld [vmem:[%s1 + $0x68] sm:$0xff]
      %v216 = vld [vmem:[%s1 + $0x70] sm:$0xff]
      %v217 = vld [vmem:[%s1 + $0x78] sm:$0xff]
      %v218 = vld [vmem:[%s1 + $0x80] sm:$0xff]
      %v219 = vld [vmem:[%s1 + $0x88] sm:$0xff]
      %v220 = vld [vmem:[%s1 + $0x90] sm:$0xff]
      %v221 = vld [vmem:[%s1 + $0x98] sm:$0xff]
      %v222 = vld [vmem:[%s1 + $0xa0] sm:$0xff]
      %v223 = vld [vmem:[%s1 + $0xa8] sm:$0xff]
      %v224 = vld [vmem:[%s1 + $0xb0] sm:$0xff]
      %v225 = vld [vmem:[%s1 + $0xb8] sm:$0xff]
      %v226 = vld [vmem:[%s1 + $0xc0] sm:$0xff]
      %v227 = vld [vmem:[%s1 + $0xc8] sm:$0xff]
      %v228 = vld [vmem:[%s1 + $0xd0] sm:$0xff]
      %v229 = vld [vmem:[%s1 + $0xd8] sm:$0xff]
      %v230 = vld [vmem:[%s1 + $0xe0] sm:$0xff]
      %v231 = vld [vmem:[%s1 + $0xe8] sm:$0xff]
      %v232 = vld [vmem:[%s1 + $0xf0] sm:$0xff]
      %v233 = vld [vmem:[%s1 + $0xf8] sm:$0xff]
      %v234 = vld [vmem:[%s1 + $0x100] sm:$0xff]
      %v235 = vld [vmem:[%s1 + $0x108] sm:$0xff]
      %v236 = vld [vmem:[%s1 + $0x110] sm:$0xff]
      %v237 = vld [vmem:[%s1 + $0x118] sm:$0xff]
      %v238 = vld [vmem:[%s1 + $0x120] sm:$0xff]
      %v239 = vld [vmem:[%s1 + $0x128] sm:$0xff]
      %v240 = vld [vmem:[%s1 + $0x130] sm:$0xff]
      %v241 = vld [vmem:[%s1 + $0x138] sm:$0xff]
      %v242 = vld [vmem:[%s1 + $0x140] sm:$0xff]
      %v243 = vld [vmem:[%s1 + $0x148] sm:$0xff]
      %v244 = vld [vmem:[%s1 + $0x150] sm:$0xff]
      %v245 = vld [vmem:[%s1 + $0x158] sm:$0xff]
      %v246 = vld [vmem:[%s1 + $0x160] sm:$0xff]
      %v247 = vld [vmem:[%s1 + $0x168] sm:$0xff]
      %v248 = vld [vmem:[%s1 + $0x170] sm:$0xff]
      %v249 = vld [vmem:[%s1 + $0x178] sm:$0xff]
      %v250 = vld [vmem:[%s1 + $0x180] sm:$0xff]
      %v251 = vld [vmem:[%s1 + $0x188] sm:$0xff]
      %v252 = vld [vmem:[%s1 + $0x190] sm:$0xff]
      %v253 = vld [vmem:[%s1 + $0x198] sm:$0xff]
      %v254 = vld [vmem:[%s1 + $0x1a0] sm:$0xff]
      %v255 = vld [vmem:[%s1 + $0x1a8] sm:$0xff]
      %v256 = vld [vmem:[%s1 + $0x1b0] sm:$0xff]
      %v257 = vld [vmem:[%s1 + $0x1b8] sm:$0xff]
      %v258 = vld [vmem:[%s1 + $0x1c0] sm:$0xff]
      %v259 = vld [vmem:[%s1 + $0x1c8] sm:$0xff]
      %v260 = vld [vmem:[%s193] sm:$0xff]
      %v261 = vld [vmem:[%s193 + $0x8] sm:$0xff]
      %v262 = vld [vmem:[%s193 + $0x10] sm:$0xff]
      %v263 = vld [vmem:[%s193 + $0x18] sm:$0xff]
      %v264 = vld [vmem:[%s193 + $0x20] sm:$0xff]
      %v265 = vld [vmem:[%s193 + $0x28] sm:$0xff]
      %v266 = vld [vmem:[%s193 + $0x30] sm:$0xff]
      %v267 = vld [vmem:[%s193 + $0x38] sm:$0xff]
      %v268 = vld [vmem:[%s193 + $0x40] sm:$0xff]
      %v269 = vld [vmem:[%s193 + $0x48] sm:$0xff]
      %v270 = vld [vmem:[%s193 + $0x50] sm:$0xff]
      %v271 = vld [vmem:[%s193 + $0x58] sm:$0xff]
      %v272 = vld [vmem:[%s193 + $0x60] sm:$0xff]
      %v273 = vld [vmem:[%s193 + $0x68] sm:$0xff]
      %v274 = vld [vmem:[%s193 + $0x70] sm:$0xff]
      %v275 = vld [vmem:[%s193 + $0x78] sm:$0xff]
      %v276 = vld [vmem:[%s193 + $0x80] sm:$0xff]
      %v277 = vld [vmem:[%s193 + $0x88] sm:$0xff]
      %v278 = vld [vmem:[%s193 + $0x90] sm:$0xff]
      %v279 = vld [vmem:[%s193 + $0x98] sm:$0xff]
      %v280 = vld [vmem:[%s193 + $0xa0] sm:$0xff]
      %v281 = vld [vmem:[%s193 + $0xa8] sm:$0xff]
      %v282 = vld [vmem:[%s193 + $0xb0] sm:$0xff]
      %v283 = vld [vmem:[%s193 + $0xb8] sm:$0xff]
      %v284 = vld [vmem:[%s193 + $0xc0] sm:$0xff]
      %v285 = vld [vmem:[%s193 + $0xc8] sm:$0xff]
      %v286 = vld [vmem:[%s193 + $0xd0] sm:$0xff]
      %v287 = vld [vmem:[%s193 + $0xd8] sm:$0xff]
      %v288 = vld [vmem:[%s193 + $0xe0] sm:$0xff]
      %v289 = vld [vmem:[%s193 + $0xe8] sm:$0xff]
      %v290 = vld [vmem:[%s193 + $0xf0] sm:$0xff]
      %v291 = vld [vmem:[%s193 + $0xf8] sm:$0xff]
      %v292 = vld [vmem:[%s193 + $0x100] sm:$0xff]
      %v293 = vld [vmem:[%s193 + $0x108] sm:$0xff]
      %v294 = vld [vmem:[%s193 + $0x110] sm:$0xff]
      %v295 = vld [vmem:[%s193 + $0x118] sm:$0xff]
      %v296 = vld [vmem:[%s193 + $0x120] sm:$0xff]
      %v297 = vld [vmem:[%s193 + $0x128] sm:$0xff]
      %v298 = vld [vmem:[%s193 + $0x130] sm:$0xff]
      %v299 = vld [vmem:[%s193 + $0x138] sm:$0xff]
      %v300 = vld [vmem:[%s193 + $0x140] sm:$0xff]
      %v301 = vld [vmem:[%s193 + $0x148] sm:$0xff]
      %v302 = vld [vmem:[%s193 + $0x150] sm:$0xff]
      %v303 = vld [vmem:[%s193 + $0x158] sm:$0xff]
      %v304 = vld [vmem:[%s193 + $0x160] sm:$0xff]
      %v305 = vld [vmem:[%s193 + $0x168] sm:$0xff]
      %v306 = vld [vmem:[%s193 + $0x170] sm:$0xff]
      %v307 = vld [vmem:[%s193 + $0x178] sm:$0xff]
      %v308 = vld [vmem:[%s193 + $0x180] sm:$0xff]
      %v309 = vld [vmem:[%s193 + $0x188] sm:$0xff]
      %v310 = vld [vmem:[%s193 + $0x190] sm:$0xff]
      %v311 = vld [vmem:[%s193 + $0x198] sm:$0xff]
      %v312 = vld [vmem:[%s193 + $0x1a0] sm:$0xff]
      %v313 = vld [vmem:[%s193 + $0x1a8] sm:$0xff]
      %v314 = vld [vmem:[%s193 + $0x1b0] sm:$0xff]
      %v315 = vld [vmem:[%s193 + $0x1b8] sm:$0xff]
      %v316 = vld [vmem:[%s193 + $0x1c0] sm:$0xff]
      %v317 = vld [vmem:[%s193 + $0x1c8] sm:$0xff]
      %v318 = vld [vmem:[%s193 + $0x1d0] sm:$0xff]
      %v319 = vld [vmem:[%s193 + $0x1d8] sm:$0xff]
      %v320 = vld [vmem:[%s193 + $0x1e0] sm:$0xff]
      %v321 = vld [vmem:[%s193 + $0x1e8] sm:$0xff]
      %v322 = vld [vmem:[%s193 + $0x1f0] sm:$0xff]
      %v323 = vld [vmem:[%s193 + $0x1f8] sm:$0xff]
      %v324 = vld [vmem:[%s193 + $0x200] sm:$0xff]
      %v325 = vld [vmem:[%s193 + $0x208] sm:$0xff]
      %v326 = vld [vmem:[%s193 + $0x210] sm:$0xff]
      %v327 = vld [vmem:[%s193 + $0x218] sm:$0xff]
      %v328 = vld [vmem:[%s193 + $0x220] sm:$0xff]
      %v329 = vld [vmem:[%s193 + $0x228] sm:$0xff]
      %v330 = vld [vmem:[%s193 + $0x230] sm:$0xff]
      %v331 = vld [vmem:[%s193 + $0x238] sm:$0xff]
      %v332 = vld [vmem:[%s193 + $0x240] sm:$0xff]
      %v333 = vld [vmem:[%s193 + $0x248] sm:$0xff]
      %v334 = vld [vmem:[%s193 + $0x250] sm:$0xff]
      %v335 = vld [vmem:[%s193 + $0x258] sm:$0xff]
      %v336 = vld [vmem:[%s193 + $0x260] sm:$0xff]
      %v337 = vld [vmem:[%s193 + $0x268] sm:$0xff]
      %v338 = vld [vmem:[%s193 + $0x270] sm:$0xff]
      %v339 = vld [vmem:[%s193 + $0x278] sm:$0xff]
      %v340 = vld [vmem:[%s193 + $0x280] sm:$0xff]
      %v341 = vld [vmem:[%s193 + $0x288] sm:$0xff]
      %v342 = vld [vmem:[%s193 + $0x290] sm:$0xff]
      %v343 = vld [vmem:[%s193 + $0x298] sm:$0xff]
      %v344 = vld [vmem:[%s193 + $0x2a0] sm:$0xff]
      %v345 = vld [vmem:[%s193 + $0x2a8] sm:$0xff]
      %v346 = vld [vmem:[%s193 + $0x2b0] sm:$0xff]
      %v347 = vld [vmem:[%s193 + $0x2b8] sm:$0xff]
      %v348 = vld [vmem:[%s193 + $0x2c0] sm:$0xff]
      %v349 = vld [vmem:[%s193 + $0x2c8] sm:$0xff]
      %v350 = vld [vmem:[%s193 + $0x2d0] sm:$0xff]
      %v351 = vld [vmem:[%s193 + $0x2d8] sm:$0xff]
      %v352 = vld [vmem:[%s193 + $0x2e0] sm:$0xff]
      %v353 = vld [vmem:[%s193 + $0x2e8] sm:$0xff]
      %v354 = vld [vmem:[%s193 + $0x2f0] sm:$0xff]
      %v355 = vld [vmem:[%s193 + $0x2f8] sm:$0xff]
      %v356 = vld [vmem:[%s193 + $0x300] sm:$0xff]
      %v357 = vld [vmem:[%s193 + $0x308] sm:$0xff]
      %v358 = vld [vmem:[%s193 + $0x310] sm:$0xff]
      %v359 = vld [vmem:[%s193 + $0x318] sm:$0xff]
      %v360 = vld [vmem:[%s193 + $0x320] sm:$0xff]
      %v361 = vld [vmem:[%s193 + $0x328] sm:$0xff]
      %v362 = vld [vmem:[%s193 + $0x330] sm:$0xff]
      %v363 = vld [vmem:[%s193 + $0x338] sm:$0xff]
      %v364 = vld [vmem:[%s193 + $0x340] sm:$0xff]
      %v365 = vld [vmem:[%s193 + $0x348] sm:$0xff]
      %v366 = vld [vmem:[%s193 + $0x350] sm:$0xff]
      %v367 = vld [vmem:[%s193 + $0x358] sm:$0xff]
      %v368 = vld [vmem:[%s193 + $0x360] sm:$0xff]
      %v369 = vld [vmem:[%s193 + $0x368] sm:$0xff]
      %v370 = vld [vmem:[%s193 + $0x370] sm:$0xff]
      %v371 = vld [vmem:[%s193 + $0x378] sm:$0xff]
      %v372 = vld [vmem:[%s193 + $0x380] sm:$0xff]
      %v373 = vld [vmem:[%s193 + $0x388] sm:$0xff]
      %v374 = vld [vmem:[%s193 + $0x390] sm:$0xff]
      %v375 = vld [vmem:[%s193 + $0x398] sm:$0xff]
      %v376 = vld [vmem:[%s193 + $0x3a0] sm:$0xff]
      %v377 = vld [vmem:[%s193 + $0x3a8] sm:$0xff]
      %v378 = vld [vmem:[%s193 + $0x3b0] sm:$0xff]
      %v379 = vld [vmem:[%s193 + $0x3b8] sm:$0xff]
      %v380 = vld [vmem:[%s193 + $0x3c0] sm:$0xff]
      %v381 = vld [vmem:[%s193 + $0x3c8] sm:$0xff]
      %v382 = vld [vmem:[%s193 + $0x3d0] sm:$0xff]
      %v383 = vld [vmem:[%s193 + $0x3d8] sm:$0xff]
      %v384 = vld [vmem:[%s193 + $0x3e0] sm:$0xff]
      %v385 = vld [vmem:[%s193 + $0x3e8] sm:$0xff]
      %v386 = vld [vmem:[%s193 + $0x3f0] sm:$0xff]
      %v387 = vld [vmem:[%s193 + $0x3f8] sm:$0xff]
      %v388 = vld [vmem:[%s193 + $0x400] sm:$0xff]
      %v389 = vld [vmem:[%s193 + $0x408] sm:$0xff]
      %v390 = vld [vmem:[%s193 + $0x410] sm:$0xff]
      %v391 = vld [vmem:[%s193 + $0x418] sm:$0xff]
      %v392 = vld [vmem:[%s193 + $0x420] sm:$0xff]
      %v393 = vld [vmem:[%s193 + $0x428] sm:$0xff]
      %v394 = vld [vmem:[%s193 + $0x430] sm:$0xff]
      %v395 = vld [vmem:[%s193 + $0x438] sm:$0xff]
      %v396 = vld [vmem:[%s193 + $0x440] sm:$0xff]
      %v397 = vld [vmem:[%s193 + $0x448] sm:$0xff]
      %v398 = vld [vmem:[%s193 + $0x450] sm:$0xff]
      %v399 = vld [vmem:[%s193 + $0x458] sm:$0xff]
      %v400 = vld [vmem:[%s193 + $0x460] sm:$0xff]
      %v401 = vld [vmem:[%s193 + $0x468] sm:$0xff]
      %v402 = vld [vmem:[%s193 + $0x470] sm:$0xff]
      %v403 = vld [vmem:[%s193 + $0x478] sm:$0xff]
      %v404 = vld [vmem:[%s193 + $0x480] sm:$0xff]
      %v405 = vld [vmem:[%s193 + $0x488] sm:$0xff]
      %v406 = vld [vmem:[%s193 + $0x490] sm:$0xff]
      %v407 = vld [vmem:[%s193 + $0x498] sm:$0xff]
      %v408 = vld [vmem:[%s193 + $0x4a0] sm:$0xff]
      %v409 = vld [vmem:[%s193 + $0x4a8] sm:$0xff]
      %v410 = vld [vmem:[%s193 + $0x4b0] sm:$0xff]
      %v411 = vld [vmem:[%s193 + $0x4b8] sm:$0xff]
      %v412 = vld [vmem:[%s193 + $0x4c0] sm:$0xff]
      %v413 = vld [vmem:[%s193 + $0x4c8] sm:$0xff]
      %v414 = vld [vmem:[%s193 + $0x4d0] sm:$0xff]
      %v415 = vld [vmem:[%s193 + $0x4d8] sm:$0xff]
      %v416 = vld [vmem:[%s193 + $0x4e0] sm:$0xff]
      %v417 = vld [vmem:[%s193 + $0x4e8] sm:$0xff]
      %v418 = vld [vmem:[%s193 + $0x4f0] sm:$0xff]
      %v419 = vld [vmem:[%s193 + $0x4f8] sm:$0xff]
      %v420 = vld [vmem:[%s193 + $0x500] sm:$0xff]
      %v421 = vld [vmem:[%s193 + $0x508] sm:$0xff]
      %v422 = vld [vmem:[%s193 + $0x510] sm:$0xff]
      %v423 = vld [vmem:[%s193 + $0x518] sm:$0xff]
      %v424 = vld [vmem:[%s193 + $0x520] sm:$0xff]
      %v425 = vld [vmem:[%s193 + $0x528] sm:$0xff]
      %v426 = vld [vmem:[%s193 + $0x530] sm:$0xff]
      %v427 = vld [vmem:[%s193 + $0x538] sm:$0xff]
      %v428 = vld [vmem:[%s193 + $0x540] sm:$0xff]
      %v429 = vld [vmem:[%s193 + $0x548] sm:$0xff]
      %v430 = vld [vmem:[%s193 + $0x550] sm:$0xff]
      %v431 = vld [vmem:[%s193 + $0x558] sm:$0xff]
      %v432 = vld [vmem:[%s193 + $0x560] sm:$0xff]
      %v433 = vld [vmem:[%s193 + $0x568] sm:$0xff]
      %v434 = vld [vmem:[%s193 + $0x570] sm:$0xff]
      %v435 = vld [vmem:[%s193 + $0x578] sm:$0xff]
      %v436 = vld [vmem:[%s193 + $0x580] sm:$0xff]
      %v437 = vld [vmem:[%s193 + $0x588] sm:$0xff]
      %v438 = vld [vmem:[%s193 + $0x590] sm:$0xff]
      %v439 = vld [vmem:[%s193 + $0x598] sm:$0xff]
      %v440 = vld [vmem:[%s193 + $0x5a0] sm:$0xff]
      %v441 = vld [vmem:[%s193 + $0x5a8] sm:$0xff]
      %v442 = vld [vmem:[%s193 + $0x5b0] sm:$0xff]
      %v443 = vld [vmem:[%s193 + $0x5b8] sm:$0xff]
      %v444 = vld [vmem:[%s193 + $0x5c0] sm:$0xff]
      %v445 = vld [vmem:[%s193 + $0x5c8] sm:$0xff]
      %v446 = vld [vmem:[%s193 + $0x5d0] sm:$0xff]
      %v447 = vld [vmem:[%s193 + $0x5d8] sm:$0xff]
      %v448 = vld [vmem:[%s193 + $0x5e0] sm:$0xff]
      %v449 = vld [vmem:[%s193 + $0x5e8] sm:$0xff]
      %v450 = vld [vmem:[%s193 + $0x5f0] sm:$0xff]
      %v451 = vld [vmem:[%s193 + $0x5f8] sm:$0xff]
      %v452 = vld [vmem:[%s193 + $0x600] sm:$0xff]
      %v453 = vld [vmem:[%s193 + $0x608] sm:$0xff]
      %v454 = vld [vmem:[%s193 + $0x610] sm:$0xff]
      %v455 = vld [vmem:[%s193 + $0x618] sm:$0xff]
      %v456 = vld [vmem:[%s193 + $0x620] sm:$0xff]
      %v457 = vld [vmem:[%s193 + $0x628] sm:$0xff]
      %v458 = vld [vmem:[%s193 + $0x630] sm:$0xff]
      %v459 = vld [vmem:[%s193 + $0x638] sm:$0xff]
      %v460 = vld [vmem:[%s193 + $0x640] sm:$0xff]
      %v461 = vld [vmem:[%s193 + $0x648] sm:$0xff]
      %v462 = vld [vmem:[%s193 + $0x650] sm:$0xff]
      %v463 = vld [vmem:[%s193 + $0x658] sm:$0xff]
      %v464 = vld [vmem:[%s193 + $0x660] sm:$0xff]
      %v465 = vld [vmem:[%s193 + $0x668] sm:$0xff]
      %v466 = vld [vmem:[%s193 + $0x670] sm:$0xff]
      %v467 = vld [vmem:[%s193 + $0x678] sm:$0xff]
      %v468 = vld [vmem:[%s193 + $0x680] sm:$0xff]
      %v469 = vld [vmem:[%s193 + $0x688] sm:$0xff]
      %v470 = vld [vmem:[%s193 + $0x690] sm:$0xff]
      %v471 = vld [vmem:[%s193 + $0x698] sm:$0xff]
      %v472 = vld [vmem:[%s193 + $0x6a0] sm:$0xff]
      %v473 = vld [vmem:[%s193 + $0x6a8] sm:$0xff]
      %v474 = vld [vmem:[%s193 + $0x6b0] sm:$0xff]
      %v475 = vld [vmem:[%s193 + $0x6b8] sm:$0xff]
      %v476 = vld [vmem:[%s193 + $0x6c0] sm:$0xff]
      %v477 = vld [vmem:[%s193 + $0x6c8] sm:$0xff]
      %v478 = vld [vmem:[%s193 + $0x6d0] sm:$0xff]
      %v479 = vld [vmem:[%s193 + $0x6d8] sm:$0xff]
      %v480 = vld [vmem:[%s193 + $0x6e0] sm:$0xff]
      %v481 = vld [vmem:[%s193 + $0x6e8] sm:$0xff]
      %v482 = vld [vmem:[%s193 + $0x6f0] sm:$0xff]
      %v483 = vld [vmem:[%s193 + $0x6f8] sm:$0xff]
      %v484 = vld [vmem:[%s193 + $0x700] sm:$0xff]
      %v485 = vld [vmem:[%s193 + $0x708] sm:$0xff]
      %v486 = vld [vmem:[%s193 + $0x710] sm:$0xff]
      %v487 = vld [vmem:[%s193 + $0x718] sm:$0xff]
      %v488 = vld [vmem:[%s193 + $0x720] sm:$0xff]
      %v489 = vld [vmem:[%s193 + $0x728] sm:$0xff]
      %v490 = vld [vmem:[%s193 + $0x730] sm:$0xff]
      %v491 = vld [vmem:[%s193 + $0x738] sm:$0xff]
      %v492 = vld [vmem:[%s193 + $0x740] sm:$0xff]
      %v493 = vld [vmem:[%s193 + $0x748] sm:$0xff]
      %v494 = vld [vmem:[%s193 + $0x750] sm:$0xff]
      %v495 = vld [vmem:[%s193 + $0x758] sm:$0xff]
      %v496 = vld [vmem:[%s193 + $0x760] sm:$0xff]
      %v497 = vld [vmem:[%s193 + $0x768] sm:$0xff]
      %v498 = vld [vmem:[%s193 + $0x770] sm:$0xff]
      %v499 = vld [vmem:[%s193 + $0x778] sm:$0xff]
      %v500 = vld [vmem:[%s193 + $0x780] sm:$0xff]
      %v501 = vld [vmem:[%s193 + $0x788] sm:$0xff]
      %v502 = vld [vmem:[%s193 + $0x790] sm:$0xff]
      %v503 = vld [vmem:[%s193 + $0x798] sm:$0xff]
      %v504 = vld [vmem:[%s193 + $0x7a0] sm:$0xff]
      %v505 = vld [vmem:[%s193 + $0x7a8] sm:$0xff]
      %v506 = vld [vmem:[%s193 + $0x7b0] sm:$0xff]
      %v507 = vld [vmem:[%s193 + $0x7b8] sm:$0xff]
      %v508 = vld [vmem:[%s193 + $0x7c0] sm:$0xff]
      %v509 = vld [vmem:[%s193 + $0x7c8] sm:$0xff]
      %v510 = vld [vmem:[%s193 + $0x7d0] sm:$0xff]
      %v511 = vld [vmem:[%s193 + $0x7d8] sm:$0xff]
      %v512 = vld [vmem:[%s193 + $0x7e0] sm:$0xff]
      %v513 = vld [vmem:[%s193 + $0x7e8] sm:$0xff]
      %v514 = vld [vmem:[%s193 + $0x7f0] sm:$0xff]
      %v515 = vld [vmem:[%s193 + $0x7f8] sm:$0xff]
      %v516 = vld [vmem:[%s193 + $0x800] sm:$0xff]
      %v517 = vld [vmem:[%s193 + $0x808] sm:$0xff]
      %v518 = vld [vmem:[%s193 + $0x810] sm:$0xff]
      %v519 = vld [vmem:[%s193 + $0x818] sm:$0xff]
      %v520 = vld [vmem:[%s193 + $0x820] sm:$0xff]
      %v521 = vld [vmem:[%s193 + $0x828] sm:$0xff]
      %v522 = vld [vmem:[%s193 + $0x830] sm:$0xff]
      %v523 = vld [vmem:[%s193 + $0x838] sm:$0xff]
      %v524 = vld [vmem:[%s193 + $0x840] sm:$0xff]
      %v525 = vld [vmem:[%s193 + $0x848] sm:$0xff]
      %v526 = vld [vmem:[%s193 + $0x850] sm:$0xff]
      %v527 = vld [vmem:[%s193 + $0x858] sm:$0xff]
      %v528 = vld [vmem:[%s193 + $0x860] sm:$0xff]
      %v529 = vld [vmem:[%s193 + $0x868] sm:$0xff]
      %v530 = vld [vmem:[%s193 + $0x870] sm:$0xff]
      %v531 = vld [vmem:[%s193 + $0x878] sm:$0xff]
      %v532 = vld [vmem:[%s193 + $0x880] sm:$0xff]
      %v533 = vld [vmem:[%s193 + $0x888] sm:$0xff]
      %v534 = vld [vmem:[%s193 + $0x890] sm:$0xff]
      %v535 = vld [vmem:[%s193 + $0x898] sm:$0xff]
      %v536 = vld [vmem:[%s193 + $0x8a0] sm:$0xff]
      %v537 = vld [vmem:[%s193 + $0x8a8] sm:$0xff]
      %v538 = vld [vmem:[%s193 + $0x8b0] sm:$0xff]
      %v539 = vld [vmem:[%s193 + $0x8b8] sm:$0xff]
      %v540 = vld [vmem:[%s193 + $0x8c0] sm:$0xff]
      %v541 = vld [vmem:[%s193 + $0x8c8] sm:$0xff]
      %v542 = vld [vmem:[%s193 + $0x8d0] sm:$0xff]
      %v543 = vld [vmem:[%s193 + $0x8d8] sm:$0xff]
      %v544 = vld [vmem:[%s193 + $0x8e0] sm:$0xff]
      %v545 = vld [vmem:[%s193 + $0x8e8] sm:$0xff]
      %v546 = vld [vmem:[%s193 + $0x8f0] sm:$0xff]
      %v547 = vld [vmem:[%s193 + $0x8f8] sm:$0xff]
      %v548 = vld [vmem:[%s193 + $0x900] sm:$0xff]
      %v549 = vld [vmem:[%s193 + $0x908] sm:$0xff]
      %v550 = vld [vmem:[%s193 + $0x910] sm:$0xff]
      %v551 = vld [vmem:[%s193 + $0x918] sm:$0xff]
      %v552 = vld [vmem:[%s193 + $0x920] sm:$0xff]
      %v553 = vld [vmem:[%s193 + $0x928] sm:$0xff]
      %v554 = vld [vmem:[%s193 + $0x930] sm:$0xff]
      %v555 = vld [vmem:[%s193 + $0x938] sm:$0xff]
      %v556 = vld [vmem:[%s193 + $0x940] sm:$0xff]
      %v557 = vld [vmem:[%s193 + $0x948] sm:$0xff]
      %v558 = vld [vmem:[%s193 + $0x950] sm:$0xff]
      %v559 = vld [vmem:[%s193 + $0x958] sm:$0xff]
      %v560 = vld [vmem:[%s193 + $0x960] sm:$0xff]
      %v561 = vld [vmem:[%s193 + $0x968] sm:$0xff]
      %v562 = vld [vmem:[%s193 + $0x970] sm:$0xff]
      %v563 = vld [vmem:[%s193 + $0x978] sm:$0xff]
      %v564 = vld [vmem:[%s193 + $0x980] sm:$0xff]
      %v565 = vld [vmem:[%s193 + $0x988] sm:$0xff]
      %v566 = vld [vmem:[%s193 + $0x990] sm:$0xff]
      %v567 = vld [vmem:[%s193 + $0x998] sm:$0xff]
      %v568 = vld [vmem:[%s193 + $0x9a0] sm:$0xff]
      %v569 = vld [vmem:[%s193 + $0x9a8] sm:$0xff]
      %v570 = vld [vmem:[%s193 + $0x9b0] sm:$0xff]
      %v571 = vld [vmem:[%s193 + $0x9b8] sm:$0xff]
      %v572 = vld [vmem:[%s193 + $0x9c0] sm:$0xff]
      %v573 = vld [vmem:[%s193 + $0x9c8] sm:$0xff]
      %v574 = vld [vmem:[%s193 + $0x9d0] sm:$0xff]
      %v575 = vld [vmem:[%s193 + $0x9d8] sm:$0xff]
      %v576 = vld [vmem:[%s193 + $0x9e0] sm:$0xff]
      %v577 = vld [vmem:[%s193 + $0x9e8] sm:$0xff]
      %v578 = vld [vmem:[%s193 + $0x9f0] sm:$0xff]
      %v579 = vld [vmem:[%s193 + $0x9f8] sm:$0xff]
      %v580 = vld [vmem:[%s193 + $0xa00] sm:$0xff]
      %v581 = vld [vmem:[%s193 + $0xa08] sm:$0xff]
      %v582 = vld [vmem:[%s193 + $0xa10] sm:$0xff]
      %v583 = vld [vmem:[%s193 + $0xa18] sm:$0xff]
      %v584 = vld [vmem:[%s193 + $0xa20] sm:$0xff]
      %v585 = vld [vmem:[%s193 + $0xa28] sm:$0xff]
      %v586 = vld [vmem:[%s193 + $0xa30] sm:$0xff]
      %v587 = vld [vmem:[%s193 + $0xa38] sm:$0xff]
      %v588 = vld [vmem:[%s193 + $0xa40] sm:$0xff]
      %v589 = vld [vmem:[%s193 + $0xa48] sm:$0xff]
      %v590 = vld [vmem:[%s193 + $0xa50] sm:$0xff]
      %v591 = vld [vmem:[%s193 + $0xa58] sm:$0xff]
      %v592 = vld [vmem:[%s193 + $0xa60] sm:$0xff]
      %v593 = vld [vmem:[%s193 + $0xa68] sm:$0xff]
      %v594 = vld [vmem:[%s193 + $0xa70] sm:$0xff]
      %v595 = vld [vmem:[%s193 + $0xa78] sm:$0xff]
      %v596 = vld [vmem:[%s193 + $0xa80] sm:$0xff]
      %v597 = vld [vmem:[%s193 + $0xa88] sm:$0xff]
      %v598 = vld [vmem:[%s193 + $0xa90] sm:$0xff]
      %v599 = vld [vmem:[%s193 + $0xa98] sm:$0xff]
      %v600 = vld [vmem:[%s193 + $0xaa0] sm:$0xff]
      %v601 = vld [vmem:[%s193 + $0xaa8] sm:$0xff]
      %v602 = vld [vmem:[%s193 + $0xab0] sm:$0xff]
      %v603 = vld [vmem:[%s193 + $0xab8] sm:$0xff]
      %v604 = vld [vmem:[%s193 + $0xac0] sm:$0xff]
      %v605 = vld [vmem:[%s193 + $0xac8] sm:$0xff]
      %v606 = vld [vmem:[%s193 + $0xad0] sm:$0xff]
      %v607 = vld [vmem:[%s193 + $0xad8] sm:$0xff]
      %v608 = vld [vmem:[%s193 + $0xae0] sm:$0xff]
      %v609 = vld [vmem:[%s193 + $0xae8] sm:$0xff]
      %v610 = vld [vmem:[%s193 + $0xaf0] sm:$0xff]
      %v611 = vld [vmem:[%s193 + $0xaf8] sm:$0xff]
      %v612 = vld [vmem:[%s193 + $0xb00] sm:$0xff]
      %v613 = vld [vmem:[%s193 + $0xb08] sm:$0xff]
      %v614 = vld [vmem:[%s193 + $0xb10] sm:$0xff]
      %v615 = vld [vmem:[%s193 + $0xb18] sm:$0xff]
      %v616 = vld [vmem:[%s193 + $0xb20] sm:$0xff]
      %v617 = vld [vmem:[%s193 + $0xb28] sm:$0xff]
      %v618 = vld [vmem:[%s193 + $0xb30] sm:$0xff]
      %v619 = vld [vmem:[%s193 + $0xb38] sm:$0xff]
      %v620 = vld [vmem:[%s193 + $0xb40] sm:$0xff]
      %v621 = vld [vmem:[%s193 + $0xb48] sm:$0xff]
      %v622 = vld [vmem:[%s193 + $0xb50] sm:$0xff]
      %v623 = vld [vmem:[%s193 + $0xb58] sm:$0xff]
      %v624 = vld [vmem:[%s193 + $0xb60] sm:$0xff]
      %v625 = vld [vmem:[%s193 + $0xb68] sm:$0xff]
      %v626 = vld [vmem:[%s193 + $0xb70] sm:$0xff]
      %v627 = vld [vmem:[%s193 + $0xb78] sm:$0xff]
      %v628 = vld [vmem:[%s193 + $0xb80] sm:$0xff]
      %v629 = vld [vmem:[%s193 + $0xb88] sm:$0xff]
      %v630 = vld [vmem:[%s193 + $0xb90] sm:$0xff]
      %v631 = vld [vmem:[%s193 + $0xb98] sm:$0xff]
      %v632 = vld [vmem:[%s193 + $0xba0] sm:$0xff]
      %v633 = vld [vmem:[%s193 + $0xba8] sm:$0xff]
      %v634 = vld [vmem:[%s193 + $0xbb0] sm:$0xff]
      %v635 = vld [vmem:[%s193 + $0xbb8] sm:$0xff]
      %v636 = vld [vmem:[%s193 + $0xbc0] sm:$0xff]
      %v637 = vld [vmem:[%s193 + $0xbc8] sm:$0xff]
      %v638 = vld [vmem:[%s193 + $0xbd0] sm:$0xff]
      %v639 = vld [vmem:[%s193 + $0xbd8] sm:$0xff]
      %v640 = vld [vmem:[%s193 + $0xbe0] sm:$0xff]
      %v641 = vld [vmem:[%s193 + $0xbe8] sm:$0xff]
      %v642 = vld [vmem:[%s193 + $0xbf0] sm:$0xff]
      %v643 = vld [vmem:[%s193 + $0xbf8] sm:$0xff]
      %v644 = vld [vmem:[%s193 + $0xc00] sm:$0xff]
      %v645 = vld [vmem:[%s193 + $0xc08] sm:$0xff]
      %v646 = vld [vmem:[%s193 + $0xc10] sm:$0xff]
      %v647 = vld [vmem:[%s193 + $0xc18] sm:$0xff]
      %v648 = vld [vmem:[%s193 + $0xc20] sm:$0xff]
      %v649 = vld [vmem:[%s193 + $0xc28] sm:$0xff]
      %v650 = vld [vmem:[%s193 + $0xc30] sm:$0xff]
      %v651 = vld [vmem:[%s193 + $0xc38] sm:$0xff]
      %v652 = vld [vmem:[%s193 + $0xc40] sm:$0xff]
      %v653 = vld [vmem:[%s193 + $0xc48] sm:$0xff]
      %v654 = vld [vmem:[%s193 + $0xc50] sm:$0xff]
      %v655 = vld [vmem:[%s193 + $0xc58] sm:$0xff]
      %v656 = vld [vmem:[%s193 + $0xc60] sm:$0xff]
      %v657 = vld [vmem:[%s193 + $0xc68] sm:$0xff]
      %v658 = vld [vmem:[%s193 + $0xc70] sm:$0xff]
      %v659 = vld [vmem:[%s193 + $0xc78] sm:$0xff]
      %v660 = vld [vmem:[%s193 + $0xc80] sm:$0xff]
      %v661 = vld [vmem:[%s193 + $0xc88] sm:$0xff]
      %v662 = vld [vmem:[%s193 + $0xc90] sm:$0xff]
      %v663 = vld [vmem:[%s193 + $0xc98] sm:$0xff]
      %v664 = vld [vmem:[%s193 + $0xca0] sm:$0xff]
      %v665 = vld [vmem:[%s193 + $0xca8] sm:$0xff]
      %v666 = vld [vmem:[%s193 + $0xcb0] sm:$0xff]
      %v667 = vld [vmem:[%s193 + $0xcb8] sm:$0xff]
      %v668 = vld [vmem:[%s193 + $0xcc0] sm:$0xff]
      %v669 = vld [vmem:[%s193 + $0xcc8] sm:$0xff]
      %v670 = vld [vmem:[%s193 + $0xcd0] sm:$0xff]
      %v671 = vld [vmem:[%s193 + $0xcd8] sm:$0xff]
      %v672 = vld [vmem:[%s193 + $0xce0] sm:$0xff]
      %v673 = vld [vmem:[%s193 + $0xce8] sm:$0xff]
      %v674 = vld [vmem:[%s193 + $0xcf0] sm:$0xff]
      %v675 = vld [vmem:[%s193 + $0xcf8] sm:$0xff]
      %v676 = vld [vmem:[%s193 + $0xd00] sm:$0xff]
      %v677 = vld [vmem:[%s193 + $0xd08] sm:$0xff]
      %v678 = vld [vmem:[%s193 + $0xd10] sm:$0xff]
      %v679 = vld [vmem:[%s193 + $0xd18] sm:$0xff]
      %v680 = vld [vmem:[%s193 + $0xd20] sm:$0xff]
      %v681 = vld [vmem:[%s193 + $0xd28] sm:$0xff]
      %v682 = vld [vmem:[%s193 + $0xd30] sm:$0xff]
      %v683 = vld [vmem:[%s193 + $0xd38] sm:$0xff]
      %v684 = vld [vmem:[%s193 + $0xd40] sm:$0xff]
      %v685 = vld [vmem:[%s193 + $0xd48] sm:$0xff]
      %v686 = vld [vmem:[%s193 + $0xd50] sm:$0xff]
      %v687 = vld [vmem:[%s193 + $0xd58] sm:$0xff]
      %v688 = vld [vmem:[%s193 + $0xd60] sm:$0xff]
      %v689 = vld [vmem:[%s193 + $0xd68] sm:$0xff]
      %v690 = vld [vmem:[%s193 + $0xd70] sm:$0xff]
      %v691 = vld [vmem:[%s193 + $0xd78] sm:$0xff]
      %v692 = vld [vmem:[%s193 + $0xd80] sm:$0xff]
      %v693 = vld [vmem:[%s193 + $0xd88] sm:$0xff]
      %v694 = vld [vmem:[%s193 + $0xd90] sm:$0xff]
      %v695 = vld [vmem:[%s193 + $0xd98] sm:$0xff]
      %v696 = vld [vmem:[%s193 + $0xda0] sm:$0xff]
      %v697 = vld [vmem:[%s193 + $0xda8] sm:$0xff]
      %v698 = vld [vmem:[%s193 + $0xdb0] sm:$0xff]
      %v699 = vld [vmem:[%s193 + $0xdb8] sm:$0xff]
      %v700 = vld [vmem:[%s193 + $0xdc0] sm:$0xff]
      %v701 = vld [vmem:[%s193 + $0xdc8] sm:$0xff]
      %v702 = vld [vmem:[%s193 + $0xdd0] sm:$0xff]
      %v703 = vld [vmem:[%s193 + $0xdd8] sm:$0xff]
      %v704 = vld [vmem:[%s193 + $0xde0] sm:$0xff]
      %v705 = vld [vmem:[%s193 + $0xde8] sm:$0xff]
      %v706 = vld [vmem:[%s193 + $0xdf0] sm:$0xff]
      %v707 = vld [vmem:[%s193 + $0xdf8] sm:$0xff]
      %v708 = vld [vmem:[%s193 + $0xe00] sm:$0xff]
      %v709 = vld [vmem:[%s193 + $0xe08] sm:$0xff]
      %v710 = vld [vmem:[%s193 + $0xe10] sm:$0x3f]
      %vm711 = vcmask 179200
      %v713 = vsel %vm711, %v230, 0
      %v716 = vsel %vm711, %v259, 0
      %vm718 = vcmask 1045504
      %v720 = vsel %vm718, %v710, 0
      %722 = vmatprep.subr.mxu0 0.0
      %723 = vmatpush1.msra.mxu0 %v275
      %724 = vmatprep.subr.mxu0 0.0
      %725 = vmatpush1.msra.mxu0 %v274
      %726 = vmatprep.subr.mxu0 0.0
      %727 = vmatpush1.msra.mxu0 %v273
      %728 = vmatprep.subr.mxu0 0.0
      %729 = vmatpush1.msra.mxu0 %v272
      %730 = vmatprep.subr.mxu0 0.0
      %731 = vmatpush1.msra.mxu0 %v271
      %732 = vmatprep.subr.mxu0 0.0
      %733 = vmatpush1.msra.mxu0 %v270
      %734 = vmatprep.subr.mxu0 0.0
      %735 = vmatpush1.msra.mxu0 %v269
      %736 = vmatprep.subr.mxu0 0.0
      %737 = vmatpush1.msra.mxu0 %v268
      %738 = vmatprep.subr.mxu0 0.0
      %739 = vmatpush1.msra.mxu0 %v267
      %740 = vmatprep.subr.mxu0 0.0
      %741 = vmatpush1.msra.mxu0 %v266
      %742 = vmatprep.subr.mxu0 0.0
      %743 = vmatpush1.msra.mxu0 %v265
      %744 = vmatprep.subr.mxu0 0.0
      %745 = vmatpush1.msra.mxu0 %v264
      %746 = vmatprep.subr.mxu0 0.0
      %747 = vmatpush1.msra.mxu0 %v263
      %748 = vmatprep.subr.mxu0 0.0
      %749 = vmatpush1.msra.mxu0 %v262
      %750 = vmatprep.subr.mxu0 0.0
      %751 = vmatpush1.msra.mxu0 %v261
      %752 = vmatprep.subr.mxu0 0.0
      %753 = vmatpush1.msra.mxu0 %v260
      %754 = vmatprep.subr.mxu0 0.0
      %755 = vmatpush2.msra.mxu0 %v291
      %756 = vmatprep.subr.mxu0 0.0
      %757 = vmatpush2.msra.mxu0 %v290
      %758 = vmatprep.subr.mxu0 0.0
      %759 = vmatpush2.msra.mxu0 %v289
      %760 = vmatprep.subr.mxu0 0.0
      %761 = vmatpush2.msra.mxu0 %v288
      %762 = vmatprep.subr.mxu0 0.0
      %763 = vmatpush2.msra.mxu0 %v287
      %764 = vmatprep.subr.mxu0 0.0
      %765 = vmatpush2.msra.mxu0 %v286
      %766 = vmatprep.subr.mxu0 0.0
      %767 = vmatpush2.msra.mxu0 %v285
      %768 = vmatprep.subr.mxu0 0.0
      %769 = vmatpush2.msra.mxu0 %v284
      %770 = vmatprep.subr.mxu0 0.0
      %771 = vmatpush2.msra.mxu0 %v283
      %772 = vmatprep.subr.mxu0 0.0
      %773 = vmatpush2.msra.mxu0 %v282
      %774 = vmatprep.subr.mxu0 0.0
      %775 = vmatpush2.msra.mxu0 %v281
      %776 = vmatprep.subr.mxu0 0.0
      %777 = vmatpush2.msra.mxu0 %v280
      %778 = vmatprep.subr.mxu0 0.0
      %779 = vmatpush2.msra.mxu0 %v279
      %780 = vmatprep.subr.mxu0 0.0
      %781 = vmatpush2.msra.mxu0 %v278
      %782 = vmatprep.subr.mxu0 0.0
      %783 = vmatpush2.msra.mxu0 %v277
      %784 = vmatprep.subr.mxu0 0.0
      %785 = vmatpush2.msra.mxu0 %v276
      %786 = vmatprep.mubr.f32.mxu0 %v203
      %787 = vmatmul.mubr.f32.gmra.mxu0 %v202
      %v788 = vpop.f32.mrf.mxu0
      %v789 = vadd.f32 0.0, %v788
      %v790 = vpop.f32.mrf.mxu0
      %791 = vmatprep.mubr.f32.mxu0 %v232
      %792 = vmatmul.mubr.f32.gmra.mxu0 %v231
      %v793 = vpop.f32.mrf.mxu0
      %v794 = vadd.f32 0.0, %v793
      %v795 = vpop.f32.mrf.mxu0
      %796 = vdwg.mxu0
      %797 = vmatprep.subr.mxu0 0.0
      %798 = vmatpush1.msra.mxu0 %v307
      %799 = vmatprep.subr.mxu0 0.0
      %800 = vmatpush1.msra.mxu0 %v306
      %801 = vmatprep.subr.mxu0 0.0
      %802 = vmatpush1.msra.mxu0 %v305
      %803 = vmatprep.subr.mxu0 0.0
      %804 = vmatpush1.msra.mxu0 %v304
      %805 = vmatprep.subr.mxu0 0.0
      %806 = vmatpush1.msra.mxu0 %v303
      %807 = vmatprep.subr.mxu0 0.0
      %808 = vmatpush1.msra.mxu0 %v302
      %809 = vmatprep.subr.mxu0 0.0
      %810 = vmatpush1.msra.mxu0 %v301
      %811 = vmatprep.subr.mxu0 0.0
      %812 = vmatpush1.msra.mxu0 %v300
      %813 = vmatprep.subr.mxu0 0.0
      %814 = vmatpush1.msra.mxu0 %v299
      %815 = vmatprep.subr.mxu0 0.0
      %816 = vmatpush1.msra.mxu0 %v298
      %817 = vmatprep.subr.mxu0 0.0
      %818 = vmatpush1.msra.mxu0 %v297
      %819 = vmatprep.subr.mxu0 0.0
      %820 = vmatpush1.msra.mxu0 %v296
      %821 = vmatprep.subr.mxu0 0.0
      %822 = vmatpush1.msra.mxu0 %v295
      %823 = vmatprep.subr.mxu0 0.0
      %824 = vmatpush1.msra.mxu0 %v294
      %825 = vmatprep.subr.mxu0 0.0
      %826 = vmatpush1.msra.mxu0 %v293
      %827 = vmatprep.subr.mxu0 0.0
      %828 = vmatpush1.msra.mxu0 %v292
      %829 = vmatprep.subr.mxu0 0.0
      %830 = vmatpush2.msra.mxu0 %v323
      %831 = vmatprep.subr.mxu0 0.0
      %832 = vmatpush2.msra.mxu0 %v322
      %833 = vmatprep.subr.mxu0 0.0
      %834 = vmatpush2.msra.mxu0 %v321
      %835 = vmatprep.subr.mxu0 0.0
      %836 = vmatpush2.msra.mxu0 %v320
      %837 = vmatprep.subr.mxu0 0.0
      %838 = vmatpush2.msra.mxu0 %v319
      %839 = vmatprep.subr.mxu0 0.0
      %840 = vmatpush2.msra.mxu0 %v318
      %841 = vmatprep.subr.mxu0 0.0
      %842 = vmatpush2.msra.mxu0 %v317
      %843 = vmatprep.subr.mxu0 0.0
      %844 = vmatpush2.msra.mxu0 %v316
      %845 = vmatprep.subr.mxu0 0.0
      %846 = vmatpush2.msra.mxu0 %v315
      %847 = vmatprep.subr.mxu0 0.0
      %848 = vmatpush2.msra.mxu0 %v314
      %849 = vmatprep.subr.mxu0 0.0
      %850 = vmatpush2.msra.mxu0 %v313
      %851 = vmatprep.subr.mxu0 0.0
      %852 = vmatpush2.msra.mxu0 %v312
      %853 = vmatprep.subr.mxu0 0.0
      %854 = vmatpush2.msra.mxu0 %v311
      %855 = vmatprep.subr.mxu0 0.0
      %856 = vmatpush2.msra.mxu0 %v310
      %857 = vmatprep.subr.mxu0 0.0
      %858 = vmatpush2.msra.mxu0 %v309
      %859 = vmatprep.subr.mxu0 0.0
      %860 = vmatpush2.msra.mxu0 %v308
      %861 = vmatprep.mubr.f32.mxu0 %v205
      %862 = vmatmul.mubr.f32.gmra.mxu0 %v204
      %v863 = vpop.f32.mrf.mxu0
      %v864 = vadd.f32 %v789, %v863
      %v865 = vpop.f32.mrf.mxu0
      %866 = vmatprep.mubr.f32.mxu0 %v234
      %867 = vmatmul.mubr.f32.gmra.mxu0 %v233
      %v868 = vpop.f32.mrf.mxu0
      %v869 = vadd.f32 %v794, %v868
      %v870 = vpop.f32.mrf.mxu0
      %871 = vdwg.mxu0
      %872 = vmatprep.subr.mxu0 0.0
      %873 = vmatpush1.msra.mxu0 %v339
      %874 = vmatprep.subr.mxu0 0.0
      %875 = vmatpush1.msra.mxu0 %v338
      %876 = vmatprep.subr.mxu0 0.0
      %877 = vmatpush1.msra.mxu0 %v337
      %878 = vmatprep.subr.mxu0 0.0
      %879 = vmatpush1.msra.mxu0 %v336
      %880 = vmatprep.subr.mxu0 0.0
      %881 = vmatpush1.msra.mxu0 %v335
      %882 = vmatprep.subr.mxu0 0.0
      %883 = vmatpush1.msra.mxu0 %v334
      %884 = vmatprep.subr.mxu0 0.0
      %885 = vmatpush1.msra.mxu0 %v333
      %886 = vmatprep.subr.mxu0 0.0
      %887 = vmatpush1.msra.mxu0 %v332
      %888 = vmatprep.subr.mxu0 0.0
      %889 = vmatpush1.msra.mxu0 %v331
      %890 = vmatprep.subr.mxu0 0.0
      %891 = vmatpush1.msra.mxu0 %v330
      %892 = vmatprep.subr.mxu0 0.0
      %893 = vmatpush1.msra.mxu0 %v329
      %894 = vmatprep.subr.mxu0 0.0
      %895 = vmatpush1.msra.mxu0 %v328
      %896 = vmatprep.subr.mxu0 0.0
      %897 = vmatpush1.msra.mxu0 %v327
      %898 = vmatprep.subr.mxu0 0.0
      %899 = vmatpush1.msra.mxu0 %v326
      %900 = vmatprep.subr.mxu0 0.0
      %901 = vmatpush1.msra.mxu0 %v325
      %902 = vmatprep.subr.mxu0 0.0
      %903 = vmatpush1.msra.mxu0 %v324
      %904 = vmatprep.subr.mxu0 0.0
      %905 = vmatpush2.msra.mxu0 %v355
      %906 = vmatprep.subr.mxu0 0.0
      %907 = vmatpush2.msra.mxu0 %v354
      %908 = vmatprep.subr.mxu0 0.0
      %909 = vmatpush2.msra.mxu0 %v353
      %910 = vmatprep.subr.mxu0 0.0
      %911 = vmatpush2.msra.mxu0 %v352
      %912 = vmatprep.subr.mxu0 0.0
      %913 = vmatpush2.msra.mxu0 %v351
      %914 = vmatprep.subr.mxu0 0.0
      %915 = vmatpush2.msra.mxu0 %v350
      %916 = vmatprep.subr.mxu0 0.0
      %917 = vmatpush2.msra.mxu0 %v349
      %918 = vmatprep.subr.mxu0 0.0
      %919 = vmatpush2.msra.mxu0 %v348
      %920 = vmatprep.subr.mxu0 0.0
      %921 = vmatpush2.msra.mxu0 %v347
      %922 = vmatprep.subr.mxu0 0.0
      %923 = vmatpush2.msra.mxu0 %v346
      %924 = vmatprep.subr.mxu0 0.0
      %925 = vmatpush2.msra.mxu0 %v345
      %926 = vmatprep.subr.mxu0 0.0
      %927 = vmatpush2.msra.mxu0 %v344
      %928 = vmatprep.subr.mxu0 0.0
      %929 = vmatpush2.msra.mxu0 %v343
      %930 = vmatprep.subr.mxu0 0.0
      %931 = vmatpush2.msra.mxu0 %v342
      %932 = vmatprep.subr.mxu0 0.0
      %933 = vmatpush2.msra.mxu0 %v341
      %934 = vmatprep.subr.mxu0 0.0
      %935 = vmatpush2.msra.mxu0 %v340
      %936 = vmatprep.mubr.f32.mxu0 %v207
      %937 = vmatmul.mubr.f32.gmra.mxu0 %v206
      %v938 = vpop.f32.mrf.mxu0
      %v939 = vadd.f32 %v864, %v938
      %v940 = vpop.f32.mrf.mxu0
      %941 = vmatprep.mubr.f32.mxu0 %v236
      %942 = vmatmul.mubr.f32.gmra.mxu0 %v235
      %v943 = vpop.f32.mrf.mxu0
      %v944 = vadd.f32 %v869, %v943
      %v945 = vpop.f32.mrf.mxu0
      %946 = vdwg.mxu0
      %947 = vmatprep.subr.mxu0 0.0
      %948 = vmatpush1.msra.mxu0 %v371
      %949 = vmatprep.subr.mxu0 0.0
      %950 = vmatpush1.msra.mxu0 %v370
      %951 = vmatprep.subr.mxu0 0.0
      %952 = vmatpush1.msra.mxu0 %v369
      %953 = vmatprep.subr.mxu0 0.0
      %954 = vmatpush1.msra.mxu0 %v368
      %955 = vmatprep.subr.mxu0 0.0
      %956 = vmatpush1.msra.mxu0 %v367
      %957 = vmatprep.subr.mxu0 0.0
      %958 = vmatpush1.msra.mxu0 %v366
      %959 = vmatprep.subr.mxu0 0.0
      %960 = vmatpush1.msra.mxu0 %v365
      %961 = vmatprep.subr.mxu0 0.0
      %962 = vmatpush1.msra.mxu0 %v364
      %963 = vmatprep.subr.mxu0 0.0
      %964 = vmatpush1.msra.mxu0 %v363
      %965 = vmatprep.subr.mxu0 0.0
      %966 = vmatpush1.msra.mxu0 %v362
      %967 = vmatprep.subr.mxu0 0.0
      %968 = vmatpush1.msra.mxu0 %v361
      %969 = vmatprep.subr.mxu0 0.0
      %970 = vmatpush1.msra.mxu0 %v360
      %971 = vmatprep.subr.mxu0 0.0
      %972 = vmatpush1.msra.mxu0 %v359
      %973 = vmatprep.subr.mxu0 0.0
      %974 = vmatpush1.msra.mxu0 %v358
      %975 = vmatprep.subr.mxu0 0.0
      %976 = vmatpush1.msra.mxu0 %v357
      %977 = vmatprep.subr.mxu0 0.0
      %978 = vmatpush1.msra.mxu0 %v356
      %979 = vmatprep.subr.mxu0 0.0
      %980 = vmatpush2.msra.mxu0 %v387
      %981 = vmatprep.subr.mxu0 0.0
      %982 = vmatpush2.msra.mxu0 %v386
      %983 = vmatprep.subr.mxu0 0.0
      %984 = vmatpush2.msra.mxu0 %v385
      %985 = vmatprep.subr.mxu0 0.0
      %986 = vmatpush2.msra.mxu0 %v384
      %987 = vmatprep.subr.mxu0 0.0
      %988 = vmatpush2.msra.mxu0 %v383
      %989 = vmatprep.subr.mxu0 0.0
      %990 = vmatpush2.msra.mxu0 %v382
      %991 = vmatprep.subr.mxu0 0.0
      %992 = vmatpush2.msra.mxu0 %v381
      %993 = vmatprep.subr.mxu0 0.0
      %994 = vmatpush2.msra.mxu0 %v380
      %995 = vmatprep.subr.mxu0 0.0
      %996 = vmatpush2.msra.mxu0 %v379
      %997 = vmatprep.subr.mxu0 0.0
      %998 = vmatpush2.msra.mxu0 %v378
      %999 = vmatprep.subr.mxu0 0.0
      %1000 = vmatpush2.msra.mxu0 %v377
      %1001 = vmatprep.subr.mxu0 0.0
      %1002 = vmatpush2.msra.mxu0 %v376
      %1003 = vmatprep.subr.mxu0 0.0
      %1004 = vmatpush2.msra.mxu0 %v375
      %1005 = vmatprep.subr.mxu0 0.0
      %1006 = vmatpush2.msra.mxu0 %v374
      %1007 = vmatprep.subr.mxu0 0.0
      %1008 = vmatpush2.msra.mxu0 %v373
      %1009 = vmatprep.subr.mxu0 0.0
      %1010 = vmatpush2.msra.mxu0 %v372
      %1011 = vmatprep.mubr.f32.mxu0 %v209
      %1012 = vmatmul.mubr.f32.gmra.mxu0 %v208
      %v1013 = vpop.f32.mrf.mxu0
      %v1014 = vadd.f32 %v939, %v1013
      %v1015 = vpop.f32.mrf.mxu0
      %1016 = vmatprep.mubr.f32.mxu0 %v238
      %1017 = vmatmul.mubr.f32.gmra.mxu0 %v237
      %v1018 = vpop.f32.mrf.mxu0
      %v1019 = vadd.f32 %v944, %v1018
      %v1020 = vpop.f32.mrf.mxu0
      %1021 = vdwg.mxu0
      %1022 = vmatprep.subr.mxu0 0.0
      %1023 = vmatpush1.msra.mxu0 %v403
      %1024 = vmatprep.subr.mxu0 0.0
      %1025 = vmatpush1.msra.mxu0 %v402
      %1026 = vmatprep.subr.mxu0 0.0
      %1027 = vmatpush1.msra.mxu0 %v401
      %1028 = vmatprep.subr.mxu0 0.0
      %1029 = vmatpush1.msra.mxu0 %v400
      %1030 = vmatprep.subr.mxu0 0.0
      %1031 = vmatpush1.msra.mxu0 %v399
      %1032 = vmatprep.subr.mxu0 0.0
      %1033 = vmatpush1.msra.mxu0 %v398
      %1034 = vmatprep.subr.mxu0 0.0
      %1035 = vmatpush1.msra.mxu0 %v397
      %1036 = vmatprep.subr.mxu0 0.0
      %1037 = vmatpush1.msra.mxu0 %v396
      %1038 = vmatprep.subr.mxu0 0.0
      %1039 = vmatpush1.msra.mxu0 %v395
      %1040 = vmatprep.subr.mxu0 0.0
      %1041 = vmatpush1.msra.mxu0 %v394
      %1042 = vmatprep.subr.mxu0 0.0
      %1043 = vmatpush1.msra.mxu0 %v393
      %1044 = vmatprep.subr.mxu0 0.0
      %1045 = vmatpush1.msra.mxu0 %v392
      %1046 = vmatprep.subr.mxu0 0.0
      %1047 = vmatpush1.msra.mxu0 %v391
      %1048 = vmatprep.subr.mxu0 0.0
      %1049 = vmatpush1.msra.mxu0 %v390
      %1050 = vmatprep.subr.mxu0 0.0
      %1051 = vmatpush1.msra.mxu0 %v389
      %1052 = vmatprep.subr.mxu0 0.0
      %1053 = vmatpush1.msra.mxu0 %v388
      %1054 = vmatprep.subr.mxu0 0.0
      %1055 = vmatpush2.msra.mxu0 %v419
      %1056 = vmatprep.subr.mxu0 0.0
      %1057 = vmatpush2.msra.mxu0 %v418
      %1058 = vmatprep.subr.mxu0 0.0
      %1059 = vmatpush2.msra.mxu0 %v417
      %1060 = vmatprep.subr.mxu0 0.0
      %1061 = vmatpush2.msra.mxu0 %v416
      %1062 = vmatprep.subr.mxu0 0.0
      %1063 = vmatpush2.msra.mxu0 %v415
      %1064 = vmatprep.subr.mxu0 0.0
      %1065 = vmatpush2.msra.mxu0 %v414
      %1066 = vmatprep.subr.mxu0 0.0
      %1067 = vmatpush2.msra.mxu0 %v413
      %1068 = vmatprep.subr.mxu0 0.0
      %1069 = vmatpush2.msra.mxu0 %v412
      %1070 = vmatprep.subr.mxu0 0.0
      %1071 = vmatpush2.msra.mxu0 %v411
      %1072 = vmatprep.subr.mxu0 0.0
      %1073 = vmatpush2.msra.mxu0 %v410
      %1074 = vmatprep.subr.mxu0 0.0
      %1075 = vmatpush2.msra.mxu0 %v409
      %1076 = vmatprep.subr.mxu0 0.0
      %1077 = vmatpush2.msra.mxu0 %v408
      %1078 = vmatprep.subr.mxu0 0.0
      %1079 = vmatpush2.msra.mxu0 %v407
      %1080 = vmatprep.subr.mxu0 0.0
      %1081 = vmatpush2.msra.mxu0 %v406
      %1082 = vmatprep.subr.mxu0 0.0
      %1083 = vmatpush2.msra.mxu0 %v405
      %1084 = vmatprep.subr.mxu0 0.0
      %1085 = vmatpush2.msra.mxu0 %v404
      %1086 = vmatprep.mubr.f32.mxu0 %v211
      %1087 = vmatmul.mubr.f32.gmra.mxu0 %v210
      %v1088 = vpop.f32.mrf.mxu0
      %v1089 = vadd.f32 %v1014, %v1088
      %v1090 = vpop.f32.mrf.mxu0
      %1091 = vmatprep.mubr.f32.mxu0 %v240
      %1092 = vmatmul.mubr.f32.gmra.mxu0 %v239
      %v1093 = vpop.f32.mrf.mxu0
      %v1094 = vadd.f32 %v1019, %v1093
      %v1095 = vpop.f32.mrf.mxu0
      %1096 = vdwg.mxu0
      %1097 = vmatprep.subr.mxu0 0.0
      %1098 = vmatpush1.msra.mxu0 %v435
      %1099 = vmatprep.subr.mxu0 0.0
      %1100 = vmatpush1.msra.mxu0 %v434
      %1101 = vmatprep.subr.mxu0 0.0
      %1102 = vmatpush1.msra.mxu0 %v433
      %1103 = vmatprep.subr.mxu0 0.0
      %1104 = vmatpush1.msra.mxu0 %v432
      %1105 = vmatprep.subr.mxu0 0.0
      %1106 = vmatpush1.msra.mxu0 %v431
      %1107 = vmatprep.subr.mxu0 0.0
      %1108 = vmatpush1.msra.mxu0 %v430
      %1109 = vmatprep.subr.mxu0 0.0
      %1110 = vmatpush1.msra.mxu0 %v429
      %1111 = vmatprep.subr.mxu0 0.0
      %1112 = vmatpush1.msra.mxu0 %v428
      %1113 = vmatprep.subr.mxu0 0.0
      %1114 = vmatpush1.msra.mxu0 %v427
      %1115 = vmatprep.subr.mxu0 0.0
      %1116 = vmatpush1.msra.mxu0 %v426
      %1117 = vmatprep.subr.mxu0 0.0
      %1118 = vmatpush1.msra.mxu0 %v425
      %1119 = vmatprep.subr.mxu0 0.0
      %1120 = vmatpush1.msra.mxu0 %v424
      %1121 = vmatprep.subr.mxu0 0.0
      %1122 = vmatpush1.msra.mxu0 %v423
      %1123 = vmatprep.subr.mxu0 0.0
      %1124 = vmatpush1.msra.mxu0 %v422
      %1125 = vmatprep.subr.mxu0 0.0
      %1126 = vmatpush1.msra.mxu0 %v421
      %1127 = vmatprep.subr.mxu0 0.0
      %1128 = vmatpush1.msra.mxu0 %v420
      %1129 = vmatprep.subr.mxu0 0.0
      %1130 = vmatpush2.msra.mxu0 %v451
      %1131 = vmatprep.subr.mxu0 0.0
      %1132 = vmatpush2.msra.mxu0 %v450
      %1133 = vmatprep.subr.mxu0 0.0
      %1134 = vmatpush2.msra.mxu0 %v449
      %1135 = vmatprep.subr.mxu0 0.0
      %1136 = vmatpush2.msra.mxu0 %v448
      %1137 = vmatprep.subr.mxu0 0.0
      %1138 = vmatpush2.msra.mxu0 %v447
      %1139 = vmatprep.subr.mxu0 0.0
      %1140 = vmatpush2.msra.mxu0 %v446
      %1141 = vmatprep.subr.mxu0 0.0
      %1142 = vmatpush2.msra.mxu0 %v445
      %1143 = vmatprep.subr.mxu0 0.0
      %1144 = vmatpush2.msra.mxu0 %v444
      %1145 = vmatprep.subr.mxu0 0.0
      %1146 = vmatpush2.msra.mxu0 %v443
      %1147 = vmatprep.subr.mxu0 0.0
      %1148 = vmatpush2.msra.mxu0 %v442
      %1149 = vmatprep.subr.mxu0 0.0
      %1150 = vmatpush2.msra.mxu0 %v441
      %1151 = vmatprep.subr.mxu0 0.0
      %1152 = vmatpush2.msra.mxu0 %v440
      %1153 = vmatprep.subr.mxu0 0.0
      %1154 = vmatpush2.msra.mxu0 %v439
      %1155 = vmatprep.subr.mxu0 0.0
      %1156 = vmatpush2.msra.mxu0 %v438
      %1157 = vmatprep.subr.mxu0 0.0
      %1158 = vmatpush2.msra.mxu0 %v437
      %1159 = vmatprep.subr.mxu0 0.0
      %1160 = vmatpush2.msra.mxu0 %v436
      %1161 = vmatprep.mubr.f32.mxu0 %v213
      %1162 = vmatmul.mubr.f32.gmra.mxu0 %v212
      %v1163 = vpop.f32.mrf.mxu0
      %v1164 = vadd.f32 %v1089, %v1163
      %v1165 = vpop.f32.mrf.mxu0
      %1166 = vmatprep.mubr.f32.mxu0 %v242
      %1167 = vmatmul.mubr.f32.gmra.mxu0 %v241
      %v1168 = vpop.f32.mrf.mxu0
      %v1169 = vadd.f32 %v1094, %v1168
      %v1170 = vpop.f32.mrf.mxu0
      %1171 = vdwg.mxu0
      %1172 = vmatprep.subr.mxu0 0.0
      %1173 = vmatpush1.msra.mxu0 %v467
      %1174 = vmatprep.subr.mxu0 0.0
      %1175 = vmatpush1.msra.mxu0 %v466
      %1176 = vmatprep.subr.mxu0 0.0
      %1177 = vmatpush1.msra.mxu0 %v465
      %1178 = vmatprep.subr.mxu0 0.0
      %1179 = vmatpush1.msra.mxu0 %v464
      %1180 = vmatprep.subr.mxu0 0.0
      %1181 = vmatpush1.msra.mxu0 %v463
      %1182 = vmatprep.subr.mxu0 0.0
      %1183 = vmatpush1.msra.mxu0 %v462
      %1184 = vmatprep.subr.mxu0 0.0
      %1185 = vmatpush1.msra.mxu0 %v461
      %1186 = vmatprep.subr.mxu0 0.0
      %1187 = vmatpush1.msra.mxu0 %v460
      %1188 = vmatprep.subr.mxu0 0.0
      %1189 = vmatpush1.msra.mxu0 %v459
      %1190 = vmatprep.subr.mxu0 0.0
      %1191 = vmatpush1.msra.mxu0 %v458
      %1192 = vmatprep.subr.mxu0 0.0
      %1193 = vmatpush1.msra.mxu0 %v457
      %1194 = vmatprep.subr.mxu0 0.0
      %1195 = vmatpush1.msra.mxu0 %v456
      %1196 = vmatprep.subr.mxu0 0.0
      %1197 = vmatpush1.msra.mxu0 %v455
      %1198 = vmatprep.subr.mxu0 0.0
      %1199 = vmatpush1.msra.mxu0 %v454
      %1200 = vmatprep.subr.mxu0 0.0
      %1201 = vmatpush1.msra.mxu0 %v453
      %1202 = vmatprep.subr.mxu0 0.0
      %1203 = vmatpush1.msra.mxu0 %v452
      %1204 = vmatprep.subr.mxu0 0.0
      %1205 = vmatpush2.msra.mxu0 %v483
      %1206 = vmatprep.subr.mxu0 0.0
      %1207 = vmatpush2.msra.mxu0 %v482
      %1208 = vmatprep.subr.mxu0 0.0
      %1209 = vmatpush2.msra.mxu0 %v481
      %1210 = vmatprep.subr.mxu0 0.0
      %1211 = vmatpush2.msra.mxu0 %v480
      %1212 = vmatprep.subr.mxu0 0.0
      %1213 = vmatpush2.msra.mxu0 %v479
      %1214 = vmatprep.subr.mxu0 0.0
      %1215 = vmatpush2.msra.mxu0 %v478
      %1216 = vmatprep.subr.mxu0 0.0
      %1217 = vmatpush2.msra.mxu0 %v477
      %1218 = vmatprep.subr.mxu0 0.0
      %1219 = vmatpush2.msra.mxu0 %v476
      %1220 = vmatprep.subr.mxu0 0.0
      %1221 = vmatpush2.msra.mxu0 %v475
      %1222 = vmatprep.subr.mxu0 0.0
      %1223 = vmatpush2.msra.mxu0 %v474
      %1224 = vmatprep.subr.mxu0 0.0
      %1225 = vmatpush2.msra.mxu0 %v473
      %1226 = vmatprep.subr.mxu0 0.0
      %1227 = vmatpush2.msra.mxu0 %v472
      %1228 = vmatprep.subr.mxu0 0.0
      %1229 = vmatpush2.msra.mxu0 %v471
      %1230 = vmatprep.subr.mxu0 0.0
      %1231 = vmatpush2.msra.mxu0 %v470
      %1232 = vmatprep.subr.mxu0 0.0
      %1233 = vmatpush2.msra.mxu0 %v469
      %1234 = vmatprep.subr.mxu0 0.0
      %1235 = vmatpush2.msra.mxu0 %v468
      %1236 = vmatprep.mubr.f32.mxu0 %v215
      %1237 = vmatmul.mubr.f32.gmra.mxu0 %v214
      %v1238 = vpop.f32.mrf.mxu0
      %v1239 = vadd.f32 %v1164, %v1238
      %v1240 = vpop.f32.mrf.mxu0
      %1241 = vmatprep.mubr.f32.mxu0 %v244
      %1242 = vmatmul.mubr.f32.gmra.mxu0 %v243
      %v1243 = vpop.f32.mrf.mxu0
      %v1244 = vadd.f32 %v1169, %v1243
      %v1245 = vpop.f32.mrf.mxu0
      %1246 = vdwg.mxu0
      %1247 = vmatprep.subr.mxu0 0.0
      %1248 = vmatpush1.msra.mxu0 %v499
      %1249 = vmatprep.subr.mxu0 0.0
      %1250 = vmatpush1.msra.mxu0 %v498
      %1251 = vmatprep.subr.mxu0 0.0
      %1252 = vmatpush1.msra.mxu0 %v497
      %1253 = vmatprep.subr.mxu0 0.0
      %1254 = vmatpush1.msra.mxu0 %v496
      %1255 = vmatprep.subr.mxu0 0.0
      %1256 = vmatpush1.msra.mxu0 %v495
      %1257 = vmatprep.subr.mxu0 0.0
      %1258 = vmatpush1.msra.mxu0 %v494
      %1259 = vmatprep.subr.mxu0 0.0
      %1260 = vmatpush1.msra.mxu0 %v493
      %1261 = vmatprep.subr.mxu0 0.0
      %1262 = vmatpush1.msra.mxu0 %v492
      %1263 = vmatprep.subr.mxu0 0.0
      %1264 = vmatpush1.msra.mxu0 %v491
      %1265 = vmatprep.subr.mxu0 0.0
      %1266 = vmatpush1.msra.mxu0 %v490
      %1267 = vmatprep.subr.mxu0 0.0
      %1268 = vmatpush1.msra.mxu0 %v489
      %1269 = vmatprep.subr.mxu0 0.0
      %1270 = vmatpush1.msra.mxu0 %v488
      %1271 = vmatprep.subr.mxu0 0.0
      %1272 = vmatpush1.msra.mxu0 %v487
      %1273 = vmatprep.subr.mxu0 0.0
      %1274 = vmatpush1.msra.mxu0 %v486
      %1275 = vmatprep.subr.mxu0 0.0
      %1276 = vmatpush1.msra.mxu0 %v485
      %1277 = vmatprep.subr.mxu0 0.0
      %1278 = vmatpush1.msra.mxu0 %v484
      %1279 = vmatprep.subr.mxu0 0.0
      %1280 = vmatpush2.msra.mxu0 %v515
      %1281 = vmatprep.subr.mxu0 0.0
      %1282 = vmatpush2.msra.mxu0 %v514
      %1283 = vmatprep.subr.mxu0 0.0
      %1284 = vmatpush2.msra.mxu0 %v513
      %1285 = vmatprep.subr.mxu0 0.0
      %1286 = vmatpush2.msra.mxu0 %v512
      %1287 = vmatprep.subr.mxu0 0.0
      %1288 = vmatpush2.msra.mxu0 %v511
      %1289 = vmatprep.subr.mxu0 0.0
      %1290 = vmatpush2.msra.mxu0 %v510
      %1291 = vmatprep.subr.mxu0 0.0
      %1292 = vmatpush2.msra.mxu0 %v509
      %1293 = vmatprep.subr.mxu0 0.0
      %1294 = vmatpush2.msra.mxu0 %v508
      %1295 = vmatprep.subr.mxu0 0.0
      %1296 = vmatpush2.msra.mxu0 %v507
      %1297 = vmatprep.subr.mxu0 0.0
      %1298 = vmatpush2.msra.mxu0 %v506
      %1299 = vmatprep.subr.mxu0 0.0
      %1300 = vmatpush2.msra.mxu0 %v505
      %1301 = vmatprep.subr.mxu0 0.0
      %1302 = vmatpush2.msra.mxu0 %v504
      %1303 = vmatprep.subr.mxu0 0.0
      %1304 = vmatpush2.msra.mxu0 %v503
      %1305 = vmatprep.subr.mxu0 0.0
      %1306 = vmatpush2.msra.mxu0 %v502
      %1307 = vmatprep.subr.mxu0 0.0
      %1308 = vmatpush2.msra.mxu0 %v501
      %1309 = vmatprep.subr.mxu0 0.0
      %1310 = vmatpush2.msra.mxu0 %v500
      %1311 = vmatprep.mubr.f32.mxu0 %v217
      %1312 = vmatmul.mubr.f32.gmra.mxu0 %v216
      %v1313 = vpop.f32.mrf.mxu0
      %v1314 = vadd.f32 %v1239, %v1313
      %v1315 = vpop.f32.mrf.mxu0
      %1316 = vmatprep.mubr.f32.mxu0 %v246
      %1317 = vmatmul.mubr.f32.gmra.mxu0 %v245
      %v1318 = vpop.f32.mrf.mxu0
      %v1319 = vadd.f32 %v1244, %v1318
      %v1320 = vpop.f32.mrf.mxu0
      %1321 = vdwg.mxu0
      %1322 = vmatprep.subr.mxu0 0.0
      %1323 = vmatpush1.msra.mxu0 %v531
      %1324 = vmatprep.subr.mxu0 0.0
      %1325 = vmatpush1.msra.mxu0 %v530
      %1326 = vmatprep.subr.mxu0 0.0
      %1327 = vmatpush1.msra.mxu0 %v529
      %1328 = vmatprep.subr.mxu0 0.0
      %1329 = vmatpush1.msra.mxu0 %v528
      %1330 = vmatprep.subr.mxu0 0.0
      %1331 = vmatpush1.msra.mxu0 %v527
      %1332 = vmatprep.subr.mxu0 0.0
      %1333 = vmatpush1.msra.mxu0 %v526
      %1334 = vmatprep.subr.mxu0 0.0
      %1335 = vmatpush1.msra.mxu0 %v525
      %1336 = vmatprep.subr.mxu0 0.0
      %1337 = vmatpush1.msra.mxu0 %v524
      %1338 = vmatprep.subr.mxu0 0.0
      %1339 = vmatpush1.msra.mxu0 %v523
      %1340 = vmatprep.subr.mxu0 0.0
      %1341 = vmatpush1.msra.mxu0 %v522
      %1342 = vmatprep.subr.mxu0 0.0
      %1343 = vmatpush1.msra.mxu0 %v521
      %1344 = vmatprep.subr.mxu0 0.0
      %1345 = vmatpush1.msra.mxu0 %v520
      %1346 = vmatprep.subr.mxu0 0.0
      %1347 = vmatpush1.msra.mxu0 %v519
      %1348 = vmatprep.subr.mxu0 0.0
      %1349 = vmatpush1.msra.mxu0 %v518
      %1350 = vmatprep.subr.mxu0 0.0
      %1351 = vmatpush1.msra.mxu0 %v517
      %1352 = vmatprep.subr.mxu0 0.0
      %1353 = vmatpush1.msra.mxu0 %v516
      %1354 = vmatprep.subr.mxu0 0.0
      %1355 = vmatpush2.msra.mxu0 %v547
      %1356 = vmatprep.subr.mxu0 0.0
      %1357 = vmatpush2.msra.mxu0 %v546
      %1358 = vmatprep.subr.mxu0 0.0
      %1359 = vmatpush2.msra.mxu0 %v545
      %1360 = vmatprep.subr.mxu0 0.0
      %1361 = vmatpush2.msra.mxu0 %v544
      %1362 = vmatprep.subr.mxu0 0.0
      %1363 = vmatpush2.msra.mxu0 %v543
      %1364 = vmatprep.subr.mxu0 0.0
      %1365 = vmatpush2.msra.mxu0 %v542
      %1366 = vmatprep.subr.mxu0 0.0
      %1367 = vmatpush2.msra.mxu0 %v541
      %1368 = vmatprep.subr.mxu0 0.0
      %1369 = vmatpush2.msra.mxu0 %v540
      %1370 = vmatprep.subr.mxu0 0.0
      %1371 = vmatpush2.msra.mxu0 %v539
      %1372 = vmatprep.subr.mxu0 0.0
      %1373 = vmatpush2.msra.mxu0 %v538
      %1374 = vmatprep.subr.mxu0 0.0
      %1375 = vmatpush2.msra.mxu0 %v537
      %1376 = vmatprep.subr.mxu0 0.0
      %1377 = vmatpush2.msra.mxu0 %v536
      %1378 = vmatprep.subr.mxu0 0.0
      %1379 = vmatpush2.msra.mxu0 %v535
      %1380 = vmatprep.subr.mxu0 0.0
      %1381 = vmatpush2.msra.mxu0 %v534
      %1382 = vmatprep.subr.mxu0 0.0
      %1383 = vmatpush2.msra.mxu0 %v533
      %1384 = vmatprep.subr.mxu0 0.0
      %1385 = vmatpush2.msra.mxu0 %v532
      %1386 = vmatprep.mubr.f32.mxu0 %v219
      %1387 = vmatmul.mubr.f32.gmra.mxu0 %v218
      %v1388 = vpop.f32.mrf.mxu0
      %v1389 = vadd.f32 %v1314, %v1388
      %v1390 = vpop.f32.mrf.mxu0
      %1391 = vmatprep.mubr.f32.mxu0 %v248
      %1392 = vmatmul.mubr.f32.gmra.mxu0 %v247
      %v1393 = vpop.f32.mrf.mxu0
      %v1394 = vadd.f32 %v1319, %v1393
      %v1395 = vpop.f32.mrf.mxu0
      %1396 = vdwg.mxu0
      %1397 = vmatprep.subr.mxu0 0.0
      %1398 = vmatpush1.msra.mxu0 %v563
      %1399 = vmatprep.subr.mxu0 0.0
      %1400 = vmatpush1.msra.mxu0 %v562
      %1401 = vmatprep.subr.mxu0 0.0
      %1402 = vmatpush1.msra.mxu0 %v561
      %1403 = vmatprep.subr.mxu0 0.0
      %1404 = vmatpush1.msra.mxu0 %v560
      %1405 = vmatprep.subr.mxu0 0.0
      %1406 = vmatpush1.msra.mxu0 %v559
      %1407 = vmatprep.subr.mxu0 0.0
      %1408 = vmatpush1.msra.mxu0 %v558
      %1409 = vmatprep.subr.mxu0 0.0
      %1410 = vmatpush1.msra.mxu0 %v557
      %1411 = vmatprep.subr.mxu0 0.0
      %1412 = vmatpush1.msra.mxu0 %v556
      %1413 = vmatprep.subr.mxu0 0.0
      %1414 = vmatpush1.msra.mxu0 %v555
      %1415 = vmatprep.subr.mxu0 0.0
      %1416 = vmatpush1.msra.mxu0 %v554
      %1417 = vmatprep.subr.mxu0 0.0
      %1418 = vmatpush1.msra.mxu0 %v553
      %1419 = vmatprep.subr.mxu0 0.0
      %1420 = vmatpush1.msra.mxu0 %v552
      %1421 = vmatprep.subr.mxu0 0.0
      %1422 = vmatpush1.msra.mxu0 %v551
      %1423 = vmatprep.subr.mxu0 0.0
      %1424 = vmatpush1.msra.mxu0 %v550
      %1425 = vmatprep.subr.mxu0 0.0
      %1426 = vmatpush1.msra.mxu0 %v549
      %1427 = vmatprep.subr.mxu0 0.0
      %1428 = vmatpush1.msra.mxu0 %v548
      %1429 = vmatprep.subr.mxu0 0.0
      %1430 = vmatpush2.msra.mxu0 %v579
      %1431 = vmatprep.subr.mxu0 0.0
      %1432 = vmatpush2.msra.mxu0 %v578
      %1433 = vmatprep.subr.mxu0 0.0
      %1434 = vmatpush2.msra.mxu0 %v577
      %1435 = vmatprep.subr.mxu0 0.0
      %1436 = vmatpush2.msra.mxu0 %v576
      %1437 = vmatprep.subr.mxu0 0.0
      %1438 = vmatpush2.msra.mxu0 %v575
      %1439 = vmatprep.subr.mxu0 0.0
      %1440 = vmatpush2.msra.mxu0 %v574
      %1441 = vmatprep.subr.mxu0 0.0
      %1442 = vmatpush2.msra.mxu0 %v573
      %1443 = vmatprep.subr.mxu0 0.0
      %1444 = vmatpush2.msra.mxu0 %v572
      %1445 = vmatprep.subr.mxu0 0.0
      %1446 = vmatpush2.msra.mxu0 %v571
      %1447 = vmatprep.subr.mxu0 0.0
      %1448 = vmatpush2.msra.mxu0 %v570
      %1449 = vmatprep.subr.mxu0 0.0
      %1450 = vmatpush2.msra.mxu0 %v569
      %1451 = vmatprep.subr.mxu0 0.0
      %1452 = vmatpush2.msra.mxu0 %v568
      %1453 = vmatprep.subr.mxu0 0.0
      %1454 = vmatpush2.msra.mxu0 %v567
      %1455 = vmatprep.subr.mxu0 0.0
      %1456 = vmatpush2.msra.mxu0 %v566
      %1457 = vmatprep.subr.mxu0 0.0
      %1458 = vmatpush2.msra.mxu0 %v565
      %1459 = vmatprep.subr.mxu0 0.0
      %1460 = vmatpush2.msra.mxu0 %v564
      %1461 = vmatprep.mubr.f32.mxu0 %v221
      %1462 = vmatmul.mubr.f32.gmra.mxu0 %v220
      %v1463 = vpop.f32.mrf.mxu0
      %v1464 = vadd.f32 %v1389, %v1463
      %v1465 = vpop.f32.mrf.mxu0
      %1466 = vmatprep.mubr.f32.mxu0 %v250
      %1467 = vmatmul.mubr.f32.gmra.mxu0 %v249
      %v1468 = vpop.f32.mrf.mxu0
      %v1469 = vadd.f32 %v1394, %v1468
      %v1470 = vpop.f32.mrf.mxu0
      %1471 = vdwg.mxu0
      %1472 = vmatprep.subr.mxu0 0.0
      %1473 = vmatpush1.msra.mxu0 %v595
      %1474 = vmatprep.subr.mxu0 0.0
      %1475 = vmatpush1.msra.mxu0 %v594
      %1476 = vmatprep.subr.mxu0 0.0
      %1477 = vmatpush1.msra.mxu0 %v593
      %1478 = vmatprep.subr.mxu0 0.0
      %1479 = vmatpush1.msra.mxu0 %v592
      %1480 = vmatprep.subr.mxu0 0.0
      %1481 = vmatpush1.msra.mxu0 %v591
      %1482 = vmatprep.subr.mxu0 0.0
      %1483 = vmatpush1.msra.mxu0 %v590
      %1484 = vmatprep.subr.mxu0 0.0
      %1485 = vmatpush1.msra.mxu0 %v589
      %1486 = vmatprep.subr.mxu0 0.0
      %1487 = vmatpush1.msra.mxu0 %v588
      %1488 = vmatprep.subr.mxu0 0.0
      %1489 = vmatpush1.msra.mxu0 %v587
      %1490 = vmatprep.subr.mxu0 0.0
      %1491 = vmatpush1.msra.mxu0 %v586
      %1492 = vmatprep.subr.mxu0 0.0
      %1493 = vmatpush1.msra.mxu0 %v585
      %1494 = vmatprep.subr.mxu0 0.0
      %1495 = vmatpush1.msra.mxu0 %v584
      %1496 = vmatprep.subr.mxu0 0.0
      %1497 = vmatpush1.msra.mxu0 %v583
      %1498 = vmatprep.subr.mxu0 0.0
      %1499 = vmatpush1.msra.mxu0 %v582
      %1500 = vmatprep.subr.mxu0 0.0
      %1501 = vmatpush1.msra.mxu0 %v581
      %1502 = vmatprep.subr.mxu0 0.0
      %1503 = vmatpush1.msra.mxu0 %v580
      %1504 = vmatprep.subr.mxu0 0.0
      %1505 = vmatpush2.msra.mxu0 %v611
      %1506 = vmatprep.subr.mxu0 0.0
      %1507 = vmatpush2.msra.mxu0 %v610
      %1508 = vmatprep.subr.mxu0 0.0
      %1509 = vmatpush2.msra.mxu0 %v609
      %1510 = vmatprep.subr.mxu0 0.0
      %1511 = vmatpush2.msra.mxu0 %v608
      %1512 = vmatprep.subr.mxu0 0.0
      %1513 = vmatpush2.msra.mxu0 %v607
      %1514 = vmatprep.subr.mxu0 0.0
      %1515 = vmatpush2.msra.mxu0 %v606
      %1516 = vmatprep.subr.mxu0 0.0
      %1517 = vmatpush2.msra.mxu0 %v605
      %1518 = vmatprep.subr.mxu0 0.0
      %1519 = vmatpush2.msra.mxu0 %v604
      %1520 = vmatprep.subr.mxu0 0.0
      %1521 = vmatpush2.msra.mxu0 %v603
      %1522 = vmatprep.subr.mxu0 0.0
      %1523 = vmatpush2.msra.mxu0 %v602
      %1524 = vmatprep.subr.mxu0 0.0
      %1525 = vmatpush2.msra.mxu0 %v601
      %1526 = vmatprep.subr.mxu0 0.0
      %1527 = vmatpush2.msra.mxu0 %v600
      %1528 = vmatprep.subr.mxu0 0.0
      %1529 = vmatpush2.msra.mxu0 %v599
      %1530 = vmatprep.subr.mxu0 0.0
      %1531 = vmatpush2.msra.mxu0 %v598
      %1532 = vmatprep.subr.mxu0 0.0
      %1533 = vmatpush2.msra.mxu0 %v597
      %1534 = vmatprep.subr.mxu0 0.0
      %1535 = vmatpush2.msra.mxu0 %v596
      %1536 = vmatprep.mubr.f32.mxu0 %v223
      %1537 = vmatmul.mubr.f32.gmra.mxu0 %v222
      %v1538 = vpop.f32.mrf.mxu0
      %v1539 = vadd.f32 %v1464, %v1538
      %v1540 = vpop.f32.mrf.mxu0
      %1541 = vmatprep.mubr.f32.mxu0 %v252
      %1542 = vmatmul.mubr.f32.gmra.mxu0 %v251
      %v1543 = vpop.f32.mrf.mxu0
      %v1544 = vadd.f32 %v1469, %v1543
      %v1545 = vpop.f32.mrf.mxu0
      %1546 = vdwg.mxu0
      %1547 = vmatprep.subr.mxu0 0.0
      %1548 = vmatpush1.msra.mxu0 %v627
      %1549 = vmatprep.subr.mxu0 0.0
      %1550 = vmatpush1.msra.mxu0 %v626
      %1551 = vmatprep.subr.mxu0 0.0
      %1552 = vmatpush1.msra.mxu0 %v625
      %1553 = vmatprep.subr.mxu0 0.0
      %1554 = vmatpush1.msra.mxu0 %v624
      %1555 = vmatprep.subr.mxu0 0.0
      %1556 = vmatpush1.msra.mxu0 %v623
      %1557 = vmatprep.subr.mxu0 0.0
      %1558 = vmatpush1.msra.mxu0 %v622
      %1559 = vmatprep.subr.mxu0 0.0
      %1560 = vmatpush1.msra.mxu0 %v621
      %1561 = vmatprep.subr.mxu0 0.0
      %1562 = vmatpush1.msra.mxu0 %v620
      %1563 = vmatprep.subr.mxu0 0.0
      %1564 = vmatpush1.msra.mxu0 %v619
      %1565 = vmatprep.subr.mxu0 0.0
      %1566 = vmatpush1.msra.mxu0 %v618
      %1567 = vmatprep.subr.mxu0 0.0
      %1568 = vmatpush1.msra.mxu0 %v617
      %1569 = vmatprep.subr.mxu0 0.0
      %1570 = vmatpush1.msra.mxu0 %v616
      %1571 = vmatprep.subr.mxu0 0.0
      %1572 = vmatpush1.msra.mxu0 %v615
      %1573 = vmatprep.subr.mxu0 0.0
      %1574 = vmatpush1.msra.mxu0 %v614
      %1575 = vmatprep.subr.mxu0 0.0
      %1576 = vmatpush1.msra.mxu0 %v613
      %1577 = vmatprep.subr.mxu0 0.0
      %1578 = vmatpush1.msra.mxu0 %v612
      %1579 = vmatprep.subr.mxu0 0.0
      %1580 = vmatpush2.msra.mxu0 %v643
      %1581 = vmatprep.subr.mxu0 0.0
      %1582 = vmatpush2.msra.mxu0 %v642
      %1583 = vmatprep.subr.mxu0 0.0
      %1584 = vmatpush2.msra.mxu0 %v641
      %1585 = vmatprep.subr.mxu0 0.0
      %1586 = vmatpush2.msra.mxu0 %v640
      %1587 = vmatprep.subr.mxu0 0.0
      %1588 = vmatpush2.msra.mxu0 %v639
      %1589 = vmatprep.subr.mxu0 0.0
      %1590 = vmatpush2.msra.mxu0 %v638
      %1591 = vmatprep.subr.mxu0 0.0
      %1592 = vmatpush2.msra.mxu0 %v637
      %1593 = vmatprep.subr.mxu0 0.0
      %1594 = vmatpush2.msra.mxu0 %v636
      %1595 = vmatprep.subr.mxu0 0.0
      %1596 = vmatpush2.msra.mxu0 %v635
      %1597 = vmatprep.subr.mxu0 0.0
      %1598 = vmatpush2.msra.mxu0 %v634
      %1599 = vmatprep.subr.mxu0 0.0
      %1600 = vmatpush2.msra.mxu0 %v633
      %1601 = vmatprep.subr.mxu0 0.0
      %1602 = vmatpush2.msra.mxu0 %v632
      %1603 = vmatprep.subr.mxu0 0.0
      %1604 = vmatpush2.msra.mxu0 %v631
      %1605 = vmatprep.subr.mxu0 0.0
      %1606 = vmatpush2.msra.mxu0 %v630
      %1607 = vmatprep.subr.mxu0 0.0
      %1608 = vmatpush2.msra.mxu0 %v629
      %1609 = vmatprep.subr.mxu0 0.0
      %1610 = vmatpush2.msra.mxu0 %v628
      %1611 = vmatprep.mubr.f32.mxu0 %v225
      %1612 = vmatmul.mubr.f32.gmra.mxu0 %v224
      %v1613 = vpop.f32.mrf.mxu0
      %v1614 = vadd.f32 %v1539, %v1613
      %v1615 = vpop.f32.mrf.mxu0
      %1616 = vmatprep.mubr.f32.mxu0 %v254
      %1617 = vmatmul.mubr.f32.gmra.mxu0 %v253
      %v1618 = vpop.f32.mrf.mxu0
      %v1619 = vadd.f32 %v1544, %v1618
      %v1620 = vpop.f32.mrf.mxu0
      %1621 = vdwg.mxu0
      %1622 = vmatprep.subr.mxu0 0.0
      %1623 = vmatpush1.msra.mxu0 %v659
      %1624 = vmatprep.subr.mxu0 0.0
      %1625 = vmatpush1.msra.mxu0 %v658
      %1626 = vmatprep.subr.mxu0 0.0
      %1627 = vmatpush1.msra.mxu0 %v657
      %1628 = vmatprep.subr.mxu0 0.0
      %1629 = vmatpush1.msra.mxu0 %v656
      %1630 = vmatprep.subr.mxu0 0.0
      %1631 = vmatpush1.msra.mxu0 %v655
      %1632 = vmatprep.subr.mxu0 0.0
      %1633 = vmatpush1.msra.mxu0 %v654
      %1634 = vmatprep.subr.mxu0 0.0
      %1635 = vmatpush1.msra.mxu0 %v653
      %1636 = vmatprep.subr.mxu0 0.0
      %1637 = vmatpush1.msra.mxu0 %v652
      %1638 = vmatprep.subr.mxu0 0.0
      %1639 = vmatpush1.msra.mxu0 %v651
      %1640 = vmatprep.subr.mxu0 0.0
      %1641 = vmatpush1.msra.mxu0 %v650
      %1642 = vmatprep.subr.mxu0 0.0
      %1643 = vmatpush1.msra.mxu0 %v649
      %1644 = vmatprep.subr.mxu0 0.0
      %1645 = vmatpush1.msra.mxu0 %v648
      %1646 = vmatprep.subr.mxu0 0.0
      %1647 = vmatpush1.msra.mxu0 %v647
      %1648 = vmatprep.subr.mxu0 0.0
      %1649 = vmatpush1.msra.mxu0 %v646
      %1650 = vmatprep.subr.mxu0 0.0
      %1651 = vmatpush1.msra.mxu0 %v645
      %1652 = vmatprep.subr.mxu0 0.0
      %1653 = vmatpush1.msra.mxu0 %v644
      %1654 = vmatprep.subr.mxu0 0.0
      %1655 = vmatpush2.msra.mxu0 %v675
      %1656 = vmatprep.subr.mxu0 0.0
      %1657 = vmatpush2.msra.mxu0 %v674
      %1658 = vmatprep.subr.mxu0 0.0
      %1659 = vmatpush2.msra.mxu0 %v673
      %1660 = vmatprep.subr.mxu0 0.0
      %1661 = vmatpush2.msra.mxu0 %v672
      %1662 = vmatprep.subr.mxu0 0.0
      %1663 = vmatpush2.msra.mxu0 %v671
      %1664 = vmatprep.subr.mxu0 0.0
      %1665 = vmatpush2.msra.mxu0 %v670
      %1666 = vmatprep.subr.mxu0 0.0
      %1667 = vmatpush2.msra.mxu0 %v669
      %1668 = vmatprep.subr.mxu0 0.0
      %1669 = vmatpush2.msra.mxu0 %v668
      %1670 = vmatprep.subr.mxu0 0.0
      %1671 = vmatpush2.msra.mxu0 %v667
      %1672 = vmatprep.subr.mxu0 0.0
      %1673 = vmatpush2.msra.mxu0 %v666
      %1674 = vmatprep.subr.mxu0 0.0
      %1675 = vmatpush2.msra.mxu0 %v665
      %1676 = vmatprep.subr.mxu0 0.0
      %1677 = vmatpush2.msra.mxu0 %v664
      %1678 = vmatprep.subr.mxu0 0.0
      %1679 = vmatpush2.msra.mxu0 %v663
      %1680 = vmatprep.subr.mxu0 0.0
      %1681 = vmatpush2.msra.mxu0 %v662
      %1682 = vmatprep.subr.mxu0 0.0
      %1683 = vmatpush2.msra.mxu0 %v661
      %1684 = vmatprep.subr.mxu0 0.0
      %1685 = vmatpush2.msra.mxu0 %v660
      %1686 = vmatprep.mubr.f32.mxu0 %v227
      %1687 = vmatmul.mubr.f32.gmra.mxu0 %v226
      %v1688 = vpop.f32.mrf.mxu0
      %v1689 = vadd.f32 %v1614, %v1688
      %v1690 = vpop.f32.mrf.mxu0
      %1691 = vmatprep.mubr.f32.mxu0 %v256
      %1692 = vmatmul.mubr.f32.gmra.mxu0 %v255
      %v1693 = vpop.f32.mrf.mxu0
      %v1694 = vadd.f32 %v1619, %v1693
      %v1695 = vpop.f32.mrf.mxu0
      %1696 = vdwg.mxu0
      %1697 = vmatprep.subr.mxu0 0.0
      %1698 = vmatpush1.msra.mxu0 %v691
      %1699 = vmatprep.subr.mxu0 0.0
      %1700 = vmatpush1.msra.mxu0 %v690
      %1701 = vmatprep.subr.mxu0 0.0
      %1702 = vmatpush1.msra.mxu0 %v689
      %1703 = vmatprep.subr.mxu0 0.0
      %1704 = vmatpush1.msra.mxu0 %v688
      %1705 = vmatprep.subr.mxu0 0.0
      %1706 = vmatpush1.msra.mxu0 %v687
      %1707 = vmatprep.subr.mxu0 0.0
      %1708 = vmatpush1.msra.mxu0 %v686
      %1709 = vmatprep.subr.mxu0 0.0
      %1710 = vmatpush1.msra.mxu0 %v685
      %1711 = vmatprep.subr.mxu0 0.0
      %1712 = vmatpush1.msra.mxu0 %v684
      %1713 = vmatprep.subr.mxu0 0.0
      %1714 = vmatpush1.msra.mxu0 %v683
      %1715 = vmatprep.subr.mxu0 0.0
      %1716 = vmatpush1.msra.mxu0 %v682
      %1717 = vmatprep.subr.mxu0 0.0
      %1718 = vmatpush1.msra.mxu0 %v681
      %1719 = vmatprep.subr.mxu0 0.0
      %1720 = vmatpush1.msra.mxu0 %v680
      %1721 = vmatprep.subr.mxu0 0.0
      %1722 = vmatpush1.msra.mxu0 %v679
      %1723 = vmatprep.subr.mxu0 0.0
      %1724 = vmatpush1.msra.mxu0 %v678
      %1725 = vmatprep.subr.mxu0 0.0
      %1726 = vmatpush1.msra.mxu0 %v677
      %1727 = vmatprep.subr.mxu0 0.0
      %1728 = vmatpush1.msra.mxu0 %v676
      %1729 = vmatprep.subr.mxu0 0.0
      %1730 = vmatpush2.msra.mxu0 %v707
      %1731 = vmatprep.subr.mxu0 0.0
      %1732 = vmatpush2.msra.mxu0 %v706
      %1733 = vmatprep.subr.mxu0 0.0
      %1734 = vmatpush2.msra.mxu0 %v705
      %1735 = vmatprep.subr.mxu0 0.0
      %1736 = vmatpush2.msra.mxu0 %v704
      %1737 = vmatprep.subr.mxu0 0.0
      %1738 = vmatpush2.msra.mxu0 %v703
      %1739 = vmatprep.subr.mxu0 0.0
      %1740 = vmatpush2.msra.mxu0 %v702
      %1741 = vmatprep.subr.mxu0 0.0
      %1742 = vmatpush2.msra.mxu0 %v701
      %1743 = vmatprep.subr.mxu0 0.0
      %1744 = vmatpush2.msra.mxu0 %v700
      %1745 = vmatprep.subr.mxu0 0.0
      %1746 = vmatpush2.msra.mxu0 %v699
      %1747 = vmatprep.subr.mxu0 0.0
      %1748 = vmatpush2.msra.mxu0 %v698
      %1749 = vmatprep.subr.mxu0 0.0
      %1750 = vmatpush2.msra.mxu0 %v697
      %1751 = vmatprep.subr.mxu0 0.0
      %1752 = vmatpush2.msra.mxu0 %v696
      %1753 = vmatprep.subr.mxu0 0.0
      %1754 = vmatpush2.msra.mxu0 %v695
      %1755 = vmatprep.subr.mxu0 0.0
      %1756 = vmatpush2.msra.mxu0 %v694
      %1757 = vmatprep.subr.mxu0 0.0
      %1758 = vmatpush2.msra.mxu0 %v693
      %1759 = vmatprep.subr.mxu0 0.0
      %1760 = vmatpush2.msra.mxu0 %v692
      %1761 = vmatprep.mubr.f32.mxu0 %v229
      %1762 = vmatmul.mubr.f32.gmra.mxu0 %v228
      %v1763 = vpop.f32.mrf.mxu0
      %v1764 = vadd.f32 %v1689, %v1763
      %v1765 = vpop.f32.mrf.mxu0
      %1766 = vmatprep.mubr.f32.mxu0 %v258
      %1767 = vmatmul.mubr.f32.gmra.mxu0 %v257
      %v1768 = vpop.f32.mrf.mxu0
      %v1769 = vadd.f32 %v1694, %v1768
      %v1770 = vpop.f32.mrf.mxu0
      %1771 = vdwg.mxu0
      %1772 = vmatprep.subr.mxu0 0.0
      %1773 = vmatpush1.msra.mxu0 0.0
      %1774 = vmatprep.subr.mxu0 0.0
      %1775 = vmatpush1.msra.mxu0 0.0
      %1776 = vmatprep.subr.mxu0 0.0
      %1777 = vmatpush1.msra.mxu0 0.0
      %1778 = vmatprep.subr.mxu0 0.0
      %1779 = vmatpush1.msra.mxu0 0.0
      %1780 = vmatprep.subr.mxu0 0.0
      %1781 = vmatpush1.msra.mxu0 0.0
      %1782 = vmatprep.subr.mxu0 0.0
      %1783 = vmatpush1.msra.mxu0 0.0
      %1784 = vmatprep.subr.mxu0 0.0
      %1785 = vmatpush1.msra.mxu0 0.0
      %1786 = vmatprep.subr.mxu0 0.0
      %1787 = vmatpush1.msra.mxu0 0.0
      %1788 = vmatprep.subr.mxu0 0.0
      %1789 = vmatpush1.msra.mxu0 0.0
      %1790 = vmatprep.subr.mxu0 0.0
      %1791 = vmatpush1.msra.mxu0 0.0
      %1792 = vmatprep.subr.mxu0 0.0
      %1793 = vmatpush1.msra.mxu0 0.0
      %1794 = vmatprep.subr.mxu0 0.0
      %1795 = vmatpush1.msra.mxu0 0.0
      %1796 = vmatprep.subr.mxu0 0.0
      %1797 = vmatpush1.msra.mxu0 0.0
      %1798 = vmatprep.subr.mxu0 0.0
      %1799 = vmatpush1.msra.mxu0 %v720
      %1800 = vmatprep.subr.mxu0 0.0
      %1801 = vmatpush1.msra.mxu0 %v709
      %1802 = vmatprep.subr.mxu0 0.0
      %1803 = vmatpush1.msra.mxu0 %v708
      %1804 = vmatprep.subr.mxu0 0.0
      %1805 = vmatpush2.msra.mxu0 0.0
      %1806 = vmatprep.subr.mxu0 0.0
      %1807 = vmatpush2.msra.mxu0 0.0
      %1808 = vmatprep.subr.mxu0 0.0
      %1809 = vmatpush2.msra.mxu0 0.0
      %1810 = vmatprep.subr.mxu0 0.0
      %1811 = vmatpush2.msra.mxu0 0.0
      %1812 = vmatprep.subr.mxu0 0.0
      %1813 = vmatpush2.msra.mxu0 0.0
      %1814 = vmatprep.subr.mxu0 0.0
      %1815 = vmatpush2.msra.mxu0 0.0
      %1816 = vmatprep.subr.mxu0 0.0
      %1817 = vmatpush2.msra.mxu0 0.0
      %1818 = vmatprep.subr.mxu0 0.0
      %1819 = vmatpush2.msra.mxu0 0.0
      %1820 = vmatprep.subr.mxu0 0.0
      %1821 = vmatpush2.msra.mxu0 0.0
      %1822 = vmatprep.subr.mxu0 0.0
      %1823 = vmatpush2.msra.mxu0 0.0
      %1824 = vmatprep.subr.mxu0 0.0
      %1825 = vmatpush2.msra.mxu0 0.0
      %1826 = vmatprep.subr.mxu0 0.0
      %1827 = vmatpush2.msra.mxu0 0.0
      %1828 = vmatprep.subr.mxu0 0.0
      %1829 = vmatpush2.msra.mxu0 0.0
      %1830 = vmatprep.subr.mxu0 0.0
      %1831 = vmatpush2.msra.mxu0 0.0
      %1832 = vmatprep.subr.mxu0 0.0
      %1833 = vmatpush2.msra.mxu0 0.0
      %1834 = vmatprep.subr.mxu0 0.0
      %1835 = vmatpush2.msra.mxu0 0.0
      %1836 = vmatprep.mubr.f32.mxu0 0.0
      %1837 = vmatmul.mubr.f32.gmra.mxu0 %v713
      %v1838 = vpop.f32.mrf.mxu0
      %v1839 = vadd.f32 %v1764, %v1838
      %v1840 = vpop.f32.mrf.mxu0
      %1841 = vmatprep.mubr.f32.mxu0 0.0
      %1842 = vmatmul.mubr.f32.gmra.mxu0 %v716
      %v1843 = vpop.f32.mrf.mxu0
      %v1844 = vadd.f32 %v1769, %v1843
      %v1845 = vpop.f32.mrf.mxu0
      %1846 = vdwg.mxu0
      %v1847 = vtanh.pop %v1839
      %v1848 = vtanh.pop %v1844
      %v1849 = vld [vmem:[%s2] sm:$0xff]
      %v1850 = vld [vmem:[%s2 + $0x8] sm:$0xff]
      %v1851 = vld [vmem:[%s2 + $0x10] sm:$0xff]
      %v1852 = vld [vmem:[%s2 + $0x18] sm:$0xff]
      %v1853 = vld [vmem:[%s2 + $0x20] sm:$0xff]
      %v1854 = vld [vmem:[%s2 + $0x28] sm:$0xff]
      %v1855 = vld [vmem:[%s2 + $0x30] sm:$0xff]
      %v1856 = vld [vmem:[%s2 + $0x38] sm:$0xff]
      %v1857 = vld [vmem:[%s2 + $0x40] sm:$0xff]
      %v1858 = vld [vmem:[%s2 + $0x48] sm:$0xff]
      %v1859 = vld [vmem:[%s2 + $0x50] sm:$0xff]
      %v1860 = vld [vmem:[%s2 + $0x58] sm:$0xff]
      %v1861 = vld [vmem:[%s2 + $0x60] sm:$0xff]
      %v1862 = vld [vmem:[%s2 + $0x68] sm:$0xff]
      %v1863 = vld [vmem:[%s2 + $0x70] sm:$0xff]
      %v1864 = vld [vmem:[%s2 + $0x78] sm:$0xff]
      %v1865 = vld [vmem:[%s2 + $0x80] sm:$0xff]
      %v1866 = vld [vmem:[%s2 + $0x88] sm:$0xff]
      %v1867 = vld [vmem:[%s2 + $0x90] sm:$0xff]
      %v1868 = vld [vmem:[%s2 + $0x98] sm:$0xff]
      %v1869 = vld [vmem:[%s2 + $0xa0] sm:$0xff]
      %v1870 = vld [vmem:[%s2 + $0xa8] sm:$0xff]
      %v1871 = vld [vmem:[%s2 + $0xb0] sm:$0xff]
      %v1872 = vld [vmem:[%s2 + $0xb8] sm:$0xff]
      %v1873 = vld [vmem:[%s2 + $0xc0] sm:$0xff]
      %v1874 = vld [vmem:[%s2 + $0xc8] sm:$0xff]
      %v1875 = vld [vmem:[%s2 + $0xd0] sm:$0xff]
      %v1876 = vld [vmem:[%s2 + $0xd8] sm:$0xff]
      %v1877 = vld [vmem:[%s2 + $0xe0] sm:$0xff]
      %v1878 = vld [vmem:[%s2 + $0xe8] sm:$0xff]
      %v1879 = vld [vmem:[%s2 + $0xf0] sm:$0xff]
      %v1880 = vld [vmem:[%s2 + $0xf8] sm:$0xff]
      %v1881 = vld [vmem:[%s2 + $0x100] sm:$0xff]
      %v1882 = vld [vmem:[%s2 + $0x108] sm:$0xff]
      %v1883 = vld [vmem:[%s2 + $0x110] sm:$0xff]
      %v1884 = vld [vmem:[%s2 + $0x118] sm:$0xff]
      %v1885 = vld [vmem:[%s2 + $0x120] sm:$0xff]
      %v1886 = vld [vmem:[%s2 + $0x128] sm:$0xff]
      %v1887 = vld [vmem:[%s2 + $0x130] sm:$0xff]
      %v1888 = vld [vmem:[%s2 + $0x138] sm:$0xff]
      %v1889 = vld [vmem:[%s2 + $0x140] sm:$0xff]
      %v1890 = vld [vmem:[%s2 + $0x148] sm:$0xff]
      %v1891 = vld [vmem:[%s2 + $0x150] sm:$0xff]
      %v1892 = vld [vmem:[%s2 + $0x158] sm:$0xff]
      %v1893 = vld [vmem:[%s2 + $0x160] sm:$0xff]
      %v1894 = vld [vmem:[%s2 + $0x168] sm:$0xff]
      %v1895 = vld [vmem:[%s2 + $0x170] sm:$0xff]
      %v1896 = vld [vmem:[%s2 + $0x178] sm:$0xff]
      %v1897 = vld [vmem:[%s2 + $0x180] sm:$0xff]
      %v1898 = vld [vmem:[%s2 + $0x188] sm:$0xff]
      %v1899 = vld [vmem:[%s2 + $0x190] sm:$0xff]
      %v1900 = vld [vmem:[%s2 + $0x198] sm:$0xff]
      %v1901 = vld [vmem:[%s2 + $0x1a0] sm:$0xff]
      %v1902 = vld [vmem:[%s2 + $0x1a8] sm:$0xff]
      %v1903 = vld [vmem:[%s2 + $0x1b0] sm:$0xff]
      %v1904 = vld [vmem:[%s2 + $0x1b8] sm:$0xff]
      %v1905 = vld [vmem:[%s2 + $0x1c0] sm:$0xff]
      %v1906 = vld [vmem:[%s2 + $0x1c8] sm:$0xff]
      %1907 = vxpose.xlu0.b32.start [1/16] %v1849, 128
      %1908 = vxpose.xlu0.b32.cont [2/16] %v1878, 128
      %1909 = vxpose.xlu0.b32.cont [3/16] 0.0, 128
      %1910 = vxpose.xlu0.b32.cont [4/16] 0.0, 128
      %1911 = vxpose.xlu0.b32.cont [5/16] 0.0, 128
      %1912 = vxpose.xlu0.b32.cont [6/16] 0.0, 128
      %1913 = vxpose.xlu0.b32.cont [7/16] 0.0, 128
      %1914 = vxpose.xlu0.b32.cont [8/16] 0.0, 128
      %1915 = vxpose.xlu0.b32.cont [9/16] 0.0, 128
      %1916 = vxpose.xlu0.b32.cont [10/16] 0.0, 128
      %1917 = vxpose.xlu0.b32.cont [11/16] 0.0, 128
      %1918 = vxpose.xlu0.b32.cont [12/16] 0.0, 128
      %1919 = vxpose.xlu0.b32.cont [13/16] 0.0, 128
      %1920 = vxpose.xlu0.b32.cont [14/16] 0.0, 128
      %1921 = vxpose.xlu0.b32.cont [15/16] 0.0, 128
      %1922 = vxpose.xlu0.b32.end [16/16] 0.0, 128
      %v1923 = vpop.trf.xlu0
      %v1924 = vpop.trf.xlu0
      %v1925 = vpop.trf.xlu0
      %v1926 = vpop.trf.xlu0
      %v1927 = vpop.trf.xlu0
      %v1928 = vpop.trf.xlu0
      %v1929 = vpop.trf.xlu0
      %v1930 = vpop.trf.xlu0
      %v1931 = vpop.trf.xlu0
      %v1932 = vpop.trf.xlu0
      %v1933 = vpop.trf.xlu0
      %v1934 = vpop.trf.xlu0
      %v1935 = vpop.trf.xlu0
      %v1936 = vpop.trf.xlu0
      %v1937 = vpop.trf.xlu0
      %v1938 = vpop.trf.xlu0
      %1939 = vxpose.xlu0.b32.start [1/16] %v1850, 128
      %1940 = vxpose.xlu0.b32.cont [2/16] %v1879, 128
      %1941 = vxpose.xlu0.b32.cont [3/16] 0.0, 128
      %1942 = vxpose.xlu0.b32.cont [4/16] 0.0, 128
      %1943 = vxpose.xlu0.b32.cont [5/16] 0.0, 128
      %1944 = vxpose.xlu0.b32.cont [6/16] 0.0, 128
      %1945 = vxpose.xlu0.b32.cont [7/16] 0.0, 128
      %1946 = vxpose.xlu0.b32.cont [8/16] 0.0, 128
      %1947 = vxpose.xlu0.b32.cont [9/16] 0.0, 128
      %1948 = vxpose.xlu0.b32.cont [10/16] 0.0, 128
      %1949 = vxpose.xlu0.b32.cont [11/16] 0.0, 128
      %1950 = vxpose.xlu0.b32.cont [12/16] 0.0, 128
      %1951 = vxpose.xlu0.b32.cont [13/16] 0.0, 128
      %1952 = vxpose.xlu0.b32.cont [14/16] 0.0, 128
      %1953 = vxpose.xlu0.b32.cont [15/16] 0.0, 128
      %1954 = vxpose.xlu0.b32.end [16/16] 0.0, 128
      %v1955 = vpop.trf.xlu0
      %v1956 = vpop.trf.xlu0
      %v1957 = vpop.trf.xlu0
      %v1958 = vpop.trf.xlu0
      %v1959 = vpop.trf.xlu0
      %v1960 = vpop.trf.xlu0
      %v1961 = vpop.trf.xlu0
      %v1962 = vpop.trf.xlu0
      %v1963 = vpop.trf.xlu0
      %v1964 = vpop.trf.xlu0
      %v1965 = vpop.trf.xlu0
      %v1966 = vpop.trf.xlu0
      %v1967 = vpop.trf.xlu0
      %v1968 = vpop.trf.xlu0
      %v1969 = vpop.trf.xlu0
      %v1970 = vpop.trf.xlu0
      %1971 = vxpose.xlu0.b32.start [1/16] %v1851, 128
      %1972 = vxpose.xlu0.b32.cont [2/16] %v1880, 128
      %1973 = vxpose.xlu0.b32.cont [3/16] 0.0, 128
      %1974 = vxpose.xlu0.b32.cont [4/16] 0.0, 128
      %1975 = vxpose.xlu0.b32.cont [5/16] 0.0, 128
      %1976 = vxpose.xlu0.b32.cont [6/16] 0.0, 128
      %1977 = vxpose.xlu0.b32.cont [7/16] 0.0, 128
      %1978 = vxpose.xlu0.b32.cont [8/16] 0.0, 128
      %1979 = vxpose.xlu0.b32.cont [9/16] 0.0, 128
      %1980 = vxpose.xlu0.b32.cont [10/16] 0.0, 128
      %1981 = vxpose.xlu0.b32.cont [11/16] 0.0, 128
      %1982 = vxpose.xlu0.b32.cont [12/16] 0.0, 128
      %1983 = vxpose.xlu0.b32.cont [13/16] 0.0, 128
      %1984 = vxpose.xlu0.b32.cont [14/16] 0.0, 128
      %1985 = vxpose.xlu0.b32.cont [15/16] 0.0, 128
      %1986 = vxpose.xlu0.b32.end [16/16] 0.0, 128
      %v1987 = vpop.trf.xlu0
      %v1988 = vpop.trf.xlu0
      %v1989 = vpop.trf.xlu0
      %v1990 = vpop.trf.xlu0
      %v1991 = vpop.trf.xlu0
      %v1992 = vpop.trf.xlu0
      %v1993 = vpop.trf.xlu0
      %v1994 = vpop.trf.xlu0
      %v1995 = vpop.trf.xlu0
      %v1996 = vpop.trf.xlu0
      %v1997 = vpop.trf.xlu0
      %v1998 = vpop.trf.xlu0
      %v1999 = vpop.trf.xlu0
      %v2000 = vpop.trf.xlu0
      %v2001 = vpop.trf.xlu0
      %v2002 = vpop.trf.xlu0
      %2003 = vxpose.xlu0.b32.start [1/16] %v1852, 128
      %2004 = vxpose.xlu0.b32.cont [2/16] %v1881, 128
      %2005 = vxpose.xlu0.b32.cont [3/16] 0.0, 128
      %2006 = vxpose.xlu0.b32.cont [4/16] 0.0, 128
      %2007 = vxpose.xlu0.b32.cont [5/16] 0.0, 128
      %2008 = vxpose.xlu0.b32.cont [6/16] 0.0, 128
      %2009 = vxpose.xlu0.b32.cont [7/16] 0.0, 128
      %2010 = vxpose.xlu0.b32.cont [8/16] 0.0, 128
      %2011 = vxpose.xlu0.b32.cont [9/16] 0.0, 128
      %2012 = vxpose.xlu0.b32.cont [10/16] 0.0, 128
      %2013 = vxpose.xlu0.b32.cont [11/16] 0.0, 128
      %2014 = vxpose.xlu0.b32.cont [12/16] 0.0, 128
      %2015 = vxpose.xlu0.b32.cont [13/16] 0.0, 128
      %2016 = vxpose.xlu0.b32.cont [14/16] 0.0, 128
      %2017 = vxpose.xlu0.b32.cont [15/16] 0.0, 128
      %2018 = vxpose.xlu0.b32.end [16/16] 0.0, 128
      %v2019 = vpop.trf.xlu0
      %v2020 = vpop.trf.xlu0
      %v2021 = vpop.trf.xlu0
      %v2022 = vpop.trf.xlu0
      %v2023 = vpop.trf.xlu0
      %v2024 = vpop.trf.xlu0
      %v2025 = vpop.trf.xlu0
      %v2026 = vpop.trf.xlu0
      %v2027 = vpop.trf.xlu0
      %v2028 = vpop.trf.xlu0
      %v2029 = vpop.trf.xlu0
      %v2030 = vpop.trf.xlu0
      %v2031 = vpop.trf.xlu0
      %v2032 = vpop.trf.xlu0
      %v2033 = vpop.trf.xlu0
      %v2034 = vpop.trf.xlu0
      %2035 = vxpose.xlu0.b32.start [1/16] %v1853, 128
      %2036 = vxpose.xlu0.b32.cont [2/16] %v1882, 128
      %2037 = vxpose.xlu0.b32.cont [3/16] 0.0, 128
      %2038 = vxpose.xlu0.b32.cont [4/16] 0.0, 128
      %2039 = vxpose.xlu0.b32.cont [5/16] 0.0, 128
      %2040 = vxpose.xlu0.b32.cont [6/16] 0.0, 128
      %2041 = vxpose.xlu0.b32.cont [7/16] 0.0, 128
      %2042 = vxpose.xlu0.b32.cont [8/16] 0.0, 128
      %2043 = vxpose.xlu0.b32.cont [9/16] 0.0, 128
      %2044 = vxpose.xlu0.b32.cont [10/16] 0.0, 128
      %2045 = vxpose.xlu0.b32.cont [11/16] 0.0, 128
      %2046 = vxpose.xlu0.b32.cont [12/16] 0.0, 128
      %2047 = vxpose.xlu0.b32.cont [13/16] 0.0, 128
      %2048 = vxpose.xlu0.b32.cont [14/16] 0.0, 128
      %2049 = vxpose.xlu0.b32.cont [15/16] 0.0, 128
      %2050 = vxpose.xlu0.b32.end [16/16] 0.0, 128
      %v2051 = vpop.trf.xlu0
      %v2052 = vpop.trf.xlu0
      %v2053 = vpop.trf.xlu0
      %v2054 = vpop.trf.xlu0
      %v2055 = vpop.trf.xlu0
      %v2056 = vpop.trf.xlu0
      %v2057 = vpop.trf.xlu0
      %v2058 = vpop.trf.xlu0
      %v2059 = vpop.trf.xlu0
      %v2060 = vpop.trf.xlu0
      %v2061 = vpop.trf.xlu0
      %v2062 = vpop.trf.xlu0
      %v2063 = vpop.trf.xlu0
      %v2064 = vpop.trf.xlu0
      %v2065 = vpop.trf.xlu0
      %v2066 = vpop.trf.xlu0
      %2067 = vxpose.xlu0.b32.start [1/16] %v1854, 128
      %2068 = vxpose.xlu0.b32.cont [2/16] %v1883, 128
      %2069 = vxpose.xlu0.b32.cont [3/16] 0.0, 128
      %2070 = vxpose.xlu0.b32.cont [4/16] 0.0, 128
      %2071 = vxpose.xlu0.b32.cont [5/16] 0.0, 128
      %2072 = vxpose.xlu0.b32.cont [6/16] 0.0, 128
      %2073 = vxpose.xlu0.b32.cont [7/16] 0.0, 128
      %2074 = vxpose.xlu0.b32.cont [8/16] 0.0, 128
      %2075 = vxpose.xlu0.b32.cont [9/16] 0.0, 128
      %2076 = vxpose.xlu0.b32.cont [10/16] 0.0, 128
      %2077 = vxpose.xlu0.b32.cont [11/16] 0.0, 128
      %2078 = vxpose.xlu0.b32.cont [12/16] 0.0, 128
      %2079 = vxpose.xlu0.b32.cont [13/16] 0.0, 128
      %2080 = vxpose.xlu0.b32.cont [14/16] 0.0, 128
      %2081 = vxpose.xlu0.b32.cont [15/16] 0.0, 128
      %2082 = vxpose.xlu0.b32.end [16/16] 0.0, 128
      %v2083 = vpop.trf.xlu0
      %v2084 = vpop.trf.xlu0
      %v2085 = vpop.trf.xlu0
      %v2086 = vpop.trf.xlu0
      %v2087 = vpop.trf.xlu0
      %v2088 = vpop.trf.xlu0
      %v2089 = vpop.trf.xlu0
      %v2090 = vpop.trf.xlu0
      %v2091 = vpop.trf.xlu0
      %v2092 = vpop.trf.xlu0
      %v2093 = vpop.trf.xlu0
      %v2094 = vpop.trf.xlu0
      %v2095 = vpop.trf.xlu0
      %v2096 = vpop.trf.xlu0
      %v2097 = vpop.trf.xlu0
      %v2098 = vpop.trf.xlu0
      %2099 = vxpose.xlu0.b32.start [1/16] %v1855, 128
      %2100 = vxpose.xlu0.b32.cont [2/16] %v1884, 128
      %2101 = vxpose.xlu0.b32.cont [3/16] 0.0, 128
      %2102 = vxpose.xlu0.b32.cont [4/16] 0.0, 128
      %2103 = vxpose.xlu0.b32.cont [5/16] 0.0, 128
      %2104 = vxpose.xlu0.b32.cont [6/16] 0.0, 128
      %2105 = vxpose.xlu0.b32.cont [7/16] 0.0, 128
      %2106 = vxpose.xlu0.b32.cont [8/16] 0.0, 128
      %2107 = vxpose.xlu0.b32.cont [9/16] 0.0, 128
      %2108 = vxpose.xlu0.b32.cont [10/16] 0.0, 128
      %2109 = vxpose.xlu0.b32.cont [11/16] 0.0, 128
      %2110 = vxpose.xlu0.b32.cont [12/16] 0.0, 128
      %2111 = vxpose.xlu0.b32.cont [13/16] 0.0, 128
      %2112 = vxpose.xlu0.b32.cont [14/16] 0.0, 128
      %2113 = vxpose.xlu0.b32.cont [15/16] 0.0, 128
      %2114 = vxpose.xlu0.b32.end [16/16] 0.0, 128
      %v2115 = vpop.trf.xlu0
      %v2116 = vpop.trf.xlu0
      %v2117 = vpop.trf.xlu0
      %v2118 = vpop.trf.xlu0
      %v2119 = vpop.trf.xlu0
      %v2120 = vpop.trf.xlu0
      %v2121 = vpop.trf.xlu0
      %v2122 = vpop.trf.xlu0
      %v2123 = vpop.trf.xlu0
      %v2124 = vpop.trf.xlu0
      %v2125 = vpop.trf.xlu0
      %v2126 = vpop.trf.xlu0
      %v2127 = vpop.trf.xlu0
      %v2128 = vpop.trf.xlu0
      %v2129 = vpop.trf.xlu0
      %v2130 = vpop.trf.xlu0
      %2131 = vxpose.xlu0.b32.start [1/16] %v1856, 128
      %2132 = vxpose.xlu0.b32.cont [2/16] %v1885, 128
      %2133 = vxpose.xlu0.b32.cont [3/16] 0.0, 128
      %2134 = vxpose.xlu0.b32.cont [4/16] 0.0, 128
      %2135 = vxpose.xlu0.b32.cont [5/16] 0.0, 128
      %2136 = vxpose.xlu0.b32.cont [6/16] 0.0, 128
      %2137 = vxpose.xlu0.b32.cont [7/16] 0.0, 128
      %2138 = vxpose.xlu0.b32.cont [8/16] 0.0, 128
      %2139 = vxpose.xlu0.b32.cont [9/16] 0.0, 128
      %2140 = vxpose.xlu0.b32.cont [10/16] 0.0, 128
      %2141 = vxpose.xlu0.b32.cont [11/16] 0.0, 128
      %2142 = vxpose.xlu0.b32.cont [12/16] 0.0, 128
      %2143 = vxpose.xlu0.b32.cont [13/16] 0.0, 128
      %2144 = vxpose.xlu0.b32.cont [14/16] 0.0, 128
      %2145 = vxpose.xlu0.b32.cont [15/16] 0.0, 128
      %2146 = vxpose.xlu0.b32.end [16/16] 0.0, 128
      %v2147 = vpop.trf.xlu0
      %v2148 = vpop.trf.xlu0
      %v2149 = vpop.trf.xlu0
      %v2150 = vpop.trf.xlu0
      %v2151 = vpop.trf.xlu0
      %v2152 = vpop.trf.xlu0
      %v2153 = vpop.trf.xlu0
      %v2154 = vpop.trf.xlu0
      %v2155 = vpop.trf.xlu0
      %v2156 = vpop.trf.xlu0
      %v2157 = vpop.trf.xlu0
      %v2158 = vpop.trf.xlu0
      %v2159 = vpop.trf.xlu0
      %v2160 = vpop.trf.xlu0
      %v2161 = vpop.trf.xlu0
      %v2162 = vpop.trf.xlu0
      %2163 = vxpose.xlu0.b32.start [1/16] %v1857, 128
      %2164 = vxpose.xlu0.b32.cont [2/16] %v1886, 128
      %2165 = vxpose.xlu0.b32.cont [3/16] 0.0, 128
      %2166 = vxpose.xlu0.b32.cont [4/16] 0.0, 128
      %2167 = vxpose.xlu0.b32.cont [5/16] 0.0, 128
      %2168 = vxpose.xlu0.b32.cont [6/16] 0.0, 128
      %2169 = vxpose.xlu0.b32.cont [7/16] 0.0, 128
      %2170 = vxpose.xlu0.b32.cont [8/16] 0.0, 128
      %2171 = vxpose.xlu0.b32.cont [9/16] 0.0, 128
      %2172 = vxpose.xlu0.b32.cont [10/16] 0.0, 128
      %2173 = vxpose.xlu0.b32.cont [11/16] 0.0, 128
      %2174 = vxpose.xlu0.b32.cont [12/16] 0.0, 128
      %2175 = vxpose.xlu0.b32.cont [13/16] 0.0, 128
      %2176 = vxpose.xlu0.b32.cont [14/16] 0.0, 128
      %2177 = vxpose.xlu0.b32.cont [15/16] 0.0, 128
      %2178 = vxpose.xlu0.b32.end [16/16] 0.0, 128
      %v2179 = vpop.trf.xlu0
      %v2180 = vpop.trf.xlu0
      %v2181 = vpop.trf.xlu0
      %v2182 = vpop.trf.xlu0
      %v2183 = vpop.trf.xlu0
      %v2184 = vpop.trf.xlu0
      %v2185 = vpop.trf.xlu0
      %v2186 = vpop.trf.xlu0
      %v2187 = vpop.trf.xlu0
      %v2188 = vpop.trf.xlu0
      %v2189 = vpop.trf.xlu0
      %v2190 = vpop.trf.xlu0
      %v2191 = vpop.trf.xlu0
      %v2192 = vpop.trf.xlu0
      %v2193 = vpop.trf.xlu0
      %v2194 = vpop.trf.xlu0
      %2195 = vxpose.xlu0.b32.start [1/16] %v1858, 128
      %2196 = vxpose.xlu0.b32.cont [2/16] %v1887, 128
      %2197 = vxpose.xlu0.b32.cont [3/16] 0.0, 128
      %2198 = vxpose.xlu0.b32.cont [4/16] 0.0, 128
      %2199 = vxpose.xlu0.b32.cont [5/16] 0.0, 128
      %2200 = vxpose.xlu0.b32.cont [6/16] 0.0, 128
      %2201 = vxpose.xlu0.b32.cont [7/16] 0.0, 128
      %2202 = vxpose.xlu0.b32.cont [8/16] 0.0, 128
      %2203 = vxpose.xlu0.b32.cont [9/16] 0.0, 128
      %2204 = vxpose.xlu0.b32.cont [10/16] 0.0, 128
      %2205 = vxpose.xlu0.b32.cont [11/16] 0.0, 128
      %2206 = vxpose.xlu0.b32.cont [12/16] 0.0, 128
      %2207 = vxpose.xlu0.b32.cont [13/16] 0.0, 128
      %2208 = vxpose.xlu0.b32.cont [14/16] 0.0, 128
      %2209 = vxpose.xlu0.b32.cont [15/16] 0.0, 128
      %2210 = vxpose.xlu0.b32.end [16/16] 0.0, 128
      %v2211 = vpop.trf.xlu0
      %v2212 = vpop.trf.xlu0
      %v2213 = vpop.trf.xlu0
      %v2214 = vpop.trf.xlu0
      %v2215 = vpop.trf.xlu0
      %v2216 = vpop.trf.xlu0
      %v2217 = vpop.trf.xlu0
      %v2218 = vpop.trf.xlu0
      %v2219 = vpop.trf.xlu0
      %v2220 = vpop.trf.xlu0
      %v2221 = vpop.trf.xlu0
      %v2222 = vpop.trf.xlu0
      %v2223 = vpop.trf.xlu0
      %v2224 = vpop.trf.xlu0
      %v2225 = vpop.trf.xlu0
      %v2226 = vpop.trf.xlu0
      %2227 = vxpose.xlu0.b32.start [1/16] %v1859, 128
      %2228 = vxpose.xlu0.b32.cont [2/16] %v1888, 128
      %2229 = vxpose.xlu0.b32.cont [3/16] 0.0, 128
      %2230 = vxpose.xlu0.b32.cont [4/16] 0.0, 128
      %2231 = vxpose.xlu0.b32.cont [5/16] 0.0, 128
      %2232 = vxpose.xlu0.b32.cont [6/16] 0.0, 128
      %2233 = vxpose.xlu0.b32.cont [7/16] 0.0, 128
      %2234 = vxpose.xlu0.b32.cont [8/16] 0.0, 128
      %2235 = vxpose.xlu0.b32.cont [9/16] 0.0, 128
      %2236 = vxpose.xlu0.b32.cont [10/16] 0.0, 128
      %2237 = vxpose.xlu0.b32.cont [11/16] 0.0, 128
      %2238 = vxpose.xlu0.b32.cont [12/16] 0.0, 128
      %2239 = vxpose.xlu0.b32.cont [13/16] 0.0, 128
      %2240 = vxpose.xlu0.b32.cont [14/16] 0.0, 128
      %2241 = vxpose.xlu0.b32.cont [15/16] 0.0, 128
      %2242 = vxpose.xlu0.b32.end [16/16] 0.0, 128
      %v2243 = vpop.trf.xlu0
      %v2244 = vpop.trf.xlu0
      %v2245 = vpop.trf.xlu0
      %v2246 = vpop.trf.xlu0
      %v2247 = vpop.trf.xlu0
      %v2248 = vpop.trf.xlu0
      %v2249 = vpop.trf.xlu0
      %v2250 = vpop.trf.xlu0
      %v2251 = vpop.trf.xlu0
      %v2252 = vpop.trf.xlu0
      %v2253 = vpop.trf.xlu0
      %v2254 = vpop.trf.xlu0
      %v2255 = vpop.trf.xlu0
      %v2256 = vpop.trf.xlu0
      %v2257 = vpop.trf.xlu0
      %v2258 = vpop.trf.xlu0
      %2259 = vxpose.xlu0.b32.start [1/16] %v1860, 128
      %2260 = vxpose.xlu0.b32.cont [2/16] %v1889, 128
      %2261 = vxpose.xlu0.b32.cont [3/16] 0.0, 128
      %2262 = vxpose.xlu0.b32.cont [4/16] 0.0, 128
      %2263 = vxpose.xlu0.b32.cont [5/16] 0.0, 128
      %2264 = vxpose.xlu0.b32.cont [6/16] 0.0, 128
      %2265 = vxpose.xlu0.b32.cont [7/16] 0.0, 128
      %2266 = vxpose.xlu0.b32.cont [8/16] 0.0, 128
      %2267 = vxpose.xlu0.b32.cont [9/16] 0.0, 128
      %2268 = vxpose.xlu0.b32.cont [10/16] 0.0, 128
      %2269 = vxpose.xlu0.b32.cont [11/16] 0.0, 128
      %2270 = vxpose.xlu0.b32.cont [12/16] 0.0, 128
      %2271 = vxpose.xlu0.b32.cont [13/16] 0.0, 128
      %2272 = vxpose.xlu0.b32.cont [14/16] 0.0, 128
      %2273 = vxpose.xlu0.b32.cont [15/16] 0.0, 128
      %2274 = vxpose.xlu0.b32.end [16/16] 0.0, 128
      %v2275 = vpop.trf.xlu0
      %v2276 = vpop.trf.xlu0
      %v2277 = vpop.trf.xlu0
      %v2278 = vpop.trf.xlu0
      %v2279 = vpop.trf.xlu0
      %v2280 = vpop.trf.xlu0
      %v2281 = vpop.trf.xlu0
      %v2282 = vpop.trf.xlu0
      %v2283 = vpop.trf.xlu0
      %v2284 = vpop.trf.xlu0
      %v2285 = vpop.trf.xlu0
      %v2286 = vpop.trf.xlu0
      %v2287 = vpop.trf.xlu0
      %v2288 = vpop.trf.xlu0
      %v2289 = vpop.trf.xlu0
      %v2290 = vpop.trf.xlu0
      %2291 = vxpose.xlu0.b32.start [1/16] %v1861, 128
      %2292 = vxpose.xlu0.b32.cont [2/16] %v1890, 128
      %2293 = vxpose.xlu0.b32.cont [3/16] 0.0, 128
      %2294 = vxpose.xlu0.b32.cont [4/16] 0.0, 128
      %2295 = vxpose.xlu0.b32.cont [5/16] 0.0, 128
      %2296 = vxpose.xlu0.b32.cont [6/16] 0.0, 128
      %2297 = vxpose.xlu0.b32.cont [7/16] 0.0, 128
      %2298 = vxpose.xlu0.b32.cont [8/16] 0.0, 128
      %2299 = vxpose.xlu0.b32.cont [9/16] 0.0, 128
      %2300 = vxpose.xlu0.b32.cont [10/16] 0.0, 128
      %2301 = vxpose.xlu0.b32.cont [11/16] 0.0, 128
      %2302 = vxpose.xlu0.b32.cont [12/16] 0.0, 128
      %2303 = vxpose.xlu0.b32.cont [13/16] 0.0, 128
      %2304 = vxpose.xlu0.b32.cont [14/16] 0.0, 128
      %2305 = vxpose.xlu0.b32.cont [15/16] 0.0, 128
      %2306 = vxpose.xlu0.b32.end [16/16] 0.0, 128
      %v2307 = vpop.trf.xlu0
      %v2308 = vpop.trf.xlu0
      %v2309 = vpop.trf.xlu0
      %v2310 = vpop.trf.xlu0
      %v2311 = vpop.trf.xlu0
      %v2312 = vpop.trf.xlu0
      %v2313 = vpop.trf.xlu0
      %v2314 = vpop.trf.xlu0
      %v2315 = vpop.trf.xlu0
      %v2316 = vpop.trf.xlu0
      %v2317 = vpop.trf.xlu0
      %v2318 = vpop.trf.xlu0
      %v2319 = vpop.trf.xlu0
      %v2320 = vpop.trf.xlu0
      %v2321 = vpop.trf.xlu0
      %v2322 = vpop.trf.xlu0
      %2323 = vxpose.xlu0.b32.start [1/16] %v1862, 128
      %2324 = vxpose.xlu0.b32.cont [2/16] %v1891, 128
      %2325 = vxpose.xlu0.b32.cont [3/16] 0.0, 128
      %2326 = vxpose.xlu0.b32.cont [4/16] 0.0, 128
      %2327 = vxpose.xlu0.b32.cont [5/16] 0.0, 128
      %2328 = vxpose.xlu0.b32.cont [6/16] 0.0, 128
      %2329 = vxpose.xlu0.b32.cont [7/16] 0.0, 128
      %2330 = vxpose.xlu0.b32.cont [8/16] 0.0, 128
      %2331 = vxpose.xlu0.b32.cont [9/16] 0.0, 128
      %2332 = vxpose.xlu0.b32.cont [10/16] 0.0, 128
      %2333 = vxpose.xlu0.b32.cont [11/16] 0.0, 128
      %2334 = vxpose.xlu0.b32.cont [12/16] 0.0, 128
      %2335 = vxpose.xlu0.b32.cont [13/16] 0.0, 128
      %2336 = vxpose.xlu0.b32.cont [14/16] 0.0, 128
      %2337 = vxpose.xlu0.b32.cont [15/16] 0.0, 128
      %2338 = vxpose.xlu0.b32.end [16/16] 0.0, 128
      %v2339 = vpop.trf.xlu0
      %v2340 = vpop.trf.xlu0
      %v2341 = vpop.trf.xlu0
      %v2342 = vpop.trf.xlu0
      %v2343 = vpop.trf.xlu0
      %v2344 = vpop.trf.xlu0
      %v2345 = vpop.trf.xlu0
      %v2346 = vpop.trf.xlu0
      %v2347 = vpop.trf.xlu0
      %v2348 = vpop.trf.xlu0
      %v2349 = vpop.trf.xlu0
      %v2350 = vpop.trf.xlu0
      %v2351 = vpop.trf.xlu0
      %v2352 = vpop.trf.xlu0
      %v2353 = vpop.trf.xlu0
      %v2354 = vpop.trf.xlu0
      %2355 = vxpose.xlu0.b32.start [1/16] %v1863, 128
      %2356 = vxpose.xlu0.b32.cont [2/16] %v1892, 128
      %2357 = vxpose.xlu0.b32.cont [3/16] 0.0, 128
      %2358 = vxpose.xlu0.b32.cont [4/16] 0.0, 128
      %2359 = vxpose.xlu0.b32.cont [5/16] 0.0, 128
      %2360 = vxpose.xlu0.b32.cont [6/16] 0.0, 128
      %2361 = vxpose.xlu0.b32.cont [7/16] 0.0, 128
      %2362 = vxpose.xlu0.b32.cont [8/16] 0.0, 128
      %2363 = vxpose.xlu0.b32.cont [9/16] 0.0, 128
      %2364 = vxpose.xlu0.b32.cont [10/16] 0.0, 128
      %2365 = vxpose.xlu0.b32.cont [11/16] 0.0, 128
      %2366 = vxpose.xlu0.b32.cont [12/16] 0.0, 128
      %2367 = vxpose.xlu0.b32.cont [13/16] 0.0, 128
      %2368 = vxpose.xlu0.b32.cont [14/16] 0.0, 128
      %2369 = vxpose.xlu0.b32.cont [15/16] 0.0, 128
      %2370 = vxpose.xlu0.b32.end [16/16] 0.0, 128
      %v2371 = vpop.trf.xlu0
      %v2372 = vpop.trf.xlu0
      %v2373 = vpop.trf.xlu0
      %v2374 = vpop.trf.xlu0
      %v2375 = vpop.trf.xlu0
      %v2376 = vpop.trf.xlu0
      %v2377 = vpop.trf.xlu0
      %v2378 = vpop.trf.xlu0
      %v2379 = vpop.trf.xlu0
      %v2380 = vpop.trf.xlu0
      %v2381 = vpop.trf.xlu0
      %v2382 = vpop.trf.xlu0
      %v2383 = vpop.trf.xlu0
      %v2384 = vpop.trf.xlu0
      %v2385 = vpop.trf.xlu0
      %v2386 = vpop.trf.xlu0
      %2387 = vxpose.xlu0.b32.start [1/16] %v1864, 128
      %2388 = vxpose.xlu0.b32.cont [2/16] %v1893, 128
      %2389 = vxpose.xlu0.b32.cont [3/16] 0.0, 128
      %2390 = vxpose.xlu0.b32.cont [4/16] 0.0, 128
      %2391 = vxpose.xlu0.b32.cont [5/16] 0.0, 128
      %2392 = vxpose.xlu0.b32.cont [6/16] 0.0, 128
      %2393 = vxpose.xlu0.b32.cont [7/16] 0.0, 128
      %2394 = vxpose.xlu0.b32.cont [8/16] 0.0, 128
      %2395 = vxpose.xlu0.b32.cont [9/16] 0.0, 128
      %2396 = vxpose.xlu0.b32.cont [10/16] 0.0, 128
      %2397 = vxpose.xlu0.b32.cont [11/16] 0.0, 128
      %2398 = vxpose.xlu0.b32.cont [12/16] 0.0, 128
      %2399 = vxpose.xlu0.b32.cont [13/16] 0.0, 128
      %2400 = vxpose.xlu0.b32.cont [14/16] 0.0, 128
      %2401 = vxpose.xlu0.b32.cont [15/16] 0.0, 128
      %2402 = vxpose.xlu0.b32.end [16/16] 0.0, 128
      %v2403 = vpop.trf.xlu0
      %v2404 = vpop.trf.xlu0
      %v2405 = vpop.trf.xlu0
      %v2406 = vpop.trf.xlu0
      %v2407 = vpop.trf.xlu0
      %v2408 = vpop.trf.xlu0
      %v2409 = vpop.trf.xlu0
      %v2410 = vpop.trf.xlu0
      %v2411 = vpop.trf.xlu0
      %v2412 = vpop.trf.xlu0
      %v2413 = vpop.trf.xlu0
      %v2414 = vpop.trf.xlu0
      %v2415 = vpop.trf.xlu0
      %v2416 = vpop.trf.xlu0
      %v2417 = vpop.trf.xlu0
      %v2418 = vpop.trf.xlu0
      %2419 = vxpose.xlu0.b32.start [1/16] %v1865, 128
      %2420 = vxpose.xlu0.b32.cont [2/16] %v1894, 128
      %2421 = vxpose.xlu0.b32.cont [3/16] 0.0, 128
      %2422 = vxpose.xlu0.b32.cont [4/16] 0.0, 128
      %2423 = vxpose.xlu0.b32.cont [5/16] 0.0, 128
      %2424 = vxpose.xlu0.b32.cont [6/16] 0.0, 128
      %2425 = vxpose.xlu0.b32.cont [7/16] 0.0, 128
      %2426 = vxpose.xlu0.b32.cont [8/16] 0.0, 128
      %2427 = vxpose.xlu0.b32.cont [9/16] 0.0, 128
      %2428 = vxpose.xlu0.b32.cont [10/16] 0.0, 128
      %2429 = vxpose.xlu0.b32.cont [11/16] 0.0, 128
      %2430 = vxpose.xlu0.b32.cont [12/16] 0.0, 128
      %2431 = vxpose.xlu0.b32.cont [13/16] 0.0, 128
      %2432 = vxpose.xlu0.b32.cont [14/16] 0.0, 128
      %2433 = vxpose.xlu0.b32.cont [15/16] 0.0, 128
      %2434 = vxpose.xlu0.b32.end [16/16] 0.0, 128
      %v2435 = vpop.trf.xlu0
      %v2436 = vpop.trf.xlu0
      %v2437 = vpop.trf.xlu0
      %v2438 = vpop.trf.xlu0
      %v2439 = vpop.trf.xlu0
      %v2440 = vpop.trf.xlu0
      %v2441 = vpop.trf.xlu0
      %v2442 = vpop.trf.xlu0
      %v2443 = vpop.trf.xlu0
      %v2444 = vpop.trf.xlu0
      %v2445 = vpop.trf.xlu0
      %v2446 = vpop.trf.xlu0
      %v2447 = vpop.trf.xlu0
      %v2448 = vpop.trf.xlu0
      %v2449 = vpop.trf.xlu0
      %v2450 = vpop.trf.xlu0
      %2451 = vxpose.xlu0.b32.start [1/16] %v1866, 128
      %2452 = vxpose.xlu0.b32.cont [2/16] %v1895, 128
      %2453 = vxpose.xlu0.b32.cont [3/16] 0.0, 128
      %2454 = vxpose.xlu0.b32.cont [4/16] 0.0, 128
      %2455 = vxpose.xlu0.b32.cont [5/16] 0.0, 128
      %2456 = vxpose.xlu0.b32.cont [6/16] 0.0, 128
      %2457 = vxpose.xlu0.b32.cont [7/16] 0.0, 128
      %2458 = vxpose.xlu0.b32.cont [8/16] 0.0, 128
      %2459 = vxpose.xlu0.b32.cont [9/16] 0.0, 128
      %2460 = vxpose.xlu0.b32.cont [10/16] 0.0, 128
      %2461 = vxpose.xlu0.b32.cont [11/16] 0.0, 128
      %2462 = vxpose.xlu0.b32.cont [12/16] 0.0, 128
      %2463 = vxpose.xlu0.b32.cont [13/16] 0.0, 128
      %2464 = vxpose.xlu0.b32.cont [14/16] 0.0, 128
      %2465 = vxpose.xlu0.b32.cont [15/16] 0.0, 128
      %2466 = vxpose.xlu0.b32.end [16/16] 0.0, 128
      %v2467 = vpop.trf.xlu0
      %v2468 = vpop.trf.xlu0
      %v2469 = vpop.trf.xlu0
      %v2470 = vpop.trf.xlu0
      %v2471 = vpop.trf.xlu0
      %v2472 = vpop.trf.xlu0
      %v2473 = vpop.trf.xlu0
      %v2474 = vpop.trf.xlu0
      %v2475 = vpop.trf.xlu0
      %v2476 = vpop.trf.xlu0
      %v2477 = vpop.trf.xlu0
      %v2478 = vpop.trf.xlu0
      %v2479 = vpop.trf.xlu0
      %v2480 = vpop.trf.xlu0
      %v2481 = vpop.trf.xlu0
      %v2482 = vpop.trf.xlu0
      %2483 = vxpose.xlu0.b32.start [1/16] %v1867, 128
      %2484 = vxpose.xlu0.b32.cont [2/16] %v1896, 128
      %2485 = vxpose.xlu0.b32.cont [3/16] 0.0, 128
      %2486 = vxpose.xlu0.b32.cont [4/16] 0.0, 128
      %2487 = vxpose.xlu0.b32.cont [5/16] 0.0, 128
      %2488 = vxpose.xlu0.b32.cont [6/16] 0.0, 128
      %2489 = vxpose.xlu0.b32.cont [7/16] 0.0, 128
      %2490 = vxpose.xlu0.b32.cont [8/16] 0.0, 128
      %2491 = vxpose.xlu0.b32.cont [9/16] 0.0, 128
      %2492 = vxpose.xlu0.b32.cont [10/16] 0.0, 128
      %2493 = vxpose.xlu0.b32.cont [11/16] 0.0, 128
      %2494 = vxpose.xlu0.b32.cont [12/16] 0.0, 128
      %2495 = vxpose.xlu0.b32.cont [13/16] 0.0, 128
      %2496 = vxpose.xlu0.b32.cont [14/16] 0.0, 128
      %2497 = vxpose.xlu0.b32.cont [15/16] 0.0, 128
      %2498 = vxpose.xlu0.b32.end [16/16] 0.0, 128
      %v2499 = vpop.trf.xlu0
      %v2500 = vpop.trf.xlu0
      %v2501 = vpop.trf.xlu0
      %v2502 = vpop.trf.xlu0
      %v2503 = vpop.trf.xlu0
      %v2504 = vpop.trf.xlu0
      %v2505 = vpop.trf.xlu0
      %v2506 = vpop.trf.xlu0
      %v2507 = vpop.trf.xlu0
      %v2508 = vpop.trf.xlu0
      %v2509 = vpop.trf.xlu0
      %v2510 = vpop.trf.xlu0
      %v2511 = vpop.trf.xlu0
      %v2512 = vpop.trf.xlu0
      %v2513 = vpop.trf.xlu0
      %v2514 = vpop.trf.xlu0
      %2515 = vxpose.xlu0.b32.start [1/16] %v1868, 128
      %2516 = vxpose.xlu0.b32.cont [2/16] %v1897, 128
      %2517 = vxpose.xlu0.b32.cont [3/16] 0.0, 128
      %2518 = vxpose.xlu0.b32.cont [4/16] 0.0, 128
      %2519 = vxpose.xlu0.b32.cont [5/16] 0.0, 128
      %2520 = vxpose.xlu0.b32.cont [6/16] 0.0, 128
      %2521 = vxpose.xlu0.b32.cont [7/16] 0.0, 128
      %2522 = vxpose.xlu0.b32.cont [8/16] 0.0, 128
      %2523 = vxpose.xlu0.b32.cont [9/16] 0.0, 128
      %2524 = vxpose.xlu0.b32.cont [10/16] 0.0, 128
      %2525 = vxpose.xlu0.b32.cont [11/16] 0.0, 128
      %2526 = vxpose.xlu0.b32.cont [12/16] 0.0, 128
      %2527 = vxpose.xlu0.b32.cont [13/16] 0.0, 128
      %2528 = vxpose.xlu0.b32.cont [14/16] 0.0, 128
      %2529 = vxpose.xlu0.b32.cont [15/16] 0.0, 128
      %2530 = vxpose.xlu0.b32.end [16/16] 0.0, 128
      %v2531 = vpop.trf.xlu0
      %v2532 = vpop.trf.xlu0
      %v2533 = vpop.trf.xlu0
      %v2534 = vpop.trf.xlu0
      %v2535 = vpop.trf.xlu0
      %v2536 = vpop.trf.xlu0
      %v2537 = vpop.trf.xlu0
      %v2538 = vpop.trf.xlu0
      %v2539 = vpop.trf.xlu0
      %v2540 = vpop.trf.xlu0
      %v2541 = vpop.trf.xlu0
      %v2542 = vpop.trf.xlu0
      %v2543 = vpop.trf.xlu0
      %v2544 = vpop.trf.xlu0
      %v2545 = vpop.trf.xlu0
      %v2546 = vpop.trf.xlu0
      %2547 = vxpose.xlu0.b32.start [1/16] %v1869, 128
      %2548 = vxpose.xlu0.b32.cont [2/16] %v1898, 128
      %2549 = vxpose.xlu0.b32.cont [3/16] 0.0, 128
      %2550 = vxpose.xlu0.b32.cont [4/16] 0.0, 128
      %2551 = vxpose.xlu0.b32.cont [5/16] 0.0, 128
      %2552 = vxpose.xlu0.b32.cont [6/16] 0.0, 128
      %2553 = vxpose.xlu0.b32.cont [7/16] 0.0, 128
      %2554 = vxpose.xlu0.b32.cont [8/16] 0.0, 128
      %2555 = vxpose.xlu0.b32.cont [9/16] 0.0, 128
      %2556 = vxpose.xlu0.b32.cont [10/16] 0.0, 128
      %2557 = vxpose.xlu0.b32.cont [11/16] 0.0, 128
      %2558 = vxpose.xlu0.b32.cont [12/16] 0.0, 128
      %2559 = vxpose.xlu0.b32.cont [13/16] 0.0, 128
      %2560 = vxpose.xlu0.b32.cont [14/16] 0.0, 128
      %2561 = vxpose.xlu0.b32.cont [15/16] 0.0, 128
      %2562 = vxpose.xlu0.b32.end [16/16] 0.0, 128
      %v2563 = vpop.trf.xlu0
      %v2564 = vpop.trf.xlu0
      %v2565 = vpop.trf.xlu0
      %v2566 = vpop.trf.xlu0
      %v2567 = vpop.trf.xlu0
      %v2568 = vpop.trf.xlu0
      %v2569 = vpop.trf.xlu0
      %v2570 = vpop.trf.xlu0
      %v2571 = vpop.trf.xlu0
      %v2572 = vpop.trf.xlu0
      %v2573 = vpop.trf.xlu0
      %v2574 = vpop.trf.xlu0
      %v2575 = vpop.trf.xlu0
      %v2576 = vpop.trf.xlu0
      %v2577 = vpop.trf.xlu0
      %v2578 = vpop.trf.xlu0
      %2579 = vxpose.xlu0.b32.start [1/16] %v1870, 128
      %2580 = vxpose.xlu0.b32.cont [2/16] %v1899, 128
      %2581 = vxpose.xlu0.b32.cont [3/16] 0.0, 128
      %2582 = vxpose.xlu0.b32.cont [4/16] 0.0, 128
      %2583 = vxpose.xlu0.b32.cont [5/16] 0.0, 128
      %2584 = vxpose.xlu0.b32.cont [6/16] 0.0, 128
      %2585 = vxpose.xlu0.b32.cont [7/16] 0.0, 128
      %2586 = vxpose.xlu0.b32.cont [8/16] 0.0, 128
      %2587 = vxpose.xlu0.b32.cont [9/16] 0.0, 128
      %2588 = vxpose.xlu0.b32.cont [10/16] 0.0, 128
      %2589 = vxpose.xlu0.b32.cont [11/16] 0.0, 128
      %2590 = vxpose.xlu0.b32.cont [12/16] 0.0, 128
      %2591 = vxpose.xlu0.b32.cont [13/16] 0.0, 128
      %2592 = vxpose.xlu0.b32.cont [14/16] 0.0, 128
      %2593 = vxpose.xlu0.b32.cont [15/16] 0.0, 128
      %2594 = vxpose.xlu0.b32.end [16/16] 0.0, 128
      %v2595 = vpop.trf.xlu0
      %v2596 = vpop.trf.xlu0
      %v2597 = vpop.trf.xlu0
      %v2598 = vpop.trf.xlu0
      %v2599 = vpop.trf.xlu0
      %v2600 = vpop.trf.xlu0
      %v2601 = vpop.trf.xlu0
      %v2602 = vpop.trf.xlu0
      %v2603 = vpop.trf.xlu0
      %v2604 = vpop.trf.xlu0
      %v2605 = vpop.trf.xlu0
      %v2606 = vpop.trf.xlu0
      %v2607 = vpop.trf.xlu0
      %v2608 = vpop.trf.xlu0
      %v2609 = vpop.trf.xlu0
      %v2610 = vpop.trf.xlu0
      %2611 = vxpose.xlu0.b32.start [1/16] %v1871, 128
      %2612 = vxpose.xlu0.b32.cont [2/16] %v1900, 128
      %2613 = vxpose.xlu0.b32.cont [3/16] 0.0, 128
      %2614 = vxpose.xlu0.b32.cont [4/16] 0.0, 128
      %2615 = vxpose.xlu0.b32.cont [5/16] 0.0, 128
      %2616 = vxpose.xlu0.b32.cont [6/16] 0.0, 128
      %2617 = vxpose.xlu0.b32.cont [7/16] 0.0, 128
      %2618 = vxpose.xlu0.b32.cont [8/16] 0.0, 128
      %2619 = vxpose.xlu0.b32.cont [9/16] 0.0, 128
      %2620 = vxpose.xlu0.b32.cont [10/16] 0.0, 128
      %2621 = vxpose.xlu0.b32.cont [11/16] 0.0, 128
      %2622 = vxpose.xlu0.b32.cont [12/16] 0.0, 128
      %2623 = vxpose.xlu0.b32.cont [13/16] 0.0, 128
      %2624 = vxpose.xlu0.b32.cont [14/16] 0.0, 128
      %2625 = vxpose.xlu0.b32.cont [15/16] 0.0, 128
      %2626 = vxpose.xlu0.b32.end [16/16] 0.0, 128
      %v2627 = vpop.trf.xlu0
      %v2628 = vpop.trf.xlu0
      %v2629 = vpop.trf.xlu0
      %v2630 = vpop.trf.xlu0
      %v2631 = vpop.trf.xlu0
      %v2632 = vpop.trf.xlu0
      %v2633 = vpop.trf.xlu0
      %v2634 = vpop.trf.xlu0
      %v2635 = vpop.trf.xlu0
      %v2636 = vpop.trf.xlu0
      %v2637 = vpop.trf.xlu0
      %v2638 = vpop.trf.xlu0
      %v2639 = vpop.trf.xlu0
      %v2640 = vpop.trf.xlu0
      %v2641 = vpop.trf.xlu0
      %v2642 = vpop.trf.xlu0
      %2643 = vxpose.xlu0.b32.start [1/16] %v1872, 128
      %2644 = vxpose.xlu0.b32.cont [2/16] %v1901, 128
      %2645 = vxpose.xlu0.b32.cont [3/16] 0.0, 128
      %2646 = vxpose.xlu0.b32.cont [4/16] 0.0, 128
      %2647 = vxpose.xlu0.b32.cont [5/16] 0.0, 128
      %2648 = vxpose.xlu0.b32.cont [6/16] 0.0, 128
      %2649 = vxpose.xlu0.b32.cont [7/16] 0.0, 128
      %2650 = vxpose.xlu0.b32.cont [8/16] 0.0, 128
      %2651 = vxpose.xlu0.b32.cont [9/16] 0.0, 128
      %2652 = vxpose.xlu0.b32.cont [10/16] 0.0, 128
      %2653 = vxpose.xlu0.b32.cont [11/16] 0.0, 128
      %2654 = vxpose.xlu0.b32.cont [12/16] 0.0, 128
      %2655 = vxpose.xlu0.b32.cont [13/16] 0.0, 128
      %2656 = vxpose.xlu0.b32.cont [14/16] 0.0, 128
      %2657 = vxpose.xlu0.b32.cont [15/16] 0.0, 128
      %2658 = vxpose.xlu0.b32.end [16/16] 0.0, 128
      %v2659 = vpop.trf.xlu0
      %v2660 = vpop.trf.xlu0
      %v2661 = vpop.trf.xlu0
      %v2662 = vpop.trf.xlu0
      %v2663 = vpop.trf.xlu0
      %v2664 = vpop.trf.xlu0
      %v2665 = vpop.trf.xlu0
      %v2666 = vpop.trf.xlu0
      %v2667 = vpop.trf.xlu0
      %v2668 = vpop.trf.xlu0
      %v2669 = vpop.trf.xlu0
      %v2670 = vpop.trf.xlu0
      %v2671 = vpop.trf.xlu0
      %v2672 = vpop.trf.xlu0
      %v2673 = vpop.trf.xlu0
      %v2674 = vpop.trf.xlu0
      %2675 = vxpose.xlu0.b32.start [1/16] %v1873, 128
      %2676 = vxpose.xlu0.b32.cont [2/16] %v1902, 128
      %2677 = vxpose.xlu0.b32.cont [3/16] 0.0, 128
      %2678 = vxpose.xlu0.b32.cont [4/16] 0.0, 128
      %2679 = vxpose.xlu0.b32.cont [5/16] 0.0, 128
      %2680 = vxpose.xlu0.b32.cont [6/16] 0.0, 128
      %2681 = vxpose.xlu0.b32.cont [7/16] 0.0, 128
      %2682 = vxpose.xlu0.b32.cont [8/16] 0.0, 128
      %2683 = vxpose.xlu0.b32.cont [9/16] 0.0, 128
      %2684 = vxpose.xlu0.b32.cont [10/16] 0.0, 128
      %2685 = vxpose.xlu0.b32.cont [11/16] 0.0, 128
      %2686 = vxpose.xlu0.b32.cont [12/16] 0.0, 128
      %2687 = vxpose.xlu0.b32.cont [13/16] 0.0, 128
      %2688 = vxpose.xlu0.b32.cont [14/16] 0.0, 128
      %2689 = vxpose.xlu0.b32.cont [15/16] 0.0, 128
      %2690 = vxpose.xlu0.b32.end [16/16] 0.0, 128
      %v2691 = vpop.trf.xlu0
      %v2692 = vpop.trf.xlu0
      %v2693 = vpop.trf.xlu0
      %v2694 = vpop.trf.xlu0
      %v2695 = vpop.trf.xlu0
      %v2696 = vpop.trf.xlu0
      %v2697 = vpop.trf.xlu0
      %v2698 = vpop.trf.xlu0
      %v2699 = vpop.trf.xlu0
      %v2700 = vpop.trf.xlu0
      %v2701 = vpop.trf.xlu0
      %v2702 = vpop.trf.xlu0
      %v2703 = vpop.trf.xlu0
      %v2704 = vpop.trf.xlu0
      %v2705 = vpop.trf.xlu0
      %v2706 = vpop.trf.xlu0
      %2707 = vxpose.xlu0.b32.start [1/16] %v1874, 128
      %2708 = vxpose.xlu0.b32.cont [2/16] %v1903, 128
      %2709 = vxpose.xlu0.b32.cont [3/16] 0.0, 128
      %2710 = vxpose.xlu0.b32.cont [4/16] 0.0, 128
      %2711 = vxpose.xlu0.b32.cont [5/16] 0.0, 128
      %2712 = vxpose.xlu0.b32.cont [6/16] 0.0, 128
      %2713 = vxpose.xlu0.b32.cont [7/16] 0.0, 128
      %2714 = vxpose.xlu0.b32.cont [8/16] 0.0, 128
      %2715 = vxpose.xlu0.b32.cont [9/16] 0.0, 128
      %2716 = vxpose.xlu0.b32.cont [10/16] 0.0, 128
      %2717 = vxpose.xlu0.b32.cont [11/16] 0.0, 128
      %2718 = vxpose.xlu0.b32.cont [12/16] 0.0, 128
      %2719 = vxpose.xlu0.b32.cont [13/16] 0.0, 128
      %2720 = vxpose.xlu0.b32.cont [14/16] 0.0, 128
      %2721 = vxpose.xlu0.b32.cont [15/16] 0.0, 128
      %2722 = vxpose.xlu0.b32.end [16/16] 0.0, 128
      %v2723 = vpop.trf.xlu0
      %v2724 = vpop.trf.xlu0
      %v2725 = vpop.trf.xlu0
      %v2726 = vpop.trf.xlu0
      %v2727 = vpop.trf.xlu0
      %v2728 = vpop.trf.xlu0
      %v2729 = vpop.trf.xlu0
      %v2730 = vpop.trf.xlu0
      %v2731 = vpop.trf.xlu0
      %v2732 = vpop.trf.xlu0
      %v2733 = vpop.trf.xlu0
      %v2734 = vpop.trf.xlu0
      %v2735 = vpop.trf.xlu0
      %v2736 = vpop.trf.xlu0
      %v2737 = vpop.trf.xlu0
      %v2738 = vpop.trf.xlu0
      %2739 = vxpose.xlu0.b32.start [1/16] %v1875, 128
      %2740 = vxpose.xlu0.b32.cont [2/16] %v1904, 128
      %2741 = vxpose.xlu0.b32.cont [3/16] 0.0, 128
      %2742 = vxpose.xlu0.b32.cont [4/16] 0.0, 128
      %2743 = vxpose.xlu0.b32.cont [5/16] 0.0, 128
      %2744 = vxpose.xlu0.b32.cont [6/16] 0.0, 128
      %2745 = vxpose.xlu0.b32.cont [7/16] 0.0, 128
      %2746 = vxpose.xlu0.b32.cont [8/16] 0.0, 128
      %2747 = vxpose.xlu0.b32.cont [9/16] 0.0, 128
      %2748 = vxpose.xlu0.b32.cont [10/16] 0.0, 128
      %2749 = vxpose.xlu0.b32.cont [11/16] 0.0, 128
      %2750 = vxpose.xlu0.b32.cont [12/16] 0.0, 128
      %2751 = vxpose.xlu0.b32.cont [13/16] 0.0, 128
      %2752 = vxpose.xlu0.b32.cont [14/16] 0.0, 128
      %2753 = vxpose.xlu0.b32.cont [15/16] 0.0, 128
      %2754 = vxpose.xlu0.b32.end [16/16] 0.0, 128
      %v2755 = vpop.trf.xlu0
      %v2756 = vpop.trf.xlu0
      %v2757 = vpop.trf.xlu0
      %v2758 = vpop.trf.xlu0
      %v2759 = vpop.trf.xlu0
      %v2760 = vpop.trf.xlu0
      %v2761 = vpop.trf.xlu0
      %v2762 = vpop.trf.xlu0
      %v2763 = vpop.trf.xlu0
      %v2764 = vpop.trf.xlu0
      %v2765 = vpop.trf.xlu0
      %v2766 = vpop.trf.xlu0
      %v2767 = vpop.trf.xlu0
      %v2768 = vpop.trf.xlu0
      %v2769 = vpop.trf.xlu0
      %v2770 = vpop.trf.xlu0
      %2771 = vxpose.xlu0.b32.start [1/16] %v1876, 128
      %2772 = vxpose.xlu0.b32.cont [2/16] %v1905, 128
      %2773 = vxpose.xlu0.b32.cont [3/16] 0.0, 128
      %2774 = vxpose.xlu0.b32.cont [4/16] 0.0, 128
      %2775 = vxpose.xlu0.b32.cont [5/16] 0.0, 128
      %2776 = vxpose.xlu0.b32.cont [6/16] 0.0, 128
      %2777 = vxpose.xlu0.b32.cont [7/16] 0.0, 128
      %2778 = vxpose.xlu0.b32.cont [8/16] 0.0, 128
      %2779 = vxpose.xlu0.b32.cont [9/16] 0.0, 128
      %2780 = vxpose.xlu0.b32.cont [10/16] 0.0, 128
      %2781 = vxpose.xlu0.b32.cont [11/16] 0.0, 128
      %2782 = vxpose.xlu0.b32.cont [12/16] 0.0, 128
      %2783 = vxpose.xlu0.b32.cont [13/16] 0.0, 128
      %2784 = vxpose.xlu0.b32.cont [14/16] 0.0, 128
      %2785 = vxpose.xlu0.b32.cont [15/16] 0.0, 128
      %2786 = vxpose.xlu0.b32.end [16/16] 0.0, 128
      %v2787 = vpop.trf.xlu0
      %v2788 = vpop.trf.xlu0
      %v2789 = vpop.trf.xlu0
      %v2790 = vpop.trf.xlu0
      %v2791 = vpop.trf.xlu0
      %v2792 = vpop.trf.xlu0
      %v2793 = vpop.trf.xlu0
      %v2794 = vpop.trf.xlu0
      %v2795 = vpop.trf.xlu0
      %v2796 = vpop.trf.xlu0
      %v2797 = vpop.trf.xlu0
      %v2798 = vpop.trf.xlu0
      %v2799 = vpop.trf.xlu0
      %v2800 = vpop.trf.xlu0
      %v2801 = vpop.trf.xlu0
      %v2802 = vpop.trf.xlu0
      %2803 = vxpose.xlu0.b32.start [1/16] %v1877, 128
      %2804 = vxpose.xlu0.b32.cont [2/16] %v1906, 128
      %2805 = vxpose.xlu0.b32.cont [3/16] 0.0, 128
      %2806 = vxpose.xlu0.b32.cont [4/16] 0.0, 128
      %2807 = vxpose.xlu0.b32.cont [5/16] 0.0, 128
      %2808 = vxpose.xlu0.b32.cont [6/16] 0.0, 128
      %2809 = vxpose.xlu0.b32.cont [7/16] 0.0, 128
      %2810 = vxpose.xlu0.b32.cont [8/16] 0.0, 128
      %2811 = vxpose.xlu0.b32.cont [9/16] 0.0, 128
      %2812 = vxpose.xlu0.b32.cont [10/16] 0.0, 128
      %2813 = vxpose.xlu0.b32.cont [11/16] 0.0, 128
      %2814 = vxpose.xlu0.b32.cont [12/16] 0.0, 128
      %2815 = vxpose.xlu0.b32.cont [13/16] 0.0, 128
      %2816 = vxpose.xlu0.b32.cont [14/16] 0.0, 128
      %2817 = vxpose.xlu0.b32.cont [15/16] 0.0, 128
      %2818 = vxpose.xlu0.b32.end [16/16] 0.0, 128
      %v2819 = vpop.trf.xlu0
      %v2820 = vpop.trf.xlu0
      %v2821 = vpop.trf.xlu0
      %v2822 = vpop.trf.xlu0
      %v2823 = vpop.trf.xlu0
      %v2824 = vpop.trf.xlu0
      %v2825 = vpop.trf.xlu0
      %v2826 = vpop.trf.xlu0
      %v2827 = vpop.trf.xlu0
      %v2828 = vpop.trf.xlu0
      %v2829 = vpop.trf.xlu0
      %v2830 = vpop.trf.xlu0
      %v2831 = vpop.trf.xlu0
      %v2832 = vpop.trf.xlu0
      %v2833 = vpop.trf.xlu0
      %v2834 = vpop.trf.xlu0
      %vm2835 = vcmask 130048
      %v2837 = vsel %vm2835, %v1923, 0
      %v2840 = vsel %vm2835, %v1924, 0
      %v2843 = vsel %vm2835, %v1925, 0
      %v2846 = vsel %vm2835, %v1926, 0
      %v2849 = vsel %vm2835, %v1927, 0
      %v2852 = vsel %vm2835, %v1928, 0
      %v2855 = vsel %vm2835, %v1929, 0
      %v2858 = vsel %vm2835, %v1930, 0
      %v2861 = vsel %vm2835, %v1931, 0
      %v2864 = vsel %vm2835, %v1932, 0
      %v2867 = vsel %vm2835, %v1933, 0
      %v2870 = vsel %vm2835, %v1934, 0
      %v2873 = vsel %vm2835, %v1935, 0
      %v2876 = vsel %vm2835, %v1936, 0
      %v2879 = vsel %vm2835, %v1937, 0
      %v2882 = vsel %vm2835, %v1938, 0
      %v2885 = vsel %vm2835, %v1955, 0
      %v2888 = vsel %vm2835, %v1956, 0
      %v2891 = vsel %vm2835, %v1957, 0
      %v2894 = vsel %vm2835, %v1958, 0
      %v2897 = vsel %vm2835, %v1959, 0
      %v2900 = vsel %vm2835, %v1960, 0
      %v2903 = vsel %vm2835, %v1961, 0
      %v2906 = vsel %vm2835, %v1962, 0
      %v2909 = vsel %vm2835, %v1963, 0
      %v2912 = vsel %vm2835, %v1964, 0
      %v2915 = vsel %vm2835, %v1965, 0
      %v2918 = vsel %vm2835, %v1966, 0
      %v2921 = vsel %vm2835, %v1967, 0
      %v2924 = vsel %vm2835, %v1968, 0
      %v2927 = vsel %vm2835, %v1969, 0
      %v2930 = vsel %vm2835, %v1970, 0
      %v2933 = vsel %vm2835, %v1987, 0
      %v2936 = vsel %vm2835, %v1988, 0
      %v2939 = vsel %vm2835, %v1989, 0
      %v2942 = vsel %vm2835, %v1990, 0
      %v2945 = vsel %vm2835, %v1991, 0
      %v2948 = vsel %vm2835, %v1992, 0
      %v2951 = vsel %vm2835, %v1993, 0
      %v2954 = vsel %vm2835, %v1994, 0
      %v2957 = vsel %vm2835, %v1995, 0
      %v2960 = vsel %vm2835, %v1996, 0
      %v2963 = vsel %vm2835, %v1997, 0
      %v2966 = vsel %vm2835, %v1998, 0
      %v2969 = vsel %vm2835, %v1999, 0
      %v2972 = vsel %vm2835, %v2000, 0
      %v2975 = vsel %vm2835, %v2001, 0
      %v2978 = vsel %vm2835, %v2002, 0
      %v2981 = vsel %vm2835, %v2019, 0
      %v2984 = vsel %vm2835, %v2020, 0
      %v2987 = vsel %vm2835, %v2021, 0
      %v2990 = vsel %vm2835, %v2022, 0
      %v2993 = vsel %vm2835, %v2023, 0
      %v2996 = vsel %vm2835, %v2024, 0
      %v2999 = vsel %vm2835, %v2025, 0
      %v3002 = vsel %vm2835, %v2026, 0
      %v3005 = vsel %vm2835, %v2027, 0
      %v3008 = vsel %vm2835, %v2028, 0
      %v3011 = vsel %vm2835, %v2029, 0
      %v3014 = vsel %vm2835, %v2030, 0
      %v3017 = vsel %vm2835, %v2031, 0
      %v3020 = vsel %vm2835, %v2032, 0
      %v3023 = vsel %vm2835, %v2033, 0
      %v3026 = vsel %vm2835, %v2034, 0
      %v3029 = vsel %vm2835, %v2051, 0
      %v3032 = vsel %vm2835, %v2052, 0
      %v3035 = vsel %vm2835, %v2053, 0
      %v3038 = vsel %vm2835, %v2054, 0
      %v3041 = vsel %vm2835, %v2055, 0
      %v3044 = vsel %vm2835, %v2056, 0
      %v3047 = vsel %vm2835, %v2057, 0
      %v3050 = vsel %vm2835, %v2058, 0
      %v3053 = vsel %vm2835, %v2059, 0
      %v3056 = vsel %vm2835, %v2060, 0
      %v3059 = vsel %vm2835, %v2061, 0
      %v3062 = vsel %vm2835, %v2062, 0
      %v3065 = vsel %vm2835, %v2063, 0
      %v3068 = vsel %vm2835, %v2064, 0
      %v3071 = vsel %vm2835, %v2065, 0
      %v3074 = vsel %vm2835, %v2066, 0
      %v3077 = vsel %vm2835, %v2083, 0
      %v3080 = vsel %vm2835, %v2084, 0
      %v3083 = vsel %vm2835, %v2085, 0
      %v3086 = vsel %vm2835, %v2086, 0
      %v3089 = vsel %vm2835, %v2087, 0
      %v3092 = vsel %vm2835, %v2088, 0
      %v3095 = vsel %vm2835, %v2089, 0
      %v3098 = vsel %vm2835, %v2090, 0
      %v3101 = vsel %vm2835, %v2091, 0
      %v3104 = vsel %vm2835, %v2092, 0
      %v3107 = vsel %vm2835, %v2093, 0
      %v3110 = vsel %vm2835, %v2094, 0
      %v3113 = vsel %vm2835, %v2095, 0
      %v3116 = vsel %vm2835, %v2096, 0
      %v3119 = vsel %vm2835, %v2097, 0
      %v3122 = vsel %vm2835, %v2098, 0
      %v3125 = vsel %vm2835, %v2115, 0
      %v3128 = vsel %vm2835, %v2116, 0
      %v3131 = vsel %vm2835, %v2117, 0
      %v3134 = vsel %vm2835, %v2118, 0
      %v3137 = vsel %vm2835, %v2119, 0
      %v3140 = vsel %vm2835, %v2120, 0
      %v3143 = vsel %vm2835, %v2121, 0
      %v3146 = vsel %vm2835, %v2122, 0
      %v3149 = vsel %vm2835, %v2123, 0
      %v3152 = vsel %vm2835, %v2124, 0
      %v3155 = vsel %vm2835, %v2125, 0
      %v3158 = vsel %vm2835, %v2126, 0
      %v3161 = vsel %vm2835, %v2127, 0
      %v3164 = vsel %vm2835, %v2128, 0
      %v3167 = vsel %vm2835, %v2129, 0
      %v3170 = vsel %vm2835, %v2130, 0
      %v3173 = vsel %vm2835, %v2147, 0
      %v3176 = vsel %vm2835, %v2148, 0
      %v3179 = vsel %vm2835, %v2149, 0
      %v3182 = vsel %vm2835, %v2150, 0
      %v3185 = vsel %vm2835, %v2151, 0
      %v3188 = vsel %vm2835, %v2152, 0
      %v3191 = vsel %vm2835, %v2153, 0
      %v3194 = vsel %vm2835, %v2154, 0
      %v3197 = vsel %vm2835, %v2155, 0
      %v3200 = vsel %vm2835, %v2156, 0
      %v3203 = vsel %vm2835, %v2157, 0
      %v3206 = vsel %vm2835, %v2158, 0
      %v3209 = vsel %vm2835, %v2159, 0
      %v3212 = vsel %vm2835, %v2160, 0
      %v3215 = vsel %vm2835, %v2161, 0
      %v3218 = vsel %vm2835, %v2162, 0
      %v3221 = vsel %vm2835, %v2179, 0
      %v3224 = vsel %vm2835, %v2180, 0
      %v3227 = vsel %vm2835, %v2181, 0
      %v3230 = vsel %vm2835, %v2182, 0
      %v3233 = vsel %vm2835, %v2183, 0
      %v3236 = vsel %vm2835, %v2184, 0
      %v3239 = vsel %vm2835, %v2185, 0
      %v3242 = vsel %vm2835, %v2186, 0
      %v3245 = vsel %vm2835, %v2187, 0
      %v3248 = vsel %vm2835, %v2188, 0
      %v3251 = vsel %vm2835, %v2189, 0
      %v3254 = vsel %vm2835, %v2190, 0
      %v3257 = vsel %vm2835, %v2191, 0
      %v3260 = vsel %vm2835, %v2192, 0
      %v3263 = vsel %vm2835, %v2193, 0
      %v3266 = vsel %vm2835, %v2194, 0
      %v3269 = vsel %vm2835, %v2211, 0
      %v3272 = vsel %vm2835, %v2212, 0
      %v3275 = vsel %vm2835, %v2213, 0
      %v3278 = vsel %vm2835, %v2214, 0
      %v3281 = vsel %vm2835, %v2215, 0
      %v3284 = vsel %vm2835, %v2216, 0
      %v3287 = vsel %vm2835, %v2217, 0
      %v3290 = vsel %vm2835, %v2218, 0
      %v3293 = vsel %vm2835, %v2219, 0
      %v3296 = vsel %vm2835, %v2220, 0
      %v3299 = vsel %vm2835, %v2221, 0
      %v3302 = vsel %vm2835, %v2222, 0
      %v3305 = vsel %vm2835, %v2223, 0
      %v3308 = vsel %vm2835, %v2224, 0
      %v3311 = vsel %vm2835, %v2225, 0
      %v3314 = vsel %vm2835, %v2226, 0
      %v3317 = vsel %vm2835, %v2243, 0
      %v3320 = vsel %vm2835, %v2244, 0
      %v3323 = vsel %vm2835, %v2245, 0
      %v3326 = vsel %vm2835, %v2246, 0
      %v3329 = vsel %vm2835, %v2247, 0
      %v3332 = vsel %vm2835, %v2248, 0
      %v3335 = vsel %vm2835, %v2249, 0
      %v3338 = vsel %vm2835, %v2250, 0
      %v3341 = vsel %vm2835, %v2251, 0
      %v3344 = vsel %vm2835, %v2252, 0
      %v3347 = vsel %vm2835, %v2253, 0
      %v3350 = vsel %vm2835, %v2254, 0
      %v3353 = vsel %vm2835, %v2255, 0
      %v3356 = vsel %vm2835, %v2256, 0
      %v3359 = vsel %vm2835, %v2257, 0
      %v3362 = vsel %vm2835, %v2258, 0
      %v3365 = vsel %vm2835, %v2275, 0
      %v3368 = vsel %vm2835, %v2276, 0
      %v3371 = vsel %vm2835, %v2277, 0
      %v3374 = vsel %vm2835, %v2278, 0
      %v3377 = vsel %vm2835, %v2279, 0
      %v3380 = vsel %vm2835, %v2280, 0
      %v3383 = vsel %vm2835, %v2281, 0
      %v3386 = vsel %vm2835, %v2282, 0
      %v3389 = vsel %vm2835, %v2283, 0
      %v3392 = vsel %vm2835, %v2284, 0
      %v3395 = vsel %vm2835, %v2285, 0
      %v3398 = vsel %vm2835, %v2286, 0
      %v3401 = vsel %vm2835, %v2287, 0
      %v3404 = vsel %vm2835, %v2288, 0
      %v3407 = vsel %vm2835, %v2289, 0
      %v3410 = vsel %vm2835, %v2290, 0
      %v3413 = vsel %vm2835, %v2307, 0
      %v3416 = vsel %vm2835, %v2308, 0
      %v3419 = vsel %vm2835, %v2309, 0
      %v3422 = vsel %vm2835, %v2310, 0
      %v3425 = vsel %vm2835, %v2311, 0
      %v3428 = vsel %vm2835, %v2312, 0
      %v3431 = vsel %vm2835, %v2313, 0
      %v3434 = vsel %vm2835, %v2314, 0
      %v3437 = vsel %vm2835, %v2315, 0
      %v3440 = vsel %vm2835, %v2316, 0
      %v3443 = vsel %vm2835, %v2317, 0
      %v3446 = vsel %vm2835, %v2318, 0
      %v3449 = vsel %vm2835, %v2319, 0
      %v3452 = vsel %vm2835, %v2320, 0
      %v3455 = vsel %vm2835, %v2321, 0
      %v3458 = vsel %vm2835, %v2322, 0
      %v3461 = vsel %vm2835, %v2339, 0
      %v3464 = vsel %vm2835, %v2340, 0
      %v3467 = vsel %vm2835, %v2341, 0
      %v3470 = vsel %vm2835, %v2342, 0
      %v3473 = vsel %vm2835, %v2343, 0
      %v3476 = vsel %vm2835, %v2344, 0
      %v3479 = vsel %vm2835, %v2345, 0
      %v3482 = vsel %vm2835, %v2346, 0
      %v3485 = vsel %vm2835, %v2347, 0
      %v3488 = vsel %vm2835, %v2348, 0
      %v3491 = vsel %vm2835, %v2349, 0
      %v3494 = vsel %vm2835, %v2350, 0
      %v3497 = vsel %vm2835, %v2351, 0
      %v3500 = vsel %vm2835, %v2352, 0
      %v3503 = vsel %vm2835, %v2353, 0
      %v3506 = vsel %vm2835, %v2354, 0
      %v3509 = vsel %vm2835, %v2371, 0
      %v3512 = vsel %vm2835, %v2372, 0
      %v3515 = vsel %vm2835, %v2373, 0
      %v3518 = vsel %vm2835, %v2374, 0
      %v3521 = vsel %vm2835, %v2375, 0
      %v3524 = vsel %vm2835, %v2376, 0
      %v3527 = vsel %vm2835, %v2377, 0
      %v3530 = vsel %vm2835, %v2378, 0
      %v3533 = vsel %vm2835, %v2379, 0
      %v3536 = vsel %vm2835, %v2380, 0
      %v3539 = vsel %vm2835, %v2381, 0
      %v3542 = vsel %vm2835, %v2382, 0
      %v3545 = vsel %vm2835, %v2383, 0
      %v3548 = vsel %vm2835, %v2384, 0
      %v3551 = vsel %vm2835, %v2385, 0
      %v3554 = vsel %vm2835, %v2386, 0
      %v3557 = vsel %vm2835, %v2403, 0
      %v3560 = vsel %vm2835, %v2404, 0
      %v3563 = vsel %vm2835, %v2405, 0
      %v3566 = vsel %vm2835, %v2406, 0
      %v3569 = vsel %vm2835, %v2407, 0
      %v3572 = vsel %vm2835, %v2408, 0
      %v3575 = vsel %vm2835, %v2409, 0
      %v3578 = vsel %vm2835, %v2410, 0
      %v3581 = vsel %vm2835, %v2411, 0
      %v3584 = vsel %vm2835, %v2412, 0
      %v3587 = vsel %vm2835, %v2413, 0
      %v3590 = vsel %vm2835, %v2414, 0
      %v3593 = vsel %vm2835, %v2415, 0
      %v3596 = vsel %vm2835, %v2416, 0
      %v3599 = vsel %vm2835, %v2417, 0
      %v3602 = vsel %vm2835, %v2418, 0
      %v3605 = vsel %vm2835, %v2435, 0
      %v3608 = vsel %vm2835, %v2436, 0
      %v3611 = vsel %vm2835, %v2437, 0
      %v3614 = vsel %vm2835, %v2438, 0
      %v3617 = vsel %vm2835, %v2439, 0
      %v3620 = vsel %vm2835, %v2440, 0
      %v3623 = vsel %vm2835, %v2441, 0
      %v3626 = vsel %vm2835, %v2442, 0
      %v3629 = vsel %vm2835, %v2443, 0
      %v3632 = vsel %vm2835, %v2444, 0
      %v3635 = vsel %vm2835, %v2445, 0
      %v3638 = vsel %vm2835, %v2446, 0
      %v3641 = vsel %vm2835, %v2447, 0
      %v3644 = vsel %vm2835, %v2448, 0
      %v3647 = vsel %vm2835, %v2449, 0
      %v3650 = vsel %vm2835, %v2450, 0
      %v3653 = vsel %vm2835, %v2467, 0
      %v3656 = vsel %vm2835, %v2468, 0
      %v3659 = vsel %vm2835, %v2469, 0
      %v3662 = vsel %vm2835, %v2470, 0
      %v3665 = vsel %vm2835, %v2471, 0
      %v3668 = vsel %vm2835, %v2472, 0
      %v3671 = vsel %vm2835, %v2473, 0
      %v3674 = vsel %vm2835, %v2474, 0
      %v3677 = vsel %vm2835, %v2475, 0
      %v3680 = vsel %vm2835, %v2476, 0
      %v3683 = vsel %vm2835, %v2477, 0
      %v3686 = vsel %vm2835, %v2478, 0
      %v3689 = vsel %vm2835, %v2479, 0
      %v3692 = vsel %vm2835, %v2480, 0
      %v3695 = vsel %vm2835, %v2481, 0
      %v3698 = vsel %vm2835, %v2482, 0
      %v3701 = vsel %vm2835, %v2499, 0
      %v3704 = vsel %vm2835, %v2500, 0
      %v3707 = vsel %vm2835, %v2501, 0
      %v3710 = vsel %vm2835, %v2502, 0
      %v3713 = vsel %vm2835, %v2503, 0
      %v3716 = vsel %vm2835, %v2504, 0
      %v3719 = vsel %vm2835, %v2505, 0
      %v3722 = vsel %vm2835, %v2506, 0
      %v3725 = vsel %vm2835, %v2507, 0
      %v3728 = vsel %vm2835, %v2508, 0
      %v3731 = vsel %vm2835, %v2509, 0
      %v3734 = vsel %vm2835, %v2510, 0
      %v3737 = vsel %vm2835, %v2511, 0
      %v3740 = vsel %vm2835, %v2512, 0
      %v3743 = vsel %vm2835, %v2513, 0
      %v3746 = vsel %vm2835, %v2514, 0
      %v3749 = vsel %vm2835, %v2531, 0
      %v3752 = vsel %vm2835, %v2532, 0
      %v3755 = vsel %vm2835, %v2533, 0
      %v3758 = vsel %vm2835, %v2534, 0
      %v3761 = vsel %vm2835, %v2535, 0
      %v3764 = vsel %vm2835, %v2536, 0
      %v3767 = vsel %vm2835, %v2537, 0
      %v3770 = vsel %vm2835, %v2538, 0
      %v3773 = vsel %vm2835, %v2539, 0
      %v3776 = vsel %vm2835, %v2540, 0
      %v3779 = vsel %vm2835, %v2541, 0
      %v3782 = vsel %vm2835, %v2542, 0
      %v3785 = vsel %vm2835, %v2543, 0
      %v3788 = vsel %vm2835, %v2544, 0
      %v3791 = vsel %vm2835, %v2545, 0
      %v3794 = vsel %vm2835, %v2546, 0
      %v3797 = vsel %vm2835, %v2563, 0
      %v3800 = vsel %vm2835, %v2564, 0
      %v3803 = vsel %vm2835, %v2565, 0
      %v3806 = vsel %vm2835, %v2566, 0
      %v3809 = vsel %vm2835, %v2567, 0
      %v3812 = vsel %vm2835, %v2568, 0
      %v3815 = vsel %vm2835, %v2569, 0
      %v3818 = vsel %vm2835, %v2570, 0
      %v3821 = vsel %vm2835, %v2571, 0
      %v3824 = vsel %vm2835, %v2572, 0
      %v3827 = vsel %vm2835, %v2573, 0
      %v3830 = vsel %vm2835, %v2574, 0
      %v3833 = vsel %vm2835, %v2575, 0
      %v3836 = vsel %vm2835, %v2576, 0
      %v3839 = vsel %vm2835, %v2577, 0
      %v3842 = vsel %vm2835, %v2578, 0
      %v3845 = vsel %vm2835, %v2595, 0
      %v3848 = vsel %vm2835, %v2596, 0
      %v3851 = vsel %vm2835, %v2597, 0
      %v3854 = vsel %vm2835, %v2598, 0
      %v3857 = vsel %vm2835, %v2599, 0
      %v3860 = vsel %vm2835, %v2600, 0
      %v3863 = vsel %vm2835, %v2601, 0
      %v3866 = vsel %vm2835, %v2602, 0
      %v3869 = vsel %vm2835, %v2603, 0
      %v3872 = vsel %vm2835, %v2604, 0
      %v3875 = vsel %vm2835, %v2605, 0
      %v3878 = vsel %vm2835, %v2606, 0
      %v3881 = vsel %vm2835, %v2607, 0
      %v3884 = vsel %vm2835, %v2608, 0
      %v3887 = vsel %vm2835, %v2609, 0
      %v3890 = vsel %vm2835, %v2610, 0
      %v3893 = vsel %vm2835, %v2627, 0
      %v3896 = vsel %vm2835, %v2628, 0
      %v3899 = vsel %vm2835, %v2629, 0
      %v3902 = vsel %vm2835, %v2630, 0
      %v3905 = vsel %vm2835, %v2631, 0
      %v3908 = vsel %vm2835, %v2632, 0
      %v3911 = vsel %vm2835, %v2633, 0
      %v3914 = vsel %vm2835, %v2634, 0
      %v3917 = vsel %vm2835, %v2635, 0
      %v3920 = vsel %vm2835, %v2636, 0
      %v3923 = vsel %vm2835, %v2637, 0
      %v3926 = vsel %vm2835, %v2638, 0
      %v3929 = vsel %vm2835, %v2639, 0
      %v3932 = vsel %vm2835, %v2640, 0
      %v3935 = vsel %vm2835, %v2641, 0
      %v3938 = vsel %vm2835, %v2642, 0
      %v3941 = vsel %vm2835, %v2659, 0
      %v3944 = vsel %vm2835, %v2660, 0
      %v3947 = vsel %vm2835, %v2661, 0
      %v3950 = vsel %vm2835, %v2662, 0
      %v3953 = vsel %vm2835, %v2663, 0
      %v3956 = vsel %vm2835, %v2664, 0
      %v3959 = vsel %vm2835, %v2665, 0
      %v3962 = vsel %vm2835, %v2666, 0
      %v3965 = vsel %vm2835, %v2667, 0
      %v3968 = vsel %vm2835, %v2668, 0
      %v3971 = vsel %vm2835, %v2669, 0
      %v3974 = vsel %vm2835, %v2670, 0
      %v3977 = vsel %vm2835, %v2671, 0
      %v3980 = vsel %vm2835, %v2672, 0
      %v3983 = vsel %vm2835, %v2673, 0
      %v3986 = vsel %vm2835, %v2674, 0
      %v3989 = vsel %vm2835, %v2691, 0
      %v3992 = vsel %vm2835, %v2692, 0
      %v3995 = vsel %vm2835, %v2693, 0
      %v3998 = vsel %vm2835, %v2694, 0
      %v4001 = vsel %vm2835, %v2695, 0
      %v4004 = vsel %vm2835, %v2696, 0
      %v4007 = vsel %vm2835, %v2697, 0
      %v4010 = vsel %vm2835, %v2698, 0
      %v4013 = vsel %vm2835, %v2699, 0
      %v4016 = vsel %vm2835, %v2700, 0
      %v4019 = vsel %vm2835, %v2701, 0
      %v4022 = vsel %vm2835, %v2702, 0
      %v4025 = vsel %vm2835, %v2703, 0
      %v4028 = vsel %vm2835, %v2704, 0
      %v4031 = vsel %vm2835, %v2705, 0
      %v4034 = vsel %vm2835, %v2706, 0
      %v4037 = vsel %vm2835, %v2723, 0
      %v4040 = vsel %vm2835, %v2724, 0
      %v4043 = vsel %vm2835, %v2725, 0
      %v4046 = vsel %vm2835, %v2726, 0
      %v4049 = vsel %vm2835, %v2727, 0
      %v4052 = vsel %vm2835, %v2728, 0
      %v4055 = vsel %vm2835, %v2729, 0
      %v4058 = vsel %vm2835, %v2730, 0
      %v4061 = vsel %vm2835, %v2731, 0
      %v4064 = vsel %vm2835, %v2732, 0
      %v4067 = vsel %vm2835, %v2733, 0
      %v4070 = vsel %vm2835, %v2734, 0
      %v4073 = vsel %vm2835, %v2735, 0
      %v4076 = vsel %vm2835, %v2736, 0
      %v4079 = vsel %vm2835, %v2737, 0
      %v4082 = vsel %vm2835, %v2738, 0
      %v4085 = vsel %vm2835, %v2755, 0
      %v4088 = vsel %vm2835, %v2756, 0
      %v4091 = vsel %vm2835, %v2757, 0
      %v4094 = vsel %vm2835, %v2758, 0
      %v4097 = vsel %vm2835, %v2759, 0
      %v4100 = vsel %vm2835, %v2760, 0
      %v4103 = vsel %vm2835, %v2761, 0
      %v4106 = vsel %vm2835, %v2762, 0
      %v4109 = vsel %vm2835, %v2763, 0
      %v4112 = vsel %vm2835, %v2764, 0
      %v4115 = vsel %vm2835, %v2765, 0
      %v4118 = vsel %vm2835, %v2766, 0
      %v4121 = vsel %vm2835, %v2767, 0
      %v4124 = vsel %vm2835, %v2768, 0
      %v4127 = vsel %vm2835, %v2769, 0
      %v4130 = vsel %vm2835, %v2770, 0
      %v4133 = vsel %vm2835, %v2787, 0
      %v4136 = vsel %vm2835, %v2788, 0
      %v4139 = vsel %vm2835, %v2789, 0
      %v4142 = vsel %vm2835, %v2790, 0
      %v4145 = vsel %vm2835, %v2791, 0
      %v4148 = vsel %vm2835, %v2792, 0
      %v4151 = vsel %vm2835, %v2793, 0
      %v4154 = vsel %vm2835, %v2794, 0
      %v4157 = vsel %vm2835, %v2795, 0
      %v4160 = vsel %vm2835, %v2796, 0
      %v4163 = vsel %vm2835, %v2797, 0
      %v4166 = vsel %vm2835, %v2798, 0
      %v4169 = vsel %vm2835, %v2799, 0
      %v4172 = vsel %vm2835, %v2800, 0
      %v4175 = vsel %vm2835, %v2801, 0
      %v4178 = vsel %vm2835, %v2802, 0
      %v4181 = vsel %vm2835, %v2819, 0
      %v4184 = vsel %vm2835, %v2820, 0
      %v4187 = vsel %vm2835, %v2821, 0
      %4189 = vmatprep.subr.mxu0 0.0
      %4190 = vmatpush1.msra.mxu0 0.0
      %4191 = vmatprep.subr.mxu0 0.0
      %4192 = vmatpush1.msra.mxu0 0.0
      %4193 = vmatprep.subr.mxu0 0.0
      %4194 = vmatpush1.msra.mxu0 0.0
      %4195 = vmatprep.subr.mxu0 0.0
      %4196 = vmatpush1.msra.mxu0 0.0
      %4197 = vmatprep.subr.mxu0 0.0
      %4198 = vmatpush1.msra.mxu0 0.0
      %4199 = vmatprep.subr.mxu0 0.0
      %4200 = vmatpush1.msra.mxu0 0.0
      %4201 = vmatprep.subr.mxu0 0.0
      %4202 = vmatpush1.msra.mxu0 0.0
      %4203 = vmatprep.subr.mxu0 0.0
      %4204 = vmatpush1.msra.mxu0 0.0
      %4205 = vmatprep.subr.mxu0 0.0
      %4206 = vmatpush1.msra.mxu0 0.0
      %4207 = vmatprep.subr.mxu0 0.0
      %4208 = vmatpush1.msra.mxu0 0.0
      %4209 = vmatprep.subr.mxu0 0.0
      %4210 = vmatpush1.msra.mxu0 0.0
      %4211 = vmatprep.subr.mxu0 0.0
      %4212 = vmatpush1.msra.mxu0 0.0
      %4213 = vmatprep.subr.mxu0 0.0
      %4214 = vmatpush1.msra.mxu0 0.0
      %4215 = vmatprep.subr.mxu0 0.0
      %4216 = vmatpush1.msra.mxu0 0.0
      %4217 = vmatprep.subr.mxu0 0.0
      %4218 = vmatpush1.msra.mxu0 %v1848
      %4219 = vmatprep.subr.mxu0 0.0
      %4220 = vmatpush1.msra.mxu0 %v1847
      %4221 = vmatprep.subr.mxu0 0.0
      %4222 = vmatpush2.msra.mxu0 0.0
      %4223 = vmatprep.subr.mxu0 0.0
      %4224 = vmatpush2.msra.mxu0 0.0
      %4225 = vmatprep.subr.mxu0 0.0
      %4226 = vmatpush2.msra.mxu0 0.0
      %4227 = vmatprep.subr.mxu0 0.0
      %4228 = vmatpush2.msra.mxu0 0.0
      %4229 = vmatprep.subr.mxu0 0.0
      %4230 = vmatpush2.msra.mxu0 0.0
      %4231 = vmatprep.subr.mxu0 0.0
      %4232 = vmatpush2.msra.mxu0 0.0
      %4233 = vmatprep.subr.mxu0 0.0
      %4234 = vmatpush2.msra.mxu0 0.0
      %4235 = vmatprep.subr.mxu0 0.0
      %4236 = vmatpush2.msra.mxu0 0.0
      %4237 = vmatprep.subr.mxu0 0.0
      %4238 = vmatpush2.msra.mxu0 0.0
      %4239 = vmatprep.subr.mxu0 0.0
      %4240 = vmatpush2.msra.mxu0 0.0
      %4241 = vmatprep.subr.mxu0 0.0
      %4242 = vmatpush2.msra.mxu0 0.0
      %4243 = vmatprep.subr.mxu0 0.0
      %4244 = vmatpush2.msra.mxu0 0.0
      %4245 = vmatprep.subr.mxu0 0.0
      %4246 = vmatpush2.msra.mxu0 0.0
      %4247 = vmatprep.subr.mxu0 0.0
      %4248 = vmatpush2.msra.mxu0 0.0
      %4249 = vmatprep.subr.mxu0 0.0
      %4250 = vmatpush2.msra.mxu0 0.0
      %4251 = vmatprep.subr.mxu0 0.0
      %4252 = vmatpush2.msra.mxu0 0.0
      %4253 = vmatprep.mubr.f32.mxu0 0.0
      %4254 = vmatmul.mubr.f32.gmra.mxu0 %v2837
      %v4255 = vpop.f32.mrf.mxu0
      %v4256 = vadd.f32 0.0, %v4255
      %v4257 = vpop.f32.mrf.mxu0
      %4258 = vmatprep.mubr.f32.mxu0 0.0
      %4259 = vmatmul.mubr.f32.gmra.mxu0 %v2840
      %v4260 = vpop.f32.mrf.mxu0
      %v4261 = vadd.f32 0.0, %v4260
      %v4262 = vpop.f32.mrf.mxu0
      %4263 = vmatprep.mubr.f32.mxu0 0.0
      %4264 = vmatmul.mubr.f32.gmra.mxu0 %v2843
      %v4265 = vpop.f32.mrf.mxu0
      %v4266 = vadd.f32 0.0, %v4265
      %v4267 = vpop.f32.mrf.mxu0
      %4268 = vmatprep.mubr.f32.mxu0 0.0
      %4269 = vmatmul.mubr.f32.gmra.mxu0 %v2846
      %v4270 = vpop.f32.mrf.mxu0
      %v4271 = vadd.f32 0.0, %v4270
      %v4272 = vpop.f32.mrf.mxu0
      %4273 = vmatprep.mubr.f32.mxu0 0.0
      %4274 = vmatmul.mubr.f32.gmra.mxu0 %v2849
      %v4275 = vpop.f32.mrf.mxu0
      %v4276 = vadd.f32 0.0, %v4275
      %v4277 = vpop.f32.mrf.mxu0
      %4278 = vmatprep.mubr.f32.mxu0 0.0
      %4279 = vmatmul.mubr.f32.gmra.mxu0 %v2852
      %v4280 = vpop.f32.mrf.mxu0
      %v4281 = vadd.f32 0.0, %v4280
      %v4282 = vpop.f32.mrf.mxu0
      %4283 = vmatprep.mubr.f32.mxu0 0.0
      %4284 = vmatmul.mubr.f32.gmra.mxu0 %v2855
      %v4285 = vpop.f32.mrf.mxu0
      %v4286 = vadd.f32 0.0, %v4285
      %v4287 = vpop.f32.mrf.mxu0
      %4288 = vmatprep.mubr.f32.mxu0 0.0
      %4289 = vmatmul.mubr.f32.gmra.mxu0 %v2858
      %v4290 = vpop.f32.mrf.mxu0
      %v4291 = vadd.f32 0.0, %v4290
      %v4292 = vpop.f32.mrf.mxu0
      %4293 = vmatprep.mubr.f32.mxu0 0.0
      %4294 = vmatmul.mubr.f32.gmra.mxu0 %v2861
      %v4295 = vpop.f32.mrf.mxu0
      %v4296 = vadd.f32 0.0, %v4295
      %v4297 = vpop.f32.mrf.mxu0
      %4298 = vmatprep.mubr.f32.mxu0 0.0
      %4299 = vmatmul.mubr.f32.gmra.mxu0 %v2864
      %v4300 = vpop.f32.mrf.mxu0
      %v4301 = vadd.f32 0.0, %v4300
      %v4302 = vpop.f32.mrf.mxu0
      %4303 = vmatprep.mubr.f32.mxu0 0.0
      %4304 = vmatmul.mubr.f32.gmra.mxu0 %v2867
      %v4305 = vpop.f32.mrf.mxu0
      %v4306 = vadd.f32 0.0, %v4305
      %v4307 = vpop.f32.mrf.mxu0
      %4308 = vmatprep.mubr.f32.mxu0 0.0
      %4309 = vmatmul.mubr.f32.gmra.mxu0 %v2870
      %v4310 = vpop.f32.mrf.mxu0
      %v4311 = vadd.f32 0.0, %v4310
      %v4312 = vpop.f32.mrf.mxu0
      %4313 = vmatprep.mubr.f32.mxu0 0.0
      %4314 = vmatmul.mubr.f32.gmra.mxu0 %v2873
      %v4315 = vpop.f32.mrf.mxu0
      %v4316 = vadd.f32 0.0, %v4315
      %v4317 = vpop.f32.mrf.mxu0
      %4318 = vmatprep.mubr.f32.mxu0 0.0
      %4319 = vmatmul.mubr.f32.gmra.mxu0 %v2876
      %v4320 = vpop.f32.mrf.mxu0
      %v4321 = vadd.f32 0.0, %v4320
      %v4322 = vpop.f32.mrf.mxu0
      %4323 = vmatprep.mubr.f32.mxu0 0.0
      %4324 = vmatmul.mubr.f32.gmra.mxu0 %v2879
      %v4325 = vpop.f32.mrf.mxu0
      %v4326 = vadd.f32 0.0, %v4325
      %v4327 = vpop.f32.mrf.mxu0
      %4328 = vmatprep.mubr.f32.mxu0 0.0
      %4329 = vmatmul.mubr.f32.gmra.mxu0 %v2882
      %v4330 = vpop.f32.mrf.mxu0
      %v4331 = vadd.f32 0.0, %v4330
      %v4332 = vpop.f32.mrf.mxu0
      %4333 = vmatprep.mubr.f32.mxu0 0.0
      %4334 = vmatmul.mubr.f32.gmra.mxu0 %v2885
      %v4335 = vpop.f32.mrf.mxu0
      %v4336 = vadd.f32 0.0, %v4335
      %v4337 = vpop.f32.mrf.mxu0
      %4338 = vmatprep.mubr.f32.mxu0 0.0
      %4339 = vmatmul.mubr.f32.gmra.mxu0 %v2888
      %v4340 = vpop.f32.mrf.mxu0
      %v4341 = vadd.f32 0.0, %v4340
      %v4342 = vpop.f32.mrf.mxu0
      %4343 = vmatprep.mubr.f32.mxu0 0.0
      %4344 = vmatmul.mubr.f32.gmra.mxu0 %v2891
      %v4345 = vpop.f32.mrf.mxu0
      %v4346 = vadd.f32 0.0, %v4345
      %v4347 = vpop.f32.mrf.mxu0
      %4348 = vmatprep.mubr.f32.mxu0 0.0
      %4349 = vmatmul.mubr.f32.gmra.mxu0 %v2894
      %v4350 = vpop.f32.mrf.mxu0
      %v4351 = vadd.f32 0.0, %v4350
      %v4352 = vpop.f32.mrf.mxu0
      %4353 = vmatprep.mubr.f32.mxu0 0.0
      %4354 = vmatmul.mubr.f32.gmra.mxu0 %v2897
      %v4355 = vpop.f32.mrf.mxu0
      %v4356 = vadd.f32 0.0, %v4355
      %v4357 = vpop.f32.mrf.mxu0
      %4358 = vmatprep.mubr.f32.mxu0 0.0
      %4359 = vmatmul.mubr.f32.gmra.mxu0 %v2900
      %v4360 = vpop.f32.mrf.mxu0
      %v4361 = vadd.f32 0.0, %v4360
      %v4362 = vpop.f32.mrf.mxu0
      %4363 = vmatprep.mubr.f32.mxu0 0.0
      %4364 = vmatmul.mubr.f32.gmra.mxu0 %v2903
      %v4365 = vpop.f32.mrf.mxu0
      %v4366 = vadd.f32 0.0, %v4365
      %v4367 = vpop.f32.mrf.mxu0
      %4368 = vmatprep.mubr.f32.mxu0 0.0
      %4369 = vmatmul.mubr.f32.gmra.mxu0 %v2906
      %v4370 = vpop.f32.mrf.mxu0
      %v4371 = vadd.f32 0.0, %v4370
      %v4372 = vpop.f32.mrf.mxu0
      %4373 = vmatprep.mubr.f32.mxu0 0.0
      %4374 = vmatmul.mubr.f32.gmra.mxu0 %v2909
      %v4375 = vpop.f32.mrf.mxu0
      %v4376 = vadd.f32 0.0, %v4375
      %v4377 = vpop.f32.mrf.mxu0
      %4378 = vmatprep.mubr.f32.mxu0 0.0
      %4379 = vmatmul.mubr.f32.gmra.mxu0 %v2912
      %v4380 = vpop.f32.mrf.mxu0
      %v4381 = vadd.f32 0.0, %v4380
      %v4382 = vpop.f32.mrf.mxu0
      %4383 = vmatprep.mubr.f32.mxu0 0.0
      %4384 = vmatmul.mubr.f32.gmra.mxu0 %v2915
      %v4385 = vpop.f32.mrf.mxu0
      %v4386 = vadd.f32 0.0, %v4385
      %v4387 = vpop.f32.mrf.mxu0
      %4388 = vmatprep.mubr.f32.mxu0 0.0
      %4389 = vmatmul.mubr.f32.gmra.mxu0 %v2918
      %v4390 = vpop.f32.mrf.mxu0
      %v4391 = vadd.f32 0.0, %v4390
      %v4392 = vpop.f32.mrf.mxu0
      %4393 = vmatprep.mubr.f32.mxu0 0.0
      %4394 = vmatmul.mubr.f32.gmra.mxu0 %v2921
      %v4395 = vpop.f32.mrf.mxu0
      %v4396 = vadd.f32 0.0, %v4395
      %v4397 = vpop.f32.mrf.mxu0
      %4398 = vmatprep.mubr.f32.mxu0 0.0
      %4399 = vmatmul.mubr.f32.gmra.mxu0 %v2924
      %v4400 = vpop.f32.mrf.mxu0
      %v4401 = vadd.f32 0.0, %v4400
      %v4402 = vpop.f32.mrf.mxu0
      %4403 = vmatprep.mubr.f32.mxu0 0.0
      %4404 = vmatmul.mubr.f32.gmra.mxu0 %v2927
      %v4405 = vpop.f32.mrf.mxu0
      %v4406 = vadd.f32 0.0, %v4405
      %v4407 = vpop.f32.mrf.mxu0
      %4408 = vmatprep.mubr.f32.mxu0 0.0
      %4409 = vmatmul.mubr.f32.gmra.mxu0 %v2930
      %v4410 = vpop.f32.mrf.mxu0
      %v4411 = vadd.f32 0.0, %v4410
      %v4412 = vpop.f32.mrf.mxu0
      %4413 = vmatprep.mubr.f32.mxu0 0.0
      %4414 = vmatmul.mubr.f32.gmra.mxu0 %v2933
      %v4415 = vpop.f32.mrf.mxu0
      %v4416 = vadd.f32 0.0, %v4415
      %v4417 = vpop.f32.mrf.mxu0
      %4418 = vmatprep.mubr.f32.mxu0 0.0
      %4419 = vmatmul.mubr.f32.gmra.mxu0 %v2936
      %v4420 = vpop.f32.mrf.mxu0
      %v4421 = vadd.f32 0.0, %v4420
      %v4422 = vpop.f32.mrf.mxu0
      %4423 = vmatprep.mubr.f32.mxu0 0.0
      %4424 = vmatmul.mubr.f32.gmra.mxu0 %v2939
      %v4425 = vpop.f32.mrf.mxu0
      %v4426 = vadd.f32 0.0, %v4425
      %v4427 = vpop.f32.mrf.mxu0
      %4428 = vmatprep.mubr.f32.mxu0 0.0
      %4429 = vmatmul.mubr.f32.gmra.mxu0 %v2942
      %v4430 = vpop.f32.mrf.mxu0
      %v4431 = vadd.f32 0.0, %v4430
      %v4432 = vpop.f32.mrf.mxu0
      %4433 = vmatprep.mubr.f32.mxu0 0.0
      %4434 = vmatmul.mubr.f32.gmra.mxu0 %v2945
      %v4435 = vpop.f32.mrf.mxu0
      %v4436 = vadd.f32 0.0, %v4435
      %v4437 = vpop.f32.mrf.mxu0
      %4438 = vmatprep.mubr.f32.mxu0 0.0
      %4439 = vmatmul.mubr.f32.gmra.mxu0 %v2948
      %v4440 = vpop.f32.mrf.mxu0
      %v4441 = vadd.f32 0.0, %v4440
      %v4442 = vpop.f32.mrf.mxu0
      %4443 = vmatprep.mubr.f32.mxu0 0.0
      %4444 = vmatmul.mubr.f32.gmra.mxu0 %v2951
      %v4445 = vpop.f32.mrf.mxu0
      %v4446 = vadd.f32 0.0, %v4445
      %v4447 = vpop.f32.mrf.mxu0
      %4448 = vmatprep.mubr.f32.mxu0 0.0
      %4449 = vmatmul.mubr.f32.gmra.mxu0 %v2954
      %v4450 = vpop.f32.mrf.mxu0
      %v4451 = vadd.f32 0.0, %v4450
      %v4452 = vpop.f32.mrf.mxu0
      %4453 = vmatprep.mubr.f32.mxu0 0.0
      %4454 = vmatmul.mubr.f32.gmra.mxu0 %v2957
      %v4455 = vpop.f32.mrf.mxu0
      %v4456 = vadd.f32 0.0, %v4455
      %v4457 = vpop.f32.mrf.mxu0
      %4458 = vmatprep.mubr.f32.mxu0 0.0
      %4459 = vmatmul.mubr.f32.gmra.mxu0 %v2960
      %v4460 = vpop.f32.mrf.mxu0
      %v4461 = vadd.f32 0.0, %v4460
      %v4462 = vpop.f32.mrf.mxu0
      %4463 = vmatprep.mubr.f32.mxu0 0.0
      %4464 = vmatmul.mubr.f32.gmra.mxu0 %v2963
      %v4465 = vpop.f32.mrf.mxu0
      %v4466 = vadd.f32 0.0, %v4465
      %v4467 = vpop.f32.mrf.mxu0
      %4468 = vmatprep.mubr.f32.mxu0 0.0
      %4469 = vmatmul.mubr.f32.gmra.mxu0 %v2966
      %v4470 = vpop.f32.mrf.mxu0
      %v4471 = vadd.f32 0.0, %v4470
      %v4472 = vpop.f32.mrf.mxu0
      %4473 = vmatprep.mubr.f32.mxu0 0.0
      %4474 = vmatmul.mubr.f32.gmra.mxu0 %v2969
      %v4475 = vpop.f32.mrf.mxu0
      %v4476 = vadd.f32 0.0, %v4475
      %v4477 = vpop.f32.mrf.mxu0
      %4478 = vmatprep.mubr.f32.mxu0 0.0
      %4479 = vmatmul.mubr.f32.gmra.mxu0 %v2972
      %v4480 = vpop.f32.mrf.mxu0
      %v4481 = vadd.f32 0.0, %v4480
      %v4482 = vpop.f32.mrf.mxu0
      %4483 = vmatprep.mubr.f32.mxu0 0.0
      %4484 = vmatmul.mubr.f32.gmra.mxu0 %v2975
      %v4485 = vpop.f32.mrf.mxu0
      %v4486 = vadd.f32 0.0, %v4485
      %v4487 = vpop.f32.mrf.mxu0
      %4488 = vmatprep.mubr.f32.mxu0 0.0
      %4489 = vmatmul.mubr.f32.gmra.mxu0 %v2978
      %v4490 = vpop.f32.mrf.mxu0
      %v4491 = vadd.f32 0.0, %v4490
      %v4492 = vpop.f32.mrf.mxu0
      %4493 = vmatprep.mubr.f32.mxu0 0.0
      %4494 = vmatmul.mubr.f32.gmra.mxu0 %v2981
      %v4495 = vpop.f32.mrf.mxu0
      %v4496 = vadd.f32 0.0, %v4495
      %v4497 = vpop.f32.mrf.mxu0
      %4498 = vmatprep.mubr.f32.mxu0 0.0
      %4499 = vmatmul.mubr.f32.gmra.mxu0 %v2984
      %v4500 = vpop.f32.mrf.mxu0
      %v4501 = vadd.f32 0.0, %v4500
      %v4502 = vpop.f32.mrf.mxu0
      %4503 = vmatprep.mubr.f32.mxu0 0.0
      %4504 = vmatmul.mubr.f32.gmra.mxu0 %v2987
      %v4505 = vpop.f32.mrf.mxu0
      %v4506 = vadd.f32 0.0, %v4505
      %v4507 = vpop.f32.mrf.mxu0
      %4508 = vmatprep.mubr.f32.mxu0 0.0
      %4509 = vmatmul.mubr.f32.gmra.mxu0 %v2990
      %v4510 = vpop.f32.mrf.mxu0
      %v4511 = vadd.f32 0.0, %v4510
      %v4512 = vpop.f32.mrf.mxu0
      %4513 = vmatprep.mubr.f32.mxu0 0.0
      %4514 = vmatmul.mubr.f32.gmra.mxu0 %v2993
      %v4515 = vpop.f32.mrf.mxu0
      %v4516 = vadd.f32 0.0, %v4515
      %v4517 = vpop.f32.mrf.mxu0
      %4518 = vmatprep.mubr.f32.mxu0 0.0
      %4519 = vmatmul.mubr.f32.gmra.mxu0 %v2996
      %v4520 = vpop.f32.mrf.mxu0
      %v4521 = vadd.f32 0.0, %v4520
      %v4522 = vpop.f32.mrf.mxu0
      %4523 = vmatprep.mubr.f32.mxu0 0.0
      %4524 = vmatmul.mubr.f32.gmra.mxu0 %v2999
      %v4525 = vpop.f32.mrf.mxu0
      %v4526 = vadd.f32 0.0, %v4525
      %v4527 = vpop.f32.mrf.mxu0
      %4528 = vmatprep.mubr.f32.mxu0 0.0
      %4529 = vmatmul.mubr.f32.gmra.mxu0 %v3002
      %v4530 = vpop.f32.mrf.mxu0
      %v4531 = vadd.f32 0.0, %v4530
      %v4532 = vpop.f32.mrf.mxu0
      %4533 = vmatprep.mubr.f32.mxu0 0.0
      %4534 = vmatmul.mubr.f32.gmra.mxu0 %v3005
      %v4535 = vpop.f32.mrf.mxu0
      %v4536 = vadd.f32 0.0, %v4535
      %v4537 = vpop.f32.mrf.mxu0
      %4538 = vmatprep.mubr.f32.mxu0 0.0
      %4539 = vmatmul.mubr.f32.gmra.mxu0 %v3008
      %v4540 = vpop.f32.mrf.mxu0
      %v4541 = vadd.f32 0.0, %v4540
      %v4542 = vpop.f32.mrf.mxu0
      %4543 = vmatprep.mubr.f32.mxu0 0.0
      %4544 = vmatmul.mubr.f32.gmra.mxu0 %v3011
      %v4545 = vpop.f32.mrf.mxu0
      %v4546 = vadd.f32 0.0, %v4545
      %v4547 = vpop.f32.mrf.mxu0
      %4548 = vmatprep.mubr.f32.mxu0 0.0
      %4549 = vmatmul.mubr.f32.gmra.mxu0 %v3014
      %v4550 = vpop.f32.mrf.mxu0
      %v4551 = vadd.f32 0.0, %v4550
      %v4552 = vpop.f32.mrf.mxu0
      %4553 = vmatprep.mubr.f32.mxu0 0.0
      %4554 = vmatmul.mubr.f32.gmra.mxu0 %v3017
      %v4555 = vpop.f32.mrf.mxu0
      %v4556 = vadd.f32 0.0, %v4555
      %v4557 = vpop.f32.mrf.mxu0
      %4558 = vmatprep.mubr.f32.mxu0 0.0
      %4559 = vmatmul.mubr.f32.gmra.mxu0 %v3020
      %v4560 = vpop.f32.mrf.mxu0
      %v4561 = vadd.f32 0.0, %v4560
      %v4562 = vpop.f32.mrf.mxu0
      %4563 = vmatprep.mubr.f32.mxu0 0.0
      %4564 = vmatmul.mubr.f32.gmra.mxu0 %v3023
      %v4565 = vpop.f32.mrf.mxu0
      %v4566 = vadd.f32 0.0, %v4565
      %v4567 = vpop.f32.mrf.mxu0
      %4568 = vmatprep.mubr.f32.mxu0 0.0
      %4569 = vmatmul.mubr.f32.gmra.mxu0 %v3026
      %v4570 = vpop.f32.mrf.mxu0
      %v4571 = vadd.f32 0.0, %v4570
      %v4572 = vpop.f32.mrf.mxu0
      %4573 = vmatprep.mubr.f32.mxu0 0.0
      %4574 = vmatmul.mubr.f32.gmra.mxu0 %v3029
      %v4575 = vpop.f32.mrf.mxu0
      %v4576 = vadd.f32 0.0, %v4575
      %v4577 = vpop.f32.mrf.mxu0
      %4578 = vmatprep.mubr.f32.mxu0 0.0
      %4579 = vmatmul.mubr.f32.gmra.mxu0 %v3032
      %v4580 = vpop.f32.mrf.mxu0
      %v4581 = vadd.f32 0.0, %v4580
      %v4582 = vpop.f32.mrf.mxu0
      %4583 = vmatprep.mubr.f32.mxu0 0.0
      %4584 = vmatmul.mubr.f32.gmra.mxu0 %v3035
      %v4585 = vpop.f32.mrf.mxu0
      %v4586 = vadd.f32 0.0, %v4585
      %v4587 = vpop.f32.mrf.mxu0
      %4588 = vmatprep.mubr.f32.mxu0 0.0
      %4589 = vmatmul.mubr.f32.gmra.mxu0 %v3038
      %v4590 = vpop.f32.mrf.mxu0
      %v4591 = vadd.f32 0.0, %v4590
      %v4592 = vpop.f32.mrf.mxu0
      %4593 = vmatprep.mubr.f32.mxu0 0.0
      %4594 = vmatmul.mubr.f32.gmra.mxu0 %v3041
      %v4595 = vpop.f32.mrf.mxu0
      %v4596 = vadd.f32 0.0, %v4595
      %v4597 = vpop.f32.mrf.mxu0
      %4598 = vmatprep.mubr.f32.mxu0 0.0
      %4599 = vmatmul.mubr.f32.gmra.mxu0 %v3044
      %v4600 = vpop.f32.mrf.mxu0
      %v4601 = vadd.f32 0.0, %v4600
      %v4602 = vpop.f32.mrf.mxu0
      %4603 = vmatprep.mubr.f32.mxu0 0.0
      %4604 = vmatmul.mubr.f32.gmra.mxu0 %v3047
      %v4605 = vpop.f32.mrf.mxu0
      %v4606 = vadd.f32 0.0, %v4605
      %v4607 = vpop.f32.mrf.mxu0
      %4608 = vmatprep.mubr.f32.mxu0 0.0
      %4609 = vmatmul.mubr.f32.gmra.mxu0 %v3050
      %v4610 = vpop.f32.mrf.mxu0
      %v4611 = vadd.f32 0.0, %v4610
      %v4612 = vpop.f32.mrf.mxu0
      %4613 = vmatprep.mubr.f32.mxu0 0.0
      %4614 = vmatmul.mubr.f32.gmra.mxu0 %v3053
      %v4615 = vpop.f32.mrf.mxu0
      %v4616 = vadd.f32 0.0, %v4615
      %v4617 = vpop.f32.mrf.mxu0
      %4618 = vmatprep.mubr.f32.mxu0 0.0
      %4619 = vmatmul.mubr.f32.gmra.mxu0 %v3056
      %v4620 = vpop.f32.mrf.mxu0
      %v4621 = vadd.f32 0.0, %v4620
      %v4622 = vpop.f32.mrf.mxu0
      %4623 = vmatprep.mubr.f32.mxu0 0.0
      %4624 = vmatmul.mubr.f32.gmra.mxu0 %v3059
      %v4625 = vpop.f32.mrf.mxu0
      %v4626 = vadd.f32 0.0, %v4625
      %v4627 = vpop.f32.mrf.mxu0
      %4628 = vmatprep.mubr.f32.mxu0 0.0
      %4629 = vmatmul.mubr.f32.gmra.mxu0 %v3062
      %v4630 = vpop.f32.mrf.mxu0
      %v4631 = vadd.f32 0.0, %v4630
      %v4632 = vpop.f32.mrf.mxu0
      %4633 = vmatprep.mubr.f32.mxu0 0.0
      %4634 = vmatmul.mubr.f32.gmra.mxu0 %v3065
      %v4635 = vpop.f32.mrf.mxu0
      %v4636 = vadd.f32 0.0, %v4635
      %v4637 = vpop.f32.mrf.mxu0
      %4638 = vmatprep.mubr.f32.mxu0 0.0
      %4639 = vmatmul.mubr.f32.gmra.mxu0 %v3068
      %v4640 = vpop.f32.mrf.mxu0
      %v4641 = vadd.f32 0.0, %v4640
      %v4642 = vpop.f32.mrf.mxu0
      %4643 = vmatprep.mubr.f32.mxu0 0.0
      %4644 = vmatmul.mubr.f32.gmra.mxu0 %v3071
      %v4645 = vpop.f32.mrf.mxu0
      %v4646 = vadd.f32 0.0, %v4645
      %v4647 = vpop.f32.mrf.mxu0
      %4648 = vmatprep.mubr.f32.mxu0 0.0
      %4649 = vmatmul.mubr.f32.gmra.mxu0 %v3074
      %v4650 = vpop.f32.mrf.mxu0
      %v4651 = vadd.f32 0.0, %v4650
      %v4652 = vpop.f32.mrf.mxu0
      %4653 = vmatprep.mubr.f32.mxu0 0.0
      %4654 = vmatmul.mubr.f32.gmra.mxu0 %v3077
      %v4655 = vpop.f32.mrf.mxu0
      %v4656 = vadd.f32 0.0, %v4655
      %v4657 = vpop.f32.mrf.mxu0
      %4658 = vmatprep.mubr.f32.mxu0 0.0
      %4659 = vmatmul.mubr.f32.gmra.mxu0 %v3080
      %v4660 = vpop.f32.mrf.mxu0
      %v4661 = vadd.f32 0.0, %v4660
      %v4662 = vpop.f32.mrf.mxu0
      %4663 = vmatprep.mubr.f32.mxu0 0.0
      %4664 = vmatmul.mubr.f32.gmra.mxu0 %v3083
      %v4665 = vpop.f32.mrf.mxu0
      %v4666 = vadd.f32 0.0, %v4665
      %v4667 = vpop.f32.mrf.mxu0
      %4668 = vmatprep.mubr.f32.mxu0 0.0
      %4669 = vmatmul.mubr.f32.gmra.mxu0 %v3086
      %v4670 = vpop.f32.mrf.mxu0
      %v4671 = vadd.f32 0.0, %v4670
      %v4672 = vpop.f32.mrf.mxu0
      %4673 = vmatprep.mubr.f32.mxu0 0.0
      %4674 = vmatmul.mubr.f32.gmra.mxu0 %v3089
      %v4675 = vpop.f32.mrf.mxu0
      %v4676 = vadd.f32 0.0, %v4675
      %v4677 = vpop.f32.mrf.mxu0
      %4678 = vmatprep.mubr.f32.mxu0 0.0
      %4679 = vmatmul.mubr.f32.gmra.mxu0 %v3092
      %v4680 = vpop.f32.mrf.mxu0
      %v4681 = vadd.f32 0.0, %v4680
      %v4682 = vpop.f32.mrf.mxu0
      %4683 = vmatprep.mubr.f32.mxu0 0.0
      %4684 = vmatmul.mubr.f32.gmra.mxu0 %v3095
      %v4685 = vpop.f32.mrf.mxu0
      %v4686 = vadd.f32 0.0, %v4685
      %v4687 = vpop.f32.mrf.mxu0
      %4688 = vmatprep.mubr.f32.mxu0 0.0
      %4689 = vmatmul.mubr.f32.gmra.mxu0 %v3098
      %v4690 = vpop.f32.mrf.mxu0
      %v4691 = vadd.f32 0.0, %v4690
      %v4692 = vpop.f32.mrf.mxu0
      %4693 = vmatprep.mubr.f32.mxu0 0.0
      %4694 = vmatmul.mubr.f32.gmra.mxu0 %v3101
      %v4695 = vpop.f32.mrf.mxu0
      %v4696 = vadd.f32 0.0, %v4695
      %v4697 = vpop.f32.mrf.mxu0
      %4698 = vmatprep.mubr.f32.mxu0 0.0
      %4699 = vmatmul.mubr.f32.gmra.mxu0 %v3104
      %v4700 = vpop.f32.mrf.mxu0
      %v4701 = vadd.f32 0.0, %v4700
      %v4702 = vpop.f32.mrf.mxu0
      %4703 = vmatprep.mubr.f32.mxu0 0.0
      %4704 = vmatmul.mubr.f32.gmra.mxu0 %v3107
      %v4705 = vpop.f32.mrf.mxu0
      %v4706 = vadd.f32 0.0, %v4705
      %v4707 = vpop.f32.mrf.mxu0
      %4708 = vmatprep.mubr.f32.mxu0 0.0
      %4709 = vmatmul.mubr.f32.gmra.mxu0 %v3110
      %v4710 = vpop.f32.mrf.mxu0
      %v4711 = vadd.f32 0.0, %v4710
      %v4712 = vpop.f32.mrf.mxu0
      %4713 = vmatprep.mubr.f32.mxu0 0.0
      %4714 = vmatmul.mubr.f32.gmra.mxu0 %v3113
      %v4715 = vpop.f32.mrf.mxu0
      %v4716 = vadd.f32 0.0, %v4715
      %v4717 = vpop.f32.mrf.mxu0
      %4718 = vmatprep.mubr.f32.mxu0 0.0
      %4719 = vmatmul.mubr.f32.gmra.mxu0 %v3116
      %v4720 = vpop.f32.mrf.mxu0
      %v4721 = vadd.f32 0.0, %v4720
      %v4722 = vpop.f32.mrf.mxu0
      %4723 = vmatprep.mubr.f32.mxu0 0.0
      %4724 = vmatmul.mubr.f32.gmra.mxu0 %v3119
      %v4725 = vpop.f32.mrf.mxu0
      %v4726 = vadd.f32 0.0, %v4725
      %v4727 = vpop.f32.mrf.mxu0
      %4728 = vmatprep.mubr.f32.mxu0 0.0
      %4729 = vmatmul.mubr.f32.gmra.mxu0 %v3122
      %v4730 = vpop.f32.mrf.mxu0
      %v4731 = vadd.f32 0.0, %v4730
      %v4732 = vpop.f32.mrf.mxu0
      %4733 = vmatprep.mubr.f32.mxu0 0.0
      %4734 = vmatmul.mubr.f32.gmra.mxu0 %v3125
      %v4735 = vpop.f32.mrf.mxu0
      %v4736 = vadd.f32 0.0, %v4735
      %v4737 = vpop.f32.mrf.mxu0
      %4738 = vmatprep.mubr.f32.mxu0 0.0
      %4739 = vmatmul.mubr.f32.gmra.mxu0 %v3128
      %v4740 = vpop.f32.mrf.mxu0
      %v4741 = vadd.f32 0.0, %v4740
      %v4742 = vpop.f32.mrf.mxu0
      %4743 = vmatprep.mubr.f32.mxu0 0.0
      %4744 = vmatmul.mubr.f32.gmra.mxu0 %v3131
      %v4745 = vpop.f32.mrf.mxu0
      %v4746 = vadd.f32 0.0, %v4745
      %v4747 = vpop.f32.mrf.mxu0
      %4748 = vmatprep.mubr.f32.mxu0 0.0
      %4749 = vmatmul.mubr.f32.gmra.mxu0 %v3134
      %v4750 = vpop.f32.mrf.mxu0
      %v4751 = vadd.f32 0.0, %v4750
      %v4752 = vpop.f32.mrf.mxu0
      %4753 = vmatprep.mubr.f32.mxu0 0.0
      %4754 = vmatmul.mubr.f32.gmra.mxu0 %v3137
      %v4755 = vpop.f32.mrf.mxu0
      %v4756 = vadd.f32 0.0, %v4755
      %v4757 = vpop.f32.mrf.mxu0
      %4758 = vmatprep.mubr.f32.mxu0 0.0
      %4759 = vmatmul.mubr.f32.gmra.mxu0 %v3140
      %v4760 = vpop.f32.mrf.mxu0
      %v4761 = vadd.f32 0.0, %v4760
      %v4762 = vpop.f32.mrf.mxu0
      %4763 = vmatprep.mubr.f32.mxu0 0.0
      %4764 = vmatmul.mubr.f32.gmra.mxu0 %v3143
      %v4765 = vpop.f32.mrf.mxu0
      %v4766 = vadd.f32 0.0, %v4765
      %v4767 = vpop.f32.mrf.mxu0
      %4768 = vmatprep.mubr.f32.mxu0 0.0
      %4769 = vmatmul.mubr.f32.gmra.mxu0 %v3146
      %v4770 = vpop.f32.mrf.mxu0
      %v4771 = vadd.f32 0.0, %v4770
      %v4772 = vpop.f32.mrf.mxu0
      %4773 = vmatprep.mubr.f32.mxu0 0.0
      %4774 = vmatmul.mubr.f32.gmra.mxu0 %v3149
      %v4775 = vpop.f32.mrf.mxu0
      %v4776 = vadd.f32 0.0, %v4775
      %v4777 = vpop.f32.mrf.mxu0
      %4778 = vmatprep.mubr.f32.mxu0 0.0
      %4779 = vmatmul.mubr.f32.gmra.mxu0 %v3152
      %v4780 = vpop.f32.mrf.mxu0
      %v4781 = vadd.f32 0.0, %v4780
      %v4782 = vpop.f32.mrf.mxu0
      %4783 = vmatprep.mubr.f32.mxu0 0.0
      %4784 = vmatmul.mubr.f32.gmra.mxu0 %v3155
      %v4785 = vpop.f32.mrf.mxu0
      %v4786 = vadd.f32 0.0, %v4785
      %v4787 = vpop.f32.mrf.mxu0
      %4788 = vmatprep.mubr.f32.mxu0 0.0
      %4789 = vmatmul.mubr.f32.gmra.mxu0 %v3158
      %v4790 = vpop.f32.mrf.mxu0
      %v4791 = vadd.f32 0.0, %v4790
      %v4792 = vpop.f32.mrf.mxu0
      %4793 = vmatprep.mubr.f32.mxu0 0.0
      %4794 = vmatmul.mubr.f32.gmra.mxu0 %v3161
      %v4795 = vpop.f32.mrf.mxu0
      %v4796 = vadd.f32 0.0, %v4795
      %v4797 = vpop.f32.mrf.mxu0
      %4798 = vmatprep.mubr.f32.mxu0 0.0
      %4799 = vmatmul.mubr.f32.gmra.mxu0 %v3164
      %v4800 = vpop.f32.mrf.mxu0
      %v4801 = vadd.f32 0.0, %v4800
      %v4802 = vpop.f32.mrf.mxu0
      %4803 = vmatprep.mubr.f32.mxu0 0.0
      %4804 = vmatmul.mubr.f32.gmra.mxu0 %v3167
      %v4805 = vpop.f32.mrf.mxu0
      %v4806 = vadd.f32 0.0, %v4805
      %v4807 = vpop.f32.mrf.mxu0
      %4808 = vmatprep.mubr.f32.mxu0 0.0
      %4809 = vmatmul.mubr.f32.gmra.mxu0 %v3170
      %v4810 = vpop.f32.mrf.mxu0
      %v4811 = vadd.f32 0.0, %v4810
      %v4812 = vpop.f32.mrf.mxu0
      %4813 = vmatprep.mubr.f32.mxu0 0.0
      %4814 = vmatmul.mubr.f32.gmra.mxu0 %v3173
      %v4815 = vpop.f32.mrf.mxu0
      %v4816 = vadd.f32 0.0, %v4815
      %v4817 = vpop.f32.mrf.mxu0
      %4818 = vmatprep.mubr.f32.mxu0 0.0
      %4819 = vmatmul.mubr.f32.gmra.mxu0 %v3176
      %v4820 = vpop.f32.mrf.mxu0
      %v4821 = vadd.f32 0.0, %v4820
      %v4822 = vpop.f32.mrf.mxu0
      %4823 = vmatprep.mubr.f32.mxu0 0.0
      %4824 = vmatmul.mubr.f32.gmra.mxu0 %v3179
      %v4825 = vpop.f32.mrf.mxu0
      %v4826 = vadd.f32 0.0, %v4825
      %v4827 = vpop.f32.mrf.mxu0
      %4828 = vmatprep.mubr.f32.mxu0 0.0
      %4829 = vmatmul.mubr.f32.gmra.mxu0 %v3182
      %v4830 = vpop.f32.mrf.mxu0
      %v4831 = vadd.f32 0.0, %v4830
      %v4832 = vpop.f32.mrf.mxu0
      %4833 = vmatprep.mubr.f32.mxu0 0.0
      %4834 = vmatmul.mubr.f32.gmra.mxu0 %v3185
      %v4835 = vpop.f32.mrf.mxu0
      %v4836 = vadd.f32 0.0, %v4835
      %v4837 = vpop.f32.mrf.mxu0
      %4838 = vmatprep.mubr.f32.mxu0 0.0
      %4839 = vmatmul.mubr.f32.gmra.mxu0 %v3188
      %v4840 = vpop.f32.mrf.mxu0
      %v4841 = vadd.f32 0.0, %v4840
      %v4842 = vpop.f32.mrf.mxu0
      %4843 = vmatprep.mubr.f32.mxu0 0.0
      %4844 = vmatmul.mubr.f32.gmra.mxu0 %v3191
      %v4845 = vpop.f32.mrf.mxu0
      %v4846 = vadd.f32 0.0, %v4845
      %v4847 = vpop.f32.mrf.mxu0
      %4848 = vmatprep.mubr.f32.mxu0 0.0
      %4849 = vmatmul.mubr.f32.gmra.mxu0 %v3194
      %v4850 = vpop.f32.mrf.mxu0
      %v4851 = vadd.f32 0.0, %v4850
      %v4852 = vpop.f32.mrf.mxu0
      %4853 = vmatprep.mubr.f32.mxu0 0.0
      %4854 = vmatmul.mubr.f32.gmra.mxu0 %v3197
      %v4855 = vpop.f32.mrf.mxu0
      %v4856 = vadd.f32 0.0, %v4855
      %v4857 = vpop.f32.mrf.mxu0
      %4858 = vmatprep.mubr.f32.mxu0 0.0
      %4859 = vmatmul.mubr.f32.gmra.mxu0 %v3200
      %v4860 = vpop.f32.mrf.mxu0
      %v4861 = vadd.f32 0.0, %v4860
      %v4862 = vpop.f32.mrf.mxu0
      %4863 = vmatprep.mubr.f32.mxu0 0.0
      %4864 = vmatmul.mubr.f32.gmra.mxu0 %v3203
      %v4865 = vpop.f32.mrf.mxu0
      %v4866 = vadd.f32 0.0, %v4865
      %v4867 = vpop.f32.mrf.mxu0
      %4868 = vmatprep.mubr.f32.mxu0 0.0
      %4869 = vmatmul.mubr.f32.gmra.mxu0 %v3206
      %v4870 = vpop.f32.mrf.mxu0
      %v4871 = vadd.f32 0.0, %v4870
      %v4872 = vpop.f32.mrf.mxu0
      %4873 = vmatprep.mubr.f32.mxu0 0.0
      %4874 = vmatmul.mubr.f32.gmra.mxu0 %v3209
      %v4875 = vpop.f32.mrf.mxu0
      %v4876 = vadd.f32 0.0, %v4875
      %v4877 = vpop.f32.mrf.mxu0
      %4878 = vmatprep.mubr.f32.mxu0 0.0
      %4879 = vmatmul.mubr.f32.gmra.mxu0 %v3212
      %v4880 = vpop.f32.mrf.mxu0
      %v4881 = vadd.f32 0.0, %v4880
      %v4882 = vpop.f32.mrf.mxu0
      %4883 = vmatprep.mubr.f32.mxu0 0.0
      %4884 = vmatmul.mubr.f32.gmra.mxu0 %v3215
      %v4885 = vpop.f32.mrf.mxu0
      %v4886 = vadd.f32 0.0, %v4885
      %v4887 = vpop.f32.mrf.mxu0
      %4888 = vmatprep.mubr.f32.mxu0 0.0
      %4889 = vmatmul.mubr.f32.gmra.mxu0 %v3218
      %v4890 = vpop.f32.mrf.mxu0
      %v4891 = vadd.f32 0.0, %v4890
      %v4892 = vpop.f32.mrf.mxu0
      %4893 = vmatprep.mubr.f32.mxu0 0.0
      %4894 = vmatmul.mubr.f32.gmra.mxu0 %v3221
      %v4895 = vpop.f32.mrf.mxu0
      %v4896 = vadd.f32 0.0, %v4895
      %v4897 = vpop.f32.mrf.mxu0
      %4898 = vmatprep.mubr.f32.mxu0 0.0
      %4899 = vmatmul.mubr.f32.gmra.mxu0 %v3224
      %v4900 = vpop.f32.mrf.mxu0
      %v4901 = vadd.f32 0.0, %v4900
      %v4902 = vpop.f32.mrf.mxu0
      %4903 = vmatprep.mubr.f32.mxu0 0.0
      %4904 = vmatmul.mubr.f32.gmra.mxu0 %v3227
      %v4905 = vpop.f32.mrf.mxu0
      %v4906 = vadd.f32 0.0, %v4905
      %v4907 = vpop.f32.mrf.mxu0
      %4908 = vmatprep.mubr.f32.mxu0 0.0
      %4909 = vmatmul.mubr.f32.gmra.mxu0 %v3230
      %v4910 = vpop.f32.mrf.mxu0
      %v4911 = vadd.f32 0.0, %v4910
      %v4912 = vpop.f32.mrf.mxu0
      %4913 = vmatprep.mubr.f32.mxu0 0.0
      %4914 = vmatmul.mubr.f32.gmra.mxu0 %v3233
      %v4915 = vpop.f32.mrf.mxu0
      %v4916 = vadd.f32 0.0, %v4915
      %v4917 = vpop.f32.mrf.mxu0
      %4918 = vmatprep.mubr.f32.mxu0 0.0
      %4919 = vmatmul.mubr.f32.gmra.mxu0 %v3236
      %v4920 = vpop.f32.mrf.mxu0
      %v4921 = vadd.f32 0.0, %v4920
      %v4922 = vpop.f32.mrf.mxu0
      %4923 = vmatprep.mubr.f32.mxu0 0.0
      %4924 = vmatmul.mubr.f32.gmra.mxu0 %v3239
      %v4925 = vpop.f32.mrf.mxu0
      %v4926 = vadd.f32 0.0, %v4925
      %v4927 = vpop.f32.mrf.mxu0
      %4928 = vmatprep.mubr.f32.mxu0 0.0
      %4929 = vmatmul.mubr.f32.gmra.mxu0 %v3242
      %v4930 = vpop.f32.mrf.mxu0
      %v4931 = vadd.f32 0.0, %v4930
      %v4932 = vpop.f32.mrf.mxu0
      %4933 = vmatprep.mubr.f32.mxu0 0.0
      %4934 = vmatmul.mubr.f32.gmra.mxu0 %v3245
      %v4935 = vpop.f32.mrf.mxu0
      %v4936 = vadd.f32 0.0, %v4935
      %v4937 = vpop.f32.mrf.mxu0
      %4938 = vmatprep.mubr.f32.mxu0 0.0
      %4939 = vmatmul.mubr.f32.gmra.mxu0 %v3248
      %v4940 = vpop.f32.mrf.mxu0
      %v4941 = vadd.f32 0.0, %v4940
      %v4942 = vpop.f32.mrf.mxu0
      %4943 = vmatprep.mubr.f32.mxu0 0.0
      %4944 = vmatmul.mubr.f32.gmra.mxu0 %v3251
      %v4945 = vpop.f32.mrf.mxu0
      %v4946 = vadd.f32 0.0, %v4945
      %v4947 = vpop.f32.mrf.mxu0
      %4948 = vmatprep.mubr.f32.mxu0 0.0
      %4949 = vmatmul.mubr.f32.gmra.mxu0 %v3254
      %v4950 = vpop.f32.mrf.mxu0
      %v4951 = vadd.f32 0.0, %v4950
      %v4952 = vpop.f32.mrf.mxu0
      %4953 = vmatprep.mubr.f32.mxu0 0.0
      %4954 = vmatmul.mubr.f32.gmra.mxu0 %v3257
      %v4955 = vpop.f32.mrf.mxu0
      %v4956 = vadd.f32 0.0, %v4955
      %v4957 = vpop.f32.mrf.mxu0
      %4958 = vmatprep.mubr.f32.mxu0 0.0
      %4959 = vmatmul.mubr.f32.gmra.mxu0 %v3260
      %v4960 = vpop.f32.mrf.mxu0
      %v4961 = vadd.f32 0.0, %v4960
      %v4962 = vpop.f32.mrf.mxu0
      %4963 = vmatprep.mubr.f32.mxu0 0.0
      %4964 = vmatmul.mubr.f32.gmra.mxu0 %v3263
      %v4965 = vpop.f32.mrf.mxu0
      %v4966 = vadd.f32 0.0, %v4965
      %v4967 = vpop.f32.mrf.mxu0
      %4968 = vmatprep.mubr.f32.mxu0 0.0
      %4969 = vmatmul.mubr.f32.gmra.mxu0 %v3266
      %v4970 = vpop.f32.mrf.mxu0
      %v4971 = vadd.f32 0.0, %v4970
      %v4972 = vpop.f32.mrf.mxu0
      %4973 = vmatprep.mubr.f32.mxu0 0.0
      %4974 = vmatmul.mubr.f32.gmra.mxu0 %v3269
      %v4975 = vpop.f32.mrf.mxu0
      %v4976 = vadd.f32 0.0, %v4975
      %v4977 = vpop.f32.mrf.mxu0
      %4978 = vmatprep.mubr.f32.mxu0 0.0
      %4979 = vmatmul.mubr.f32.gmra.mxu0 %v3272
      %v4980 = vpop.f32.mrf.mxu0
      %v4981 = vadd.f32 0.0, %v4980
      %v4982 = vpop.f32.mrf.mxu0
      %4983 = vmatprep.mubr.f32.mxu0 0.0
      %4984 = vmatmul.mubr.f32.gmra.mxu0 %v3275
      %v4985 = vpop.f32.mrf.mxu0
      %v4986 = vadd.f32 0.0, %v4985
      %v4987 = vpop.f32.mrf.mxu0
      %4988 = vmatprep.mubr.f32.mxu0 0.0
      %4989 = vmatmul.mubr.f32.gmra.mxu0 %v3278
      %v4990 = vpop.f32.mrf.mxu0
      %v4991 = vadd.f32 0.0, %v4990
      %v4992 = vpop.f32.mrf.mxu0
      %4993 = vmatprep.mubr.f32.mxu0 0.0
      %4994 = vmatmul.mubr.f32.gmra.mxu0 %v3281
      %v4995 = vpop.f32.mrf.mxu0
      %v4996 = vadd.f32 0.0, %v4995
      %v4997 = vpop.f32.mrf.mxu0
      %4998 = vmatprep.mubr.f32.mxu0 0.0
      %4999 = vmatmul.mubr.f32.gmra.mxu0 %v3284
      %v5000 = vpop.f32.mrf.mxu0
      %v5001 = vadd.f32 0.0, %v5000
      %v5002 = vpop.f32.mrf.mxu0
      %5003 = vmatprep.mubr.f32.mxu0 0.0
      %5004 = vmatmul.mubr.f32.gmra.mxu0 %v3287
      %v5005 = vpop.f32.mrf.mxu0
      %v5006 = vadd.f32 0.0, %v5005
      %v5007 = vpop.f32.mrf.mxu0
      %5008 = vmatprep.mubr.f32.mxu0 0.0
      %5009 = vmatmul.mubr.f32.gmra.mxu0 %v3290
      %v5010 = vpop.f32.mrf.mxu0
      %v5011 = vadd.f32 0.0, %v5010
      %v5012 = vpop.f32.mrf.mxu0
      %5013 = vmatprep.mubr.f32.mxu0 0.0
      %5014 = vmatmul.mubr.f32.gmra.mxu0 %v3293
      %v5015 = vpop.f32.mrf.mxu0
      %v5016 = vadd.f32 0.0, %v5015
      %v5017 = vpop.f32.mrf.mxu0
      %5018 = vmatprep.mubr.f32.mxu0 0.0
      %5019 = vmatmul.mubr.f32.gmra.mxu0 %v3296
      %v5020 = vpop.f32.mrf.mxu0
      %v5021 = vadd.f32 0.0, %v5020
      %v5022 = vpop.f32.mrf.mxu0
      %5023 = vmatprep.mubr.f32.mxu0 0.0
      %5024 = vmatmul.mubr.f32.gmra.mxu0 %v3299
      %v5025 = vpop.f32.mrf.mxu0
      %v5026 = vadd.f32 0.0, %v5025
      %v5027 = vpop.f32.mrf.mxu0
      %5028 = vmatprep.mubr.f32.mxu0 0.0
      %5029 = vmatmul.mubr.f32.gmra.mxu0 %v3302
      %v5030 = vpop.f32.mrf.mxu0
      %v5031 = vadd.f32 0.0, %v5030
      %v5032 = vpop.f32.mrf.mxu0
      %5033 = vmatprep.mubr.f32.mxu0 0.0
      %5034 = vmatmul.mubr.f32.gmra.mxu0 %v3305
      %v5035 = vpop.f32.mrf.mxu0
      %v5036 = vadd.f32 0.0, %v5035
      %v5037 = vpop.f32.mrf.mxu0
      %5038 = vmatprep.mubr.f32.mxu0 0.0
      %5039 = vmatmul.mubr.f32.gmra.mxu0 %v3308
      %v5040 = vpop.f32.mrf.mxu0
      %v5041 = vadd.f32 0.0, %v5040
      %v5042 = vpop.f32.mrf.mxu0
      %5043 = vmatprep.mubr.f32.mxu0 0.0
      %5044 = vmatmul.mubr.f32.gmra.mxu0 %v3311
      %v5045 = vpop.f32.mrf.mxu0
      %v5046 = vadd.f32 0.0, %v5045
      %v5047 = vpop.f32.mrf.mxu0
      %5048 = vmatprep.mubr.f32.mxu0 0.0
      %5049 = vmatmul.mubr.f32.gmra.mxu0 %v3314
      %v5050 = vpop.f32.mrf.mxu0
      %v5051 = vadd.f32 0.0, %v5050
      %v5052 = vpop.f32.mrf.mxu0
      %5053 = vmatprep.mubr.f32.mxu0 0.0
      %5054 = vmatmul.mubr.f32.gmra.mxu0 %v3317
      %v5055 = vpop.f32.mrf.mxu0
      %v5056 = vadd.f32 0.0, %v5055
      %v5057 = vpop.f32.mrf.mxu0
      %5058 = vmatprep.mubr.f32.mxu0 0.0
      %5059 = vmatmul.mubr.f32.gmra.mxu0 %v3320
      %v5060 = vpop.f32.mrf.mxu0
      %v5061 = vadd.f32 0.0, %v5060
      %v5062 = vpop.f32.mrf.mxu0
      %5063 = vmatprep.mubr.f32.mxu0 0.0
      %5064 = vmatmul.mubr.f32.gmra.mxu0 %v3323
      %v5065 = vpop.f32.mrf.mxu0
      %v5066 = vadd.f32 0.0, %v5065
      %v5067 = vpop.f32.mrf.mxu0
      %5068 = vmatprep.mubr.f32.mxu0 0.0
      %5069 = vmatmul.mubr.f32.gmra.mxu0 %v3326
      %v5070 = vpop.f32.mrf.mxu0
      %v5071 = vadd.f32 0.0, %v5070
      %v5072 = vpop.f32.mrf.mxu0
      %5073 = vmatprep.mubr.f32.mxu0 0.0
      %5074 = vmatmul.mubr.f32.gmra.mxu0 %v3329
      %v5075 = vpop.f32.mrf.mxu0
      %v5076 = vadd.f32 0.0, %v5075
      %v5077 = vpop.f32.mrf.mxu0
      %5078 = vmatprep.mubr.f32.mxu0 0.0
      %5079 = vmatmul.mubr.f32.gmra.mxu0 %v3332
      %v5080 = vpop.f32.mrf.mxu0
      %v5081 = vadd.f32 0.0, %v5080
      %v5082 = vpop.f32.mrf.mxu0
      %5083 = vmatprep.mubr.f32.mxu0 0.0
      %5084 = vmatmul.mubr.f32.gmra.mxu0 %v3335
      %v5085 = vpop.f32.mrf.mxu0
      %v5086 = vadd.f32 0.0, %v5085
      %v5087 = vpop.f32.mrf.mxu0
      %5088 = vmatprep.mubr.f32.mxu0 0.0
      %5089 = vmatmul.mubr.f32.gmra.mxu0 %v3338
      %v5090 = vpop.f32.mrf.mxu0
      %v5091 = vadd.f32 0.0, %v5090
      %v5092 = vpop.f32.mrf.mxu0
      %5093 = vmatprep.mubr.f32.mxu0 0.0
      %5094 = vmatmul.mubr.f32.gmra.mxu0 %v3341
      %v5095 = vpop.f32.mrf.mxu0
      %v5096 = vadd.f32 0.0, %v5095
      %v5097 = vpop.f32.mrf.mxu0
      %5098 = vmatprep.mubr.f32.mxu0 0.0
      %5099 = vmatmul.mubr.f32.gmra.mxu0 %v3344
      %v5100 = vpop.f32.mrf.mxu0
      %v5101 = vadd.f32 0.0, %v5100
      %v5102 = vpop.f32.mrf.mxu0
      %5103 = vmatprep.mubr.f32.mxu0 0.0
      %5104 = vmatmul.mubr.f32.gmra.mxu0 %v3347
      %v5105 = vpop.f32.mrf.mxu0
      %v5106 = vadd.f32 0.0, %v5105
      %v5107 = vpop.f32.mrf.mxu0
      %5108 = vmatprep.mubr.f32.mxu0 0.0
      %5109 = vmatmul.mubr.f32.gmra.mxu0 %v3350
      %v5110 = vpop.f32.mrf.mxu0
      %v5111 = vadd.f32 0.0, %v5110
      %v5112 = vpop.f32.mrf.mxu0
      %5113 = vmatprep.mubr.f32.mxu0 0.0
      %5114 = vmatmul.mubr.f32.gmra.mxu0 %v3353
      %v5115 = vpop.f32.mrf.mxu0
      %v5116 = vadd.f32 0.0, %v5115
      %v5117 = vpop.f32.mrf.mxu0
      %5118 = vmatprep.mubr.f32.mxu0 0.0
      %5119 = vmatmul.mubr.f32.gmra.mxu0 %v3356
      %v5120 = vpop.f32.mrf.mxu0
      %v5121 = vadd.f32 0.0, %v5120
      %v5122 = vpop.f32.mrf.mxu0
      %5123 = vmatprep.mubr.f32.mxu0 0.0
      %5124 = vmatmul.mubr.f32.gmra.mxu0 %v3359
      %v5125 = vpop.f32.mrf.mxu0
      %v5126 = vadd.f32 0.0, %v5125
      %v5127 = vpop.f32.mrf.mxu0
      %5128 = vmatprep.mubr.f32.mxu0 0.0
      %5129 = vmatmul.mubr.f32.gmra.mxu0 %v3362
      %v5130 = vpop.f32.mrf.mxu0
      %v5131 = vadd.f32 0.0, %v5130
      %v5132 = vpop.f32.mrf.mxu0
      %5133 = vmatprep.mubr.f32.mxu0 0.0
      %5134 = vmatmul.mubr.f32.gmra.mxu0 %v3365
      %v5135 = vpop.f32.mrf.mxu0
      %v5136 = vadd.f32 0.0, %v5135
      %v5137 = vpop.f32.mrf.mxu0
      %5138 = vmatprep.mubr.f32.mxu0 0.0
      %5139 = vmatmul.mubr.f32.gmra.mxu0 %v3368
      %v5140 = vpop.f32.mrf.mxu0
      %v5141 = vadd.f32 0.0, %v5140
      %v5142 = vpop.f32.mrf.mxu0
      %5143 = vmatprep.mubr.f32.mxu0 0.0
      %5144 = vmatmul.mubr.f32.gmra.mxu0 %v3371
      %v5145 = vpop.f32.mrf.mxu0
      %v5146 = vadd.f32 0.0, %v5145
      %v5147 = vpop.f32.mrf.mxu0
      %5148 = vmatprep.mubr.f32.mxu0 0.0
      %5149 = vmatmul.mubr.f32.gmra.mxu0 %v3374
      %v5150 = vpop.f32.mrf.mxu0
      %v5151 = vadd.f32 0.0, %v5150
      %v5152 = vpop.f32.mrf.mxu0
      %5153 = vmatprep.mubr.f32.mxu0 0.0
      %5154 = vmatmul.mubr.f32.gmra.mxu0 %v3377
      %v5155 = vpop.f32.mrf.mxu0
      %v5156 = vadd.f32 0.0, %v5155
      %v5157 = vpop.f32.mrf.mxu0
      %5158 = vmatprep.mubr.f32.mxu0 0.0
      %5159 = vmatmul.mubr.f32.gmra.mxu0 %v3380
      %v5160 = vpop.f32.mrf.mxu0
      %v5161 = vadd.f32 0.0, %v5160
      %v5162 = vpop.f32.mrf.mxu0
      %5163 = vmatprep.mubr.f32.mxu0 0.0
      %5164 = vmatmul.mubr.f32.gmra.mxu0 %v3383
      %v5165 = vpop.f32.mrf.mxu0
      %v5166 = vadd.f32 0.0, %v5165
      %v5167 = vpop.f32.mrf.mxu0
      %5168 = vmatprep.mubr.f32.mxu0 0.0
      %5169 = vmatmul.mubr.f32.gmra.mxu0 %v3386
      %v5170 = vpop.f32.mrf.mxu0
      %v5171 = vadd.f32 0.0, %v5170
      %v5172 = vpop.f32.mrf.mxu0
      %5173 = vmatprep.mubr.f32.mxu0 0.0
      %5174 = vmatmul.mubr.f32.gmra.mxu0 %v3389
      %v5175 = vpop.f32.mrf.mxu0
      %v5176 = vadd.f32 0.0, %v5175
      %v5177 = vpop.f32.mrf.mxu0
      %5178 = vmatprep.mubr.f32.mxu0 0.0
      %5179 = vmatmul.mubr.f32.gmra.mxu0 %v3392
      %v5180 = vpop.f32.mrf.mxu0
      %v5181 = vadd.f32 0.0, %v5180
      %v5182 = vpop.f32.mrf.mxu0
      %5183 = vmatprep.mubr.f32.mxu0 0.0
      %5184 = vmatmul.mubr.f32.gmra.mxu0 %v3395
      %v5185 = vpop.f32.mrf.mxu0
      %v5186 = vadd.f32 0.0, %v5185
      %v5187 = vpop.f32.mrf.mxu0
      %5188 = vmatprep.mubr.f32.mxu0 0.0
      %5189 = vmatmul.mubr.f32.gmra.mxu0 %v3398
      %v5190 = vpop.f32.mrf.mxu0
      %v5191 = vadd.f32 0.0, %v5190
      %v5192 = vpop.f32.mrf.mxu0
      %5193 = vmatprep.mubr.f32.mxu0 0.0
      %5194 = vmatmul.mubr.f32.gmra.mxu0 %v3401
      %v5195 = vpop.f32.mrf.mxu0
      %v5196 = vadd.f32 0.0, %v5195
      %v5197 = vpop.f32.mrf.mxu0
      %5198 = vmatprep.mubr.f32.mxu0 0.0
      %5199 = vmatmul.mubr.f32.gmra.mxu0 %v3404
      %v5200 = vpop.f32.mrf.mxu0
      %v5201 = vadd.f32 0.0, %v5200
      %v5202 = vpop.f32.mrf.mxu0
      %5203 = vmatprep.mubr.f32.mxu0 0.0
      %5204 = vmatmul.mubr.f32.gmra.mxu0 %v3407
      %v5205 = vpop.f32.mrf.mxu0
      %v5206 = vadd.f32 0.0, %v5205
      %v5207 = vpop.f32.mrf.mxu0
      %5208 = vmatprep.mubr.f32.mxu0 0.0
      %5209 = vmatmul.mubr.f32.gmra.mxu0 %v3410
      %v5210 = vpop.f32.mrf.mxu0
      %v5211 = vadd.f32 0.0, %v5210
      %v5212 = vpop.f32.mrf.mxu0
      %5213 = vmatprep.mubr.f32.mxu0 0.0
      %5214 = vmatmul.mubr.f32.gmra.mxu0 %v3413
      %v5215 = vpop.f32.mrf.mxu0
      %v5216 = vadd.f32 0.0, %v5215
      %v5217 = vpop.f32.mrf.mxu0
      %5218 = vmatprep.mubr.f32.mxu0 0.0
      %5219 = vmatmul.mubr.f32.gmra.mxu0 %v3416
      %v5220 = vpop.f32.mrf.mxu0
      %v5221 = vadd.f32 0.0, %v5220
      %v5222 = vpop.f32.mrf.mxu0
      %5223 = vmatprep.mubr.f32.mxu0 0.0
      %5224 = vmatmul.mubr.f32.gmra.mxu0 %v3419
      %v5225 = vpop.f32.mrf.mxu0
      %v5226 = vadd.f32 0.0, %v5225
      %v5227 = vpop.f32.mrf.mxu0
      %5228 = vmatprep.mubr.f32.mxu0 0.0
      %5229 = vmatmul.mubr.f32.gmra.mxu0 %v3422
      %v5230 = vpop.f32.mrf.mxu0
      %v5231 = vadd.f32 0.0, %v5230
      %v5232 = vpop.f32.mrf.mxu0
      %5233 = vmatprep.mubr.f32.mxu0 0.0
      %5234 = vmatmul.mubr.f32.gmra.mxu0 %v3425
      %v5235 = vpop.f32.mrf.mxu0
      %v5236 = vadd.f32 0.0, %v5235
      %v5237 = vpop.f32.mrf.mxu0
      %5238 = vmatprep.mubr.f32.mxu0 0.0
      %5239 = vmatmul.mubr.f32.gmra.mxu0 %v3428
      %v5240 = vpop.f32.mrf.mxu0
      %v5241 = vadd.f32 0.0, %v5240
      %v5242 = vpop.f32.mrf.mxu0
      %5243 = vmatprep.mubr.f32.mxu0 0.0
      %5244 = vmatmul.mubr.f32.gmra.mxu0 %v3431
      %v5245 = vpop.f32.mrf.mxu0
      %v5246 = vadd.f32 0.0, %v5245
      %v5247 = vpop.f32.mrf.mxu0
      %5248 = vmatprep.mubr.f32.mxu0 0.0
      %5249 = vmatmul.mubr.f32.gmra.mxu0 %v3434
      %v5250 = vpop.f32.mrf.mxu0
      %v5251 = vadd.f32 0.0, %v5250
      %v5252 = vpop.f32.mrf.mxu0
      %5253 = vmatprep.mubr.f32.mxu0 0.0
      %5254 = vmatmul.mubr.f32.gmra.mxu0 %v3437
      %v5255 = vpop.f32.mrf.mxu0
      %v5256 = vadd.f32 0.0, %v5255
      %v5257 = vpop.f32.mrf.mxu0
      %5258 = vmatprep.mubr.f32.mxu0 0.0
      %5259 = vmatmul.mubr.f32.gmra.mxu0 %v3440
      %v5260 = vpop.f32.mrf.mxu0
      %v5261 = vadd.f32 0.0, %v5260
      %v5262 = vpop.f32.mrf.mxu0
      %5263 = vmatprep.mubr.f32.mxu0 0.0
      %5264 = vmatmul.mubr.f32.gmra.mxu0 %v3443
      %v5265 = vpop.f32.mrf.mxu0
      %v5266 = vadd.f32 0.0, %v5265
      %v5267 = vpop.f32.mrf.mxu0
      %5268 = vmatprep.mubr.f32.mxu0 0.0
      %5269 = vmatmul.mubr.f32.gmra.mxu0 %v3446
      %v5270 = vpop.f32.mrf.mxu0
      %v5271 = vadd.f32 0.0, %v5270
      %v5272 = vpop.f32.mrf.mxu0
      %5273 = vmatprep.mubr.f32.mxu0 0.0
      %5274 = vmatmul.mubr.f32.gmra.mxu0 %v3449
      %v5275 = vpop.f32.mrf.mxu0
      %v5276 = vadd.f32 0.0, %v5275
      %v5277 = vpop.f32.mrf.mxu0
      %5278 = vmatprep.mubr.f32.mxu0 0.0
      %5279 = vmatmul.mubr.f32.gmra.mxu0 %v3452
      %v5280 = vpop.f32.mrf.mxu0
      %v5281 = vadd.f32 0.0, %v5280
      %v5282 = vpop.f32.mrf.mxu0
      %5283 = vmatprep.mubr.f32.mxu0 0.0
      %5284 = vmatmul.mubr.f32.gmra.mxu0 %v3455
      %v5285 = vpop.f32.mrf.mxu0
      %v5286 = vadd.f32 0.0, %v5285
      %v5287 = vpop.f32.mrf.mxu0
      %5288 = vmatprep.mubr.f32.mxu0 0.0
      %5289 = vmatmul.mubr.f32.gmra.mxu0 %v3458
      %v5290 = vpop.f32.mrf.mxu0
      %v5291 = vadd.f32 0.0, %v5290
      %v5292 = vpop.f32.mrf.mxu0
      %5293 = vmatprep.mubr.f32.mxu0 0.0
      %5294 = vmatmul.mubr.f32.gmra.mxu0 %v3461
      %v5295 = vpop.f32.mrf.mxu0
      %v5296 = vadd.f32 0.0, %v5295
      %v5297 = vpop.f32.mrf.mxu0
      %5298 = vmatprep.mubr.f32.mxu0 0.0
      %5299 = vmatmul.mubr.f32.gmra.mxu0 %v3464
      %v5300 = vpop.f32.mrf.mxu0
      %v5301 = vadd.f32 0.0, %v5300
      %v5302 = vpop.f32.mrf.mxu0
      %5303 = vmatprep.mubr.f32.mxu0 0.0
      %5304 = vmatmul.mubr.f32.gmra.mxu0 %v3467
      %v5305 = vpop.f32.mrf.mxu0
      %v5306 = vadd.f32 0.0, %v5305
      %v5307 = vpop.f32.mrf.mxu0
      %5308 = vmatprep.mubr.f32.mxu0 0.0
      %5309 = vmatmul.mubr.f32.gmra.mxu0 %v3470
      %v5310 = vpop.f32.mrf.mxu0
      %v5311 = vadd.f32 0.0, %v5310
      %v5312 = vpop.f32.mrf.mxu0
      %5313 = vmatprep.mubr.f32.mxu0 0.0
      %5314 = vmatmul.mubr.f32.gmra.mxu0 %v3473
      %v5315 = vpop.f32.mrf.mxu0
      %v5316 = vadd.f32 0.0, %v5315
      %v5317 = vpop.f32.mrf.mxu0
      %5318 = vmatprep.mubr.f32.mxu0 0.0
      %5319 = vmatmul.mubr.f32.gmra.mxu0 %v3476
      %v5320 = vpop.f32.mrf.mxu0
      %v5321 = vadd.f32 0.0, %v5320
      %v5322 = vpop.f32.mrf.mxu0
      %5323 = vmatprep.mubr.f32.mxu0 0.0
      %5324 = vmatmul.mubr.f32.gmra.mxu0 %v3479
      %v5325 = vpop.f32.mrf.mxu0
      %v5326 = vadd.f32 0.0, %v5325
      %v5327 = vpop.f32.mrf.mxu0
      %5328 = vmatprep.mubr.f32.mxu0 0.0
      %5329 = vmatmul.mubr.f32.gmra.mxu0 %v3482
      %v5330 = vpop.f32.mrf.mxu0
      %v5331 = vadd.f32 0.0, %v5330
      %v5332 = vpop.f32.mrf.mxu0
      %5333 = vmatprep.mubr.f32.mxu0 0.0
      %5334 = vmatmul.mubr.f32.gmra.mxu0 %v3485
      %v5335 = vpop.f32.mrf.mxu0
      %v5336 = vadd.f32 0.0, %v5335
      %v5337 = vpop.f32.mrf.mxu0
      %5338 = vmatprep.mubr.f32.mxu0 0.0
      %5339 = vmatmul.mubr.f32.gmra.mxu0 %v3488
      %v5340 = vpop.f32.mrf.mxu0
      %v5341 = vadd.f32 0.0, %v5340
      %v5342 = vpop.f32.mrf.mxu0
      %5343 = vmatprep.mubr.f32.mxu0 0.0
      %5344 = vmatmul.mubr.f32.gmra.mxu0 %v3491
      %v5345 = vpop.f32.mrf.mxu0
      %v5346 = vadd.f32 0.0, %v5345
      %v5347 = vpop.f32.mrf.mxu0
      %5348 = vmatprep.mubr.f32.mxu0 0.0
      %5349 = vmatmul.mubr.f32.gmra.mxu0 %v3494
      %v5350 = vpop.f32.mrf.mxu0
      %v5351 = vadd.f32 0.0, %v5350
      %v5352 = vpop.f32.mrf.mxu0
      %5353 = vmatprep.mubr.f32.mxu0 0.0
      %5354 = vmatmul.mubr.f32.gmra.mxu0 %v3497
      %v5355 = vpop.f32.mrf.mxu0
      %v5356 = vadd.f32 0.0, %v5355
      %v5357 = vpop.f32.mrf.mxu0
      %5358 = vmatprep.mubr.f32.mxu0 0.0
      %5359 = vmatmul.mubr.f32.gmra.mxu0 %v3500
      %v5360 = vpop.f32.mrf.mxu0
      %v5361 = vadd.f32 0.0, %v5360
      %v5362 = vpop.f32.mrf.mxu0
      %5363 = vmatprep.mubr.f32.mxu0 0.0
      %5364 = vmatmul.mubr.f32.gmra.mxu0 %v3503
      %v5365 = vpop.f32.mrf.mxu0
      %v5366 = vadd.f32 0.0, %v5365
      %v5367 = vpop.f32.mrf.mxu0
      %5368 = vmatprep.mubr.f32.mxu0 0.0
      %5369 = vmatmul.mubr.f32.gmra.mxu0 %v3506
      %v5370 = vpop.f32.mrf.mxu0
      %v5371 = vadd.f32 0.0, %v5370
      %v5372 = vpop.f32.mrf.mxu0
      %5373 = vmatprep.mubr.f32.mxu0 0.0
      %5374 = vmatmul.mubr.f32.gmra.mxu0 %v3509
      %v5375 = vpop.f32.mrf.mxu0
      %v5376 = vadd.f32 0.0, %v5375
      %v5377 = vpop.f32.mrf.mxu0
      %5378 = vmatprep.mubr.f32.mxu0 0.0
      %5379 = vmatmul.mubr.f32.gmra.mxu0 %v3512
      %v5380 = vpop.f32.mrf.mxu0
      %v5381 = vadd.f32 0.0, %v5380
      %v5382 = vpop.f32.mrf.mxu0
      %5383 = vmatprep.mubr.f32.mxu0 0.0
      %5384 = vmatmul.mubr.f32.gmra.mxu0 %v3515
      %v5385 = vpop.f32.mrf.mxu0
      %v5386 = vadd.f32 0.0, %v5385
      %v5387 = vpop.f32.mrf.mxu0
      %5388 = vmatprep.mubr.f32.mxu0 0.0
      %5389 = vmatmul.mubr.f32.gmra.mxu0 %v3518
      %v5390 = vpop.f32.mrf.mxu0
      %v5391 = vadd.f32 0.0, %v5390
      %v5392 = vpop.f32.mrf.mxu0
      %5393 = vmatprep.mubr.f32.mxu0 0.0
      %5394 = vmatmul.mubr.f32.gmra.mxu0 %v3521
      %v5395 = vpop.f32.mrf.mxu0
      %v5396 = vadd.f32 0.0, %v5395
      %v5397 = vpop.f32.mrf.mxu0
      %5398 = vmatprep.mubr.f32.mxu0 0.0
      %5399 = vmatmul.mubr.f32.gmra.mxu0 %v3524
      %v5400 = vpop.f32.mrf.mxu0
      %v5401 = vadd.f32 0.0, %v5400
      %v5402 = vpop.f32.mrf.mxu0
      %5403 = vmatprep.mubr.f32.mxu0 0.0
      %5404 = vmatmul.mubr.f32.gmra.mxu0 %v3527
      %v5405 = vpop.f32.mrf.mxu0
      %v5406 = vadd.f32 0.0, %v5405
      %v5407 = vpop.f32.mrf.mxu0
      %5408 = vmatprep.mubr.f32.mxu0 0.0
      %5409 = vmatmul.mubr.f32.gmra.mxu0 %v3530
      %v5410 = vpop.f32.mrf.mxu0
      %v5411 = vadd.f32 0.0, %v5410
      %v5412 = vpop.f32.mrf.mxu0
      %5413 = vmatprep.mubr.f32.mxu0 0.0
      %5414 = vmatmul.mubr.f32.gmra.mxu0 %v3533
      %v5415 = vpop.f32.mrf.mxu0
      %v5416 = vadd.f32 0.0, %v5415
      %v5417 = vpop.f32.mrf.mxu0
      %5418 = vmatprep.mubr.f32.mxu0 0.0
      %5419 = vmatmul.mubr.f32.gmra.mxu0 %v3536
      %v5420 = vpop.f32.mrf.mxu0
      %v5421 = vadd.f32 0.0, %v5420
      %v5422 = vpop.f32.mrf.mxu0
      %5423 = vmatprep.mubr.f32.mxu0 0.0
      %5424 = vmatmul.mubr.f32.gmra.mxu0 %v3539
      %v5425 = vpop.f32.mrf.mxu0
      %v5426 = vadd.f32 0.0, %v5425
      %v5427 = vpop.f32.mrf.mxu0
      %5428 = vmatprep.mubr.f32.mxu0 0.0
      %5429 = vmatmul.mubr.f32.gmra.mxu0 %v3542
      %v5430 = vpop.f32.mrf.mxu0
      %v5431 = vadd.f32 0.0, %v5430
      %v5432 = vpop.f32.mrf.mxu0
      %5433 = vmatprep.mubr.f32.mxu0 0.0
      %5434 = vmatmul.mubr.f32.gmra.mxu0 %v3545
      %v5435 = vpop.f32.mrf.mxu0
      %v5436 = vadd.f32 0.0, %v5435
      %v5437 = vpop.f32.mrf.mxu0
      %5438 = vmatprep.mubr.f32.mxu0 0.0
      %5439 = vmatmul.mubr.f32.gmra.mxu0 %v3548
      %v5440 = vpop.f32.mrf.mxu0
      %v5441 = vadd.f32 0.0, %v5440
      %v5442 = vpop.f32.mrf.mxu0
      %5443 = vmatprep.mubr.f32.mxu0 0.0
      %5444 = vmatmul.mubr.f32.gmra.mxu0 %v3551
      %v5445 = vpop.f32.mrf.mxu0
      %v5446 = vadd.f32 0.0, %v5445
      %v5447 = vpop.f32.mrf.mxu0
      %5448 = vmatprep.mubr.f32.mxu0 0.0
      %5449 = vmatmul.mubr.f32.gmra.mxu0 %v3554
      %v5450 = vpop.f32.mrf.mxu0
      %v5451 = vadd.f32 0.0, %v5450
      %v5452 = vpop.f32.mrf.mxu0
      %5453 = vmatprep.mubr.f32.mxu0 0.0
      %5454 = vmatmul.mubr.f32.gmra.mxu0 %v3557
      %v5455 = vpop.f32.mrf.mxu0
      %v5456 = vadd.f32 0.0, %v5455
      %v5457 = vpop.f32.mrf.mxu0
      %5458 = vmatprep.mubr.f32.mxu0 0.0
      %5459 = vmatmul.mubr.f32.gmra.mxu0 %v3560
      %v5460 = vpop.f32.mrf.mxu0
      %v5461 = vadd.f32 0.0, %v5460
      %v5462 = vpop.f32.mrf.mxu0
      %5463 = vmatprep.mubr.f32.mxu0 0.0
      %5464 = vmatmul.mubr.f32.gmra.mxu0 %v3563
      %v5465 = vpop.f32.mrf.mxu0
      %v5466 = vadd.f32 0.0, %v5465
      %v5467 = vpop.f32.mrf.mxu0
      %5468 = vmatprep.mubr.f32.mxu0 0.0
      %5469 = vmatmul.mubr.f32.gmra.mxu0 %v3566
      %v5470 = vpop.f32.mrf.mxu0
      %v5471 = vadd.f32 0.0, %v5470
      %v5472 = vpop.f32.mrf.mxu0
      %5473 = vmatprep.mubr.f32.mxu0 0.0
      %5474 = vmatmul.mubr.f32.gmra.mxu0 %v3569
      %v5475 = vpop.f32.mrf.mxu0
      %v5476 = vadd.f32 0.0, %v5475
      %v5477 = vpop.f32.mrf.mxu0
      %5478 = vmatprep.mubr.f32.mxu0 0.0
      %5479 = vmatmul.mubr.f32.gmra.mxu0 %v3572
      %v5480 = vpop.f32.mrf.mxu0
      %v5481 = vadd.f32 0.0, %v5480
      %v5482 = vpop.f32.mrf.mxu0
      %5483 = vmatprep.mubr.f32.mxu0 0.0
      %5484 = vmatmul.mubr.f32.gmra.mxu0 %v3575
      %v5485 = vpop.f32.mrf.mxu0
      %v5486 = vadd.f32 0.0, %v5485
      %v5487 = vpop.f32.mrf.mxu0
      %5488 = vmatprep.mubr.f32.mxu0 0.0
      %5489 = vmatmul.mubr.f32.gmra.mxu0 %v3578
      %v5490 = vpop.f32.mrf.mxu0
      %v5491 = vadd.f32 0.0, %v5490
      %v5492 = vpop.f32.mrf.mxu0
      %5493 = vmatprep.mubr.f32.mxu0 0.0
      %5494 = vmatmul.mubr.f32.gmra.mxu0 %v3581
      %v5495 = vpop.f32.mrf.mxu0
      %v5496 = vadd.f32 0.0, %v5495
      %v5497 = vpop.f32.mrf.mxu0
      %5498 = vmatprep.mubr.f32.mxu0 0.0
      %5499 = vmatmul.mubr.f32.gmra.mxu0 %v3584
      %v5500 = vpop.f32.mrf.mxu0
      %v5501 = vadd.f32 0.0, %v5500
      %v5502 = vpop.f32.mrf.mxu0
      %5503 = vmatprep.mubr.f32.mxu0 0.0
      %5504 = vmatmul.mubr.f32.gmra.mxu0 %v3587
      %v5505 = vpop.f32.mrf.mxu0
      %v5506 = vadd.f32 0.0, %v5505
      %v5507 = vpop.f32.mrf.mxu0
      %5508 = vmatprep.mubr.f32.mxu0 0.0
      %5509 = vmatmul.mubr.f32.gmra.mxu0 %v3590
      %v5510 = vpop.f32.mrf.mxu0
      %v5511 = vadd.f32 0.0, %v5510
      %v5512 = vpop.f32.mrf.mxu0
      %5513 = vmatprep.mubr.f32.mxu0 0.0
      %5514 = vmatmul.mubr.f32.gmra.mxu0 %v3593
      %v5515 = vpop.f32.mrf.mxu0
      %v5516 = vadd.f32 0.0, %v5515
      %v5517 = vpop.f32.mrf.mxu0
      %5518 = vmatprep.mubr.f32.mxu0 0.0
      %5519 = vmatmul.mubr.f32.gmra.mxu0 %v3596
      %v5520 = vpop.f32.mrf.mxu0
      %v5521 = vadd.f32 0.0, %v5520
      %v5522 = vpop.f32.mrf.mxu0
      %5523 = vmatprep.mubr.f32.mxu0 0.0
      %5524 = vmatmul.mubr.f32.gmra.mxu0 %v3599
      %v5525 = vpop.f32.mrf.mxu0
      %v5526 = vadd.f32 0.0, %v5525
      %v5527 = vpop.f32.mrf.mxu0
      %5528 = vmatprep.mubr.f32.mxu0 0.0
      %5529 = vmatmul.mubr.f32.gmra.mxu0 %v3602
      %v5530 = vpop.f32.mrf.mxu0
      %v5531 = vadd.f32 0.0, %v5530
      %v5532 = vpop.f32.mrf.mxu0
      %5533 = vmatprep.mubr.f32.mxu0 0.0
      %5534 = vmatmul.mubr.f32.gmra.mxu0 %v3605
      %v5535 = vpop.f32.mrf.mxu0
      %v5536 = vadd.f32 0.0, %v5535
      %v5537 = vpop.f32.mrf.mxu0
      %5538 = vmatprep.mubr.f32.mxu0 0.0
      %5539 = vmatmul.mubr.f32.gmra.mxu0 %v3608
      %v5540 = vpop.f32.mrf.mxu0
      %v5541 = vadd.f32 0.0, %v5540
      %v5542 = vpop.f32.mrf.mxu0
      %5543 = vmatprep.mubr.f32.mxu0 0.0
      %5544 = vmatmul.mubr.f32.gmra.mxu0 %v3611
      %v5545 = vpop.f32.mrf.mxu0
      %v5546 = vadd.f32 0.0, %v5545
      %v5547 = vpop.f32.mrf.mxu0
      %5548 = vmatprep.mubr.f32.mxu0 0.0
      %5549 = vmatmul.mubr.f32.gmra.mxu0 %v3614
      %v5550 = vpop.f32.mrf.mxu0
      %v5551 = vadd.f32 0.0, %v5550
      %v5552 = vpop.f32.mrf.mxu0
      %5553 = vmatprep.mubr.f32.mxu0 0.0
      %5554 = vmatmul.mubr.f32.gmra.mxu0 %v3617
      %v5555 = vpop.f32.mrf.mxu0
      %v5556 = vadd.f32 0.0, %v5555
      %v5557 = vpop.f32.mrf.mxu0
      %5558 = vmatprep.mubr.f32.mxu0 0.0
      %5559 = vmatmul.mubr.f32.gmra.mxu0 %v3620
      %v5560 = vpop.f32.mrf.mxu0
      %v5561 = vadd.f32 0.0, %v5560
      %v5562 = vpop.f32.mrf.mxu0
      %5563 = vmatprep.mubr.f32.mxu0 0.0
      %5564 = vmatmul.mubr.f32.gmra.mxu0 %v3623
      %v5565 = vpop.f32.mrf.mxu0
      %v5566 = vadd.f32 0.0, %v5565
      %v5567 = vpop.f32.mrf.mxu0
      %5568 = vmatprep.mubr.f32.mxu0 0.0
      %5569 = vmatmul.mubr.f32.gmra.mxu0 %v3626
      %v5570 = vpop.f32.mrf.mxu0
      %v5571 = vadd.f32 0.0, %v5570
      %v5572 = vpop.f32.mrf.mxu0
      %5573 = vmatprep.mubr.f32.mxu0 0.0
      %5574 = vmatmul.mubr.f32.gmra.mxu0 %v3629
      %v5575 = vpop.f32.mrf.mxu0
      %v5576 = vadd.f32 0.0, %v5575
      %v5577 = vpop.f32.mrf.mxu0
      %5578 = vmatprep.mubr.f32.mxu0 0.0
      %5579 = vmatmul.mubr.f32.gmra.mxu0 %v3632
      %v5580 = vpop.f32.mrf.mxu0
      %v5581 = vadd.f32 0.0, %v5580
      %v5582 = vpop.f32.mrf.mxu0
      %5583 = vmatprep.mubr.f32.mxu0 0.0
      %5584 = vmatmul.mubr.f32.gmra.mxu0 %v3635
      %v5585 = vpop.f32.mrf.mxu0
      %v5586 = vadd.f32 0.0, %v5585
      %v5587 = vpop.f32.mrf.mxu0
      %5588 = vmatprep.mubr.f32.mxu0 0.0
      %5589 = vmatmul.mubr.f32.gmra.mxu0 %v3638
      %v5590 = vpop.f32.mrf.mxu0
      %v5591 = vadd.f32 0.0, %v5590
      %v5592 = vpop.f32.mrf.mxu0
      %5593 = vmatprep.mubr.f32.mxu0 0.0
      %5594 = vmatmul.mubr.f32.gmra.mxu0 %v3641
      %v5595 = vpop.f32.mrf.mxu0
      %v5596 = vadd.f32 0.0, %v5595
      %v5597 = vpop.f32.mrf.mxu0
      %5598 = vmatprep.mubr.f32.mxu0 0.0
      %5599 = vmatmul.mubr.f32.gmra.mxu0 %v3644
      %v5600 = vpop.f32.mrf.mxu0
      %v5601 = vadd.f32 0.0, %v5600
      %v5602 = vpop.f32.mrf.mxu0
      %5603 = vmatprep.mubr.f32.mxu0 0.0
      %5604 = vmatmul.mubr.f32.gmra.mxu0 %v3647
      %v5605 = vpop.f32.mrf.mxu0
      %v5606 = vadd.f32 0.0, %v5605
      %v5607 = vpop.f32.mrf.mxu0
      %5608 = vmatprep.mubr.f32.mxu0 0.0
      %5609 = vmatmul.mubr.f32.gmra.mxu0 %v3650
      %v5610 = vpop.f32.mrf.mxu0
      %v5611 = vadd.f32 0.0, %v5610
      %v5612 = vpop.f32.mrf.mxu0
      %5613 = vmatprep.mubr.f32.mxu0 0.0
      %5614 = vmatmul.mubr.f32.gmra.mxu0 %v3653
      %v5615 = vpop.f32.mrf.mxu0
      %v5616 = vadd.f32 0.0, %v5615
      %v5617 = vpop.f32.mrf.mxu0
      %5618 = vmatprep.mubr.f32.mxu0 0.0
      %5619 = vmatmul.mubr.f32.gmra.mxu0 %v3656
      %v5620 = vpop.f32.mrf.mxu0
      %v5621 = vadd.f32 0.0, %v5620
      %v5622 = vpop.f32.mrf.mxu0
      %5623 = vmatprep.mubr.f32.mxu0 0.0
      %5624 = vmatmul.mubr.f32.gmra.mxu0 %v3659
      %v5625 = vpop.f32.mrf.mxu0
      %v5626 = vadd.f32 0.0, %v5625
      %v5627 = vpop.f32.mrf.mxu0
      %5628 = vmatprep.mubr.f32.mxu0 0.0
      %5629 = vmatmul.mubr.f32.gmra.mxu0 %v3662
      %v5630 = vpop.f32.mrf.mxu0
      %v5631 = vadd.f32 0.0, %v5630
      %v5632 = vpop.f32.mrf.mxu0
      %5633 = vmatprep.mubr.f32.mxu0 0.0
      %5634 = vmatmul.mubr.f32.gmra.mxu0 %v3665
      %v5635 = vpop.f32.mrf.mxu0
      %v5636 = vadd.f32 0.0, %v5635
      %v5637 = vpop.f32.mrf.mxu0
      %5638 = vmatprep.mubr.f32.mxu0 0.0
      %5639 = vmatmul.mubr.f32.gmra.mxu0 %v3668
      %v5640 = vpop.f32.mrf.mxu0
      %v5641 = vadd.f32 0.0, %v5640
      %v5642 = vpop.f32.mrf.mxu0
      %5643 = vmatprep.mubr.f32.mxu0 0.0
      %5644 = vmatmul.mubr.f32.gmra.mxu0 %v3671
      %v5645 = vpop.f32.mrf.mxu0
      %v5646 = vadd.f32 0.0, %v5645
      %v5647 = vpop.f32.mrf.mxu0
      %5648 = vmatprep.mubr.f32.mxu0 0.0
      %5649 = vmatmul.mubr.f32.gmra.mxu0 %v3674
      %v5650 = vpop.f32.mrf.mxu0
      %v5651 = vadd.f32 0.0, %v5650
      %v5652 = vpop.f32.mrf.mxu0
      %5653 = vmatprep.mubr.f32.mxu0 0.0
      %5654 = vmatmul.mubr.f32.gmra.mxu0 %v3677
      %v5655 = vpop.f32.mrf.mxu0
      %v5656 = vadd.f32 0.0, %v5655
      %v5657 = vpop.f32.mrf.mxu0
      %5658 = vmatprep.mubr.f32.mxu0 0.0
      %5659 = vmatmul.mubr.f32.gmra.mxu0 %v3680
      %v5660 = vpop.f32.mrf.mxu0
      %v5661 = vadd.f32 0.0, %v5660
      %v5662 = vpop.f32.mrf.mxu0
      %5663 = vmatprep.mubr.f32.mxu0 0.0
      %5664 = vmatmul.mubr.f32.gmra.mxu0 %v3683
      %v5665 = vpop.f32.mrf.mxu0
      %v5666 = vadd.f32 0.0, %v5665
      %v5667 = vpop.f32.mrf.mxu0
      %5668 = vmatprep.mubr.f32.mxu0 0.0
      %5669 = vmatmul.mubr.f32.gmra.mxu0 %v3686
      %v5670 = vpop.f32.mrf.mxu0
      %v5671 = vadd.f32 0.0, %v5670
      %v5672 = vpop.f32.mrf.mxu0
      %5673 = vmatprep.mubr.f32.mxu0 0.0
      %5674 = vmatmul.mubr.f32.gmra.mxu0 %v3689
      %v5675 = vpop.f32.mrf.mxu0
      %v5676 = vadd.f32 0.0, %v5675
      %v5677 = vpop.f32.mrf.mxu0
      %5678 = vmatprep.mubr.f32.mxu0 0.0
      %5679 = vmatmul.mubr.f32.gmra.mxu0 %v3692
      %v5680 = vpop.f32.mrf.mxu0
      %v5681 = vadd.f32 0.0, %v5680
      %v5682 = vpop.f32.mrf.mxu0
      %5683 = vmatprep.mubr.f32.mxu0 0.0
      %5684 = vmatmul.mubr.f32.gmra.mxu0 %v3695
      %v5685 = vpop.f32.mrf.mxu0
      %v5686 = vadd.f32 0.0, %v5685
      %v5687 = vpop.f32.mrf.mxu0
      %5688 = vmatprep.mubr.f32.mxu0 0.0
      %5689 = vmatmul.mubr.f32.gmra.mxu0 %v3698
      %v5690 = vpop.f32.mrf.mxu0
      %v5691 = vadd.f32 0.0, %v5690
      %v5692 = vpop.f32.mrf.mxu0
      %5693 = vmatprep.mubr.f32.mxu0 0.0
      %5694 = vmatmul.mubr.f32.gmra.mxu0 %v3701
      %v5695 = vpop.f32.mrf.mxu0
      %v5696 = vadd.f32 0.0, %v5695
      %v5697 = vpop.f32.mrf.mxu0
      %5698 = vmatprep.mubr.f32.mxu0 0.0
      %5699 = vmatmul.mubr.f32.gmra.mxu0 %v3704
      %v5700 = vpop.f32.mrf.mxu0
      %v5701 = vadd.f32 0.0, %v5700
      %v5702 = vpop.f32.mrf.mxu0
      %5703 = vmatprep.mubr.f32.mxu0 0.0
      %5704 = vmatmul.mubr.f32.gmra.mxu0 %v3707
      %v5705 = vpop.f32.mrf.mxu0
      %v5706 = vadd.f32 0.0, %v5705
      %v5707 = vpop.f32.mrf.mxu0
      %5708 = vmatprep.mubr.f32.mxu0 0.0
      %5709 = vmatmul.mubr.f32.gmra.mxu0 %v3710
      %v5710 = vpop.f32.mrf.mxu0
      %v5711 = vadd.f32 0.0, %v5710
      %v5712 = vpop.f32.mrf.mxu0
      %5713 = vmatprep.mubr.f32.mxu0 0.0
      %5714 = vmatmul.mubr.f32.gmra.mxu0 %v3713
      %v5715 = vpop.f32.mrf.mxu0
      %v5716 = vadd.f32 0.0, %v5715
      %v5717 = vpop.f32.mrf.mxu0
      %5718 = vmatprep.mubr.f32.mxu0 0.0
      %5719 = vmatmul.mubr.f32.gmra.mxu0 %v3716
      %v5720 = vpop.f32.mrf.mxu0
      %v5721 = vadd.f32 0.0, %v5720
      %v5722 = vpop.f32.mrf.mxu0
      %5723 = vmatprep.mubr.f32.mxu0 0.0
      %5724 = vmatmul.mubr.f32.gmra.mxu0 %v3719
      %v5725 = vpop.f32.mrf.mxu0
      %v5726 = vadd.f32 0.0, %v5725
      %v5727 = vpop.f32.mrf.mxu0
      %5728 = vmatprep.mubr.f32.mxu0 0.0
      %5729 = vmatmul.mubr.f32.gmra.mxu0 %v3722
      %v5730 = vpop.f32.mrf.mxu0
      %v5731 = vadd.f32 0.0, %v5730
      %v5732 = vpop.f32.mrf.mxu0
      %5733 = vmatprep.mubr.f32.mxu0 0.0
      %5734 = vmatmul.mubr.f32.gmra.mxu0 %v3725
      %v5735 = vpop.f32.mrf.mxu0
      %v5736 = vadd.f32 0.0, %v5735
      %v5737 = vpop.f32.mrf.mxu0
      %5738 = vmatprep.mubr.f32.mxu0 0.0
      %5739 = vmatmul.mubr.f32.gmra.mxu0 %v3728
      %v5740 = vpop.f32.mrf.mxu0
      %v5741 = vadd.f32 0.0, %v5740
      %v5742 = vpop.f32.mrf.mxu0
      %5743 = vmatprep.mubr.f32.mxu0 0.0
      %5744 = vmatmul.mubr.f32.gmra.mxu0 %v3731
      %v5745 = vpop.f32.mrf.mxu0
      %v5746 = vadd.f32 0.0, %v5745
      %v5747 = vpop.f32.mrf.mxu0
      %5748 = vmatprep.mubr.f32.mxu0 0.0
      %5749 = vmatmul.mubr.f32.gmra.mxu0 %v3734
      %v5750 = vpop.f32.mrf.mxu0
      %v5751 = vadd.f32 0.0, %v5750
      %v5752 = vpop.f32.mrf.mxu0
      %5753 = vmatprep.mubr.f32.mxu0 0.0
      %5754 = vmatmul.mubr.f32.gmra.mxu0 %v3737
      %v5755 = vpop.f32.mrf.mxu0
      %v5756 = vadd.f32 0.0, %v5755
      %v5757 = vpop.f32.mrf.mxu0
      %5758 = vmatprep.mubr.f32.mxu0 0.0
      %5759 = vmatmul.mubr.f32.gmra.mxu0 %v3740
      %v5760 = vpop.f32.mrf.mxu0
      %v5761 = vadd.f32 0.0, %v5760
      %v5762 = vpop.f32.mrf.mxu0
      %5763 = vmatprep.mubr.f32.mxu0 0.0
      %5764 = vmatmul.mubr.f32.gmra.mxu0 %v3743
      %v5765 = vpop.f32.mrf.mxu0
      %v5766 = vadd.f32 0.0, %v5765
      %v5767 = vpop.f32.mrf.mxu0
      %5768 = vmatprep.mubr.f32.mxu0 0.0
      %5769 = vmatmul.mubr.f32.gmra.mxu0 %v3746
      %v5770 = vpop.f32.mrf.mxu0
      %v5771 = vadd.f32 0.0, %v5770
      %v5772 = vpop.f32.mrf.mxu0
      %5773 = vmatprep.mubr.f32.mxu0 0.0
      %5774 = vmatmul.mubr.f32.gmra.mxu0 %v3749
      %v5775 = vpop.f32.mrf.mxu0
      %v5776 = vadd.f32 0.0, %v5775
      %v5777 = vpop.f32.mrf.mxu0
      %5778 = vmatprep.mubr.f32.mxu0 0.0
      %5779 = vmatmul.mubr.f32.gmra.mxu0 %v3752
      %v5780 = vpop.f32.mrf.mxu0
      %v5781 = vadd.f32 0.0, %v5780
      %v5782 = vpop.f32.mrf.mxu0
      %5783 = vmatprep.mubr.f32.mxu0 0.0
      %5784 = vmatmul.mubr.f32.gmra.mxu0 %v3755
      %v5785 = vpop.f32.mrf.mxu0
      %v5786 = vadd.f32 0.0, %v5785
      %v5787 = vpop.f32.mrf.mxu0
      %5788 = vmatprep.mubr.f32.mxu0 0.0
      %5789 = vmatmul.mubr.f32.gmra.mxu0 %v3758
      %v5790 = vpop.f32.mrf.mxu0
      %v5791 = vadd.f32 0.0, %v5790
      %v5792 = vpop.f32.mrf.mxu0
      %5793 = vmatprep.mubr.f32.mxu0 0.0
      %5794 = vmatmul.mubr.f32.gmra.mxu0 %v3761
      %v5795 = vpop.f32.mrf.mxu0
      %v5796 = vadd.f32 0.0, %v5795
      %v5797 = vpop.f32.mrf.mxu0
      %5798 = vmatprep.mubr.f32.mxu0 0.0
      %5799 = vmatmul.mubr.f32.gmra.mxu0 %v3764
      %v5800 = vpop.f32.mrf.mxu0
      %v5801 = vadd.f32 0.0, %v5800
      %v5802 = vpop.f32.mrf.mxu0
      %5803 = vmatprep.mubr.f32.mxu0 0.0
      %5804 = vmatmul.mubr.f32.gmra.mxu0 %v3767
      %v5805 = vpop.f32.mrf.mxu0
      %v5806 = vadd.f32 0.0, %v5805
      %v5807 = vpop.f32.mrf.mxu0
      %5808 = vmatprep.mubr.f32.mxu0 0.0
      %5809 = vmatmul.mubr.f32.gmra.mxu0 %v3770
      %v5810 = vpop.f32.mrf.mxu0
      %v5811 = vadd.f32 0.0, %v5810
      %v5812 = vpop.f32.mrf.mxu0
      %5813 = vmatprep.mubr.f32.mxu0 0.0
      %5814 = vmatmul.mubr.f32.gmra.mxu0 %v3773
      %v5815 = vpop.f32.mrf.mxu0
      %v5816 = vadd.f32 0.0, %v5815
      %v5817 = vpop.f32.mrf.mxu0
      %5818 = vmatprep.mubr.f32.mxu0 0.0
      %5819 = vmatmul.mubr.f32.gmra.mxu0 %v3776
      %v5820 = vpop.f32.mrf.mxu0
      %v5821 = vadd.f32 0.0, %v5820
      %v5822 = vpop.f32.mrf.mxu0
      %5823 = vmatprep.mubr.f32.mxu0 0.0
      %5824 = vmatmul.mubr.f32.gmra.mxu0 %v3779
      %v5825 = vpop.f32.mrf.mxu0
      %v5826 = vadd.f32 0.0, %v5825
      %v5827 = vpop.f32.mrf.mxu0
      %5828 = vmatprep.mubr.f32.mxu0 0.0
      %5829 = vmatmul.mubr.f32.gmra.mxu0 %v3782
      %v5830 = vpop.f32.mrf.mxu0
      %v5831 = vadd.f32 0.0, %v5830
      %v5832 = vpop.f32.mrf.mxu0
      %5833 = vmatprep.mubr.f32.mxu0 0.0
      %5834 = vmatmul.mubr.f32.gmra.mxu0 %v3785
      %v5835 = vpop.f32.mrf.mxu0
      %v5836 = vadd.f32 0.0, %v5835
      %v5837 = vpop.f32.mrf.mxu0
      %5838 = vmatprep.mubr.f32.mxu0 0.0
      %5839 = vmatmul.mubr.f32.gmra.mxu0 %v3788
      %v5840 = vpop.f32.mrf.mxu0
      %v5841 = vadd.f32 0.0, %v5840
      %v5842 = vpop.f32.mrf.mxu0
      %5843 = vmatprep.mubr.f32.mxu0 0.0
      %5844 = vmatmul.mubr.f32.gmra.mxu0 %v3791
      %v5845 = vpop.f32.mrf.mxu0
      %v5846 = vadd.f32 0.0, %v5845
      %v5847 = vpop.f32.mrf.mxu0
      %5848 = vmatprep.mubr.f32.mxu0 0.0
      %5849 = vmatmul.mubr.f32.gmra.mxu0 %v3794
      %v5850 = vpop.f32.mrf.mxu0
      %v5851 = vadd.f32 0.0, %v5850
      %v5852 = vpop.f32.mrf.mxu0
      %5853 = vmatprep.mubr.f32.mxu0 0.0
      %5854 = vmatmul.mubr.f32.gmra.mxu0 %v3797
      %v5855 = vpop.f32.mrf.mxu0
      %v5856 = vadd.f32 0.0, %v5855
      %v5857 = vpop.f32.mrf.mxu0
      %5858 = vmatprep.mubr.f32.mxu0 0.0
      %5859 = vmatmul.mubr.f32.gmra.mxu0 %v3800
      %v5860 = vpop.f32.mrf.mxu0
      %v5861 = vadd.f32 0.0, %v5860
      %v5862 = vpop.f32.mrf.mxu0
      %5863 = vmatprep.mubr.f32.mxu0 0.0
      %5864 = vmatmul.mubr.f32.gmra.mxu0 %v3803
      %v5865 = vpop.f32.mrf.mxu0
      %v5866 = vadd.f32 0.0, %v5865
      %v5867 = vpop.f32.mrf.mxu0
      %5868 = vmatprep.mubr.f32.mxu0 0.0
      %5869 = vmatmul.mubr.f32.gmra.mxu0 %v3806
      %v5870 = vpop.f32.mrf.mxu0
      %v5871 = vadd.f32 0.0, %v5870
      %v5872 = vpop.f32.mrf.mxu0
      %5873 = vmatprep.mubr.f32.mxu0 0.0
      %5874 = vmatmul.mubr.f32.gmra.mxu0 %v3809
      %v5875 = vpop.f32.mrf.mxu0
      %v5876 = vadd.f32 0.0, %v5875
      %v5877 = vpop.f32.mrf.mxu0
      %5878 = vmatprep.mubr.f32.mxu0 0.0
      %5879 = vmatmul.mubr.f32.gmra.mxu0 %v3812
      %v5880 = vpop.f32.mrf.mxu0
      %v5881 = vadd.f32 0.0, %v5880
      %v5882 = vpop.f32.mrf.mxu0
      %5883 = vmatprep.mubr.f32.mxu0 0.0
      %5884 = vmatmul.mubr.f32.gmra.mxu0 %v3815
      %v5885 = vpop.f32.mrf.mxu0
      %v5886 = vadd.f32 0.0, %v5885
      %v5887 = vpop.f32.mrf.mxu0
      %5888 = vmatprep.mubr.f32.mxu0 0.0
      %5889 = vmatmul.mubr.f32.gmra.mxu0 %v3818
      %v5890 = vpop.f32.mrf.mxu0
      %v5891 = vadd.f32 0.0, %v5890
      %v5892 = vpop.f32.mrf.mxu0
      %5893 = vmatprep.mubr.f32.mxu0 0.0
      %5894 = vmatmul.mubr.f32.gmra.mxu0 %v3821
      %v5895 = vpop.f32.mrf.mxu0
      %v5896 = vadd.f32 0.0, %v5895
      %v5897 = vpop.f32.mrf.mxu0
      %5898 = vmatprep.mubr.f32.mxu0 0.0
      %5899 = vmatmul.mubr.f32.gmra.mxu0 %v3824
      %v5900 = vpop.f32.mrf.mxu0
      %v5901 = vadd.f32 0.0, %v5900
      %v5902 = vpop.f32.mrf.mxu0
      %5903 = vmatprep.mubr.f32.mxu0 0.0
      %5904 = vmatmul.mubr.f32.gmra.mxu0 %v3827
      %v5905 = vpop.f32.mrf.mxu0
      %v5906 = vadd.f32 0.0, %v5905
      %v5907 = vpop.f32.mrf.mxu0
      %5908 = vmatprep.mubr.f32.mxu0 0.0
      %5909 = vmatmul.mubr.f32.gmra.mxu0 %v3830
      %v5910 = vpop.f32.mrf.mxu0
      %v5911 = vadd.f32 0.0, %v5910
      %v5912 = vpop.f32.mrf.mxu0
      %5913 = vmatprep.mubr.f32.mxu0 0.0
      %5914 = vmatmul.mubr.f32.gmra.mxu0 %v3833
      %v5915 = vpop.f32.mrf.mxu0
      %v5916 = vadd.f32 0.0, %v5915
      %v5917 = vpop.f32.mrf.mxu0
      %5918 = vmatprep.mubr.f32.mxu0 0.0
      %5919 = vmatmul.mubr.f32.gmra.mxu0 %v3836
      %v5920 = vpop.f32.mrf.mxu0
      %v5921 = vadd.f32 0.0, %v5920
      %v5922 = vpop.f32.mrf.mxu0
      %5923 = vmatprep.mubr.f32.mxu0 0.0
      %5924 = vmatmul.mubr.f32.gmra.mxu0 %v3839
      %v5925 = vpop.f32.mrf.mxu0
      %v5926 = vadd.f32 0.0, %v5925
      %v5927 = vpop.f32.mrf.mxu0
      %5928 = vmatprep.mubr.f32.mxu0 0.0
      %5929 = vmatmul.mubr.f32.gmra.mxu0 %v3842
      %v5930 = vpop.f32.mrf.mxu0
      %v5931 = vadd.f32 0.0, %v5930
      %v5932 = vpop.f32.mrf.mxu0
      %5933 = vmatprep.mubr.f32.mxu0 0.0
      %5934 = vmatmul.mubr.f32.gmra.mxu0 %v3845
      %v5935 = vpop.f32.mrf.mxu0
      %v5936 = vadd.f32 0.0, %v5935
      %v5937 = vpop.f32.mrf.mxu0
      %5938 = vmatprep.mubr.f32.mxu0 0.0
      %5939 = vmatmul.mubr.f32.gmra.mxu0 %v3848
      %v5940 = vpop.f32.mrf.mxu0
      %v5941 = vadd.f32 0.0, %v5940
      %v5942 = vpop.f32.mrf.mxu0
      %5943 = vmatprep.mubr.f32.mxu0 0.0
      %5944 = vmatmul.mubr.f32.gmra.mxu0 %v3851
      %v5945 = vpop.f32.mrf.mxu0
      %v5946 = vadd.f32 0.0, %v5945
      %v5947 = vpop.f32.mrf.mxu0
      %5948 = vmatprep.mubr.f32.mxu0 0.0
      %5949 = vmatmul.mubr.f32.gmra.mxu0 %v3854
      %v5950 = vpop.f32.mrf.mxu0
      %v5951 = vadd.f32 0.0, %v5950
      %v5952 = vpop.f32.mrf.mxu0
      %5953 = vmatprep.mubr.f32.mxu0 0.0
      %5954 = vmatmul.mubr.f32.gmra.mxu0 %v3857
      %v5955 = vpop.f32.mrf.mxu0
      %v5956 = vadd.f32 0.0, %v5955
      %v5957 = vpop.f32.mrf.mxu0
      %5958 = vmatprep.mubr.f32.mxu0 0.0
      %5959 = vmatmul.mubr.f32.gmra.mxu0 %v3860
      %v5960 = vpop.f32.mrf.mxu0
      %v5961 = vadd.f32 0.0, %v5960
      %v5962 = vpop.f32.mrf.mxu0
      %5963 = vmatprep.mubr.f32.mxu0 0.0
      %5964 = vmatmul.mubr.f32.gmra.mxu0 %v3863
      %v5965 = vpop.f32.mrf.mxu0
      %v5966 = vadd.f32 0.0, %v5965
      %v5967 = vpop.f32.mrf.mxu0
      %5968 = vmatprep.mubr.f32.mxu0 0.0
      %5969 = vmatmul.mubr.f32.gmra.mxu0 %v3866
      %v5970 = vpop.f32.mrf.mxu0
      %v5971 = vadd.f32 0.0, %v5970
      %v5972 = vpop.f32.mrf.mxu0
      %5973 = vmatprep.mubr.f32.mxu0 0.0
      %5974 = vmatmul.mubr.f32.gmra.mxu0 %v3869
      %v5975 = vpop.f32.mrf.mxu0
      %v5976 = vadd.f32 0.0, %v5975
      %v5977 = vpop.f32.mrf.mxu0
      %5978 = vmatprep.mubr.f32.mxu0 0.0
      %5979 = vmatmul.mubr.f32.gmra.mxu0 %v3872
      %v5980 = vpop.f32.mrf.mxu0
      %v5981 = vadd.f32 0.0, %v5980
      %v5982 = vpop.f32.mrf.mxu0
      %5983 = vmatprep.mubr.f32.mxu0 0.0
      %5984 = vmatmul.mubr.f32.gmra.mxu0 %v3875
      %v5985 = vpop.f32.mrf.mxu0
      %v5986 = vadd.f32 0.0, %v5985
      %v5987 = vpop.f32.mrf.mxu0
      %5988 = vmatprep.mubr.f32.mxu0 0.0
      %5989 = vmatmul.mubr.f32.gmra.mxu0 %v3878
      %v5990 = vpop.f32.mrf.mxu0
      %v5991 = vadd.f32 0.0, %v5990
      %v5992 = vpop.f32.mrf.mxu0
      %5993 = vmatprep.mubr.f32.mxu0 0.0
      %5994 = vmatmul.mubr.f32.gmra.mxu0 %v3881
      %v5995 = vpop.f32.mrf.mxu0
      %v5996 = vadd.f32 0.0, %v5995
      %v5997 = vpop.f32.mrf.mxu0
      %5998 = vmatprep.mubr.f32.mxu0 0.0
      %5999 = vmatmul.mubr.f32.gmra.mxu0 %v3884
      %v6000 = vpop.f32.mrf.mxu0
      %v6001 = vadd.f32 0.0, %v6000
      %v6002 = vpop.f32.mrf.mxu0
      %6003 = vmatprep.mubr.f32.mxu0 0.0
      %6004 = vmatmul.mubr.f32.gmra.mxu0 %v3887
      %v6005 = vpop.f32.mrf.mxu0
      %v6006 = vadd.f32 0.0, %v6005
      %v6007 = vpop.f32.mrf.mxu0
      %6008 = vmatprep.mubr.f32.mxu0 0.0
      %6009 = vmatmul.mubr.f32.gmra.mxu0 %v3890
      %v6010 = vpop.f32.mrf.mxu0
      %v6011 = vadd.f32 0.0, %v6010
      %v6012 = vpop.f32.mrf.mxu0
      %6013 = vmatprep.mubr.f32.mxu0 0.0
      %6014 = vmatmul.mubr.f32.gmra.mxu0 %v3893
      %v6015 = vpop.f32.mrf.mxu0
      %v6016 = vadd.f32 0.0, %v6015
      %v6017 = vpop.f32.mrf.mxu0
      %6018 = vmatprep.mubr.f32.mxu0 0.0
      %6019 = vmatmul.mubr.f32.gmra.mxu0 %v3896
      %v6020 = vpop.f32.mrf.mxu0
      %v6021 = vadd.f32 0.0, %v6020
      %v6022 = vpop.f32.mrf.mxu0
      %6023 = vmatprep.mubr.f32.mxu0 0.0
      %6024 = vmatmul.mubr.f32.gmra.mxu0 %v3899
      %v6025 = vpop.f32.mrf.mxu0
      %v6026 = vadd.f32 0.0, %v6025
      %v6027 = vpop.f32.mrf.mxu0
      %6028 = vmatprep.mubr.f32.mxu0 0.0
      %6029 = vmatmul.mubr.f32.gmra.mxu0 %v3902
      %v6030 = vpop.f32.mrf.mxu0
      %v6031 = vadd.f32 0.0, %v6030
      %v6032 = vpop.f32.mrf.mxu0
      %6033 = vmatprep.mubr.f32.mxu0 0.0
      %6034 = vmatmul.mubr.f32.gmra.mxu0 %v3905
      %v6035 = vpop.f32.mrf.mxu0
      %v6036 = vadd.f32 0.0, %v6035
      %v6037 = vpop.f32.mrf.mxu0
      %6038 = vmatprep.mubr.f32.mxu0 0.0
      %6039 = vmatmul.mubr.f32.gmra.mxu0 %v3908
      %v6040 = vpop.f32.mrf.mxu0
      %v6041 = vadd.f32 0.0, %v6040
      %v6042 = vpop.f32.mrf.mxu0
      %6043 = vmatprep.mubr.f32.mxu0 0.0
      %6044 = vmatmul.mubr.f32.gmra.mxu0 %v3911
      %v6045 = vpop.f32.mrf.mxu0
      %v6046 = vadd.f32 0.0, %v6045
      %v6047 = vpop.f32.mrf.mxu0
      %6048 = vmatprep.mubr.f32.mxu0 0.0
      %6049 = vmatmul.mubr.f32.gmra.mxu0 %v3914
      %v6050 = vpop.f32.mrf.mxu0
      %v6051 = vadd.f32 0.0, %v6050
      %v6052 = vpop.f32.mrf.mxu0
      %6053 = vmatprep.mubr.f32.mxu0 0.0
      %6054 = vmatmul.mubr.f32.gmra.mxu0 %v3917
      %v6055 = vpop.f32.mrf.mxu0
      %v6056 = vadd.f32 0.0, %v6055
      %v6057 = vpop.f32.mrf.mxu0
      %6058 = vmatprep.mubr.f32.mxu0 0.0
      %6059 = vmatmul.mubr.f32.gmra.mxu0 %v3920
      %v6060 = vpop.f32.mrf.mxu0
      %v6061 = vadd.f32 0.0, %v6060
      %v6062 = vpop.f32.mrf.mxu0
      %6063 = vmatprep.mubr.f32.mxu0 0.0
      %6064 = vmatmul.mubr.f32.gmra.mxu0 %v3923
      %v6065 = vpop.f32.mrf.mxu0
      %v6066 = vadd.f32 0.0, %v6065
      %v6067 = vpop.f32.mrf.mxu0
      %6068 = vmatprep.mubr.f32.mxu0 0.0
      %6069 = vmatmul.mubr.f32.gmra.mxu0 %v3926
      %v6070 = vpop.f32.mrf.mxu0
      %v6071 = vadd.f32 0.0, %v6070
      %v6072 = vpop.f32.mrf.mxu0
      %6073 = vmatprep.mubr.f32.mxu0 0.0
      %6074 = vmatmul.mubr.f32.gmra.mxu0 %v3929
      %v6075 = vpop.f32.mrf.mxu0
      %v6076 = vadd.f32 0.0, %v6075
      %v6077 = vpop.f32.mrf.mxu0
      %6078 = vmatprep.mubr.f32.mxu0 0.0
      %6079 = vmatmul.mubr.f32.gmra.mxu0 %v3932
      %v6080 = vpop.f32.mrf.mxu0
      %v6081 = vadd.f32 0.0, %v6080
      %v6082 = vpop.f32.mrf.mxu0
      %6083 = vmatprep.mubr.f32.mxu0 0.0
      %6084 = vmatmul.mubr.f32.gmra.mxu0 %v3935
      %v6085 = vpop.f32.mrf.mxu0
      %v6086 = vadd.f32 0.0, %v6085
      %v6087 = vpop.f32.mrf.mxu0
      %6088 = vmatprep.mubr.f32.mxu0 0.0
      %6089 = vmatmul.mubr.f32.gmra.mxu0 %v3938
      %v6090 = vpop.f32.mrf.mxu0
      %v6091 = vadd.f32 0.0, %v6090
      %v6092 = vpop.f32.mrf.mxu0
      %6093 = vmatprep.mubr.f32.mxu0 0.0
      %6094 = vmatmul.mubr.f32.gmra.mxu0 %v3941
      %v6095 = vpop.f32.mrf.mxu0
      %v6096 = vadd.f32 0.0, %v6095
      %v6097 = vpop.f32.mrf.mxu0
      %6098 = vmatprep.mubr.f32.mxu0 0.0
      %6099 = vmatmul.mubr.f32.gmra.mxu0 %v3944
      %v6100 = vpop.f32.mrf.mxu0
      %v6101 = vadd.f32 0.0, %v6100
      %v6102 = vpop.f32.mrf.mxu0
      %6103 = vmatprep.mubr.f32.mxu0 0.0
      %6104 = vmatmul.mubr.f32.gmra.mxu0 %v3947
      %v6105 = vpop.f32.mrf.mxu0
      %v6106 = vadd.f32 0.0, %v6105
      %v6107 = vpop.f32.mrf.mxu0
      %6108 = vmatprep.mubr.f32.mxu0 0.0
      %6109 = vmatmul.mubr.f32.gmra.mxu0 %v3950
      %v6110 = vpop.f32.mrf.mxu0
      %v6111 = vadd.f32 0.0, %v6110
      %v6112 = vpop.f32.mrf.mxu0
      %6113 = vmatprep.mubr.f32.mxu0 0.0
      %6114 = vmatmul.mubr.f32.gmra.mxu0 %v3953
      %v6115 = vpop.f32.mrf.mxu0
      %v6116 = vadd.f32 0.0, %v6115
      %v6117 = vpop.f32.mrf.mxu0
      %6118 = vmatprep.mubr.f32.mxu0 0.0
      %6119 = vmatmul.mubr.f32.gmra.mxu0 %v3956
      %v6120 = vpop.f32.mrf.mxu0
      %v6121 = vadd.f32 0.0, %v6120
      %v6122 = vpop.f32.mrf.mxu0
      %6123 = vmatprep.mubr.f32.mxu0 0.0
      %6124 = vmatmul.mubr.f32.gmra.mxu0 %v3959
      %v6125 = vpop.f32.mrf.mxu0
      %v6126 = vadd.f32 0.0, %v6125
      %v6127 = vpop.f32.mrf.mxu0
      %6128 = vmatprep.mubr.f32.mxu0 0.0
      %6129 = vmatmul.mubr.f32.gmra.mxu0 %v3962
      %v6130 = vpop.f32.mrf.mxu0
      %v6131 = vadd.f32 0.0, %v6130
      %v6132 = vpop.f32.mrf.mxu0
      %6133 = vmatprep.mubr.f32.mxu0 0.0
      %6134 = vmatmul.mubr.f32.gmra.mxu0 %v3965
      %v6135 = vpop.f32.mrf.mxu0
      %v6136 = vadd.f32 0.0, %v6135
      %v6137 = vpop.f32.mrf.mxu0
      %6138 = vmatprep.mubr.f32.mxu0 0.0
      %6139 = vmatmul.mubr.f32.gmra.mxu0 %v3968
      %v6140 = vpop.f32.mrf.mxu0
      %v6141 = vadd.f32 0.0, %v6140
      %v6142 = vpop.f32.mrf.mxu0
      %6143 = vmatprep.mubr.f32.mxu0 0.0
      %6144 = vmatmul.mubr.f32.gmra.mxu0 %v3971
      %v6145 = vpop.f32.mrf.mxu0
      %v6146 = vadd.f32 0.0, %v6145
      %v6147 = vpop.f32.mrf.mxu0
      %6148 = vmatprep.mubr.f32.mxu0 0.0
      %6149 = vmatmul.mubr.f32.gmra.mxu0 %v3974
      %v6150 = vpop.f32.mrf.mxu0
      %v6151 = vadd.f32 0.0, %v6150
      %v6152 = vpop.f32.mrf.mxu0
      %6153 = vmatprep.mubr.f32.mxu0 0.0
      %6154 = vmatmul.mubr.f32.gmra.mxu0 %v3977
      %v6155 = vpop.f32.mrf.mxu0
      %v6156 = vadd.f32 0.0, %v6155
      %v6157 = vpop.f32.mrf.mxu0
      %6158 = vmatprep.mubr.f32.mxu0 0.0
      %6159 = vmatmul.mubr.f32.gmra.mxu0 %v3980
      %v6160 = vpop.f32.mrf.mxu0
      %v6161 = vadd.f32 0.0, %v6160
      %v6162 = vpop.f32.mrf.mxu0
      %6163 = vmatprep.mubr.f32.mxu0 0.0
      %6164 = vmatmul.mubr.f32.gmra.mxu0 %v3983
      %v6165 = vpop.f32.mrf.mxu0
      %v6166 = vadd.f32 0.0, %v6165
      %v6167 = vpop.f32.mrf.mxu0
      %6168 = vmatprep.mubr.f32.mxu0 0.0
      %6169 = vmatmul.mubr.f32.gmra.mxu0 %v3986
      %v6170 = vpop.f32.mrf.mxu0
      %v6171 = vadd.f32 0.0, %v6170
      %v6172 = vpop.f32.mrf.mxu0
      %6173 = vmatprep.mubr.f32.mxu0 0.0
      %6174 = vmatmul.mubr.f32.gmra.mxu0 %v3989
      %v6175 = vpop.f32.mrf.mxu0
      %v6176 = vadd.f32 0.0, %v6175
      %v6177 = vpop.f32.mrf.mxu0
      %6178 = vmatprep.mubr.f32.mxu0 0.0
      %6179 = vmatmul.mubr.f32.gmra.mxu0 %v3992
      %v6180 = vpop.f32.mrf.mxu0
      %v6181 = vadd.f32 0.0, %v6180
      %v6182 = vpop.f32.mrf.mxu0
      %6183 = vmatprep.mubr.f32.mxu0 0.0
      %6184 = vmatmul.mubr.f32.gmra.mxu0 %v3995
      %v6185 = vpop.f32.mrf.mxu0
      %v6186 = vadd.f32 0.0, %v6185
      %v6187 = vpop.f32.mrf.mxu0
      %6188 = vmatprep.mubr.f32.mxu0 0.0
      %6189 = vmatmul.mubr.f32.gmra.mxu0 %v3998
      %v6190 = vpop.f32.mrf.mxu0
      %v6191 = vadd.f32 0.0, %v6190
      %v6192 = vpop.f32.mrf.mxu0
      %6193 = vmatprep.mubr.f32.mxu0 0.0
      %6194 = vmatmul.mubr.f32.gmra.mxu0 %v4001
      %v6195 = vpop.f32.mrf.mxu0
      %v6196 = vadd.f32 0.0, %v6195
      %v6197 = vpop.f32.mrf.mxu0
      %6198 = vmatprep.mubr.f32.mxu0 0.0
      %6199 = vmatmul.mubr.f32.gmra.mxu0 %v4004
      %v6200 = vpop.f32.mrf.mxu0
      %v6201 = vadd.f32 0.0, %v6200
      %v6202 = vpop.f32.mrf.mxu0
      %6203 = vmatprep.mubr.f32.mxu0 0.0
      %6204 = vmatmul.mubr.f32.gmra.mxu0 %v4007
      %v6205 = vpop.f32.mrf.mxu0
      %v6206 = vadd.f32 0.0, %v6205
      %v6207 = vpop.f32.mrf.mxu0
      %6208 = vmatprep.mubr.f32.mxu0 0.0
      %6209 = vmatmul.mubr.f32.gmra.mxu0 %v4010
      %v6210 = vpop.f32.mrf.mxu0
      %v6211 = vadd.f32 0.0, %v6210
      %v6212 = vpop.f32.mrf.mxu0
      %6213 = vmatprep.mubr.f32.mxu0 0.0
      %6214 = vmatmul.mubr.f32.gmra.mxu0 %v4013
      %v6215 = vpop.f32.mrf.mxu0
      %v6216 = vadd.f32 0.0, %v6215
      %v6217 = vpop.f32.mrf.mxu0
      %6218 = vmatprep.mubr.f32.mxu0 0.0
      %6219 = vmatmul.mubr.f32.gmra.mxu0 %v4016
      %v6220 = vpop.f32.mrf.mxu0
      %v6221 = vadd.f32 0.0, %v6220
      %v6222 = vpop.f32.mrf.mxu0
      %6223 = vmatprep.mubr.f32.mxu0 0.0
      %6224 = vmatmul.mubr.f32.gmra.mxu0 %v4019
      %v6225 = vpop.f32.mrf.mxu0
      %v6226 = vadd.f32 0.0, %v6225
      %v6227 = vpop.f32.mrf.mxu0
      %6228 = vmatprep.mubr.f32.mxu0 0.0
      %6229 = vmatmul.mubr.f32.gmra.mxu0 %v4022
      %v6230 = vpop.f32.mrf.mxu0
      %v6231 = vadd.f32 0.0, %v6230
      %v6232 = vpop.f32.mrf.mxu0
      %6233 = vmatprep.mubr.f32.mxu0 0.0
      %6234 = vmatmul.mubr.f32.gmra.mxu0 %v4025
      %v6235 = vpop.f32.mrf.mxu0
      %v6236 = vadd.f32 0.0, %v6235
      %v6237 = vpop.f32.mrf.mxu0
      %6238 = vmatprep.mubr.f32.mxu0 0.0
      %6239 = vmatmul.mubr.f32.gmra.mxu0 %v4028
      %v6240 = vpop.f32.mrf.mxu0
      %v6241 = vadd.f32 0.0, %v6240
      %v6242 = vpop.f32.mrf.mxu0
      %6243 = vmatprep.mubr.f32.mxu0 0.0
      %6244 = vmatmul.mubr.f32.gmra.mxu0 %v4031
      %v6245 = vpop.f32.mrf.mxu0
      %v6246 = vadd.f32 0.0, %v6245
      %v6247 = vpop.f32.mrf.mxu0
      %6248 = vmatprep.mubr.f32.mxu0 0.0
      %6249 = vmatmul.mubr.f32.gmra.mxu0 %v4034
      %v6250 = vpop.f32.mrf.mxu0
      %v6251 = vadd.f32 0.0, %v6250
      %v6252 = vpop.f32.mrf.mxu0
      %6253 = vmatprep.mubr.f32.mxu0 0.0
      %6254 = vmatmul.mubr.f32.gmra.mxu0 %v4037
      %v6255 = vpop.f32.mrf.mxu0
      %v6256 = vadd.f32 0.0, %v6255
      %v6257 = vpop.f32.mrf.mxu0
      %6258 = vmatprep.mubr.f32.mxu0 0.0
      %6259 = vmatmul.mubr.f32.gmra.mxu0 %v4040
      %v6260 = vpop.f32.mrf.mxu0
      %v6261 = vadd.f32 0.0, %v6260
      %v6262 = vpop.f32.mrf.mxu0
      %6263 = vmatprep.mubr.f32.mxu0 0.0
      %6264 = vmatmul.mubr.f32.gmra.mxu0 %v4043
      %v6265 = vpop.f32.mrf.mxu0
      %v6266 = vadd.f32 0.0, %v6265
      %v6267 = vpop.f32.mrf.mxu0
      %6268 = vmatprep.mubr.f32.mxu0 0.0
      %6269 = vmatmul.mubr.f32.gmra.mxu0 %v4046
      %v6270 = vpop.f32.mrf.mxu0
      %v6271 = vadd.f32 0.0, %v6270
      %v6272 = vpop.f32.mrf.mxu0
      %6273 = vmatprep.mubr.f32.mxu0 0.0
      %6274 = vmatmul.mubr.f32.gmra.mxu0 %v4049
      %v6275 = vpop.f32.mrf.mxu0
      %v6276 = vadd.f32 0.0, %v6275
      %v6277 = vpop.f32.mrf.mxu0
      %6278 = vmatprep.mubr.f32.mxu0 0.0
      %6279 = vmatmul.mubr.f32.gmra.mxu0 %v4052
      %v6280 = vpop.f32.mrf.mxu0
      %v6281 = vadd.f32 0.0, %v6280
      %v6282 = vpop.f32.mrf.mxu0
      %6283 = vmatprep.mubr.f32.mxu0 0.0
      %6284 = vmatmul.mubr.f32.gmra.mxu0 %v4055
      %v6285 = vpop.f32.mrf.mxu0
      %v6286 = vadd.f32 0.0, %v6285
      %v6287 = vpop.f32.mrf.mxu0
      %6288 = vmatprep.mubr.f32.mxu0 0.0
      %6289 = vmatmul.mubr.f32.gmra.mxu0 %v4058
      %v6290 = vpop.f32.mrf.mxu0
      %v6291 = vadd.f32 0.0, %v6290
      %v6292 = vpop.f32.mrf.mxu0
      %6293 = vmatprep.mubr.f32.mxu0 0.0
      %6294 = vmatmul.mubr.f32.gmra.mxu0 %v4061
      %v6295 = vpop.f32.mrf.mxu0
      %v6296 = vadd.f32 0.0, %v6295
      %v6297 = vpop.f32.mrf.mxu0
      %6298 = vmatprep.mubr.f32.mxu0 0.0
      %6299 = vmatmul.mubr.f32.gmra.mxu0 %v4064
      %v6300 = vpop.f32.mrf.mxu0
      %v6301 = vadd.f32 0.0, %v6300
      %v6302 = vpop.f32.mrf.mxu0
      %6303 = vmatprep.mubr.f32.mxu0 0.0
      %6304 = vmatmul.mubr.f32.gmra.mxu0 %v4067
      %v6305 = vpop.f32.mrf.mxu0
      %v6306 = vadd.f32 0.0, %v6305
      %v6307 = vpop.f32.mrf.mxu0
      %6308 = vmatprep.mubr.f32.mxu0 0.0
      %6309 = vmatmul.mubr.f32.gmra.mxu0 %v4070
      %v6310 = vpop.f32.mrf.mxu0
      %v6311 = vadd.f32 0.0, %v6310
      %v6312 = vpop.f32.mrf.mxu0
      %6313 = vmatprep.mubr.f32.mxu0 0.0
      %6314 = vmatmul.mubr.f32.gmra.mxu0 %v4073
      %v6315 = vpop.f32.mrf.mxu0
      %v6316 = vadd.f32 0.0, %v6315
      %v6317 = vpop.f32.mrf.mxu0
      %6318 = vmatprep.mubr.f32.mxu0 0.0
      %6319 = vmatmul.mubr.f32.gmra.mxu0 %v4076
      %v6320 = vpop.f32.mrf.mxu0
      %v6321 = vadd.f32 0.0, %v6320
      %v6322 = vpop.f32.mrf.mxu0
      %6323 = vmatprep.mubr.f32.mxu0 0.0
      %6324 = vmatmul.mubr.f32.gmra.mxu0 %v4079
      %v6325 = vpop.f32.mrf.mxu0
      %v6326 = vadd.f32 0.0, %v6325
      %v6327 = vpop.f32.mrf.mxu0
      %6328 = vmatprep.mubr.f32.mxu0 0.0
      %6329 = vmatmul.mubr.f32.gmra.mxu0 %v4082
      %v6330 = vpop.f32.mrf.mxu0
      %v6331 = vadd.f32 0.0, %v6330
      %v6332 = vpop.f32.mrf.mxu0
      %6333 = vmatprep.mubr.f32.mxu0 0.0
      %6334 = vmatmul.mubr.f32.gmra.mxu0 %v4085
      %v6335 = vpop.f32.mrf.mxu0
      %v6336 = vadd.f32 0.0, %v6335
      %v6337 = vpop.f32.mrf.mxu0
      %6338 = vmatprep.mubr.f32.mxu0 0.0
      %6339 = vmatmul.mubr.f32.gmra.mxu0 %v4088
      %v6340 = vpop.f32.mrf.mxu0
      %v6341 = vadd.f32 0.0, %v6340
      %v6342 = vpop.f32.mrf.mxu0
      %6343 = vmatprep.mubr.f32.mxu0 0.0
      %6344 = vmatmul.mubr.f32.gmra.mxu0 %v4091
      %v6345 = vpop.f32.mrf.mxu0
      %v6346 = vadd.f32 0.0, %v6345
      %v6347 = vpop.f32.mrf.mxu0
      %6348 = vmatprep.mubr.f32.mxu0 0.0
      %6349 = vmatmul.mubr.f32.gmra.mxu0 %v4094
      %v6350 = vpop.f32.mrf.mxu0
      %v6351 = vadd.f32 0.0, %v6350
      %v6352 = vpop.f32.mrf.mxu0
      %6353 = vmatprep.mubr.f32.mxu0 0.0
      %6354 = vmatmul.mubr.f32.gmra.mxu0 %v4097
      %v6355 = vpop.f32.mrf.mxu0
      %v6356 = vadd.f32 0.0, %v6355
      %v6357 = vpop.f32.mrf.mxu0
      %6358 = vmatprep.mubr.f32.mxu0 0.0
      %6359 = vmatmul.mubr.f32.gmra.mxu0 %v4100
      %v6360 = vpop.f32.mrf.mxu0
      %v6361 = vadd.f32 0.0, %v6360
      %v6362 = vpop.f32.mrf.mxu0
      %6363 = vmatprep.mubr.f32.mxu0 0.0
      %6364 = vmatmul.mubr.f32.gmra.mxu0 %v4103
      %v6365 = vpop.f32.mrf.mxu0
      %v6366 = vadd.f32 0.0, %v6365
      %v6367 = vpop.f32.mrf.mxu0
      %6368 = vmatprep.mubr.f32.mxu0 0.0
      %6369 = vmatmul.mubr.f32.gmra.mxu0 %v4106
      %v6370 = vpop.f32.mrf.mxu0
      %v6371 = vadd.f32 0.0, %v6370
      %v6372 = vpop.f32.mrf.mxu0
      %6373 = vmatprep.mubr.f32.mxu0 0.0
      %6374 = vmatmul.mubr.f32.gmra.mxu0 %v4109
      %v6375 = vpop.f32.mrf.mxu0
      %v6376 = vadd.f32 0.0, %v6375
      %v6377 = vpop.f32.mrf.mxu0
      %6378 = vmatprep.mubr.f32.mxu0 0.0
      %6379 = vmatmul.mubr.f32.gmra.mxu0 %v4112
      %v6380 = vpop.f32.mrf.mxu0
      %v6381 = vadd.f32 0.0, %v6380
      %v6382 = vpop.f32.mrf.mxu0
      %6383 = vmatprep.mubr.f32.mxu0 0.0
      %6384 = vmatmul.mubr.f32.gmra.mxu0 %v4115
      %v6385 = vpop.f32.mrf.mxu0
      %v6386 = vadd.f32 0.0, %v6385
      %v6387 = vpop.f32.mrf.mxu0
      %6388 = vmatprep.mubr.f32.mxu0 0.0
      %6389 = vmatmul.mubr.f32.gmra.mxu0 %v4118
      %v6390 = vpop.f32.mrf.mxu0
      %v6391 = vadd.f32 0.0, %v6390
      %v6392 = vpop.f32.mrf.mxu0
      %6393 = vmatprep.mubr.f32.mxu0 0.0
      %6394 = vmatmul.mubr.f32.gmra.mxu0 %v4121
      %v6395 = vpop.f32.mrf.mxu0
      %v6396 = vadd.f32 0.0, %v6395
      %v6397 = vpop.f32.mrf.mxu0
      %6398 = vmatprep.mubr.f32.mxu0 0.0
      %6399 = vmatmul.mubr.f32.gmra.mxu0 %v4124
      %v6400 = vpop.f32.mrf.mxu0
      %v6401 = vadd.f32 0.0, %v6400
      %v6402 = vpop.f32.mrf.mxu0
      %6403 = vmatprep.mubr.f32.mxu0 0.0
      %6404 = vmatmul.mubr.f32.gmra.mxu0 %v4127
      %v6405 = vpop.f32.mrf.mxu0
      %v6406 = vadd.f32 0.0, %v6405
      %v6407 = vpop.f32.mrf.mxu0
      %6408 = vmatprep.mubr.f32.mxu0 0.0
      %6409 = vmatmul.mubr.f32.gmra.mxu0 %v4130
      %v6410 = vpop.f32.mrf.mxu0
      %v6411 = vadd.f32 0.0, %v6410
      %v6412 = vpop.f32.mrf.mxu0
      %6413 = vmatprep.mubr.f32.mxu0 0.0
      %6414 = vmatmul.mubr.f32.gmra.mxu0 %v4133
      %v6415 = vpop.f32.mrf.mxu0
      %v6416 = vadd.f32 0.0, %v6415
      %v6417 = vpop.f32.mrf.mxu0
      %6418 = vmatprep.mubr.f32.mxu0 0.0
      %6419 = vmatmul.mubr.f32.gmra.mxu0 %v4136
      %v6420 = vpop.f32.mrf.mxu0
      %v6421 = vadd.f32 0.0, %v6420
      %v6422 = vpop.f32.mrf.mxu0
      %6423 = vmatprep.mubr.f32.mxu0 0.0
      %6424 = vmatmul.mubr.f32.gmra.mxu0 %v4139
      %v6425 = vpop.f32.mrf.mxu0
      %v6426 = vadd.f32 0.0, %v6425
      %v6427 = vpop.f32.mrf.mxu0
      %6428 = vmatprep.mubr.f32.mxu0 0.0
      %6429 = vmatmul.mubr.f32.gmra.mxu0 %v4142
      %v6430 = vpop.f32.mrf.mxu0
      %v6431 = vadd.f32 0.0, %v6430
      %v6432 = vpop.f32.mrf.mxu0
      %6433 = vmatprep.mubr.f32.mxu0 0.0
      %6434 = vmatmul.mubr.f32.gmra.mxu0 %v4145
      %v6435 = vpop.f32.mrf.mxu0
      %v6436 = vadd.f32 0.0, %v6435
      %v6437 = vpop.f32.mrf.mxu0
      %6438 = vmatprep.mubr.f32.mxu0 0.0
      %6439 = vmatmul.mubr.f32.gmra.mxu0 %v4148
      %v6440 = vpop.f32.mrf.mxu0
      %v6441 = vadd.f32 0.0, %v6440
      %v6442 = vpop.f32.mrf.mxu0
      %6443 = vmatprep.mubr.f32.mxu0 0.0
      %6444 = vmatmul.mubr.f32.gmra.mxu0 %v4151
      %v6445 = vpop.f32.mrf.mxu0
      %v6446 = vadd.f32 0.0, %v6445
      %v6447 = vpop.f32.mrf.mxu0
      %6448 = vmatprep.mubr.f32.mxu0 0.0
      %6449 = vmatmul.mubr.f32.gmra.mxu0 %v4154
      %v6450 = vpop.f32.mrf.mxu0
      %v6451 = vadd.f32 0.0, %v6450
      %v6452 = vpop.f32.mrf.mxu0
      %6453 = vmatprep.mubr.f32.mxu0 0.0
      %6454 = vmatmul.mubr.f32.gmra.mxu0 %v4157
      %v6455 = vpop.f32.mrf.mxu0
      %v6456 = vadd.f32 0.0, %v6455
      %v6457 = vpop.f32.mrf.mxu0
      %6458 = vmatprep.mubr.f32.mxu0 0.0
      %6459 = vmatmul.mubr.f32.gmra.mxu0 %v4160
      %v6460 = vpop.f32.mrf.mxu0
      %v6461 = vadd.f32 0.0, %v6460
      %v6462 = vpop.f32.mrf.mxu0
      %6463 = vmatprep.mubr.f32.mxu0 0.0
      %6464 = vmatmul.mubr.f32.gmra.mxu0 %v4163
      %v6465 = vpop.f32.mrf.mxu0
      %v6466 = vadd.f32 0.0, %v6465
      %v6467 = vpop.f32.mrf.mxu0
      %6468 = vmatprep.mubr.f32.mxu0 0.0
      %6469 = vmatmul.mubr.f32.gmra.mxu0 %v4166
      %v6470 = vpop.f32.mrf.mxu0
      %v6471 = vadd.f32 0.0, %v6470
      %v6472 = vpop.f32.mrf.mxu0
      %6473 = vmatprep.mubr.f32.mxu0 0.0
      %6474 = vmatmul.mubr.f32.gmra.mxu0 %v4169
      %v6475 = vpop.f32.mrf.mxu0
      %v6476 = vadd.f32 0.0, %v6475
      %v6477 = vpop.f32.mrf.mxu0
      %6478 = vmatprep.mubr.f32.mxu0 0.0
      %6479 = vmatmul.mubr.f32.gmra.mxu0 %v4172
      %v6480 = vpop.f32.mrf.mxu0
      %v6481 = vadd.f32 0.0, %v6480
      %v6482 = vpop.f32.mrf.mxu0
      %6483 = vmatprep.mubr.f32.mxu0 0.0
      %6484 = vmatmul.mubr.f32.gmra.mxu0 %v4175
      %v6485 = vpop.f32.mrf.mxu0
      %v6486 = vadd.f32 0.0, %v6485
      %v6487 = vpop.f32.mrf.mxu0
      %6488 = vmatprep.mubr.f32.mxu0 0.0
      %6489 = vmatmul.mubr.f32.gmra.mxu0 %v4178
      %v6490 = vpop.f32.mrf.mxu0
      %v6491 = vadd.f32 0.0, %v6490
      %v6492 = vpop.f32.mrf.mxu0
      %6493 = vmatprep.mubr.f32.mxu0 0.0
      %6494 = vmatmul.mubr.f32.gmra.mxu0 %v4181
      %v6495 = vpop.f32.mrf.mxu0
      %v6496 = vadd.f32 0.0, %v6495
      %v6497 = vpop.f32.mrf.mxu0
      %6498 = vmatprep.mubr.f32.mxu0 0.0
      %6499 = vmatmul.mubr.f32.gmra.mxu0 %v4184
      %v6500 = vpop.f32.mrf.mxu0
      %v6501 = vadd.f32 0.0, %v6500
      %v6502 = vpop.f32.mrf.mxu0
      %6503 = vmatprep.mubr.f32.mxu0 0.0
      %6504 = vmatmul.mubr.f32.gmra.mxu0 %v4187
      %v6505 = vpop.f32.mrf.mxu0
      %v6506 = vadd.f32 0.0, %v6505
      %v6507 = vpop.f32.mrf.mxu0
      %6508 = vdwg.mxu0
      %vm6509 = vcmask 64512
      %6510 = vst.msk [vmem:[%s201] sm:$0xff] %vm6509, %v4256
      %6511 = vst.msk [vmem:[%s201 + $0x8] sm:$0xff] %vm6509, %v4261
      %6512 = vst.msk [vmem:[%s201 + $0x10] sm:$0xff] %vm6509, %v4266
      %6513 = vst.msk [vmem:[%s201 + $0x18] sm:$0xff] %vm6509, %v4271
      %6514 = vst.msk [vmem:[%s201 + $0x20] sm:$0xff] %vm6509, %v4276
      %6515 = vst.msk [vmem:[%s201 + $0x28] sm:$0xff] %vm6509, %v4281
      %6516 = vst.msk [vmem:[%s201 + $0x30] sm:$0xff] %vm6509, %v4286
      %6517 = vst.msk [vmem:[%s201 + $0x38] sm:$0xff] %vm6509, %v4291
      %6518 = vst.msk [vmem:[%s201 + $0x40] sm:$0xff] %vm6509, %v4296
      %6519 = vst.msk [vmem:[%s201 + $0x48] sm:$0xff] %vm6509, %v4301
      %6520 = vst.msk [vmem:[%s201 + $0x50] sm:$0xff] %vm6509, %v4306
      %6521 = vst.msk [vmem:[%s201 + $0x58] sm:$0xff] %vm6509, %v4311
      %6522 = vst.msk [vmem:[%s201 + $0x60] sm:$0xff] %vm6509, %v4316
      %6523 = vst.msk [vmem:[%s201 + $0x68] sm:$0xff] %vm6509, %v4321
      %6524 = vst.msk [vmem:[%s201 + $0x70] sm:$0xff] %vm6509, %v4326
      %6525 = vst.msk [vmem:[%s201 + $0x78] sm:$0xff] %vm6509, %v4331
      %6526 = vst.msk [vmem:[%s201 + $0x80] sm:$0xff] %vm6509, %v4336
      %6527 = vst.msk [vmem:[%s201 + $0x88] sm:$0xff] %vm6509, %v4341
      %6528 = vst.msk [vmem:[%s201 + $0x90] sm:$0xff] %vm6509, %v4346
      %6529 = vst.msk [vmem:[%s201 + $0x98] sm:$0xff] %vm6509, %v4351
      %6530 = vst.msk [vmem:[%s201 + $0xa0] sm:$0xff] %vm6509, %v4356
      %6531 = vst.msk [vmem:[%s201 + $0xa8] sm:$0xff] %vm6509, %v4361
      %6532 = vst.msk [vmem:[%s201 + $0xb0] sm:$0xff] %vm6509, %v4366
      %6533 = vst.msk [vmem:[%s201 + $0xb8] sm:$0xff] %vm6509, %v4371
      %6534 = vst.msk [vmem:[%s201 + $0xc0] sm:$0xff] %vm6509, %v4376
      %6535 = vst.msk [vmem:[%s201 + $0xc8] sm:$0xff] %vm6509, %v4381
      %6536 = vst.msk [vmem:[%s201 + $0xd0] sm:$0xff] %vm6509, %v4386
      %6537 = vst.msk [vmem:[%s201 + $0xd8] sm:$0xff] %vm6509, %v4391
      %6538 = vst.msk [vmem:[%s201 + $0xe0] sm:$0xff] %vm6509, %v4396
      %6539 = vst.msk [vmem:[%s201 + $0xe8] sm:$0xff] %vm6509, %v4401
      %6540 = vst.msk [vmem:[%s201 + $0xf0] sm:$0xff] %vm6509, %v4406
      %6541 = vst.msk [vmem:[%s201 + $0xf8] sm:$0xff] %vm6509, %v4411
      %6542 = vst.msk [vmem:[%s201 + $0x100] sm:$0xff] %vm6509, %v4416
      %6543 = vst.msk [vmem:[%s201 + $0x108] sm:$0xff] %vm6509, %v4421
      %6544 = vst.msk [vmem:[%s201 + $0x110] sm:$0xff] %vm6509, %v4426
      %6545 = vst.msk [vmem:[%s201 + $0x118] sm:$0xff] %vm6509, %v4431
      %6546 = vst.msk [vmem:[%s201 + $0x120] sm:$0xff] %vm6509, %v4436
      %6547 = vst.msk [vmem:[%s201 + $0x128] sm:$0xff] %vm6509, %v4441
      %6548 = vst.msk [vmem:[%s201 + $0x130] sm:$0xff] %vm6509, %v4446
      %6549 = vst.msk [vmem:[%s201 + $0x138] sm:$0xff] %vm6509, %v4451
      %6550 = vst.msk [vmem:[%s201 + $0x140] sm:$0xff] %vm6509, %v4456
      %6551 = vst.msk [vmem:[%s201 + $0x148] sm:$0xff] %vm6509, %v4461
      %6552 = vst.msk [vmem:[%s201 + $0x150] sm:$0xff] %vm6509, %v4466
      %6553 = vst.msk [vmem:[%s201 + $0x158] sm:$0xff] %vm6509, %v4471
      %6554 = vst.msk [vmem:[%s201 + $0x160] sm:$0xff] %vm6509, %v4476
      %6555 = vst.msk [vmem:[%s201 + $0x168] sm:$0xff] %vm6509, %v4481
      %6556 = vst.msk [vmem:[%s201 + $0x170] sm:$0xff] %vm6509, %v4486
      %6557 = vst.msk [vmem:[%s201 + $0x178] sm:$0xff] %vm6509, %v4491
      %6558 = vst.msk [vmem:[%s201 + $0x180] sm:$0xff] %vm6509, %v4496
      %6559 = vst.msk [vmem:[%s201 + $0x188] sm:$0xff] %vm6509, %v4501
      %6560 = vst.msk [vmem:[%s201 + $0x190] sm:$0xff] %vm6509, %v4506
      %6561 = vst.msk [vmem:[%s201 + $0x198] sm:$0xff] %vm6509, %v4511
      %6562 = vst.msk [vmem:[%s201 + $0x1a0] sm:$0xff] %vm6509, %v4516
      %6563 = vst.msk [vmem:[%s201 + $0x1a8] sm:$0xff] %vm6509, %v4521
      %6564 = vst.msk [vmem:[%s201 + $0x1b0] sm:$0xff] %vm6509, %v4526
      %6565 = vst.msk [vmem:[%s201 + $0x1b8] sm:$0xff] %vm6509, %v4531
      %6566 = vst.msk [vmem:[%s201 + $0x1c0] sm:$0xff] %vm6509, %v4536
      %6567 = vst.msk [vmem:[%s201 + $0x1c8] sm:$0xff] %vm6509, %v4541
      %6568 = vst.msk [vmem:[%s201 + $0x1d0] sm:$0xff] %vm6509, %v4546
      %6569 = vst.msk [vmem:[%s201 + $0x1d8] sm:$0xff] %vm6509, %v4551
      %6570 = vst.msk [vmem:[%s201 + $0x1e0] sm:$0xff] %vm6509, %v4556
      %6571 = vst.msk [vmem:[%s201 + $0x1e8] sm:$0xff] %vm6509, %v4561
      %6572 = vst.msk [vmem:[%s201 + $0x1f0] sm:$0xff] %vm6509, %v4566
      %6573 = vst.msk [vmem:[%s201 + $0x1f8] sm:$0xff] %vm6509, %v4571
      %6574 = vst.msk [vmem:[%s201 + $0x200] sm:$0xff] %vm6509, %v4576
      %6575 = vst.msk [vmem:[%s201 + $0x208] sm:$0xff] %vm6509, %v4581
      %6576 = vst.msk [vmem:[%s201 + $0x210] sm:$0xff] %vm6509, %v4586
      %6577 = vst.msk [vmem:[%s201 + $0x218] sm:$0xff] %vm6509, %v4591
      %6578 = vst.msk [vmem:[%s201 + $0x220] sm:$0xff] %vm6509, %v4596
      %6579 = vst.msk [vmem:[%s201 + $0x228] sm:$0xff] %vm6509, %v4601
      %6580 = vst.msk [vmem:[%s201 + $0x230] sm:$0xff] %vm6509, %v4606
      %6581 = vst.msk [vmem:[%s201 + $0x238] sm:$0xff] %vm6509, %v4611
      %6582 = vst.msk [vmem:[%s201 + $0x240] sm:$0xff] %vm6509, %v4616
      %6583 = vst.msk [vmem:[%s201 + $0x248] sm:$0xff] %vm6509, %v4621
      %6584 = vst.msk [vmem:[%s201 + $0x250] sm:$0xff] %vm6509, %v4626
      %6585 = vst.msk [vmem:[%s201 + $0x258] sm:$0xff] %vm6509, %v4631
      %6586 = vst.msk [vmem:[%s201 + $0x260] sm:$0xff] %vm6509, %v4636
      %6587 = vst.msk [vmem:[%s201 + $0x268] sm:$0xff] %vm6509, %v4641
      %6588 = vst.msk [vmem:[%s201 + $0x270] sm:$0xff] %vm6509, %v4646
      %6589 = vst.msk [vmem:[%s201 + $0x278] sm:$0xff] %vm6509, %v4651
      %6590 = vst.msk [vmem:[%s201 + $0x280] sm:$0xff] %vm6509, %v4656
      %6591 = vst.msk [vmem:[%s201 + $0x288] sm:$0xff] %vm6509, %v4661
      %6592 = vst.msk [vmem:[%s201 + $0x290] sm:$0xff] %vm6509, %v4666
      %6593 = vst.msk [vmem:[%s201 + $0x298] sm:$0xff] %vm6509, %v4671
      %6594 = vst.msk [vmem:[%s201 + $0x2a0] sm:$0xff] %vm6509, %v4676
      %6595 = vst.msk [vmem:[%s201 + $0x2a8] sm:$0xff] %vm6509, %v4681
      %6596 = vst.msk [vmem:[%s201 + $0x2b0] sm:$0xff] %vm6509, %v4686
      %6597 = vst.msk [vmem:[%s201 + $0x2b8] sm:$0xff] %vm6509, %v4691
      %6598 = vst.msk [vmem:[%s201 + $0x2c0] sm:$0xff] %vm6509, %v4696
      %6599 = vst.msk [vmem:[%s201 + $0x2c8] sm:$0xff] %vm6509, %v4701
      %6600 = vst.msk [vmem:[%s201 + $0x2d0] sm:$0xff] %vm6509, %v4706
      %6601 = vst.msk [vmem:[%s201 + $0x2d8] sm:$0xff] %vm6509, %v4711
      %6602 = vst.msk [vmem:[%s201 + $0x2e0] sm:$0xff] %vm6509, %v4716
      %6603 = vst.msk [vmem:[%s201 + $0x2e8] sm:$0xff] %vm6509, %v4721
      %6604 = vst.msk [vmem:[%s201 + $0x2f0] sm:$0xff] %vm6509, %v4726
      %6605 = vst.msk [vmem:[%s201 + $0x2f8] sm:$0xff] %vm6509, %v4731
      %6606 = vst.msk [vmem:[%s201 + $0x300] sm:$0xff] %vm6509, %v4736
      %6607 = vst.msk [vmem:[%s201 + $0x308] sm:$0xff] %vm6509, %v4741
      %6608 = vst.msk [vmem:[%s201 + $0x310] sm:$0xff] %vm6509, %v4746
      %6609 = vst.msk [vmem:[%s201 + $0x318] sm:$0xff] %vm6509, %v4751
      %6610 = vst.msk [vmem:[%s201 + $0x320] sm:$0xff] %vm6509, %v4756
      %6611 = vst.msk [vmem:[%s201 + $0x328] sm:$0xff] %vm6509, %v4761
      %6612 = vst.msk [vmem:[%s201 + $0x330] sm:$0xff] %vm6509, %v4766
      %6613 = vst.msk [vmem:[%s201 + $0x338] sm:$0xff] %vm6509, %v4771
      %6614 = vst.msk [vmem:[%s201 + $0x340] sm:$0xff] %vm6509, %v4776
      %6615 = vst.msk [vmem:[%s201 + $0x348] sm:$0xff] %vm6509, %v4781
      %6616 = vst.msk [vmem:[%s201 + $0x350] sm:$0xff] %vm6509, %v4786
      %6617 = vst.msk [vmem:[%s201 + $0x358] sm:$0xff] %vm6509, %v4791
      %6618 = vst.msk [vmem:[%s201 + $0x360] sm:$0xff] %vm6509, %v4796
      %6619 = vst.msk [vmem:[%s201 + $0x368] sm:$0xff] %vm6509, %v4801
      %6620 = vst.msk [vmem:[%s201 + $0x370] sm:$0xff] %vm6509, %v4806
      %6621 = vst.msk [vmem:[%s201 + $0x378] sm:$0xff] %vm6509, %v4811
      %6622 = vst.msk [vmem:[%s201 + $0x380] sm:$0xff] %vm6509, %v4816
      %6623 = vst.msk [vmem:[%s201 + $0x388] sm:$0xff] %vm6509, %v4821
      %6624 = vst.msk [vmem:[%s201 + $0x390] sm:$0xff] %vm6509, %v4826
      %6625 = vst.msk [vmem:[%s201 + $0x398] sm:$0xff] %vm6509, %v4831
      %6626 = vst.msk [vmem:[%s201 + $0x3a0] sm:$0xff] %vm6509, %v4836
      %6627 = vst.msk [vmem:[%s201 + $0x3a8] sm:$0xff] %vm6509, %v4841
      %6628 = vst.msk [vmem:[%s201 + $0x3b0] sm:$0xff] %vm6509, %v4846
      %6629 = vst.msk [vmem:[%s201 + $0x3b8] sm:$0xff] %vm6509, %v4851
      %6630 = vst.msk [vmem:[%s201 + $0x3c0] sm:$0xff] %vm6509, %v4856
      %6631 = vst.msk [vmem:[%s201 + $0x3c8] sm:$0xff] %vm6509, %v4861
      %6632 = vst.msk [vmem:[%s201 + $0x3d0] sm:$0xff] %vm6509, %v4866
      %6633 = vst.msk [vmem:[%s201 + $0x3d8] sm:$0xff] %vm6509, %v4871
      %6634 = vst.msk [vmem:[%s201 + $0x3e0] sm:$0xff] %vm6509, %v4876
      %6635 = vst.msk [vmem:[%s201 + $0x3e8] sm:$0xff] %vm6509, %v4881
      %6636 = vst.msk [vmem:[%s201 + $0x3f0] sm:$0xff] %vm6509, %v4886
      %6637 = vst.msk [vmem:[%s201 + $0x3f8] sm:$0xff] %vm6509, %v4891
      %6638 = vst.msk [vmem:[%s201 + $0x400] sm:$0xff] %vm6509, %v4896
      %6639 = vst.msk [vmem:[%s201 + $0x408] sm:$0xff] %vm6509, %v4901
      %6640 = vst.msk [vmem:[%s201 + $0x410] sm:$0xff] %vm6509, %v4906
      %6641 = vst.msk [vmem:[%s201 + $0x418] sm:$0xff] %vm6509, %v4911
      %6642 = vst.msk [vmem:[%s201 + $0x420] sm:$0xff] %vm6509, %v4916
      %6643 = vst.msk [vmem:[%s201 + $0x428] sm:$0xff] %vm6509, %v4921
      %6644 = vst.msk [vmem:[%s201 + $0x430] sm:$0xff] %vm6509, %v4926
      %6645 = vst.msk [vmem:[%s201 + $0x438] sm:$0xff] %vm6509, %v4931
      %6646 = vst.msk [vmem:[%s201 + $0x440] sm:$0xff] %vm6509, %v4936
      %6647 = vst.msk [vmem:[%s201 + $0x448] sm:$0xff] %vm6509, %v4941
      %6648 = vst.msk [vmem:[%s201 + $0x450] sm:$0xff] %vm6509, %v4946
      %6649 = vst.msk [vmem:[%s201 + $0x458] sm:$0xff] %vm6509, %v4951
      %6650 = vst.msk [vmem:[%s201 + $0x460] sm:$0xff] %vm6509, %v4956
      %6651 = vst.msk [vmem:[%s201 + $0x468] sm:$0xff] %vm6509, %v4961
      %6652 = vst.msk [vmem:[%s201 + $0x470] sm:$0xff] %vm6509, %v4966
      %6653 = vst.msk [vmem:[%s201 + $0x478] sm:$0xff] %vm6509, %v4971
      %6654 = vst.msk [vmem:[%s201 + $0x480] sm:$0xff] %vm6509, %v4976
      %6655 = vst.msk [vmem:[%s201 + $0x488] sm:$0xff] %vm6509, %v4981
      %6656 = vst.msk [vmem:[%s201 + $0x490] sm:$0xff] %vm6509, %v4986
      %6657 = vst.msk [vmem:[%s201 + $0x498] sm:$0xff] %vm6509, %v4991
      %6658 = vst.msk [vmem:[%s201 + $0x4a0] sm:$0xff] %vm6509, %v4996
      %6659 = vst.msk [vmem:[%s201 + $0x4a8] sm:$0xff] %vm6509, %v5001
      %6660 = vst.msk [vmem:[%s201 + $0x4b0] sm:$0xff] %vm6509, %v5006
      %6661 = vst.msk [vmem:[%s201 + $0x4b8] sm:$0xff] %vm6509, %v5011
      %6662 = vst.msk [vmem:[%s201 + $0x4c0] sm:$0xff] %vm6509, %v5016
      %6663 = vst.msk [vmem:[%s201 + $0x4c8] sm:$0xff] %vm6509, %v5021
      %6664 = vst.msk [vmem:[%s201 + $0x4d0] sm:$0xff] %vm6509, %v5026
      %6665 = vst.msk [vmem:[%s201 + $0x4d8] sm:$0xff] %vm6509, %v5031
      %6666 = vst.msk [vmem:[%s201 + $0x4e0] sm:$0xff] %vm6509, %v5036
      %6667 = vst.msk [vmem:[%s201 + $0x4e8] sm:$0xff] %vm6509, %v5041
      %6668 = vst.msk [vmem:[%s201 + $0x4f0] sm:$0xff] %vm6509, %v5046
      %6669 = vst.msk [vmem:[%s201 + $0x4f8] sm:$0xff] %vm6509, %v5051
      %6670 = vst.msk [vmem:[%s201 + $0x500] sm:$0xff] %vm6509, %v5056
      %6671 = vst.msk [vmem:[%s201 + $0x508] sm:$0xff] %vm6509, %v5061
      %6672 = vst.msk [vmem:[%s201 + $0x510] sm:$0xff] %vm6509, %v5066
      %6673 = vst.msk [vmem:[%s201 + $0x518] sm:$0xff] %vm6509, %v5071
      %6674 = vst.msk [vmem:[%s201 + $0x520] sm:$0xff] %vm6509, %v5076
      %6675 = vst.msk [vmem:[%s201 + $0x528] sm:$0xff] %vm6509, %v5081
      %6676 = vst.msk [vmem:[%s201 + $0x530] sm:$0xff] %vm6509, %v5086
      %6677 = vst.msk [vmem:[%s201 + $0x538] sm:$0xff] %vm6509, %v5091
      %6678 = vst.msk [vmem:[%s201 + $0x540] sm:$0xff] %vm6509, %v5096
      %6679 = vst.msk [vmem:[%s201 + $0x548] sm:$0xff] %vm6509, %v5101
      %6680 = vst.msk [vmem:[%s201 + $0x550] sm:$0xff] %vm6509, %v5106
      %6681 = vst.msk [vmem:[%s201 + $0x558] sm:$0xff] %vm6509, %v5111
      %6682 = vst.msk [vmem:[%s201 + $0x560] sm:$0xff] %vm6509, %v5116
      %6683 = vst.msk [vmem:[%s201 + $0x568] sm:$0xff] %vm6509, %v5121
      %6684 = vst.msk [vmem:[%s201 + $0x570] sm:$0xff] %vm6509, %v5126
      %6685 = vst.msk [vmem:[%s201 + $0x578] sm:$0xff] %vm6509, %v5131
      %6686 = vst.msk [vmem:[%s201 + $0x580] sm:$0xff] %vm6509, %v5136
      %6687 = vst.msk [vmem:[%s201 + $0x588] sm:$0xff] %vm6509, %v5141
      %6688 = vst.msk [vmem:[%s201 + $0x590] sm:$0xff] %vm6509, %v5146
      %6689 = vst.msk [vmem:[%s201 + $0x598] sm:$0xff] %vm6509, %v5151
      %6690 = vst.msk [vmem:[%s201 + $0x5a0] sm:$0xff] %vm6509, %v5156
      %6691 = vst.msk [vmem:[%s201 + $0x5a8] sm:$0xff] %vm6509, %v5161
      %6692 = vst.msk [vmem:[%s201 + $0x5b0] sm:$0xff] %vm6509, %v5166
      %6693 = vst.msk [vmem:[%s201 + $0x5b8] sm:$0xff] %vm6509, %v5171
      %6694 = vst.msk [vmem:[%s201 + $0x5c0] sm:$0xff] %vm6509, %v5176
      %6695 = vst.msk [vmem:[%s201 + $0x5c8] sm:$0xff] %vm6509, %v5181
      %6696 = vst.msk [vmem:[%s201 + $0x5d0] sm:$0xff] %vm6509, %v5186
      %6697 = vst.msk [vmem:[%s201 + $0x5d8] sm:$0xff] %vm6509, %v5191
      %6698 = vst.msk [vmem:[%s201 + $0x5e0] sm:$0xff] %vm6509, %v5196
      %6699 = vst.msk [vmem:[%s201 + $0x5e8] sm:$0xff] %vm6509, %v5201
      %6700 = vst.msk [vmem:[%s201 + $0x5f0] sm:$0xff] %vm6509, %v5206
      %6701 = vst.msk [vmem:[%s201 + $0x5f8] sm:$0xff] %vm6509, %v5211
      %6702 = vst.msk [vmem:[%s201 + $0x600] sm:$0xff] %vm6509, %v5216
      %6703 = vst.msk [vmem:[%s201 + $0x608] sm:$0xff] %vm6509, %v5221
      %6704 = vst.msk [vmem:[%s201 + $0x610] sm:$0xff] %vm6509, %v5226
      %6705 = vst.msk [vmem:[%s201 + $0x618] sm:$0xff] %vm6509, %v5231
      %6706 = vst.msk [vmem:[%s201 + $0x620] sm:$0xff] %vm6509, %v5236
      %6707 = vst.msk [vmem:[%s201 + $0x628] sm:$0xff] %vm6509, %v5241
      %6708 = vst.msk [vmem:[%s201 + $0x630] sm:$0xff] %vm6509, %v5246
      %6709 = vst.msk [vmem:[%s201 + $0x638] sm:$0xff] %vm6509, %v5251
      %6710 = vst.msk [vmem:[%s201 + $0x640] sm:$0xff] %vm6509, %v5256
      %6711 = vst.msk [vmem:[%s201 + $0x648] sm:$0xff] %vm6509, %v5261
      %6712 = vst.msk [vmem:[%s201 + $0x650] sm:$0xff] %vm6509, %v5266
      %6713 = vst.msk [vmem:[%s201 + $0x658] sm:$0xff] %vm6509, %v5271
      %6714 = vst.msk [vmem:[%s201 + $0x660] sm:$0xff] %vm6509, %v5276
      %6715 = vst.msk [vmem:[%s201 + $0x668] sm:$0xff] %vm6509, %v5281
      %6716 = vst.msk [vmem:[%s201 + $0x670] sm:$0xff] %vm6509, %v5286
      %6717 = vst.msk [vmem:[%s201 + $0x678] sm:$0xff] %vm6509, %v5291
      %6718 = vst.msk [vmem:[%s201 + $0x680] sm:$0xff] %vm6509, %v5296
      %6719 = vst.msk [vmem:[%s201 + $0x688] sm:$0xff] %vm6509, %v5301
      %6720 = vst.msk [vmem:[%s201 + $0x690] sm:$0xff] %vm6509, %v5306
      %6721 = vst.msk [vmem:[%s201 + $0x698] sm:$0xff] %vm6509, %v5311
      %6722 = vst.msk [vmem:[%s201 + $0x6a0] sm:$0xff] %vm6509, %v5316
      %6723 = vst.msk [vmem:[%s201 + $0x6a8] sm:$0xff] %vm6509, %v5321
      %6724 = vst.msk [vmem:[%s201 + $0x6b0] sm:$0xff] %vm6509, %v5326
      %6725 = vst.msk [vmem:[%s201 + $0x6b8] sm:$0xff] %vm6509, %v5331
      %6726 = vst.msk [vmem:[%s201 + $0x6c0] sm:$0xff] %vm6509, %v5336
      %6727 = vst.msk [vmem:[%s201 + $0x6c8] sm:$0xff] %vm6509, %v5341
      %6728 = vst.msk [vmem:[%s201 + $0x6d0] sm:$0xff] %vm6509, %v5346
      %6729 = vst.msk [vmem:[%s201 + $0x6d8] sm:$0xff] %vm6509, %v5351
      %6730 = vst.msk [vmem:[%s201 + $0x6e0] sm:$0xff] %vm6509, %v5356
      %6731 = vst.msk [vmem:[%s201 + $0x6e8] sm:$0xff] %vm6509, %v5361
      %6732 = vst.msk [vmem:[%s201 + $0x6f0] sm:$0xff] %vm6509, %v5366
      %6733 = vst.msk [vmem:[%s201 + $0x6f8] sm:$0xff] %vm6509, %v5371
      %6734 = vst.msk [vmem:[%s201 + $0x700] sm:$0xff] %vm6509, %v5376
      %6735 = vst.msk [vmem:[%s201 + $0x708] sm:$0xff] %vm6509, %v5381
      %6736 = vst.msk [vmem:[%s201 + $0x710] sm:$0xff] %vm6509, %v5386
      %6737 = vst.msk [vmem:[%s201 + $0x718] sm:$0xff] %vm6509, %v5391
      %6738 = vst.msk [vmem:[%s201 + $0x720] sm:$0xff] %vm6509, %v5396
      %6739 = vst.msk [vmem:[%s201 + $0x728] sm:$0xff] %vm6509, %v5401
      %6740 = vst.msk [vmem:[%s201 + $0x730] sm:$0xff] %vm6509, %v5406
      %6741 = vst.msk [vmem:[%s201 + $0x738] sm:$0xff] %vm6509, %v5411
      %6742 = vst.msk [vmem:[%s201 + $0x740] sm:$0xff] %vm6509, %v5416
      %6743 = vst.msk [vmem:[%s201 + $0x748] sm:$0xff] %vm6509, %v5421
      %6744 = vst.msk [vmem:[%s201 + $0x750] sm:$0xff] %vm6509, %v5426
      %6745 = vst.msk [vmem:[%s201 + $0x758] sm:$0xff] %vm6509, %v5431
      %6746 = vst.msk [vmem:[%s201 + $0x760] sm:$0xff] %vm6509, %v5436
      %6747 = vst.msk [vmem:[%s201 + $0x768] sm:$0xff] %vm6509, %v5441
      %6748 = vst.msk [vmem:[%s201 + $0x770] sm:$0xff] %vm6509, %v5446
      %6749 = vst.msk [vmem:[%s201 + $0x778] sm:$0xff] %vm6509, %v5451
      %6750 = vst.msk [vmem:[%s201 + $0x780] sm:$0xff] %vm6509, %v5456
      %6751 = vst.msk [vmem:[%s201 + $0x788] sm:$0xff] %vm6509, %v5461
      %6752 = vst.msk [vmem:[%s201 + $0x790] sm:$0xff] %vm6509, %v5466
      %6753 = vst.msk [vmem:[%s201 + $0x798] sm:$0xff] %vm6509, %v5471
      %6754 = vst.msk [vmem:[%s201 + $0x7a0] sm:$0xff] %vm6509, %v5476
      %6755 = vst.msk [vmem:[%s201 + $0x7a8] sm:$0xff] %vm6509, %v5481
      %6756 = vst.msk [vmem:[%s201 + $0x7b0] sm:$0xff] %vm6509, %v5486
      %6757 = vst.msk [vmem:[%s201 + $0x7b8] sm:$0xff] %vm6509, %v5491
      %6758 = vst.msk [vmem:[%s201 + $0x7c0] sm:$0xff] %vm6509, %v5496
      %6759 = vst.msk [vmem:[%s201 + $0x7c8] sm:$0xff] %vm6509, %v5501
      %6760 = vst.msk [vmem:[%s201 + $0x7d0] sm:$0xff] %vm6509, %v5506
      %6761 = vst.msk [vmem:[%s201 + $0x7d8] sm:$0xff] %vm6509, %v5511
      %6762 = vst.msk [vmem:[%s201 + $0x7e0] sm:$0xff] %vm6509, %v5516
      %6763 = vst.msk [vmem:[%s201 + $0x7e8] sm:$0xff] %vm6509, %v5521
      %6764 = vst.msk [vmem:[%s201 + $0x7f0] sm:$0xff] %vm6509, %v5526
      %6765 = vst.msk [vmem:[%s201 + $0x7f8] sm:$0xff] %vm6509, %v5531
      %6766 = vst.msk [vmem:[%s201 + $0x800] sm:$0xff] %vm6509, %v5536
      %6767 = vst.msk [vmem:[%s201 + $0x808] sm:$0xff] %vm6509, %v5541
      %6768 = vst.msk [vmem:[%s201 + $0x810] sm:$0xff] %vm6509, %v5546
      %6769 = vst.msk [vmem:[%s201 + $0x818] sm:$0xff] %vm6509, %v5551
      %6770 = vst.msk [vmem:[%s201 + $0x820] sm:$0xff] %vm6509, %v5556
      %6771 = vst.msk [vmem:[%s201 + $0x828] sm:$0xff] %vm6509, %v5561
      %6772 = vst.msk [vmem:[%s201 + $0x830] sm:$0xff] %vm6509, %v5566
      %6773 = vst.msk [vmem:[%s201 + $0x838] sm:$0xff] %vm6509, %v5571
      %6774 = vst.msk [vmem:[%s201 + $0x840] sm:$0xff] %vm6509, %v5576
      %6775 = vst.msk [vmem:[%s201 + $0x848] sm:$0xff] %vm6509, %v5581
      %6776 = vst.msk [vmem:[%s201 + $0x850] sm:$0xff] %vm6509, %v5586
      %6777 = vst.msk [vmem:[%s201 + $0x858] sm:$0xff] %vm6509, %v5591
      %6778 = vst.msk [vmem:[%s201 + $0x860] sm:$0xff] %vm6509, %v5596
      %6779 = vst.msk [vmem:[%s201 + $0x868] sm:$0xff] %vm6509, %v5601
      %6780 = vst.msk [vmem:[%s201 + $0x870] sm:$0xff] %vm6509, %v5606
      %6781 = vst.msk [vmem:[%s201 + $0x878] sm:$0xff] %vm6509, %v5611
      %6782 = vst.msk [vmem:[%s201 + $0x880] sm:$0xff] %vm6509, %v5616
      %6783 = vst.msk [vmem:[%s201 + $0x888] sm:$0xff] %vm6509, %v5621
      %6784 = vst.msk [vmem:[%s201 + $0x890] sm:$0xff] %vm6509, %v5626
      %6785 = vst.msk [vmem:[%s201 + $0x898] sm:$0xff] %vm6509, %v5631
      %6786 = vst.msk [vmem:[%s201 + $0x8a0] sm:$0xff] %vm6509, %v5636
      %6787 = vst.msk [vmem:[%s201 + $0x8a8] sm:$0xff] %vm6509, %v5641
      %6788 = vst.msk [vmem:[%s201 + $0x8b0] sm:$0xff] %vm6509, %v5646
      %6789 = vst.msk [vmem:[%s201 + $0x8b8] sm:$0xff] %vm6509, %v5651
      %6790 = vst.msk [vmem:[%s201 + $0x8c0] sm:$0xff] %vm6509, %v5656
      %6791 = vst.msk [vmem:[%s201 + $0x8c8] sm:$0xff] %vm6509, %v5661
      %6792 = vst.msk [vmem:[%s201 + $0x8d0] sm:$0xff] %vm6509, %v5666
      %6793 = vst.msk [vmem:[%s201 + $0x8d8] sm:$0xff] %vm6509, %v5671
      %6794 = vst.msk [vmem:[%s201 + $0x8e0] sm:$0xff] %vm6509, %v5676
      %6795 = vst.msk [vmem:[%s201 + $0x8e8] sm:$0xff] %vm6509, %v5681
      %6796 = vst.msk [vmem:[%s201 + $0x8f0] sm:$0xff] %vm6509, %v5686
      %6797 = vst.msk [vmem:[%s201 + $0x8f8] sm:$0xff] %vm6509, %v5691
      %6798 = vst.msk [vmem:[%s201 + $0x900] sm:$0xff] %vm6509, %v5696
      %6799 = vst.msk [vmem:[%s201 + $0x908] sm:$0xff] %vm6509, %v5701
      %6800 = vst.msk [vmem:[%s201 + $0x910] sm:$0xff] %vm6509, %v5706
      %6801 = vst.msk [vmem:[%s201 + $0x918] sm:$0xff] %vm6509, %v5711
      %6802 = vst.msk [vmem:[%s201 + $0x920] sm:$0xff] %vm6509, %v5716
      %6803 = vst.msk [vmem:[%s201 + $0x928] sm:$0xff] %vm6509, %v5721
      %6804 = vst.msk [vmem:[%s201 + $0x930] sm:$0xff] %vm6509, %v5726
      %6805 = vst.msk [vmem:[%s201 + $0x938] sm:$0xff] %vm6509, %v5731
      %6806 = vst.msk [vmem:[%s201 + $0x940] sm:$0xff] %vm6509, %v5736
      %6807 = vst.msk [vmem:[%s201 + $0x948] sm:$0xff] %vm6509, %v5741
      %6808 = vst.msk [vmem:[%s201 + $0x950] sm:$0xff] %vm6509, %v5746
      %6809 = vst.msk [vmem:[%s201 + $0x958] sm:$0xff] %vm6509, %v5751
      %6810 = vst.msk [vmem:[%s201 + $0x960] sm:$0xff] %vm6509, %v5756
      %6811 = vst.msk [vmem:[%s201 + $0x968] sm:$0xff] %vm6509, %v5761
      %6812 = vst.msk [vmem:[%s201 + $0x970] sm:$0xff] %vm6509, %v5766
      %6813 = vst.msk [vmem:[%s201 + $0x978] sm:$0xff] %vm6509, %v5771
      %6814 = vst.msk [vmem:[%s201 + $0x980] sm:$0xff] %vm6509, %v5776
      %6815 = vst.msk [vmem:[%s201 + $0x988] sm:$0xff] %vm6509, %v5781
      %6816 = vst.msk [vmem:[%s201 + $0x990] sm:$0xff] %vm6509, %v5786
      %6817 = vst.msk [vmem:[%s201 + $0x998] sm:$0xff] %vm6509, %v5791
      %6818 = vst.msk [vmem:[%s201 + $0x9a0] sm:$0xff] %vm6509, %v5796
      %6819 = vst.msk [vmem:[%s201 + $0x9a8] sm:$0xff] %vm6509, %v5801
      %6820 = vst.msk [vmem:[%s201 + $0x9b0] sm:$0xff] %vm6509, %v5806
      %6821 = vst.msk [vmem:[%s201 + $0x9b8] sm:$0xff] %vm6509, %v5811
      %6822 = vst.msk [vmem:[%s201 + $0x9c0] sm:$0xff] %vm6509, %v5816
      %6823 = vst.msk [vmem:[%s201 + $0x9c8] sm:$0xff] %vm6509, %v5821
      %6824 = vst.msk [vmem:[%s201 + $0x9d0] sm:$0xff] %vm6509, %v5826
      %6825 = vst.msk [vmem:[%s201 + $0x9d8] sm:$0xff] %vm6509, %v5831
      %6826 = vst.msk [vmem:[%s201 + $0x9e0] sm:$0xff] %vm6509, %v5836
      %6827 = vst.msk [vmem:[%s201 + $0x9e8] sm:$0xff] %vm6509, %v5841
      %6828 = vst.msk [vmem:[%s201 + $0x9f0] sm:$0xff] %vm6509, %v5846
      %6829 = vst.msk [vmem:[%s201 + $0x9f8] sm:$0xff] %vm6509, %v5851
      %6830 = vst.msk [vmem:[%s201 + $0xa00] sm:$0xff] %vm6509, %v5856
      %6831 = vst.msk [vmem:[%s201 + $0xa08] sm:$0xff] %vm6509, %v5861
      %6832 = vst.msk [vmem:[%s201 + $0xa10] sm:$0xff] %vm6509, %v5866
      %6833 = vst.msk [vmem:[%s201 + $0xa18] sm:$0xff] %vm6509, %v5871
      %6834 = vst.msk [vmem:[%s201 + $0xa20] sm:$0xff] %vm6509, %v5876
      %6835 = vst.msk [vmem:[%s201 + $0xa28] sm:$0xff] %vm6509, %v5881
      %6836 = vst.msk [vmem:[%s201 + $0xa30] sm:$0xff] %vm6509, %v5886
      %6837 = vst.msk [vmem:[%s201 + $0xa38] sm:$0xff] %vm6509, %v5891
      %6838 = vst.msk [vmem:[%s201 + $0xa40] sm:$0xff] %vm6509, %v5896
      %6839 = vst.msk [vmem:[%s201 + $0xa48] sm:$0xff] %vm6509, %v5901
      %6840 = vst.msk [vmem:[%s201 + $0xa50] sm:$0xff] %vm6509, %v5906
      %6841 = vst.msk [vmem:[%s201 + $0xa58] sm:$0xff] %vm6509, %v5911
      %6842 = vst.msk [vmem:[%s201 + $0xa60] sm:$0xff] %vm6509, %v5916
      %6843 = vst.msk [vmem:[%s201 + $0xa68] sm:$0xff] %vm6509, %v5921
      %6844 = vst.msk [vmem:[%s201 + $0xa70] sm:$0xff] %vm6509, %v5926
      %6845 = vst.msk [vmem:[%s201 + $0xa78] sm:$0xff] %vm6509, %v5931
      %6846 = vst.msk [vmem:[%s201 + $0xa80] sm:$0xff] %vm6509, %v5936
      %6847 = vst.msk [vmem:[%s201 + $0xa88] sm:$0xff] %vm6509, %v5941
      %6848 = vst.msk [vmem:[%s201 + $0xa90] sm:$0xff] %vm6509, %v5946
      %6849 = vst.msk [vmem:[%s201 + $0xa98] sm:$0xff] %vm6509, %v5951
      %6850 = vst.msk [vmem:[%s201 + $0xaa0] sm:$0xff] %vm6509, %v5956
      %6851 = vst.msk [vmem:[%s201 + $0xaa8] sm:$0xff] %vm6509, %v5961
      %6852 = vst.msk [vmem:[%s201 + $0xab0] sm:$0xff] %vm6509, %v5966
      %6853 = vst.msk [vmem:[%s201 + $0xab8] sm:$0xff] %vm6509, %v5971
      %6854 = vst.msk [vmem:[%s201 + $0xac0] sm:$0xff] %vm6509, %v5976
      %6855 = vst.msk [vmem:[%s201 + $0xac8] sm:$0xff] %vm6509, %v5981
      %6856 = vst.msk [vmem:[%s201 + $0xad0] sm:$0xff] %vm6509, %v5986
      %6857 = vst.msk [vmem:[%s201 + $0xad8] sm:$0xff] %vm6509, %v5991
      %6858 = vst.msk [vmem:[%s201 + $0xae0] sm:$0xff] %vm6509, %v5996
      %6859 = vst.msk [vmem:[%s201 + $0xae8] sm:$0xff] %vm6509, %v6001
      %6860 = vst.msk [vmem:[%s201 + $0xaf0] sm:$0xff] %vm6509, %v6006
      %6861 = vst.msk [vmem:[%s201 + $0xaf8] sm:$0xff] %vm6509, %v6011
      %6862 = vst.msk [vmem:[%s201 + $0xb00] sm:$0xff] %vm6509, %v6016
      %6863 = vst.msk [vmem:[%s201 + $0xb08] sm:$0xff] %vm6509, %v6021
      %6864 = vst.msk [vmem:[%s201 + $0xb10] sm:$0xff] %vm6509, %v6026
      %6865 = vst.msk [vmem:[%s201 + $0xb18] sm:$0xff] %vm6509, %v6031
      %6866 = vst.msk [vmem:[%s201 + $0xb20] sm:$0xff] %vm6509, %v6036
      %6867 = vst.msk [vmem:[%s201 + $0xb28] sm:$0xff] %vm6509, %v6041
      %6868 = vst.msk [vmem:[%s201 + $0xb30] sm:$0xff] %vm6509, %v6046
      %6869 = vst.msk [vmem:[%s201 + $0xb38] sm:$0xff] %vm6509, %v6051
      %6870 = vst.msk [vmem:[%s201 + $0xb40] sm:$0xff] %vm6509, %v6056
      %6871 = vst.msk [vmem:[%s201 + $0xb48] sm:$0xff] %vm6509, %v6061
      %6872 = vst.msk [vmem:[%s201 + $0xb50] sm:$0xff] %vm6509, %v6066
      %6873 = vst.msk [vmem:[%s201 + $0xb58] sm:$0xff] %vm6509, %v6071
      %6874 = vst.msk [vmem:[%s201 + $0xb60] sm:$0xff] %vm6509, %v6076
      %6875 = vst.msk [vmem:[%s201 + $0xb68] sm:$0xff] %vm6509, %v6081
      %6876 = vst.msk [vmem:[%s201 + $0xb70] sm:$0xff] %vm6509, %v6086
      %6877 = vst.msk [vmem:[%s201 + $0xb78] sm:$0xff] %vm6509, %v6091
      %6878 = vst.msk [vmem:[%s201 + $0xb80] sm:$0xff] %vm6509, %v6096
      %6879 = vst.msk [vmem:[%s201 + $0xb88] sm:$0xff] %vm6509, %v6101
      %6880 = vst.msk [vmem:[%s201 + $0xb90] sm:$0xff] %vm6509, %v6106
      %6881 = vst.msk [vmem:[%s201 + $0xb98] sm:$0xff] %vm6509, %v6111
      %6882 = vst.msk [vmem:[%s201 + $0xba0] sm:$0xff] %vm6509, %v6116
      %6883 = vst.msk [vmem:[%s201 + $0xba8] sm:$0xff] %vm6509, %v6121
      %6884 = vst.msk [vmem:[%s201 + $0xbb0] sm:$0xff] %vm6509, %v6126
      %6885 = vst.msk [vmem:[%s201 + $0xbb8] sm:$0xff] %vm6509, %v6131
      %6886 = vst.msk [vmem:[%s201 + $0xbc0] sm:$0xff] %vm6509, %v6136
      %6887 = vst.msk [vmem:[%s201 + $0xbc8] sm:$0xff] %vm6509, %v6141
      %6888 = vst.msk [vmem:[%s201 + $0xbd0] sm:$0xff] %vm6509, %v6146
      %6889 = vst.msk [vmem:[%s201 + $0xbd8] sm:$0xff] %vm6509, %v6151
      %6890 = vst.msk [vmem:[%s201 + $0xbe0] sm:$0xff] %vm6509, %v6156
      %6891 = vst.msk [vmem:[%s201 + $0xbe8] sm:$0xff] %vm6509, %v6161
      %6892 = vst.msk [vmem:[%s201 + $0xbf0] sm:$0xff] %vm6509, %v6166
      %6893 = vst.msk [vmem:[%s201 + $0xbf8] sm:$0xff] %vm6509, %v6171
      %6894 = vst.msk [vmem:[%s201 + $0xc00] sm:$0xff] %vm6509, %v6176
      %6895 = vst.msk [vmem:[%s201 + $0xc08] sm:$0xff] %vm6509, %v6181
      %6896 = vst.msk [vmem:[%s201 + $0xc10] sm:$0xff] %vm6509, %v6186
      %6897 = vst.msk [vmem:[%s201 + $0xc18] sm:$0xff] %vm6509, %v6191
      %6898 = vst.msk [vmem:[%s201 + $0xc20] sm:$0xff] %vm6509, %v6196
      %6899 = vst.msk [vmem:[%s201 + $0xc28] sm:$0xff] %vm6509, %v6201
      %6900 = vst.msk [vmem:[%s201 + $0xc30] sm:$0xff] %vm6509, %v6206
      %6901 = vst.msk [vmem:[%s201 + $0xc38] sm:$0xff] %vm6509, %v6211
      %6902 = vst.msk [vmem:[%s201 + $0xc40] sm:$0xff] %vm6509, %v6216
      %6903 = vst.msk [vmem:[%s201 + $0xc48] sm:$0xff] %vm6509, %v6221
      %6904 = vst.msk [vmem:[%s201 + $0xc50] sm:$0xff] %vm6509, %v6226
      %6905 = vst.msk [vmem:[%s201 + $0xc58] sm:$0xff] %vm6509, %v6231
      %6906 = vst.msk [vmem:[%s201 + $0xc60] sm:$0xff] %vm6509, %v6236
      %6907 = vst.msk [vmem:[%s201 + $0xc68] sm:$0xff] %vm6509, %v6241
      %6908 = vst.msk [vmem:[%s201 + $0xc70] sm:$0xff] %vm6509, %v6246
      %6909 = vst.msk [vmem:[%s201 + $0xc78] sm:$0xff] %vm6509, %v6251
      %6910 = vst.msk [vmem:[%s201 + $0xc80] sm:$0xff] %vm6509, %v6256
      %6911 = vst.msk [vmem:[%s201 + $0xc88] sm:$0xff] %vm6509, %v6261
      %6912 = vst.msk [vmem:[%s201 + $0xc90] sm:$0xff] %vm6509, %v6266
      %6913 = vst.msk [vmem:[%s201 + $0xc98] sm:$0xff] %vm6509, %v6271
      %6914 = vst.msk [vmem:[%s201 + $0xca0] sm:$0xff] %vm6509, %v6276
      %6915 = vst.msk [vmem:[%s201 + $0xca8] sm:$0xff] %vm6509, %v6281
      %6916 = vst.msk [vmem:[%s201 + $0xcb0] sm:$0xff] %vm6509, %v6286
      %6917 = vst.msk [vmem:[%s201 + $0xcb8] sm:$0xff] %vm6509, %v6291
      %6918 = vst.msk [vmem:[%s201 + $0xcc0] sm:$0xff] %vm6509, %v6296
      %6919 = vst.msk [vmem:[%s201 + $0xcc8] sm:$0xff] %vm6509, %v6301
      %6920 = vst.msk [vmem:[%s201 + $0xcd0] sm:$0xff] %vm6509, %v6306
      %6921 = vst.msk [vmem:[%s201 + $0xcd8] sm:$0xff] %vm6509, %v6311
      %6922 = vst.msk [vmem:[%s201 + $0xce0] sm:$0xff] %vm6509, %v6316
      %6923 = vst.msk [vmem:[%s201 + $0xce8] sm:$0xff] %vm6509, %v6321
      %6924 = vst.msk [vmem:[%s201 + $0xcf0] sm:$0xff] %vm6509, %v6326
      %6925 = vst.msk [vmem:[%s201 + $0xcf8] sm:$0xff] %vm6509, %v6331
      %6926 = vst.msk [vmem:[%s201 + $0xd00] sm:$0xff] %vm6509, %v6336
      %6927 = vst.msk [vmem:[%s201 + $0xd08] sm:$0xff] %vm6509, %v6341
      %6928 = vst.msk [vmem:[%s201 + $0xd10] sm:$0xff] %vm6509, %v6346
      %6929 = vst.msk [vmem:[%s201 + $0xd18] sm:$0xff] %vm6509, %v6351
      %6930 = vst.msk [vmem:[%s201 + $0xd20] sm:$0xff] %vm6509, %v6356
      %6931 = vst.msk [vmem:[%s201 + $0xd28] sm:$0xff] %vm6509, %v6361
      %6932 = vst.msk [vmem:[%s201 + $0xd30] sm:$0xff] %vm6509, %v6366
      %6933 = vst.msk [vmem:[%s201 + $0xd38] sm:$0xff] %vm6509, %v6371
      %6934 = vst.msk [vmem:[%s201 + $0xd40] sm:$0xff] %vm6509, %v6376
      %6935 = vst.msk [vmem:[%s201 + $0xd48] sm:$0xff] %vm6509, %v6381
      %6936 = vst.msk [vmem:[%s201 + $0xd50] sm:$0xff] %vm6509, %v6386
      %6937 = vst.msk [vmem:[%s201 + $0xd58] sm:$0xff] %vm6509, %v6391
      %6938 = vst.msk [vmem:[%s201 + $0xd60] sm:$0xff] %vm6509, %v6396
      %6939 = vst.msk [vmem:[%s201 + $0xd68] sm:$0xff] %vm6509, %v6401
      %6940 = vst.msk [vmem:[%s201 + $0xd70] sm:$0xff] %vm6509, %v6406
      %6941 = vst.msk [vmem:[%s201 + $0xd78] sm:$0xff] %vm6509, %v6411
      %6942 = vst.msk [vmem:[%s201 + $0xd80] sm:$0xff] %vm6509, %v6416
      %6943 = vst.msk [vmem:[%s201 + $0xd88] sm:$0xff] %vm6509, %v6421
      %6944 = vst.msk [vmem:[%s201 + $0xd90] sm:$0xff] %vm6509, %v6426
      %6945 = vst.msk [vmem:[%s201 + $0xd98] sm:$0xff] %vm6509, %v6431
      %6946 = vst.msk [vmem:[%s201 + $0xda0] sm:$0xff] %vm6509, %v6436
      %6947 = vst.msk [vmem:[%s201 + $0xda8] sm:$0xff] %vm6509, %v6441
      %6948 = vst.msk [vmem:[%s201 + $0xdb0] sm:$0xff] %vm6509, %v6446
      %6949 = vst.msk [vmem:[%s201 + $0xdb8] sm:$0xff] %vm6509, %v6451
      %6950 = vst.msk [vmem:[%s201 + $0xdc0] sm:$0xff] %vm6509, %v6456
      %6951 = vst.msk [vmem:[%s201 + $0xdc8] sm:$0xff] %vm6509, %v6461
      %6952 = vst.msk [vmem:[%s201 + $0xdd0] sm:$0xff] %vm6509, %v6466
      %6953 = vst.msk [vmem:[%s201 + $0xdd8] sm:$0xff] %vm6509, %v6471
      %6954 = vst.msk [vmem:[%s201 + $0xde0] sm:$0xff] %vm6509, %v6476
      %6955 = vst.msk [vmem:[%s201 + $0xde8] sm:$0xff] %vm6509, %v6481
      %6956 = vst.msk [vmem:[%s201 + $0xdf0] sm:$0xff] %vm6509, %v6486
      %6957 = vst.msk [vmem:[%s201 + $0xdf8] sm:$0xff] %vm6509, %v6491
      %6958 = vst.msk [vmem:[%s201 + $0xe00] sm:$0xff] %vm6509, %v6496
      %6959 = vst.msk [vmem:[%s201 + $0xe08] sm:$0xff] %vm6509, %v6501
      %vm6960 = vcmask 62464
      %6961 = vst.msk [vmem:[%s201 + $0xe10] sm:$0x3f] %vm6960, %v6506
      %p6962 = scmp.lt.s32.totalorder %s18, 1
      %s6963 = scalar_select %p6962, %s18, 1
      %p6964 = scmp.lt.s32.totalorder %s19, 0
      %s6965 = scalar_select %p6964, %s19, 0
      %s6966 = smul.addr %s6963, 451
      %s6967 = sadd.s32 %s6965, %s6966
      %s6968 = smul.addr %s6967, 8
      %s6969 = scalar_lea.vmem %s3, %s6968
      // Predicated region
      $region33: #{tpu_custom_call.1} parent=31 // pred_check
        %p6970 = pneg %p116
      $region34: #{tpu_custom_call.1} parent=31 // pred_check_branch
        %6972 = sbr.rel (%p6970) target = $region36
      $region35: #{tpu_custom_call.1} parent=31 // pred_region
        _
      $region36: #{tpu_custom_call.1} parent=31 // pred_fallthru
        _
    $region32: #{tpu_custom_call.1} parent=5 // pred_fallthru
      _
    %p6973 = scmp.le.s32.totalorder 2, %s9
    // Predicated region
    $region37: #{tpu_custom_call.1} parent=5 // pred_check
      %p6974 = pneg %p6973
    $region38: #{tpu_custom_call.1} parent=5 // pred_check_branch
      %6976 = sbr.rel (%p6974) target = $region40
    $region39: #{tpu_custom_call.1} parent=5 // pred_region
      %s6977 = ssub.s32 %s9, 2
      // Predicated region
      $region41: #{tpu_custom_call.1} parent=39 // pred_check
        %p6978 = pneg %p122
      $region42: #{tpu_custom_call.1} parent=39 // pred_check_branch
        %6980 = sbr.rel (%p6978) target = $region44
      $region43: #{tpu_custom_call.1} parent=39 // pred_region
        %p6981 = scmp.lt.s32.totalorder %s20, 1
        %s6982 = scalar_select %p6981, %s20, 1
        %p6983 = scmp.lt.s32.totalorder %s21, 0
        %s6984 = scalar_select %p6983, %s21, 0
        %s6985 = smul.addr %s6982, 451
        %s6986 = sadd.s32 %s6984, %s6985
        %s6987 = smul.addr %s6986, 8
        %s6988 = scalar_lea.vmem %s3, %s6987
      $region44: #{tpu_custom_call.1} parent=39 // pred_fallthru
        _
    $region40: #{tpu_custom_call.1} parent=5 // pred_fallthru
      _
  $region6: #{tpu_custom_call.1} parent=0 // loop_footer
    %s13 = sadd.s32 1, %s9
  $region7: #{tpu_custom_call.1} parent=0 // loop_footer_branch
    %8 = sbr.rel target = $region3
  $region8: #{tpu_custom_call.1} parent=0 // loop_exit
    _

</llo_original>
